<compile_context>
chip_gen: v6e
topology: v6e:2x2x1
jax: 0.10.0
libtpu: 0.0.40
codegen_flags: <defaults>
</compile_context>

<pallas_src>
import functools
import math

import jax
import jax.numpy as jnp
from jax.experimental import pallas as pl
from jax.experimental.pallas import tpu as pltpu


# ----------------------------------------------------------------------------
# Packed-parameter layouts (shared by pack_params and the kernel)
# ----------------------------------------------------------------------------

def _w_din_layout(D, F):
    # Per-layer weights whose input dim is D, lane-concatenated: (L, D, sum(widths)).
    return (("enc_wqkv", 3 * D), ("enc_w1", F),
            ("dec_self_wqkv", 3 * D), ("dec_cross_wq", D),
            ("dec_cross_wkv", 2 * D), ("dec_w1", F))


def _vec_layout(D, F):
    # Per-layer biases + LayerNorm gamma/beta, lane-concatenated: (L, 1, sum(widths)).
    return (("enc_bqkv", 3 * D), ("enc_bo", D), ("enc_ln1_g", D), ("enc_ln1_b", D),
            ("enc_b1", F), ("enc_b2", D), ("enc_ln2_g", D), ("enc_ln2_b", D),
            ("dec_self_bqkv", 3 * D), ("dec_self_bo", D), ("dec_ln1_g", D), ("dec_ln1_b", D),
            ("dec_cross_bq", D), ("dec_cross_bkv", 2 * D), ("dec_cross_bo", D),
            ("dec_ln2_g", D), ("dec_ln2_b", D),
            ("dec_b1", F), ("dec_b2", D), ("dec_ln3_g", D), ("dec_ln3_b", D))


def _offsets(layout):
    offs, cur = {}, 0
    for name, width in layout:
        offs[name] = (cur, width)
        cur += width
    return offs


# ----------------------------------------------------------------------------
# In-kernel helpers (matmuls in bf16, f32 MXU accumulation; softmax/LN in f32)
# ----------------------------------------------------------------------------

def _linear(x, w, b, relu=False):
    y = jnp.dot(x.astype(jnp.bfloat16), w, preferred_element_type=jnp.float32) + b
    if relu:
        y = jnp.maximum(y, 0.0)
    return y


def _layernorm(x, g, b, eps):
    mu = jnp.mean(x, axis=-1, keepdims=True)
    var = jnp.mean(jnp.square(x - mu), axis=-1, keepdims=True)
    return (x - mu) * jax.lax.rsqrt(var + eps) * g + b


def _mha(q, k, v, bias, wo_heads, bo, n_head, dk):
    """Multi-head attention + output projection.

    q: (Rq, D) f32, k/v: (Rk, D) f32 (1/sqrt(dk) already folded into the Q proj).
    bias: (Rq, Rk) additive f32 (0 keep / -1e9 mask), block-diagonal over batch.
    wo_heads: (H, dk, D) bf16 head-split output projection, bo: (1, D) f32.
    """
    # Cast once per tensor (cheapest on v5e: no bf16 VPU), then split heads onto a
    # leading batch axis via static lane slices + stack (no minor-dim reshapes).
    qb, kb, vb = (t.astype(jnp.bfloat16) for t in (q, k, v))
    qh = jnp.stack([qb[:, h * dk:(h + 1) * dk] for h in range(n_head)])   # (H, Rq, dk)
    kh = jnp.stack([kb[:, h * dk:(h + 1) * dk] for h in range(n_head)])   # (H, Rk, dk)
    vh = jnp.stack([vb[:, h * dk:(h + 1) * dk] for h in range(n_head)])   # (H, Rk, dk)

    s = jnp.einsum('hqd,hkd->hqk', qh, kh,
                   preferred_element_type=jnp.float32)                    # (H, Rq, Rk) f32
    s = s + bias                                                          # head broadcast
    s = s - jnp.max(s, axis=-1, keepdims=True)
    p = jnp.exp(s)
    p = p * pl.reciprocal(jnp.sum(p, axis=-1, keepdims=True), approx=True)

    o = jnp.einsum('hqk,hkd->hqd', p.astype(jnp.bfloat16), vh,
                   preferred_element_type=jnp.float32)                    # (H, Rq, dk) f32
    # Fold head-concat into the output projection: ctx @ Wo == sum_h o_h @ Wo[h].
    ph = jnp.einsum('hqd,hde->hqe', o.astype(jnp.bfloat16), wo_heads,
                    preferred_element_type=jnp.float32)                   # (H, Rq, D) f32
    return jnp.sum(ph, axis=0) + bo                                       # (Rq, D)


# ----------------------------------------------------------------------------
# Fused whole-model kernel (single invocation; batch folded into rows)
# ----------------------------------------------------------------------------

def _transformer_kernel(enc_x_ref, dec_x_ref, enc_bias_ref, dec_bias_ref, cross_bias_ref,
                        w_din_ref, w_fin_ref, w_attn_o_ref, w_vocab_ref, vec_ref,
                        b_vocab_ref, out_ref,
                        *, n_layers, n_head, d_model, ffn_hidden, eps):
    D, F = d_model, ffn_hidden
    dk = D // n_head
    woff = _offsets(_w_din_layout(D, F))
    voff = _offsets(_vec_layout(D, F))

    enc_bias = enc_bias_ref[...]     # (Re, Re)
    dec_bias = dec_bias_ref[...]     # (Rd, Rd)
    cross_bias = cross_bias_ref[...]  # (Rd, Re) block-diagonal (keeps folded batches apart)

    def layer_accessors(l):
        def W(name):  # (D, width) bf16, static slice of the packed D-input weights
            o, w = woff[name]
            return w_din_ref[l, :, o:o + w]

        def V(name):  # (1, width) f32, static slice of the packed bias/LN vector
            o, w = voff[name]
            return vec_ref[l, :, o:o + w]
        return W, V

    # ---------------- encoder stack ----------------
    # TODO(synk): switch this static unroll to lax.fori_loop over the stacked layer
    # axis when n_layers grows (bounds code size / vreg live ranges).
    x = enc_x_ref[...]               # (Re, D) f32
    for l in range(n_layers):
        W, V = layer_accessors(l)
        qkv = _linear(x, W("enc_wqkv"), V("enc_bqkv"))
        a = _mha(qkv[:, :D], qkv[:, D:2 * D], qkv[:, 2 * D:], enc_bias,
                 w_attn_o_ref[3 * l + 0], V("enc_bo"), n_head, dk)
        x = _layernorm(x + a, V("enc_ln1_g"), V("enc_ln1_b"), eps)
        f = _linear(x, W("enc_w1"), V("enc_b1"), relu=True)
        f = _linear(f, w_fin_ref[l, :, :D], V("enc_b2"))
        x = _layernorm(x + f, V("enc_ln2_g"), V("enc_ln2_b"), eps)
    enc_out = x

    # ---------------- decoder stack ----------------
    y = dec_x_ref[...]               # (Rd, D) f32
    for l in range(n_layers):
        W, V = layer_accessors(l)
        qkv = _linear(y, W("dec_self_wqkv"), V("dec_self_bqkv"))
        a = _mha(qkv[:, :D], qkv[:, D:2 * D], qkv[:, 2 * D:], dec_bias,
                 w_attn_o_ref[3 * l + 1], V("dec_self_bo"), n_head, dk)
        y = _layernorm(y + a, V("dec_ln1_g"), V("dec_ln1_b"), eps)

        q = _linear(y, W("dec_cross_wq"), V("dec_cross_bq"))
        kv = _linear(enc_out, W("dec_cross_wkv"), V("dec_cross_bkv"))
        # TODO(synk): reference Decoder signature only receives dec_mask; cross-attention
        # is unmasked within a batch element (block-diagonal bias only separates batches).
        c = _mha(q, kv[:, :D], kv[:, D:], cross_bias,
                 w_attn_o_ref[3 * l + 2], V("dec_cross_bo"), n_head, dk)
        y = _layernorm(y + c, V("dec_ln2_g"), V("dec_ln2_b"), eps)

        f = _linear(y, W("dec_w1"), V("dec_b1"), relu=True)
        f = _linear(f, w_fin_ref[l, :, D:2 * D], V("dec_b2"))
        y = _layernorm(y + f, V("dec_ln3_g"), V("dec_ln3_b"), eps)

    # ---------------- final projection (lane-dense padded vocab) ----------------
    out_ref[...] = _linear(y, w_vocab_ref[...], b_vocab_ref[...])


# ----------------------------------------------------------------------------
# Wrapper
# ----------------------------------------------------------------------------

def _block_diag_bias(mask, B, sq, sk):
    """mask (1=keep, 0=mask), broadcastable to (B,1,sq,sk) -> additive (B*sq, B*sk)
    bias that is the per-batch mask on the block diagonal and -1e9 off-diagonal."""
    m = jnp.broadcast_to(mask.astype(jnp.float32), (B, 1, sq, sk)).reshape(B, sq, sk)
    idx = jnp.arange(B)
    blocks = jnp.zeros((B, sq, B, sk), jnp.float32).at[idx, :, idx, :].set(m)
    return (blocks.reshape(B * sq, B * sk) - 1.0) * 1e9


def transformer_forward(packed, enc_b, dec_b, enc_mask, dec_mask, *,
                        n_head, n_layers, d_model, ffn_hidden, hi_vocab_size):
    B, s_enc, D = enc_b.shape
    s_dec = dec_b.shape[1]
    v_pad = packed["w_vocab"].shape[1]

    enc_bias = _block_diag_bias(enc_mask, B, s_enc, s_enc)
    dec_bias = _block_diag_bias(dec_mask, B, s_dec, s_dec)
    cross_bias = _block_diag_bias(jnp.ones((B, 1, s_dec, s_enc), jnp.float32), B, s_dec, s_enc)

    out = pl.pallas_call(
        functools.partial(_transformer_kernel, n_layers=n_layers, n_head=n_head,
                          d_model=d_model, ffn_hidden=ffn_hidden, eps=1e-5),
        out_shape=jax.ShapeDtypeStruct((B * s_dec, v_pad), jnp.float32),
        # Single invocation (grid=()); everything fits comfortably in VMEM.
        # TODO(synk): when L*(4*D^2 + 2*D*F) approaches tens of MiB (v7x has 64 MiB),
        # stream layer weights via a grid axis + per-layer BlockSpecs instead.
        compiler_params=pltpu.CompilerParams(vmem_limit_bytes=32 * 1024 * 1024),
    )(enc_b.reshape(B * s_enc, D), dec_b.reshape(B * s_dec, D),
      enc_bias, dec_bias, cross_bias,
      packed["w_din"], packed["w_fin"], packed["w_attn_o"],
      packed["w_vocab"], packed["vec"], packed["b_vocab"])

    return out.reshape(B, s_dec, v_pad)[..., :hi_vocab_size]


# ----------------------------------------------------------------------------
# Parameter init (PyTorch nn.Linear-style uniform) + packing for the fused kernel
# ----------------------------------------------------------------------------

def init_linear(key, fan_in, fan_out):
    kw, kb = jax.random.split(key)
    bound = 1.0 / math.sqrt(fan_in)
    w = jax.random.uniform(kw, (fan_in, fan_out), jnp.float32, -bound, bound)
    b = jax.random.uniform(kb, (fan_out,), jnp.float32, -bound, bound)
    return w, b


def init_mha(key, d_model):
    ks = jax.random.split(key, 4)
    p = {}
    for name, kk in zip(("q", "k", "v", "o"), ks):
        w, b = init_linear(kk, d_model, d_model)
        p["w" + name], p["b" + name] = w, b
    return p


def init_ln(d_model):
    return {"gamma": jnp.ones((d_model,), jnp.float32),
            "beta": jnp.zeros((d_model,), jnp.float32)}


def init_ffn(key, d_model, ffn_hidden):
    k1, k2 = jax.random.split(key)
    w1, b1 = init_linear(k1, d_model, ffn_hidden)
    w2, b2 = init_linear(k2, ffn_hidden, d_model)
    return {"w1": w1, "b1": b1, "w2": w2, "b2": b2}


def init_encoder_layer(key, d_model, ffn_hidden):
    k1, k2 = jax.random.split(key)
    return {"mha": init_mha(k1, d_model), "ln1": init_ln(d_model),
            "ffn": init_ffn(k2, d_model, ffn_hidden), "ln2": init_ln(d_model)}


def init_decoder_layer(key, d_model, ffn_hidden):
    k1, k2, k3 = jax.random.split(key, 3)
    return {"self_mha": init_mha(k1, d_model), "ln1": init_ln(d_model),
            "cross_mha": init_mha(k2, d_model), "ln2": init_ln(d_model),
            "ffn": init_ffn(k3, d_model, ffn_hidden), "ln3": init_ln(d_model)}


def init_transformer(key, d_model, ffn_hidden, n_layers, hi_vocab_size):
    keys = jax.random.split(key, 2 * n_layers + 1)
    enc_layers = [init_encoder_layer(keys[i], d_model, ffn_hidden) for i in range(n_layers)]
    dec_layers = [init_decoder_layer(keys[n_layers + i], d_model, ffn_hidden) for i in range(n_layers)]
    wl, bl = init_linear(keys[-1], d_model, hi_vocab_size)
    return {"encoder": enc_layers, "decoder": dec_layers, "l_w": wl, "l_b": bl}


def pack_params(params, d_model, n_head, ffn_hidden, hi_vocab_size):
    """Pack all weights into 6 arrays: fuse QKV / cross-KV, fold 1/sqrt(dk) into Wq/bq,
    head-split the attention output projections, cast matmul weights to bf16, pad the
    vocab projection to a lane-dense width, and stack per-layer."""
    D, F = d_model, ffn_hidden
    dk = D // n_head
    scale = 1.0 / math.sqrt(dk)
    v_pad = ((hi_vocab_size + 127) // 128) * 128
    enc, dec = params["encoder"], params["decoder"]

    w_din_layers, w_fin_layers, w_o_layers, vec_layers = [], [], [], []
    for e, d in zip(enc, dec):
        wmap = {
            "enc_wqkv": jnp.concatenate([e["mha"]["wq"] * scale, e["mha"]["wk"], e["mha"]["wv"]], axis=1),
            "enc_w1": e["ffn"]["w1"],
            "dec_self_wqkv": jnp.concatenate([d["self_mha"]["wq"] * scale, d["self_mha"]["wk"],
                                              d["self_mha"]["wv"]], axis=1),
            "dec_cross_wq": d["cross_mha"]["wq"] * scale,
            "dec_cross_wkv": jnp.concatenate([d["cross_mha"]["wk"], d["cross_mha"]["wv"]], axis=1),
            "dec_w1": d["ffn"]["w1"],
        }
        vmap = {
            "enc_bqkv": jnp.concatenate([e["mha"]["bq"] * scale, e["mha"]["bk"], e["mha"]["bv"]]),
            "enc_bo": e["mha"]["bo"],
            "enc_ln1_g": e["ln1"]["gamma"], "enc_ln1_b": e["ln1"]["beta"],
            "enc_b1": e["ffn"]["b1"], "enc_b2": e["ffn"]["b2"],
            "enc_ln2_g": e["ln2"]["gamma"], "enc_ln2_b": e["ln2"]["beta"],
            "dec_self_bqkv": jnp.concatenate([d["self_mha"]["bq"] * scale, d["self_mha"]["bk"],
                                              d["self_mha"]["bv"]]),
            "dec_self_bo": d["self_mha"]["bo"],
            "dec_ln1_g": d["ln1"]["gamma"], "dec_ln1_b": d["ln1"]["beta"],
            "dec_cross_bq": d["cross_mha"]["bq"] * scale,
            "dec_cross_bkv": jnp.concatenate([d["cross_mha"]["bk"], d["cross_mha"]["bv"]]),
            "dec_cross_bo": d["cross_mha"]["bo"],
            "dec_ln2_g": d["ln2"]["gamma"], "dec_ln2_b": d["ln2"]["beta"],
            "dec_b1": d["ffn"]["b1"], "dec_b2": d["ffn"]["b2"],
            "dec_ln3_g": d["ln3"]["gamma"], "dec_ln3_b": d["ln3"]["beta"],
        }
        w_din_layers.append(jnp.concatenate([wmap[n] for n, _ in _w_din_layout(D, F)], axis=1))
        vec_layers.append(jnp.concatenate([vmap[n] for n, _ in _vec_layout(D, F)])[None, :])
        w_fin_layers.append(jnp.concatenate([e["ffn"]["w2"], d["ffn"]["w2"]], axis=1))
        w_o_layers.append(jnp.stack([e["mha"]["wo"].reshape(n_head, dk, D),
                                     d["self_mha"]["wo"].reshape(n_head, dk, D),
                                     d["cross_mha"]["wo"].reshape(n_head, dk, D)]))

    w_vocab = jnp.zeros((D, v_pad), jnp.float32).at[:, :hi_vocab_size].set(params["l_w"])
    b_vocab = jnp.zeros((1, v_pad), jnp.float32).at[0, :hi_vocab_size].set(params["l_b"])

    return {
        "w_din": jnp.stack(w_din_layers).astype(jnp.bfloat16),            # (L, D, 8D+2F)
        "w_fin": jnp.stack(w_fin_layers).astype(jnp.bfloat16),            # (L, F, 2D)
        "w_attn_o": jnp.concatenate(w_o_layers, axis=0).astype(jnp.bfloat16),  # (3L, H, dk, D)
        "vec": jnp.stack(vec_layers).astype(jnp.float32),                 # (L, 1, NVEC)
        "w_vocab": w_vocab.astype(jnp.bfloat16),                          # (D, v_pad)
        "b_vocab": b_vocab,                                               # (1, v_pad)
    }


# ----------------------------------------------------------------------------
# Main
# ----------------------------------------------------------------------------

if __name__ == "__main__":
    d_model = 32
    ffn_hidden = 64
    n_head = 4
    n_layers = 2
    hi_vocab_size = 48
    batch = 2
    s_enc = 8
    s_dec = 8

    key = jax.random.PRNGKey(0)
    kp, ke, kd = jax.random.split(key, 3)

    raw_params = init_transformer(kp, d_model, ffn_hidden, n_layers, hi_vocab_size)
    packed = pack_params(raw_params, d_model, n_head, ffn_hidden, hi_vocab_size)

    enc_b = jax.random.normal(ke, (batch, s_enc, d_model), jnp.float32)
    dec_b = jax.random.normal(kd, (batch, s_dec, d_model), jnp.float32)

    # source padding mask: batch 1 has its last two positions padded
    enc_mask = jnp.ones((batch, 1, 1, s_enc), jnp.float32).at[1, 0, 0, -2:].set(0.0)
    # target mask: causal
    dec_mask = jnp.broadcast_to(jnp.tril(jnp.ones((s_dec, s_dec), jnp.float32))[None, None],
                                (batch, 1, s_dec, s_dec))

    fwd = jax.jit(functools.partial(transformer_forward,
                                    n_head=n_head, n_layers=n_layers, d_model=d_model,
                                    ffn_hidden=ffn_hidden, hi_vocab_size=hi_vocab_size))
    out = jax.block_until_ready(fwd(packed, enc_b, dec_b, enc_mask, dec_mask))

    assert out.shape == (batch, s_dec, hi_vocab_size)
    assert bool(jnp.all(jnp.isfinite(out)))
    print("KERNEL_OK")
</pallas_src>

<mosaic_0001>
module attributes {stable_mosaic.version = 11 : i64} {
  func.func @_transformer_kernel(%arg0: memref<16x32xf32, #tpu.memory_space<vmem>>, %arg1: memref<16x32xf32, #tpu.memory_space<vmem>>, %arg2: memref<16x16xf32, #tpu.memory_space<vmem>>, %arg3: memref<16x16xf32, #tpu.memory_space<vmem>>, %arg4: memref<16x16xf32, #tpu.memory_space<vmem>>, %arg5: memref<2x32x416xbf16, #tpu.memory_space<vmem>>, %arg6: memref<2x64x64xbf16, #tpu.memory_space<vmem>>, %arg7: memref<6x4x8x32xbf16, #tpu.memory_space<vmem>>, %arg8: memref<32x128xbf16, #tpu.memory_space<vmem>>, %arg9: memref<2x1x896xf32, #tpu.memory_space<vmem>>, %arg10: memref<1x128xf32, #tpu.memory_space<vmem>>, %arg11: memref<16x128xf32, #tpu.memory_space<vmem>>) attributes {dimension_semantics = [], scalar_prefetch = 0 : i64, scratch_operands = 0 : i64, tpu.core_type = #tpu.core_type<tc>} {
    %c0 = arith.constant 0 : index
    %c0_0 = arith.constant 0 : index
    %0 = vector.load %arg2[%c0, %c0_0] : memref<16x16xf32, #tpu.memory_space<vmem>>, vector<16x16xf32>
    %c0_1 = arith.constant 0 : index
    %c0_2 = arith.constant 0 : index
    %1 = vector.load %arg3[%c0_1, %c0_2] : memref<16x16xf32, #tpu.memory_space<vmem>>, vector<16x16xf32>
    %c0_3 = arith.constant 0 : index
    %c0_4 = arith.constant 0 : index
    %2 = vector.load %arg4[%c0_3, %c0_4] : memref<16x16xf32, #tpu.memory_space<vmem>>, vector<16x16xf32>
    %c0_5 = arith.constant 0 : index
    %c0_6 = arith.constant 0 : index
    %3 = vector.load %arg0[%c0_5, %c0_6] : memref<16x32xf32, #tpu.memory_space<vmem>>, vector<16x32xf32>
    %c0_7 = arith.constant 0 : index
    %c0_8 = arith.constant 0 : index
    %c0_9 = arith.constant 0 : index
    %4 = vector.load %arg5[%c0_7, %c0_8, %c0_9] : memref<2x32x416xbf16, #tpu.memory_space<vmem>>, vector<1x32x96xbf16>
    %5 = vector.shape_cast %4 : vector<1x32x96xbf16> to vector<32x96xbf16>
    %c0_10 = arith.constant 0 : index
    %c0_11 = arith.constant 0 : index
    %c0_12 = arith.constant 0 : index
    %6 = vector.load %arg9[%c0_10, %c0_11, %c0_12] : memref<2x1x896xf32, #tpu.memory_space<vmem>>, vector<1x1x96xf32>
    %7 = vector.shape_cast %6 : vector<1x1x96xf32> to vector<1x96xf32>
    %8 = arith.truncf %3 : vector<16x32xf32> to vector<16x32xbf16>
    %cst = arith.constant dense<0.000000e+00> : vector<16x96xf32>
    %9 = tpu.matmul %8, %5, %cst {dimension_numbers = #tpu.dot_dimension_numbers<[1], [0], [0], [1], [0, 0, 1, 1], [], []>} : vector<16x32xbf16>, vector<32x96xbf16>, vector<16x96xf32> -> vector<16x96xf32>
    %10 = vector.broadcast %7 : vector<1x96xf32> to vector<16x96xf32>
    %11 = arith.addf %9, %10 : vector<16x96xf32>
    %12 = vector.extract_strided_slice %11 {offsets = [0, 0], sizes = [16, 32], strides = [1, 1]} : vector<16x96xf32> to vector<16x32xf32>
    %13 = vector.extract_strided_slice %11 {offsets = [0, 32], sizes = [16, 32], strides = [1, 1]} : vector<16x96xf32> to vector<16x32xf32>
    %14 = vector.extract_strided_slice %11 {offsets = [0, 64], sizes = [16, 32], strides = [1, 1]} : vector<16x96xf32> to vector<16x32xf32>
    %c0_13 = arith.constant 0 : index
    %c0_14 = arith.constant 0 : index
    %c0_15 = arith.constant 0 : index
    %c0_16 = arith.constant 0 : index
    %15 = vector.load %arg7[%c0_13, %c0_14, %c0_15, %c0_16] : memref<6x4x8x32xbf16, #tpu.memory_space<vmem>>, vector<1x4x8x32xbf16>
    %16 = vector.shape_cast %15 : vector<1x4x8x32xbf16> to vector<4x8x32xbf16>
    %c0_17 = arith.constant 0 : index
    %c0_18 = arith.constant 0 : index
    %c96 = arith.constant 96 : index
    %17 = vector.load %arg9[%c0_17, %c0_18, %c96] : memref<2x1x896xf32, #tpu.memory_space<vmem>>, vector<1x1x32xf32>
    %18 = vector.shape_cast %17 : vector<1x1x32xf32> to vector<1x32xf32>
    %19 = arith.truncf %12 : vector<16x32xf32> to vector<16x32xbf16>
    %20 = arith.truncf %13 : vector<16x32xf32> to vector<16x32xbf16>
    %21 = arith.truncf %14 : vector<16x32xf32> to vector<16x32xbf16>
    %22 = vector.extract_strided_slice %19 {offsets = [0, 0], sizes = [16, 8], strides = [1, 1]} : vector<16x32xbf16> to vector<16x8xbf16>
    %23 = vector.extract_strided_slice %19 {offsets = [0, 8], sizes = [16, 8], strides = [1, 1]} : vector<16x32xbf16> to vector<16x8xbf16>
    %24 = vector.extract_strided_slice %19 {offsets = [0, 16], sizes = [16, 8], strides = [1, 1]} : vector<16x32xbf16> to vector<16x8xbf16>
    %25 = vector.extract_strided_slice %19 {offsets = [0, 24], sizes = [16, 8], strides = [1, 1]} : vector<16x32xbf16> to vector<16x8xbf16>
    %26 = vector.shape_cast %22 : vector<16x8xbf16> to vector<1x16x8xbf16>
    %27 = vector.shape_cast %23 : vector<16x8xbf16> to vector<1x16x8xbf16>
    %28 = vector.shape_cast %24 : vector<16x8xbf16> to vector<1x16x8xbf16>
    %29 = vector.shape_cast %25 : vector<16x8xbf16> to vector<1x16x8xbf16>
    %30 = tpu.concatenate %26, %27, %28, %29 in 0 : vector<1x16x8xbf16>, vector<1x16x8xbf16>, vector<1x16x8xbf16>, vector<1x16x8xbf16> -> vector<4x16x8xbf16>
    %31 = vector.extract_strided_slice %20 {offsets = [0, 0], sizes = [16, 8], strides = [1, 1]} : vector<16x32xbf16> to vector<16x8xbf16>
    %32 = vector.extract_strided_slice %20 {offsets = [0, 8], sizes = [16, 8], strides = [1, 1]} : vector<16x32xbf16> to vector<16x8xbf16>
    %33 = vector.extract_strided_slice %20 {offsets = [0, 16], sizes = [16, 8], strides = [1, 1]} : vector<16x32xbf16> to vector<16x8xbf16>
    %34 = vector.extract_strided_slice %20 {offsets = [0, 24], sizes = [16, 8], strides = [1, 1]} : vector<16x32xbf16> to vector<16x8xbf16>
    %35 = vector.shape_cast %31 : vector<16x8xbf16> to vector<1x16x8xbf16>
    %36 = vector.shape_cast %32 : vector<16x8xbf16> to vector<1x16x8xbf16>
    %37 = vector.shape_cast %33 : vector<16x8xbf16> to vector<1x16x8xbf16>
    %38 = vector.shape_cast %34 : vector<16x8xbf16> to vector<1x16x8xbf16>
    %39 = tpu.concatenate %35, %36, %37, %38 in 0 : vector<1x16x8xbf16>, vector<1x16x8xbf16>, vector<1x16x8xbf16>, vector<1x16x8xbf16> -> vector<4x16x8xbf16>
    %40 = vector.extract_strided_slice %21 {offsets = [0, 0], sizes = [16, 8], strides = [1, 1]} : vector<16x32xbf16> to vector<16x8xbf16>
    %41 = vector.extract_strided_slice %21 {offsets = [0, 8], sizes = [16, 8], strides = [1, 1]} : vector<16x32xbf16> to vector<16x8xbf16>
    %42 = vector.extract_strided_slice %21 {offsets = [0, 16], sizes = [16, 8], strides = [1, 1]} : vector<16x32xbf16> to vector<16x8xbf16>
    %43 = vector.extract_strided_slice %21 {offsets = [0, 24], sizes = [16, 8], strides = [1, 1]} : vector<16x32xbf16> to vector<16x8xbf16>
    %44 = vector.shape_cast %40 : vector<16x8xbf16> to vector<1x16x8xbf16>
    %45 = vector.shape_cast %41 : vector<16x8xbf16> to vector<1x16x8xbf16>
    %46 = vector.shape_cast %42 : vector<16x8xbf16> to vector<1x16x8xbf16>
    %47 = vector.shape_cast %43 : vector<16x8xbf16> to vector<1x16x8xbf16>
    %48 = tpu.concatenate %44, %45, %46, %47 in 0 : vector<1x16x8xbf16>, vector<1x16x8xbf16>, vector<1x16x8xbf16>, vector<1x16x8xbf16> -> vector<4x16x8xbf16>
    "tpu.trace_start"() <{level = 10 : i32, message = "hqd,hkd->hqk"}> : () -> ()
    %cst_19 = arith.constant dense<0.000000e+00> : vector<4x16x16xf32>
    %49 = tpu.matmul %30, %39, %cst_19 {dimension_numbers = #tpu.dot_dimension_numbers<[2], [2], [1], [1], [0, 0, 0, 1, 1, 1], [0], [0]>} : vector<4x16x8xbf16>, vector<4x16x8xbf16>, vector<4x16x16xf32> -> vector<4x16x16xf32>
    "tpu.trace_stop"() : () -> ()
    %50 = vector.shape_cast %0 : vector<16x16xf32> to vector<1x16x16xf32>
    %51 = vector.broadcast %50 : vector<1x16x16xf32> to vector<4x16x16xf32>
    %52 = arith.addf %49, %51 : vector<4x16x16xf32>
    %cst_20 = arith.constant dense<0xFF800000> : vector<4x16xf32>
    %53 = vector.multi_reduction <maximumf>, %52, %cst_20 [2] : vector<4x16x16xf32> to vector<4x16xf32>
    %54 = vector.shape_cast %53 : vector<4x16xf32> to vector<4x16x1xf32>
    %55 = vector.broadcast %54 : vector<4x16x1xf32> to vector<4x16x16xf32>
    %56 = arith.subf %52, %55 : vector<4x16x16xf32>
    %57 = math.exp %56 : vector<4x16x16xf32>
    %cst_21 = arith.constant dense<0.000000e+00> : vector<4x16xf32>
    %58 = vector.multi_reduction <add>, %57, %cst_21 [2] : vector<4x16x16xf32> to vector<4x16xf32>
    %59 = vector.shape_cast %58 : vector<4x16xf32> to vector<4x16x1xf32>
    %60 = tpu.reciprocal %59 {approx = true} : vector<4x16x1xf32> -> vector<4x16x1xf32>
    %61 = vector.broadcast %60 : vector<4x16x1xf32> to vector<4x16x16xf32>
    %62 = arith.mulf %57, %61 : vector<4x16x16xf32>
    %63 = arith.truncf %62 : vector<4x16x16xf32> to vector<4x16x16xbf16>
    "tpu.trace_start"() <{level = 10 : i32, message = "hqk,hkd->hqd"}> : () -> ()
    %cst_22 = arith.constant dense<0.000000e+00> : vector<4x16x8xf32>
    %64 = tpu.matmul %63, %48, %cst_22 {dimension_numbers = #tpu.dot_dimension_numbers<[2], [1], [1], [2], [0, 0, 0, 1, 1, 2], [0], [0]>} : vector<4x16x16xbf16>, vector<4x16x8xbf16>, vector<4x16x8xf32> -> vector<4x16x8xf32>
    "tpu.trace_stop"() : () -> ()
    %65 = arith.truncf %64 : vector<4x16x8xf32> to vector<4x16x8xbf16>
    "tpu.trace_start"() <{level = 10 : i32, message = "hqd,hde->hqe"}> : () -> ()
    %cst_23 = arith.constant dense<0.000000e+00> : vector<4x16x32xf32>
    %66 = tpu.matmul %65, %16, %cst_23 {dimension_numbers = #tpu.dot_dimension_numbers<[2], [1], [1], [2], [0, 0, 0, 1, 1, 2], [0], [0]>} : vector<4x16x8xbf16>, vector<4x8x32xbf16>, vector<4x16x32xf32> -> vector<4x16x32xf32>
    "tpu.trace_stop"() : () -> ()
    %cst_24 = arith.constant dense<0.000000e+00> : vector<16x32xf32>
    %67 = vector.multi_reduction <add>, %66, %cst_24 [0] : vector<4x16x32xf32> to vector<16x32xf32>
    %68 = vector.broadcast %18 : vector<1x32xf32> to vector<16x32xf32>
    %69 = arith.addf %67, %68 : vector<16x32xf32>
    %70 = arith.addf %3, %69 : vector<16x32xf32>
    %c0_25 = arith.constant 0 : index
    %c0_26 = arith.constant 0 : index
    %c128 = arith.constant 128 : index
    %71 = vector.load %arg9[%c0_25, %c0_26, %c128] : memref<2x1x896xf32, #tpu.memory_space<vmem>>, vector<1x1x32xf32>
    %72 = vector.shape_cast %71 : vector<1x1x32xf32> to vector<1x32xf32>
    %c0_27 = arith.constant 0 : index
    %c0_28 = arith.constant 0 : index
    %c160 = arith.constant 160 : index
    %73 = vector.load %arg9[%c0_27, %c0_28, %c160] : memref<2x1x896xf32, #tpu.memory_space<vmem>>, vector<1x1x32xf32>
    %74 = vector.shape_cast %73 : vector<1x1x32xf32> to vector<1x32xf32>
    %cst_29 = arith.constant dense<0.000000e+00> : vector<16xf32>
    %75 = vector.multi_reduction <add>, %70, %cst_29 [1] : vector<16x32xf32> to vector<16xf32>
    %76 = vector.shape_cast %75 : vector<16xf32> to vector<16x1xf32>
    %cst_30 = arith.constant 3.200000e+01 : f32
    %77 = vector.broadcast %cst_30 : f32 to vector<16x1xf32>
    %78 = arith.divf %76, %77 : vector<16x1xf32>
    %79 = vector.broadcast %78 : vector<16x1xf32> to vector<16x32xf32>
    %80 = arith.subf %70, %79 : vector<16x32xf32>
    %81 = arith.mulf %80, %80 : vector<16x32xf32>
    %cst_31 = arith.constant dense<0.000000e+00> : vector<16xf32>
    %82 = vector.multi_reduction <add>, %81, %cst_31 [1] : vector<16x32xf32> to vector<16xf32>
    %83 = vector.shape_cast %82 : vector<16xf32> to vector<16x1xf32>
    %cst_32 = arith.constant 3.200000e+01 : f32
    %84 = vector.broadcast %cst_32 : f32 to vector<16x1xf32>
    %85 = arith.divf %83, %84 : vector<16x1xf32>
    %86 = vector.broadcast %78 : vector<16x1xf32> to vector<16x32xf32>
    %87 = arith.subf %70, %86 : vector<16x32xf32>
    %cst_33 = arith.constant 9.99999974E-6 : f32
    %88 = vector.broadcast %cst_33 : f32 to vector<16x1xf32>
    %89 = arith.addf %85, %88 : vector<16x1xf32>
    %90 = math.rsqrt %89 : vector<16x1xf32>
    %91 = vector.broadcast %90 : vector<16x1xf32> to vector<16x32xf32>
    %92 = arith.mulf %87, %91 : vector<16x32xf32>
    %93 = vector.broadcast %72 : vector<1x32xf32> to vector<16x32xf32>
    %94 = arith.mulf %92, %93 : vector<16x32xf32>
    %95 = vector.broadcast %74 : vector<1x32xf32> to vector<16x32xf32>
    %96 = arith.addf %94, %95 : vector<16x32xf32>
    %c0_34 = arith.constant 0 : index
    %c0_35 = arith.constant 0 : index
    %c96_36 = arith.constant 96 : index
    %97 = vector.load %arg5[%c0_34, %c0_35, %c96_36] : memref<2x32x416xbf16, #tpu.memory_space<vmem>>, vector<1x32x64xbf16>
    %98 = vector.shape_cast %97 : vector<1x32x64xbf16> to vector<32x64xbf16>
    %c0_37 = arith.constant 0 : index
    %c0_38 = arith.constant 0 : index
    %c192 = arith.constant 192 : index
    %99 = vector.load %arg9[%c0_37, %c0_38, %c192] : memref<2x1x896xf32, #tpu.memory_space<vmem>>, vector<1x1x64xf32>
    %100 = vector.shape_cast %99 : vector<1x1x64xf32> to vector<1x64xf32>
    %101 = arith.truncf %96 : vector<16x32xf32> to vector<16x32xbf16>
    %cst_39 = arith.constant dense<0.000000e+00> : vector<16x64xf32>
    %102 = tpu.matmul %101, %98, %cst_39 {dimension_numbers = #tpu.dot_dimension_numbers<[1], [0], [0], [1], [0, 0, 1, 1], [], []>} : vector<16x32xbf16>, vector<32x64xbf16>, vector<16x64xf32> -> vector<16x64xf32>
    %103 = vector.broadcast %100 : vector<1x64xf32> to vector<16x64xf32>
    %104 = arith.addf %102, %103 : vector<16x64xf32>
    %cst_40 = arith.constant 0.000000e+00 : f32
    %105 = vector.broadcast %cst_40 : f32 to vector<16x64xf32>
    %106 = arith.maximumf %104, %105 : vector<16x64xf32>
    %c0_41 = arith.constant 0 : index
    %c0_42 = arith.constant 0 : index
    %c0_43 = arith.constant 0 : index
    %107 = vector.load %arg6[%c0_41, %c0_42, %c0_43] : memref<2x64x64xbf16, #tpu.memory_space<vmem>>, vector<1x64x32xbf16>
    %108 = vector.shape_cast %107 : vector<1x64x32xbf16> to vector<64x32xbf16>
    %c0_44 = arith.constant 0 : index
    %c0_45 = arith.constant 0 : index
    %c256 = arith.constant 256 : index
    %109 = vector.load %arg9[%c0_44, %c0_45, %c256] : memref<2x1x896xf32, #tpu.memory_space<vmem>>, vector<1x1x32xf32>
    %110 = vector.shape_cast %109 : vector<1x1x32xf32> to vector<1x32xf32>
    %111 = arith.truncf %106 : vector<16x64xf32> to vector<16x64xbf16>
    %cst_46 = arith.constant dense<0.000000e+00> : vector<16x32xf32>
    %112 = tpu.matmul %111, %108, %cst_46 {dimension_numbers = #tpu.dot_dimension_numbers<[1], [0], [0], [1], [0, 0, 1, 1], [], []>} : vector<16x64xbf16>, vector<64x32xbf16>, vector<16x32xf32> -> vector<16x32xf32>
    %113 = vector.broadcast %110 : vector<1x32xf32> to vector<16x32xf32>
    %114 = arith.addf %112, %113 : vector<16x32xf32>
    %115 = arith.addf %96, %114 : vector<16x32xf32>
    %c0_47 = arith.constant 0 : index
    %c0_48 = arith.constant 0 : index
    %c288 = arith.constant 288 : index
    %116 = vector.load %arg9[%c0_47, %c0_48, %c288] : memref<2x1x896xf32, #tpu.memory_space<vmem>>, vector<1x1x32xf32>
    %117 = vector.shape_cast %116 : vector<1x1x32xf32> to vector<1x32xf32>
    %c0_49 = arith.constant 0 : index
    %c0_50 = arith.constant 0 : index
    %c320 = arith.constant 320 : index
    %118 = vector.load %arg9[%c0_49, %c0_50, %c320] : memref<2x1x896xf32, #tpu.memory_space<vmem>>, vector<1x1x32xf32>
    %119 = vector.shape_cast %118 : vector<1x1x32xf32> to vector<1x32xf32>
    %cst_51 = arith.constant dense<0.000000e+00> : vector<16xf32>
    %120 = vector.multi_reduction <add>, %115, %cst_51 [1] : vector<16x32xf32> to vector<16xf32>
    %121 = vector.shape_cast %120 : vector<16xf32> to vector<16x1xf32>
    %cst_52 = arith.constant 3.200000e+01 : f32
    %122 = vector.broadcast %cst_52 : f32 to vector<16x1xf32>
    %123 = arith.divf %121, %122 : vector<16x1xf32>
    %124 = vector.broadcast %123 : vector<16x1xf32> to vector<16x32xf32>
    %125 = arith.subf %115, %124 : vector<16x32xf32>
    %126 = arith.mulf %125, %125 : vector<16x32xf32>
    %cst_53 = arith.constant dense<0.000000e+00> : vector<16xf32>
    %127 = vector.multi_reduction <add>, %126, %cst_53 [1] : vector<16x32xf32> to vector<16xf32>
    %128 = vector.shape_cast %127 : vector<16xf32> to vector<16x1xf32>
    %cst_54 = arith.constant 3.200000e+01 : f32
    %129 = vector.broadcast %cst_54 : f32 to vector<16x1xf32>
    %130 = arith.divf %128, %129 : vector<16x1xf32>
    %131 = vector.broadcast %123 : vector<16x1xf32> to vector<16x32xf32>
    %132 = arith.subf %115, %131 : vector<16x32xf32>
    %cst_55 = arith.constant 9.99999974E-6 : f32
    %133 = vector.broadcast %cst_55 : f32 to vector<16x1xf32>
    %134 = arith.addf %130, %133 : vector<16x1xf32>
    %135 = math.rsqrt %134 : vector<16x1xf32>
    %136 = vector.broadcast %135 : vector<16x1xf32> to vector<16x32xf32>
    %137 = arith.mulf %132, %136 : vector<16x32xf32>
    %138 = vector.broadcast %117 : vector<1x32xf32> to vector<16x32xf32>
    %139 = arith.mulf %137, %138 : vector<16x32xf32>
    %140 = vector.broadcast %119 : vector<1x32xf32> to vector<16x32xf32>
    %141 = arith.addf %139, %140 : vector<16x32xf32>
    %c1 = arith.constant 1 : index
    %c0_56 = arith.constant 0 : index
    %c0_57 = arith.constant 0 : index
    %142 = vector.load %arg5[%c1, %c0_56, %c0_57] : memref<2x32x416xbf16, #tpu.memory_space<vmem>>, vector<1x32x96xbf16>
    %143 = vector.shape_cast %142 : vector<1x32x96xbf16> to vector<32x96xbf16>
    %c1_58 = arith.constant 1 : index
    %c0_59 = arith.constant 0 : index
    %c0_60 = arith.constant 0 : index
    %144 = vector.load %arg9[%c1_58, %c0_59, %c0_60] : memref<2x1x896xf32, #tpu.memory_space<vmem>>, vector<1x1x96xf32>
    %145 = vector.shape_cast %144 : vector<1x1x96xf32> to vector<1x96xf32>
    %146 = arith.truncf %141 : vector<16x32xf32> to vector<16x32xbf16>
    %cst_61 = arith.constant dense<0.000000e+00> : vector<16x96xf32>
    %147 = tpu.matmul %146, %143, %cst_61 {dimension_numbers = #tpu.dot_dimension_numbers<[1], [0], [0], [1], [0, 0, 1, 1], [], []>} : vector<16x32xbf16>, vector<32x96xbf16>, vector<16x96xf32> -> vector<16x96xf32>
    %148 = vector.broadcast %145 : vector<1x96xf32> to vector<16x96xf32>
    %149 = arith.addf %147, %148 : vector<16x96xf32>
    %150 = vector.extract_strided_slice %149 {offsets = [0, 0], sizes = [16, 32], strides = [1, 1]} : vector<16x96xf32> to vector<16x32xf32>
    %151 = vector.extract_strided_slice %149 {offsets = [0, 32], sizes = [16, 32], strides = [1, 1]} : vector<16x96xf32> to vector<16x32xf32>
    %152 = vector.extract_strided_slice %149 {offsets = [0, 64], sizes = [16, 32], strides = [1, 1]} : vector<16x96xf32> to vector<16x32xf32>
    %c3 = arith.constant 3 : index
    %c0_62 = arith.constant 0 : index
    %c0_63 = arith.constant 0 : index
    %c0_64 = arith.constant 0 : index
    %153 = vector.load %arg7[%c3, %c0_62, %c0_63, %c0_64] : memref<6x4x8x32xbf16, #tpu.memory_space<vmem>>, vector<1x4x8x32xbf16>
    %154 = vector.shape_cast %153 : vector<1x4x8x32xbf16> to vector<4x8x32xbf16>
    %c1_65 = arith.constant 1 : index
    %c0_66 = arith.constant 0 : index
    %c96_67 = arith.constant 96 : index
    %155 = vector.load %arg9[%c1_65, %c0_66, %c96_67] : memref<2x1x896xf32, #tpu.memory_space<vmem>>, vector<1x1x32xf32>
    %156 = vector.shape_cast %155 : vector<1x1x32xf32> to vector<1x32xf32>
    %157 = arith.truncf %150 : vector<16x32xf32> to vector<16x32xbf16>
    %158 = arith.truncf %151 : vector<16x32xf32> to vector<16x32xbf16>
    %159 = arith.truncf %152 : vector<16x32xf32> to vector<16x32xbf16>
    %160 = vector.extract_strided_slice %157 {offsets = [0, 0], sizes = [16, 8], strides = [1, 1]} : vector<16x32xbf16> to vector<16x8xbf16>
    %161 = vector.extract_strided_slice %157 {offsets = [0, 8], sizes = [16, 8], strides = [1, 1]} : vector<16x32xbf16> to vector<16x8xbf16>
    %162 = vector.extract_strided_slice %157 {offsets = [0, 16], sizes = [16, 8], strides = [1, 1]} : vector<16x32xbf16> to vector<16x8xbf16>
    %163 = vector.extract_strided_slice %157 {offsets = [0, 24], sizes = [16, 8], strides = [1, 1]} : vector<16x32xbf16> to vector<16x8xbf16>
    %164 = vector.shape_cast %160 : vector<16x8xbf16> to vector<1x16x8xbf16>
    %165 = vector.shape_cast %161 : vector<16x8xbf16> to vector<1x16x8xbf16>
    %166 = vector.shape_cast %162 : vector<16x8xbf16> to vector<1x16x8xbf16>
    %167 = vector.shape_cast %163 : vector<16x8xbf16> to vector<1x16x8xbf16>
    %168 = tpu.concatenate %164, %165, %166, %167 in 0 : vector<1x16x8xbf16>, vector<1x16x8xbf16>, vector<1x16x8xbf16>, vector<1x16x8xbf16> -> vector<4x16x8xbf16>
    %169 = vector.extract_strided_slice %158 {offsets = [0, 0], sizes = [16, 8], strides = [1, 1]} : vector<16x32xbf16> to vector<16x8xbf16>
    %170 = vector.extract_strided_slice %158 {offsets = [0, 8], sizes = [16, 8], strides = [1, 1]} : vector<16x32xbf16> to vector<16x8xbf16>
    %171 = vector.extract_strided_slice %158 {offsets = [0, 16], sizes = [16, 8], strides = [1, 1]} : vector<16x32xbf16> to vector<16x8xbf16>
    %172 = vector.extract_strided_slice %158 {offsets = [0, 24], sizes = [16, 8], strides = [1, 1]} : vector<16x32xbf16> to vector<16x8xbf16>
    %173 = vector.shape_cast %169 : vector<16x8xbf16> to vector<1x16x8xbf16>
    %174 = vector.shape_cast %170 : vector<16x8xbf16> to vector<1x16x8xbf16>
    %175 = vector.shape_cast %171 : vector<16x8xbf16> to vector<1x16x8xbf16>
    %176 = vector.shape_cast %172 : vector<16x8xbf16> to vector<1x16x8xbf16>
    %177 = tpu.concatenate %173, %174, %175, %176 in 0 : vector<1x16x8xbf16>, vector<1x16x8xbf16>, vector<1x16x8xbf16>, vector<1x16x8xbf16> -> vector<4x16x8xbf16>
    %178 = vector.extract_strided_slice %159 {offsets = [0, 0], sizes = [16, 8], strides = [1, 1]} : vector<16x32xbf16> to vector<16x8xbf16>
    %179 = vector.extract_strided_slice %159 {offsets = [0, 8], sizes = [16, 8], strides = [1, 1]} : vector<16x32xbf16> to vector<16x8xbf16>
    %180 = vector.extract_strided_slice %159 {offsets = [0, 16], sizes = [16, 8], strides = [1, 1]} : vector<16x32xbf16> to vector<16x8xbf16>
    %181 = vector.extract_strided_slice %159 {offsets = [0, 24], sizes = [16, 8], strides = [1, 1]} : vector<16x32xbf16> to vector<16x8xbf16>
    %182 = vector.shape_cast %178 : vector<16x8xbf16> to vector<1x16x8xbf16>
    %183 = vector.shape_cast %179 : vector<16x8xbf16> to vector<1x16x8xbf16>
    %184 = vector.shape_cast %180 : vector<16x8xbf16> to vector<1x16x8xbf16>
    %185 = vector.shape_cast %181 : vector<16x8xbf16> to vector<1x16x8xbf16>
    %186 = tpu.concatenate %182, %183, %184, %185 in 0 : vector<1x16x8xbf16>, vector<1x16x8xbf16>, vector<1x16x8xbf16>, vector<1x16x8xbf16> -> vector<4x16x8xbf16>
    "tpu.trace_start"() <{level = 10 : i32, message = "hqd,hkd->hqk"}> : () -> ()
    %cst_68 = arith.constant dense<0.000000e+00> : vector<4x16x16xf32>
    %187 = tpu.matmul %168, %177, %cst_68 {dimension_numbers = #tpu.dot_dimension_numbers<[2], [2], [1], [1], [0, 0, 0, 1, 1, 1], [0], [0]>} : vector<4x16x8xbf16>, vector<4x16x8xbf16>, vector<4x16x16xf32> -> vector<4x16x16xf32>
    "tpu.trace_stop"() : () -> ()
    %188 = vector.shape_cast %0 : vector<16x16xf32> to vector<1x16x16xf32>
    %189 = vector.broadcast %188 : vector<1x16x16xf32> to vector<4x16x16xf32>
    %190 = arith.addf %187, %189 : vector<4x16x16xf32>
    %cst_69 = arith.constant dense<0xFF800000> : vector<4x16xf32>
    %191 = vector.multi_reduction <maximumf>, %190, %cst_69 [2] : vector<4x16x16xf32> to vector<4x16xf32>
    %192 = vector.shape_cast %191 : vector<4x16xf32> to vector<4x16x1xf32>
    %193 = vector.broadcast %192 : vector<4x16x1xf32> to vector<4x16x16xf32>
    %194 = arith.subf %190, %193 : vector<4x16x16xf32>
    %195 = math.exp %194 : vector<4x16x16xf32>
    %cst_70 = arith.constant dense<0.000000e+00> : vector<4x16xf32>
    %196 = vector.multi_reduction <add>, %195, %cst_70 [2] : vector<4x16x16xf32> to vector<4x16xf32>
    %197 = vector.shape_cast %196 : vector<4x16xf32> to vector<4x16x1xf32>
    %198 = tpu.reciprocal %197 {approx = true} : vector<4x16x1xf32> -> vector<4x16x1xf32>
    %199 = vector.broadcast %198 : vector<4x16x1xf32> to vector<4x16x16xf32>
    %200 = arith.mulf %195, %199 : vector<4x16x16xf32>
    %201 = arith.truncf %200 : vector<4x16x16xf32> to vector<4x16x16xbf16>
    "tpu.trace_start"() <{level = 10 : i32, message = "hqk,hkd->hqd"}> : () -> ()
    %cst_71 = arith.constant dense<0.000000e+00> : vector<4x16x8xf32>
    %202 = tpu.matmul %201, %186, %cst_71 {dimension_numbers = #tpu.dot_dimension_numbers<[2], [1], [1], [2], [0, 0, 0, 1, 1, 2], [0], [0]>} : vector<4x16x16xbf16>, vector<4x16x8xbf16>, vector<4x16x8xf32> -> vector<4x16x8xf32>
    "tpu.trace_stop"() : () -> ()
    %203 = arith.truncf %202 : vector<4x16x8xf32> to vector<4x16x8xbf16>
    "tpu.trace_start"() <{level = 10 : i32, message = "hqd,hde->hqe"}> : () -> ()
    %cst_72 = arith.constant dense<0.000000e+00> : vector<4x16x32xf32>
    %204 = tpu.matmul %203, %154, %cst_72 {dimension_numbers = #tpu.dot_dimension_numbers<[2], [1], [1], [2], [0, 0, 0, 1, 1, 2], [0], [0]>} : vector<4x16x8xbf16>, vector<4x8x32xbf16>, vector<4x16x32xf32> -> vector<4x16x32xf32>
    "tpu.trace_stop"() : () -> ()
    %cst_73 = arith.constant dense<0.000000e+00> : vector<16x32xf32>
    %205 = vector.multi_reduction <add>, %204, %cst_73 [0] : vector<4x16x32xf32> to vector<16x32xf32>
    %206 = vector.broadcast %156 : vector<1x32xf32> to vector<16x32xf32>
    %207 = arith.addf %205, %206 : vector<16x32xf32>
    %208 = arith.addf %141, %207 : vector<16x32xf32>
    %c1_74 = arith.constant 1 : index
    %c0_75 = arith.constant 0 : index
    %c128_76 = arith.constant 128 : index
    %209 = vector.load %arg9[%c1_74, %c0_75, %c128_76] : memref<2x1x896xf32, #tpu.memory_space<vmem>>, vector<1x1x32xf32>
    %210 = vector.shape_cast %209 : vector<1x1x32xf32> to vector<1x32xf32>
    %c1_77 = arith.constant 1 : index
    %c0_78 = arith.constant 0 : index
    %c160_79 = arith.constant 160 : index
    %211 = vector.load %arg9[%c1_77, %c0_78, %c160_79] : memref<2x1x896xf32, #tpu.memory_space<vmem>>, vector<1x1x32xf32>
    %212 = vector.shape_cast %211 : vector<1x1x32xf32> to vector<1x32xf32>
    %cst_80 = arith.constant dense<0.000000e+00> : vector<16xf32>
    %213 = vector.multi_reduction <add>, %208, %cst_80 [1] : vector<16x32xf32> to vector<16xf32>
    %214 = vector.shape_cast %213 : vector<16xf32> to vector<16x1xf32>
    %cst_81 = arith.constant 3.200000e+01 : f32
    %215 = vector.broadcast %cst_81 : f32 to vector<16x1xf32>
    %216 = arith.divf %214, %215 : vector<16x1xf32>
    %217 = vector.broadcast %216 : vector<16x1xf32> to vector<16x32xf32>
    %218 = arith.subf %208, %217 : vector<16x32xf32>
    %219 = arith.mulf %218, %218 : vector<16x32xf32>
    %cst_82 = arith.constant dense<0.000000e+00> : vector<16xf32>
    %220 = vector.multi_reduction <add>, %219, %cst_82 [1] : vector<16x32xf32> to vector<16xf32>
    %221 = vector.shape_cast %220 : vector<16xf32> to vector<16x1xf32>
    %cst_83 = arith.constant 3.200000e+01 : f32
    %222 = vector.broadcast %cst_83 : f32 to vector<16x1xf32>
    %223 = arith.divf %221, %222 : vector<16x1xf32>
    %224 = vector.broadcast %216 : vector<16x1xf32> to vector<16x32xf32>
    %225 = arith.subf %208, %224 : vector<16x32xf32>
    %cst_84 = arith.constant 9.99999974E-6 : f32
    %226 = vector.broadcast %cst_84 : f32 to vector<16x1xf32>
    %227 = arith.addf %223, %226 : vector<16x1xf32>
    %228 = math.rsqrt %227 : vector<16x1xf32>
    %229 = vector.broadcast %228 : vector<16x1xf32> to vector<16x32xf32>
    %230 = arith.mulf %225, %229 : vector<16x32xf32>
    %231 = vector.broadcast %210 : vector<1x32xf32> to vector<16x32xf32>
    %232 = arith.mulf %230, %231 : vector<16x32xf32>
    %233 = vector.broadcast %212 : vector<1x32xf32> to vector<16x32xf32>
    %234 = arith.addf %232, %233 : vector<16x32xf32>
    %c1_85 = arith.constant 1 : index
    %c0_86 = arith.constant 0 : index
    %c96_87 = arith.constant 96 : index
    %235 = vector.load %arg5[%c1_85, %c0_86, %c96_87] : memref<2x32x416xbf16, #tpu.memory_space<vmem>>, vector<1x32x64xbf16>
    %236 = vector.shape_cast %235 : vector<1x32x64xbf16> to vector<32x64xbf16>
    %c1_88 = arith.constant 1 : index
    %c0_89 = arith.constant 0 : index
    %c192_90 = arith.constant 192 : index
    %237 = vector.load %arg9[%c1_88, %c0_89, %c192_90] : memref<2x1x896xf32, #tpu.memory_space<vmem>>, vector<1x1x64xf32>
    %238 = vector.shape_cast %237 : vector<1x1x64xf32> to vector<1x64xf32>
    %239 = arith.truncf %234 : vector<16x32xf32> to vector<16x32xbf16>
    %cst_91 = arith.constant dense<0.000000e+00> : vector<16x64xf32>
    %240 = tpu.matmul %239, %236, %cst_91 {dimension_numbers = #tpu.dot_dimension_numbers<[1], [0], [0], [1], [0, 0, 1, 1], [], []>} : vector<16x32xbf16>, vector<32x64xbf16>, vector<16x64xf32> -> vector<16x64xf32>
    %241 = vector.broadcast %238 : vector<1x64xf32> to vector<16x64xf32>
    %242 = arith.addf %240, %241 : vector<16x64xf32>
    %cst_92 = arith.constant 0.000000e+00 : f32
    %243 = vector.broadcast %cst_92 : f32 to vector<16x64xf32>
    %244 = arith.maximumf %242, %243 : vector<16x64xf32>
    %c1_93 = arith.constant 1 : index
    %c0_94 = arith.constant 0 : index
    %c0_95 = arith.constant 0 : index
    %245 = vector.load %arg6[%c1_93, %c0_94, %c0_95] : memref<2x64x64xbf16, #tpu.memory_space<vmem>>, vector<1x64x32xbf16>
    %246 = vector.shape_cast %245 : vector<1x64x32xbf16> to vector<64x32xbf16>
    %c1_96 = arith.constant 1 : index
    %c0_97 = arith.constant 0 : index
    %c256_98 = arith.constant 256 : index
    %247 = vector.load %arg9[%c1_96, %c0_97, %c256_98] : memref<2x1x896xf32, #tpu.memory_space<vmem>>, vector<1x1x32xf32>
    %248 = vector.shape_cast %247 : vector<1x1x32xf32> to vector<1x32xf32>
    %249 = arith.truncf %244 : vector<16x64xf32> to vector<16x64xbf16>
    %cst_99 = arith.constant dense<0.000000e+00> : vector<16x32xf32>
    %250 = tpu.matmul %249, %246, %cst_99 {dimension_numbers = #tpu.dot_dimension_numbers<[1], [0], [0], [1], [0, 0, 1, 1], [], []>} : vector<16x64xbf16>, vector<64x32xbf16>, vector<16x32xf32> -> vector<16x32xf32>
    %251 = vector.broadcast %248 : vector<1x32xf32> to vector<16x32xf32>
    %252 = arith.addf %250, %251 : vector<16x32xf32>
    %253 = arith.addf %234, %252 : vector<16x32xf32>
    %c1_100 = arith.constant 1 : index
    %c0_101 = arith.constant 0 : index
    %c288_102 = arith.constant 288 : index
    %254 = vector.load %arg9[%c1_100, %c0_101, %c288_102] : memref<2x1x896xf32, #tpu.memory_space<vmem>>, vector<1x1x32xf32>
    %255 = vector.shape_cast %254 : vector<1x1x32xf32> to vector<1x32xf32>
    %c1_103 = arith.constant 1 : index
    %c0_104 = arith.constant 0 : index
    %c320_105 = arith.constant 320 : index
    %256 = vector.load %arg9[%c1_103, %c0_104, %c320_105] : memref<2x1x896xf32, #tpu.memory_space<vmem>>, vector<1x1x32xf32>
    %257 = vector.shape_cast %256 : vector<1x1x32xf32> to vector<1x32xf32>
    %cst_106 = arith.constant dense<0.000000e+00> : vector<16xf32>
    %258 = vector.multi_reduction <add>, %253, %cst_106 [1] : vector<16x32xf32> to vector<16xf32>
    %259 = vector.shape_cast %258 : vector<16xf32> to vector<16x1xf32>
    %cst_107 = arith.constant 3.200000e+01 : f32
    %260 = vector.broadcast %cst_107 : f32 to vector<16x1xf32>
    %261 = arith.divf %259, %260 : vector<16x1xf32>
    %262 = vector.broadcast %261 : vector<16x1xf32> to vector<16x32xf32>
    %263 = arith.subf %253, %262 : vector<16x32xf32>
    %264 = arith.mulf %263, %263 : vector<16x32xf32>
    %cst_108 = arith.constant dense<0.000000e+00> : vector<16xf32>
    %265 = vector.multi_reduction <add>, %264, %cst_108 [1] : vector<16x32xf32> to vector<16xf32>
    %266 = vector.shape_cast %265 : vector<16xf32> to vector<16x1xf32>
    %cst_109 = arith.constant 3.200000e+01 : f32
    %267 = vector.broadcast %cst_109 : f32 to vector<16x1xf32>
    %268 = arith.divf %266, %267 : vector<16x1xf32>
    %269 = vector.broadcast %261 : vector<16x1xf32> to vector<16x32xf32>
    %270 = arith.subf %253, %269 : vector<16x32xf32>
    %cst_110 = arith.constant 9.99999974E-6 : f32
    %271 = vector.broadcast %cst_110 : f32 to vector<16x1xf32>
    %272 = arith.addf %268, %271 : vector<16x1xf32>
    %273 = math.rsqrt %272 : vector<16x1xf32>
    %274 = vector.broadcast %273 : vector<16x1xf32> to vector<16x32xf32>
    %275 = arith.mulf %270, %274 : vector<16x32xf32>
    %276 = vector.broadcast %255 : vector<1x32xf32> to vector<16x32xf32>
    %277 = arith.mulf %275, %276 : vector<16x32xf32>
    %278 = vector.broadcast %257 : vector<1x32xf32> to vector<16x32xf32>
    %279 = arith.addf %277, %278 : vector<16x32xf32>
    %c0_111 = arith.constant 0 : index
    %c0_112 = arith.constant 0 : index
    %280 = vector.load %arg1[%c0_111, %c0_112] : memref<16x32xf32, #tpu.memory_space<vmem>>, vector<16x32xf32>
    %c0_113 = arith.constant 0 : index
    %c0_114 = arith.constant 0 : index
    %c160_115 = arith.constant 160 : index
    %281 = vector.load %arg5[%c0_113, %c0_114, %c160_115] : memref<2x32x416xbf16, #tpu.memory_space<vmem>>, vector<1x32x96xbf16>
    %282 = vector.shape_cast %281 : vector<1x32x96xbf16> to vector<32x96xbf16>
    %c0_116 = arith.constant 0 : index
    %c0_117 = arith.constant 0 : index
    %c352 = arith.constant 352 : index
    %283 = vector.load %arg9[%c0_116, %c0_117, %c352] : memref<2x1x896xf32, #tpu.memory_space<vmem>>, vector<1x1x96xf32>
    %284 = vector.shape_cast %283 : vector<1x1x96xf32> to vector<1x96xf32>
    %285 = arith.truncf %280 : vector<16x32xf32> to vector<16x32xbf16>
    %cst_118 = arith.constant dense<0.000000e+00> : vector<16x96xf32>
    %286 = tpu.matmul %285, %282, %cst_118 {dimension_numbers = #tpu.dot_dimension_numbers<[1], [0], [0], [1], [0, 0, 1, 1], [], []>} : vector<16x32xbf16>, vector<32x96xbf16>, vector<16x96xf32> -> vector<16x96xf32>
    %287 = vector.broadcast %284 : vector<1x96xf32> to vector<16x96xf32>
    %288 = arith.addf %286, %287 : vector<16x96xf32>
    %289 = vector.extract_strided_slice %288 {offsets = [0, 0], sizes = [16, 32], strides = [1, 1]} : vector<16x96xf32> to vector<16x32xf32>
    %290 = vector.extract_strided_slice %288 {offsets = [0, 32], sizes = [16, 32], strides = [1, 1]} : vector<16x96xf32> to vector<16x32xf32>
    %291 = vector.extract_strided_slice %288 {offsets = [0, 64], sizes = [16, 32], strides = [1, 1]} : vector<16x96xf32> to vector<16x32xf32>
    %c1_119 = arith.constant 1 : index
    %c0_120 = arith.constant 0 : index
    %c0_121 = arith.constant 0 : index
    %c0_122 = arith.constant 0 : index
    %292 = vector.load %arg7[%c1_119, %c0_120, %c0_121, %c0_122] : memref<6x4x8x32xbf16, #tpu.memory_space<vmem>>, vector<1x4x8x32xbf16>
    %293 = vector.shape_cast %292 : vector<1x4x8x32xbf16> to vector<4x8x32xbf16>
    %c0_123 = arith.constant 0 : index
    %c0_124 = arith.constant 0 : index
    %c448 = arith.constant 448 : index
    %294 = vector.load %arg9[%c0_123, %c0_124, %c448] : memref<2x1x896xf32, #tpu.memory_space<vmem>>, vector<1x1x32xf32>
    %295 = vector.shape_cast %294 : vector<1x1x32xf32> to vector<1x32xf32>
    %296 = arith.truncf %289 : vector<16x32xf32> to vector<16x32xbf16>
    %297 = arith.truncf %290 : vector<16x32xf32> to vector<16x32xbf16>
    %298 = arith.truncf %291 : vector<16x32xf32> to vector<16x32xbf16>
    %299 = vector.extract_strided_slice %296 {offsets = [0, 0], sizes = [16, 8], strides = [1, 1]} : vector<16x32xbf16> to vector<16x8xbf16>
    %300 = vector.extract_strided_slice %296 {offsets = [0, 8], sizes = [16, 8], strides = [1, 1]} : vector<16x32xbf16> to vector<16x8xbf16>
    %301 = vector.extract_strided_slice %296 {offsets = [0, 16], sizes = [16, 8], strides = [1, 1]} : vector<16x32xbf16> to vector<16x8xbf16>
    %302 = vector.extract_strided_slice %296 {offsets = [0, 24], sizes = [16, 8], strides = [1, 1]} : vector<16x32xbf16> to vector<16x8xbf16>
    %303 = vector.shape_cast %299 : vector<16x8xbf16> to vector<1x16x8xbf16>
    %304 = vector.shape_cast %300 : vector<16x8xbf16> to vector<1x16x8xbf16>
    %305 = vector.shape_cast %301 : vector<16x8xbf16> to vector<1x16x8xbf16>
    %306 = vector.shape_cast %302 : vector<16x8xbf16> to vector<1x16x8xbf16>
    %307 = tpu.concatenate %303, %304, %305, %306 in 0 : vector<1x16x8xbf16>, vector<1x16x8xbf16>, vector<1x16x8xbf16>, vector<1x16x8xbf16> -> vector<4x16x8xbf16>
    %308 = vector.extract_strided_slice %297 {offsets = [0, 0], sizes = [16, 8], strides = [1, 1]} : vector<16x32xbf16> to vector<16x8xbf16>
    %309 = vector.extract_strided_slice %297 {offsets = [0, 8], sizes = [16, 8], strides = [1, 1]} : vector<16x32xbf16> to vector<16x8xbf16>
    %310 = vector.extract_strided_slice %297 {offsets = [0, 16], sizes = [16, 8], strides = [1, 1]} : vector<16x32xbf16> to vector<16x8xbf16>
    %311 = vector.extract_strided_slice %297 {offsets = [0, 24], sizes = [16, 8], strides = [1, 1]} : vector<16x32xbf16> to vector<16x8xbf16>
    %312 = vector.shape_cast %308 : vector<16x8xbf16> to vector<1x16x8xbf16>
    %313 = vector.shape_cast %309 : vector<16x8xbf16> to vector<1x16x8xbf16>
    %314 = vector.shape_cast %310 : vector<16x8xbf16> to vector<1x16x8xbf16>
    %315 = vector.shape_cast %311 : vector<16x8xbf16> to vector<1x16x8xbf16>
    %316 = tpu.concatenate %312, %313, %314, %315 in 0 : vector<1x16x8xbf16>, vector<1x16x8xbf16>, vector<1x16x8xbf16>, vector<1x16x8xbf16> -> vector<4x16x8xbf16>
    %317 = vector.extract_strided_slice %298 {offsets = [0, 0], sizes = [16, 8], strides = [1, 1]} : vector<16x32xbf16> to vector<16x8xbf16>
    %318 = vector.extract_strided_slice %298 {offsets = [0, 8], sizes = [16, 8], strides = [1, 1]} : vector<16x32xbf16> to vector<16x8xbf16>
    %319 = vector.extract_strided_slice %298 {offsets = [0, 16], sizes = [16, 8], strides = [1, 1]} : vector<16x32xbf16> to vector<16x8xbf16>
    %320 = vector.extract_strided_slice %298 {offsets = [0, 24], sizes = [16, 8], strides = [1, 1]} : vector<16x32xbf16> to vector<16x8xbf16>
    %321 = vector.shape_cast %317 : vector<16x8xbf16> to vector<1x16x8xbf16>
    %322 = vector.shape_cast %318 : vector<16x8xbf16> to vector<1x16x8xbf16>
    %323 = vector.shape_cast %319 : vector<16x8xbf16> to vector<1x16x8xbf16>
    %324 = vector.shape_cast %320 : vector<16x8xbf16> to vector<1x16x8xbf16>
    %325 = tpu.concatenate %321, %322, %323, %324 in 0 : vector<1x16x8xbf16>, vector<1x16x8xbf16>, vector<1x16x8xbf16>, vector<1x16x8xbf16> -> vector<4x16x8xbf16>
    "tpu.trace_start"() <{level = 10 : i32, message = "hqd,hkd->hqk"}> : () -> ()
    %cst_125 = arith.constant dense<0.000000e+00> : vector<4x16x16xf32>
    %326 = tpu.matmul %307, %316, %cst_125 {dimension_numbers = #tpu.dot_dimension_numbers<[2], [2], [1], [1], [0, 0, 0, 1, 1, 1], [0], [0]>} : vector<4x16x8xbf16>, vector<4x16x8xbf16>, vector<4x16x16xf32> -> vector<4x16x16xf32>
    "tpu.trace_stop"() : () -> ()
    %327 = vector.shape_cast %1 : vector<16x16xf32> to vector<1x16x16xf32>
    %328 = vector.broadcast %327 : vector<1x16x16xf32> to vector<4x16x16xf32>
    %329 = arith.addf %326, %328 : vector<4x16x16xf32>
    %cst_126 = arith.constant dense<0xFF800000> : vector<4x16xf32>
    %330 = vector.multi_reduction <maximumf>, %329, %cst_126 [2] : vector<4x16x16xf32> to vector<4x16xf32>
    %331 = vector.shape_cast %330 : vector<4x16xf32> to vector<4x16x1xf32>
    %332 = vector.broadcast %331 : vector<4x16x1xf32> to vector<4x16x16xf32>
    %333 = arith.subf %329, %332 : vector<4x16x16xf32>
    %334 = math.exp %333 : vector<4x16x16xf32>
    %cst_127 = arith.constant dense<0.000000e+00> : vector<4x16xf32>
    %335 = vector.multi_reduction <add>, %334, %cst_127 [2] : vector<4x16x16xf32> to vector<4x16xf32>
    %336 = vector.shape_cast %335 : vector<4x16xf32> to vector<4x16x1xf32>
    %337 = tpu.reciprocal %336 {approx = true} : vector<4x16x1xf32> -> vector<4x16x1xf32>
    %338 = vector.broadcast %337 : vector<4x16x1xf32> to vector<4x16x16xf32>
    %339 = arith.mulf %334, %338 : vector<4x16x16xf32>
    %340 = arith.truncf %339 : vector<4x16x16xf32> to vector<4x16x16xbf16>
    "tpu.trace_start"() <{level = 10 : i32, message = "hqk,hkd->hqd"}> : () -> ()
    %cst_128 = arith.constant dense<0.000000e+00> : vector<4x16x8xf32>
    %341 = tpu.matmul %340, %325, %cst_128 {dimension_numbers = #tpu.dot_dimension_numbers<[2], [1], [1], [2], [0, 0, 0, 1, 1, 2], [0], [0]>} : vector<4x16x16xbf16>, vector<4x16x8xbf16>, vector<4x16x8xf32> -> vector<4x16x8xf32>
    "tpu.trace_stop"() : () -> ()
    %342 = arith.truncf %341 : vector<4x16x8xf32> to vector<4x16x8xbf16>
    "tpu.trace_start"() <{level = 10 : i32, message = "hqd,hde->hqe"}> : () -> ()
    %cst_129 = arith.constant dense<0.000000e+00> : vector<4x16x32xf32>
    %343 = tpu.matmul %342, %293, %cst_129 {dimension_numbers = #tpu.dot_dimension_numbers<[2], [1], [1], [2], [0, 0, 0, 1, 1, 2], [0], [0]>} : vector<4x16x8xbf16>, vector<4x8x32xbf16>, vector<4x16x32xf32> -> vector<4x16x32xf32>
    "tpu.trace_stop"() : () -> ()
    %cst_130 = arith.constant dense<0.000000e+00> : vector<16x32xf32>
    %344 = vector.multi_reduction <add>, %343, %cst_130 [0] : vector<4x16x32xf32> to vector<16x32xf32>
    %345 = vector.broadcast %295 : vector<1x32xf32> to vector<16x32xf32>
    %346 = arith.addf %344, %345 : vector<16x32xf32>
    %347 = arith.addf %280, %346 : vector<16x32xf32>
    %c0_131 = arith.constant 0 : index
    %c0_132 = arith.constant 0 : index
    %c480 = arith.constant 480 : index
    %348 = vector.load %arg9[%c0_131, %c0_132, %c480] : memref<2x1x896xf32, #tpu.memory_space<vmem>>, vector<1x1x32xf32>
    %349 = vector.shape_cast %348 : vector<1x1x32xf32> to vector<1x32xf32>
    %c0_133 = arith.constant 0 : index
    %c0_134 = arith.constant 0 : index
    %c512 = arith.constant 512 : index
    %350 = vector.load %arg9[%c0_133, %c0_134, %c512] : memref<2x1x896xf32, #tpu.memory_space<vmem>>, vector<1x1x32xf32>
    %351 = vector.shape_cast %350 : vector<1x1x32xf32> to vector<1x32xf32>
    %cst_135 = arith.constant dense<0.000000e+00> : vector<16xf32>
    %352 = vector.multi_reduction <add>, %347, %cst_135 [1] : vector<16x32xf32> to vector<16xf32>
    %353 = vector.shape_cast %352 : vector<16xf32> to vector<16x1xf32>
    %cst_136 = arith.constant 3.200000e+01 : f32
    %354 = vector.broadcast %cst_136 : f32 to vector<16x1xf32>
    %355 = arith.divf %353, %354 : vector<16x1xf32>
    %356 = vector.broadcast %355 : vector<16x1xf32> to vector<16x32xf32>
    %357 = arith.subf %347, %356 : vector<16x32xf32>
    %358 = arith.mulf %357, %357 : vector<16x32xf32>
    %cst_137 = arith.constant dense<0.000000e+00> : vector<16xf32>
    %359 = vector.multi_reduction <add>, %358, %cst_137 [1] : vector<16x32xf32> to vector<16xf32>
    %360 = vector.shape_cast %359 : vector<16xf32> to vector<16x1xf32>
    %cst_138 = arith.constant 3.200000e+01 : f32
    %361 = vector.broadcast %cst_138 : f32 to vector<16x1xf32>
    %362 = arith.divf %360, %361 : vector<16x1xf32>
    %363 = vector.broadcast %355 : vector<16x1xf32> to vector<16x32xf32>
    %364 = arith.subf %347, %363 : vector<16x32xf32>
    %cst_139 = arith.constant 9.99999974E-6 : f32
    %365 = vector.broadcast %cst_139 : f32 to vector<16x1xf32>
    %366 = arith.addf %362, %365 : vector<16x1xf32>
    %367 = math.rsqrt %366 : vector<16x1xf32>
    %368 = vector.broadcast %367 : vector<16x1xf32> to vector<16x32xf32>
    %369 = arith.mulf %364, %368 : vector<16x32xf32>
    %370 = vector.broadcast %349 : vector<1x32xf32> to vector<16x32xf32>
    %371 = arith.mulf %369, %370 : vector<16x32xf32>
    %372 = vector.broadcast %351 : vector<1x32xf32> to vector<16x32xf32>
    %373 = arith.addf %371, %372 : vector<16x32xf32>
    %c0_140 = arith.constant 0 : index
    %c0_141 = arith.constant 0 : index
    %c256_142 = arith.constant 256 : index
    %374 = vector.load %arg5[%c0_140, %c0_141, %c256_142] : memref<2x32x416xbf16, #tpu.memory_space<vmem>>, vector<1x32x32xbf16>
    %375 = vector.shape_cast %374 : vector<1x32x32xbf16> to vector<32x32xbf16>
    %c0_143 = arith.constant 0 : index
    %c0_144 = arith.constant 0 : index
    %c544 = arith.constant 544 : index
    %376 = vector.load %arg9[%c0_143, %c0_144, %c544] : memref<2x1x896xf32, #tpu.memory_space<vmem>>, vector<1x1x32xf32>
    %377 = vector.shape_cast %376 : vector<1x1x32xf32> to vector<1x32xf32>
    %378 = arith.truncf %373 : vector<16x32xf32> to vector<16x32xbf16>
    %cst_145 = arith.constant dense<0.000000e+00> : vector<16x32xf32>
    %379 = tpu.matmul %378, %375, %cst_145 {dimension_numbers = #tpu.dot_dimension_numbers<[1], [0], [0], [1], [0, 0, 1, 1], [], []>} : vector<16x32xbf16>, vector<32x32xbf16>, vector<16x32xf32> -> vector<16x32xf32>
    %380 = vector.broadcast %377 : vector<1x32xf32> to vector<16x32xf32>
    %381 = arith.addf %379, %380 : vector<16x32xf32>
    %c0_146 = arith.constant 0 : index
    %c0_147 = arith.constant 0 : index
    %c288_148 = arith.constant 288 : index
    %382 = vector.load %arg5[%c0_146, %c0_147, %c288_148] : memref<2x32x416xbf16, #tpu.memory_space<vmem>>, vector<1x32x64xbf16>
    %383 = vector.shape_cast %382 : vector<1x32x64xbf16> to vector<32x64xbf16>
    %c0_149 = arith.constant 0 : index
    %c0_150 = arith.constant 0 : index
    %c576 = arith.constant 576 : index
    %384 = vector.load %arg9[%c0_149, %c0_150, %c576] : memref<2x1x896xf32, #tpu.memory_space<vmem>>, vector<1x1x64xf32>
    %385 = vector.shape_cast %384 : vector<1x1x64xf32> to vector<1x64xf32>
    %386 = arith.truncf %279 : vector<16x32xf32> to vector<16x32xbf16>
    %cst_151 = arith.constant dense<0.000000e+00> : vector<16x64xf32>
    %387 = tpu.matmul %386, %383, %cst_151 {dimension_numbers = #tpu.dot_dimension_numbers<[1], [0], [0], [1], [0, 0, 1, 1], [], []>} : vector<16x32xbf16>, vector<32x64xbf16>, vector<16x64xf32> -> vector<16x64xf32>
    %388 = vector.broadcast %385 : vector<1x64xf32> to vector<16x64xf32>
    %389 = arith.addf %387, %388 : vector<16x64xf32>
    %390 = vector.extract_strided_slice %389 {offsets = [0, 0], sizes = [16, 32], strides = [1, 1]} : vector<16x64xf32> to vector<16x32xf32>
    %391 = vector.extract_strided_slice %389 {offsets = [0, 32], sizes = [16, 32], strides = [1, 1]} : vector<16x64xf32> to vector<16x32xf32>
    %c2 = arith.constant 2 : index
    %c0_152 = arith.constant 0 : index
    %c0_153 = arith.constant 0 : index
    %c0_154 = arith.constant 0 : index
    %392 = vector.load %arg7[%c2, %c0_152, %c0_153, %c0_154] : memref<6x4x8x32xbf16, #tpu.memory_space<vmem>>, vector<1x4x8x32xbf16>
    %393 = vector.shape_cast %392 : vector<1x4x8x32xbf16> to vector<4x8x32xbf16>
    %c0_155 = arith.constant 0 : index
    %c0_156 = arith.constant 0 : index
    %c640 = arith.constant 640 : index
    %394 = vector.load %arg9[%c0_155, %c0_156, %c640] : memref<2x1x896xf32, #tpu.memory_space<vmem>>, vector<1x1x32xf32>
    %395 = vector.shape_cast %394 : vector<1x1x32xf32> to vector<1x32xf32>
    %396 = arith.truncf %381 : vector<16x32xf32> to vector<16x32xbf16>
    %397 = arith.truncf %390 : vector<16x32xf32> to vector<16x32xbf16>
    %398 = arith.truncf %391 : vector<16x32xf32> to vector<16x32xbf16>
    %399 = vector.extract_strided_slice %396 {offsets = [0, 0], sizes = [16, 8], strides = [1, 1]} : vector<16x32xbf16> to vector<16x8xbf16>
    %400 = vector.extract_strided_slice %396 {offsets = [0, 8], sizes = [16, 8], strides = [1, 1]} : vector<16x32xbf16> to vector<16x8xbf16>
    %401 = vector.extract_strided_slice %396 {offsets = [0, 16], sizes = [16, 8], strides = [1, 1]} : vector<16x32xbf16> to vector<16x8xbf16>
    %402 = vector.extract_strided_slice %396 {offsets = [0, 24], sizes = [16, 8], strides = [1, 1]} : vector<16x32xbf16> to vector<16x8xbf16>
    %403 = vector.shape_cast %399 : vector<16x8xbf16> to vector<1x16x8xbf16>
    %404 = vector.shape_cast %400 : vector<16x8xbf16> to vector<1x16x8xbf16>
    %405 = vector.shape_cast %401 : vector<16x8xbf16> to vector<1x16x8xbf16>
    %406 = vector.shape_cast %402 : vector<16x8xbf16> to vector<1x16x8xbf16>
    %407 = tpu.concatenate %403, %404, %405, %406 in 0 : vector<1x16x8xbf16>, vector<1x16x8xbf16>, vector<1x16x8xbf16>, vector<1x16x8xbf16> -> vector<4x16x8xbf16>
    %408 = vector.extract_strided_slice %397 {offsets = [0, 0], sizes = [16, 8], strides = [1, 1]} : vector<16x32xbf16> to vector<16x8xbf16>
    %409 = vector.extract_strided_slice %397 {offsets = [0, 8], sizes = [16, 8], strides = [1, 1]} : vector<16x32xbf16> to vector<16x8xbf16>
    %410 = vector.extract_strided_slice %397 {offsets = [0, 16], sizes = [16, 8], strides = [1, 1]} : vector<16x32xbf16> to vector<16x8xbf16>
    %411 = vector.extract_strided_slice %397 {offsets = [0, 24], sizes = [16, 8], strides = [1, 1]} : vector<16x32xbf16> to vector<16x8xbf16>
    %412 = vector.shape_cast %408 : vector<16x8xbf16> to vector<1x16x8xbf16>
    %413 = vector.shape_cast %409 : vector<16x8xbf16> to vector<1x16x8xbf16>
    %414 = vector.shape_cast %410 : vector<16x8xbf16> to vector<1x16x8xbf16>
    %415 = vector.shape_cast %411 : vector<16x8xbf16> to vector<1x16x8xbf16>
    %416 = tpu.concatenate %412, %413, %414, %415 in 0 : vector<1x16x8xbf16>, vector<1x16x8xbf16>, vector<1x16x8xbf16>, vector<1x16x8xbf16> -> vector<4x16x8xbf16>
    %417 = vector.extract_strided_slice %398 {offsets = [0, 0], sizes = [16, 8], strides = [1, 1]} : vector<16x32xbf16> to vector<16x8xbf16>
    %418 = vector.extract_strided_slice %398 {offsets = [0, 8], sizes = [16, 8], strides = [1, 1]} : vector<16x32xbf16> to vector<16x8xbf16>
    %419 = vector.extract_strided_slice %398 {offsets = [0, 16], sizes = [16, 8], strides = [1, 1]} : vector<16x32xbf16> to vector<16x8xbf16>
    %420 = vector.extract_strided_slice %398 {offsets = [0, 24], sizes = [16, 8], strides = [1, 1]} : vector<16x32xbf16> to vector<16x8xbf16>
    %421 = vector.shape_cast %417 : vector<16x8xbf16> to vector<1x16x8xbf16>
    %422 = vector.shape_cast %418 : vector<16x8xbf16> to vector<1x16x8xbf16>
    %423 = vector.shape_cast %419 : vector<16x8xbf16> to vector<1x16x8xbf16>
    %424 = vector.shape_cast %420 : vector<16x8xbf16> to vector<1x16x8xbf16>
    %425 = tpu.concatenate %421, %422, %423, %424 in 0 : vector<1x16x8xbf16>, vector<1x16x8xbf16>, vector<1x16x8xbf16>, vector<1x16x8xbf16> -> vector<4x16x8xbf16>
    "tpu.trace_start"() <{level = 10 : i32, message = "hqd,hkd->hqk"}> : () -> ()
    %cst_157 = arith.constant dense<0.000000e+00> : vector<4x16x16xf32>
    %426 = tpu.matmul %407, %416, %cst_157 {dimension_numbers = #tpu.dot_dimension_numbers<[2], [2], [1], [1], [0, 0, 0, 1, 1, 1], [0], [0]>} : vector<4x16x8xbf16>, vector<4x16x8xbf16>, vector<4x16x16xf32> -> vector<4x16x16xf32>
    "tpu.trace_stop"() : () -> ()
    %427 = vector.shape_cast %2 : vector<16x16xf32> to vector<1x16x16xf32>
    %428 = vector.broadcast %427 : vector<1x16x16xf32> to vector<4x16x16xf32>
    %429 = arith.addf %426, %428 : vector<4x16x16xf32>
    %cst_158 = arith.constant dense<0xFF800000> : vector<4x16xf32>
    %430 = vector.multi_reduction <maximumf>, %429, %cst_158 [2] : vector<4x16x16xf32> to vector<4x16xf32>
    %431 = vector.shape_cast %430 : vector<4x16xf32> to vector<4x16x1xf32>
    %432 = vector.broadcast %431 : vector<4x16x1xf32> to vector<4x16x16xf32>
    %433 = arith.subf %429, %432 : vector<4x16x16xf32>
    %434 = math.exp %433 : vector<4x16x16xf32>
    %cst_159 = arith.constant dense<0.000000e+00> : vector<4x16xf32>
    %435 = vector.multi_reduction <add>, %434, %cst_159 [2] : vector<4x16x16xf32> to vector<4x16xf32>
    %436 = vector.shape_cast %435 : vector<4x16xf32> to vector<4x16x1xf32>
    %437 = tpu.reciprocal %436 {approx = true} : vector<4x16x1xf32> -> vector<4x16x1xf32>
    %438 = vector.broadcast %437 : vector<4x16x1xf32> to vector<4x16x16xf32>
    %439 = arith.mulf %434, %438 : vector<4x16x16xf32>
    %440 = arith.truncf %439 : vector<4x16x16xf32> to vector<4x16x16xbf16>
    "tpu.trace_start"() <{level = 10 : i32, message = "hqk,hkd->hqd"}> : () -> ()
    %cst_160 = arith.constant dense<0.000000e+00> : vector<4x16x8xf32>
    %441 = tpu.matmul %440, %425, %cst_160 {dimension_numbers = #tpu.dot_dimension_numbers<[2], [1], [1], [2], [0, 0, 0, 1, 1, 2], [0], [0]>} : vector<4x16x16xbf16>, vector<4x16x8xbf16>, vector<4x16x8xf32> -> vector<4x16x8xf32>
    "tpu.trace_stop"() : () -> ()
    %442 = arith.truncf %441 : vector<4x16x8xf32> to vector<4x16x8xbf16>
    "tpu.trace_start"() <{level = 10 : i32, message = "hqd,hde->hqe"}> : () -> ()
    %cst_161 = arith.constant dense<0.000000e+00> : vector<4x16x32xf32>
    %443 = tpu.matmul %442, %393, %cst_161 {dimension_numbers = #tpu.dot_dimension_numbers<[2], [1], [1], [2], [0, 0, 0, 1, 1, 2], [0], [0]>} : vector<4x16x8xbf16>, vector<4x8x32xbf16>, vector<4x16x32xf32> -> vector<4x16x32xf32>
    "tpu.trace_stop"() : () -> ()
    %cst_162 = arith.constant dense<0.000000e+00> : vector<16x32xf32>
    %444 = vector.multi_reduction <add>, %443, %cst_162 [0] : vector<4x16x32xf32> to vector<16x32xf32>
    %445 = vector.broadcast %395 : vector<1x32xf32> to vector<16x32xf32>
    %446 = arith.addf %444, %445 : vector<16x32xf32>
    %447 = arith.addf %373, %446 : vector<16x32xf32>
    %c0_163 = arith.constant 0 : index
    %c0_164 = arith.constant 0 : index
    %c672 = arith.constant 672 : index
    %448 = vector.load %arg9[%c0_163, %c0_164, %c672] : memref<2x1x896xf32, #tpu.memory_space<vmem>>, vector<1x1x32xf32>
    %449 = vector.shape_cast %448 : vector<1x1x32xf32> to vector<1x32xf32>
    %c0_165 = arith.constant 0 : index
    %c0_166 = arith.constant 0 : index
    %c704 = arith.constant 704 : index
    %450 = vector.load %arg9[%c0_165, %c0_166, %c704] : memref<2x1x896xf32, #tpu.memory_space<vmem>>, vector<1x1x32xf32>
    %451 = vector.shape_cast %450 : vector<1x1x32xf32> to vector<1x32xf32>
    %cst_167 = arith.constant dense<0.000000e+00> : vector<16xf32>
    %452 = vector.multi_reduction <add>, %447, %cst_167 [1] : vector<16x32xf32> to vector<16xf32>
    %453 = vector.shape_cast %452 : vector<16xf32> to vector<16x1xf32>
    %cst_168 = arith.constant 3.200000e+01 : f32
    %454 = vector.broadcast %cst_168 : f32 to vector<16x1xf32>
    %455 = arith.divf %453, %454 : vector<16x1xf32>
    %456 = vector.broadcast %455 : vector<16x1xf32> to vector<16x32xf32>
    %457 = arith.subf %447, %456 : vector<16x32xf32>
    %458 = arith.mulf %457, %457 : vector<16x32xf32>
    %cst_169 = arith.constant dense<0.000000e+00> : vector<16xf32>
    %459 = vector.multi_reduction <add>, %458, %cst_169 [1] : vector<16x32xf32> to vector<16xf32>
    %460 = vector.shape_cast %459 : vector<16xf32> to vector<16x1xf32>
    %cst_170 = arith.constant 3.200000e+01 : f32
    %461 = vector.broadcast %cst_170 : f32 to vector<16x1xf32>
    %462 = arith.divf %460, %461 : vector<16x1xf32>
    %463 = vector.broadcast %455 : vector<16x1xf32> to vector<16x32xf32>
    %464 = arith.subf %447, %463 : vector<16x32xf32>
    %cst_171 = arith.constant 9.99999974E-6 : f32
    %465 = vector.broadcast %cst_171 : f32 to vector<16x1xf32>
    %466 = arith.addf %462, %465 : vector<16x1xf32>
    %467 = math.rsqrt %466 : vector<16x1xf32>
    %468 = vector.broadcast %467 : vector<16x1xf32> to vector<16x32xf32>
    %469 = arith.mulf %464, %468 : vector<16x32xf32>
    %470 = vector.broadcast %449 : vector<1x32xf32> to vector<16x32xf32>
    %471 = arith.mulf %469, %470 : vector<16x32xf32>
    %472 = vector.broadcast %451 : vector<1x32xf32> to vector<16x32xf32>
    %473 = arith.addf %471, %472 : vector<16x32xf32>
    %c0_172 = arith.constant 0 : index
    %c0_173 = arith.constant 0 : index
    %c352_174 = arith.constant 352 : index
    %474 = vector.load %arg5[%c0_172, %c0_173, %c352_174] : memref<2x32x416xbf16, #tpu.memory_space<vmem>>, vector<1x32x64xbf16>
    %475 = vector.shape_cast %474 : vector<1x32x64xbf16> to vector<32x64xbf16>
    %c0_175 = arith.constant 0 : index
    %c0_176 = arith.constant 0 : index
    %c736 = arith.constant 736 : index
    %476 = vector.load %arg9[%c0_175, %c0_176, %c736] : memref<2x1x896xf32, #tpu.memory_space<vmem>>, vector<1x1x64xf32>
    %477 = vector.shape_cast %476 : vector<1x1x64xf32> to vector<1x64xf32>
    %478 = arith.truncf %473 : vector<16x32xf32> to vector<16x32xbf16>
    %cst_177 = arith.constant dense<0.000000e+00> : vector<16x64xf32>
    %479 = tpu.matmul %478, %475, %cst_177 {dimension_numbers = #tpu.dot_dimension_numbers<[1], [0], [0], [1], [0, 0, 1, 1], [], []>} : vector<16x32xbf16>, vector<32x64xbf16>, vector<16x64xf32> -> vector<16x64xf32>
    %480 = vector.broadcast %477 : vector<1x64xf32> to vector<16x64xf32>
    %481 = arith.addf %479, %480 : vector<16x64xf32>
    %cst_178 = arith.constant 0.000000e+00 : f32
    %482 = vector.broadcast %cst_178 : f32 to vector<16x64xf32>
    %483 = arith.maximumf %481, %482 : vector<16x64xf32>
    %c0_179 = arith.constant 0 : index
    %c0_180 = arith.constant 0 : index
    %c32 = arith.constant 32 : index
    %484 = vector.load %arg6[%c0_179, %c0_180, %c32] : memref<2x64x64xbf16, #tpu.memory_space<vmem>>, vector<1x64x32xbf16>
    %485 = vector.shape_cast %484 : vector<1x64x32xbf16> to vector<64x32xbf16>
    %c0_181 = arith.constant 0 : index
    %c0_182 = arith.constant 0 : index
    %c800 = arith.constant 800 : index
    %486 = vector.load %arg9[%c0_181, %c0_182, %c800] : memref<2x1x896xf32, #tpu.memory_space<vmem>>, vector<1x1x32xf32>
    %487 = vector.shape_cast %486 : vector<1x1x32xf32> to vector<1x32xf32>
    %488 = arith.truncf %483 : vector<16x64xf32> to vector<16x64xbf16>
    %cst_183 = arith.constant dense<0.000000e+00> : vector<16x32xf32>
    %489 = tpu.matmul %488, %485, %cst_183 {dimension_numbers = #tpu.dot_dimension_numbers<[1], [0], [0], [1], [0, 0, 1, 1], [], []>} : vector<16x64xbf16>, vector<64x32xbf16>, vector<16x32xf32> -> vector<16x32xf32>
    %490 = vector.broadcast %487 : vector<1x32xf32> to vector<16x32xf32>
    %491 = arith.addf %489, %490 : vector<16x32xf32>
    %492 = arith.addf %473, %491 : vector<16x32xf32>
    %c0_184 = arith.constant 0 : index
    %c0_185 = arith.constant 0 : index
    %c832 = arith.constant 832 : index
    %493 = vector.load %arg9[%c0_184, %c0_185, %c832] : memref<2x1x896xf32, #tpu.memory_space<vmem>>, vector<1x1x32xf32>
    %494 = vector.shape_cast %493 : vector<1x1x32xf32> to vector<1x32xf32>
    %c0_186 = arith.constant 0 : index
    %c0_187 = arith.constant 0 : index
    %c864 = arith.constant 864 : index
    %495 = vector.load %arg9[%c0_186, %c0_187, %c864] : memref<2x1x896xf32, #tpu.memory_space<vmem>>, vector<1x1x32xf32>
    %496 = vector.shape_cast %495 : vector<1x1x32xf32> to vector<1x32xf32>
    %cst_188 = arith.constant dense<0.000000e+00> : vector<16xf32>
    %497 = vector.multi_reduction <add>, %492, %cst_188 [1] : vector<16x32xf32> to vector<16xf32>
    %498 = vector.shape_cast %497 : vector<16xf32> to vector<16x1xf32>
    %cst_189 = arith.constant 3.200000e+01 : f32
    %499 = vector.broadcast %cst_189 : f32 to vector<16x1xf32>
    %500 = arith.divf %498, %499 : vector<16x1xf32>
    %501 = vector.broadcast %500 : vector<16x1xf32> to vector<16x32xf32>
    %502 = arith.subf %492, %501 : vector<16x32xf32>
    %503 = arith.mulf %502, %502 : vector<16x32xf32>
    %cst_190 = arith.constant dense<0.000000e+00> : vector<16xf32>
    %504 = vector.multi_reduction <add>, %503, %cst_190 [1] : vector<16x32xf32> to vector<16xf32>
    %505 = vector.shape_cast %504 : vector<16xf32> to vector<16x1xf32>
    %cst_191 = arith.constant 3.200000e+01 : f32
    %506 = vector.broadcast %cst_191 : f32 to vector<16x1xf32>
    %507 = arith.divf %505, %506 : vector<16x1xf32>
    %508 = vector.broadcast %500 : vector<16x1xf32> to vector<16x32xf32>
    %509 = arith.subf %492, %508 : vector<16x32xf32>
    %cst_192 = arith.constant 9.99999974E-6 : f32
    %510 = vector.broadcast %cst_192 : f32 to vector<16x1xf32>
    %511 = arith.addf %507, %510 : vector<16x1xf32>
    %512 = math.rsqrt %511 : vector<16x1xf32>
    %513 = vector.broadcast %512 : vector<16x1xf32> to vector<16x32xf32>
    %514 = arith.mulf %509, %513 : vector<16x32xf32>
    %515 = vector.broadcast %494 : vector<1x32xf32> to vector<16x32xf32>
    %516 = arith.mulf %514, %515 : vector<16x32xf32>
    %517 = vector.broadcast %496 : vector<1x32xf32> to vector<16x32xf32>
    %518 = arith.addf %516, %517 : vector<16x32xf32>
    %c1_193 = arith.constant 1 : index
    %c0_194 = arith.constant 0 : index
    %c160_195 = arith.constant 160 : index
    %519 = vector.load %arg5[%c1_193, %c0_194, %c160_195] : memref<2x32x416xbf16, #tpu.memory_space<vmem>>, vector<1x32x96xbf16>
    %520 = vector.shape_cast %519 : vector<1x32x96xbf16> to vector<32x96xbf16>
    %c1_196 = arith.constant 1 : index
    %c0_197 = arith.constant 0 : index
    %c352_198 = arith.constant 352 : index
    %521 = vector.load %arg9[%c1_196, %c0_197, %c352_198] : memref<2x1x896xf32, #tpu.memory_space<vmem>>, vector<1x1x96xf32>
    %522 = vector.shape_cast %521 : vector<1x1x96xf32> to vector<1x96xf32>
    %523 = arith.truncf %518 : vector<16x32xf32> to vector<16x32xbf16>
    %cst_199 = arith.constant dense<0.000000e+00> : vector<16x96xf32>
    %524 = tpu.matmul %523, %520, %cst_199 {dimension_numbers = #tpu.dot_dimension_numbers<[1], [0], [0], [1], [0, 0, 1, 1], [], []>} : vector<16x32xbf16>, vector<32x96xbf16>, vector<16x96xf32> -> vector<16x96xf32>
    %525 = vector.broadcast %522 : vector<1x96xf32> to vector<16x96xf32>
    %526 = arith.addf %524, %525 : vector<16x96xf32>
    %527 = vector.extract_strided_slice %526 {offsets = [0, 0], sizes = [16, 32], strides = [1, 1]} : vector<16x96xf32> to vector<16x32xf32>
    %528 = vector.extract_strided_slice %526 {offsets = [0, 32], sizes = [16, 32], strides = [1, 1]} : vector<16x96xf32> to vector<16x32xf32>
    %529 = vector.extract_strided_slice %526 {offsets = [0, 64], sizes = [16, 32], strides = [1, 1]} : vector<16x96xf32> to vector<16x32xf32>
    %c4 = arith.constant 4 : index
    %c0_200 = arith.constant 0 : index
    %c0_201 = arith.constant 0 : index
    %c0_202 = arith.constant 0 : index
    %530 = vector.load %arg7[%c4, %c0_200, %c0_201, %c0_202] : memref<6x4x8x32xbf16, #tpu.memory_space<vmem>>, vector<1x4x8x32xbf16>
    %531 = vector.shape_cast %530 : vector<1x4x8x32xbf16> to vector<4x8x32xbf16>
    %c1_203 = arith.constant 1 : index
    %c0_204 = arith.constant 0 : index
    %c448_205 = arith.constant 448 : index
    %532 = vector.load %arg9[%c1_203, %c0_204, %c448_205] : memref<2x1x896xf32, #tpu.memory_space<vmem>>, vector<1x1x32xf32>
    %533 = vector.shape_cast %532 : vector<1x1x32xf32> to vector<1x32xf32>
    %534 = arith.truncf %527 : vector<16x32xf32> to vector<16x32xbf16>
    %535 = arith.truncf %528 : vector<16x32xf32> to vector<16x32xbf16>
    %536 = arith.truncf %529 : vector<16x32xf32> to vector<16x32xbf16>
    %537 = vector.extract_strided_slice %534 {offsets = [0, 0], sizes = [16, 8], strides = [1, 1]} : vector<16x32xbf16> to vector<16x8xbf16>
    %538 = vector.extract_strided_slice %534 {offsets = [0, 8], sizes = [16, 8], strides = [1, 1]} : vector<16x32xbf16> to vector<16x8xbf16>
    %539 = vector.extract_strided_slice %534 {offsets = [0, 16], sizes = [16, 8], strides = [1, 1]} : vector<16x32xbf16> to vector<16x8xbf16>
    %540 = vector.extract_strided_slice %534 {offsets = [0, 24], sizes = [16, 8], strides = [1, 1]} : vector<16x32xbf16> to vector<16x8xbf16>
    %541 = vector.shape_cast %537 : vector<16x8xbf16> to vector<1x16x8xbf16>
    %542 = vector.shape_cast %538 : vector<16x8xbf16> to vector<1x16x8xbf16>
    %543 = vector.shape_cast %539 : vector<16x8xbf16> to vector<1x16x8xbf16>
    %544 = vector.shape_cast %540 : vector<16x8xbf16> to vector<1x16x8xbf16>
    %545 = tpu.concatenate %541, %542, %543, %544 in 0 : vector<1x16x8xbf16>, vector<1x16x8xbf16>, vector<1x16x8xbf16>, vector<1x16x8xbf16> -> vector<4x16x8xbf16>
    %546 = vector.extract_strided_slice %535 {offsets = [0, 0], sizes = [16, 8], strides = [1, 1]} : vector<16x32xbf16> to vector<16x8xbf16>
    %547 = vector.extract_strided_slice %535 {offsets = [0, 8], sizes = [16, 8], strides = [1, 1]} : vector<16x32xbf16> to vector<16x8xbf16>
    %548 = vector.extract_strided_slice %535 {offsets = [0, 16], sizes = [16, 8], strides = [1, 1]} : vector<16x32xbf16> to vector<16x8xbf16>
    %549 = vector.extract_strided_slice %535 {offsets = [0, 24], sizes = [16, 8], strides = [1, 1]} : vector<16x32xbf16> to vector<16x8xbf16>
    %550 = vector.shape_cast %546 : vector<16x8xbf16> to vector<1x16x8xbf16>
    %551 = vector.shape_cast %547 : vector<16x8xbf16> to vector<1x16x8xbf16>
    %552 = vector.shape_cast %548 : vector<16x8xbf16> to vector<1x16x8xbf16>
    %553 = vector.shape_cast %549 : vector<16x8xbf16> to vector<1x16x8xbf16>
    %554 = tpu.concatenate %550, %551, %552, %553 in 0 : vector<1x16x8xbf16>, vector<1x16x8xbf16>, vector<1x16x8xbf16>, vector<1x16x8xbf16> -> vector<4x16x8xbf16>
    %555 = vector.extract_strided_slice %536 {offsets = [0, 0], sizes = [16, 8], strides = [1, 1]} : vector<16x32xbf16> to vector<16x8xbf16>
    %556 = vector.extract_strided_slice %536 {offsets = [0, 8], sizes = [16, 8], strides = [1, 1]} : vector<16x32xbf16> to vector<16x8xbf16>
    %557 = vector.extract_strided_slice %536 {offsets = [0, 16], sizes = [16, 8], strides = [1, 1]} : vector<16x32xbf16> to vector<16x8xbf16>
    %558 = vector.extract_strided_slice %536 {offsets = [0, 24], sizes = [16, 8], strides = [1, 1]} : vector<16x32xbf16> to vector<16x8xbf16>
    %559 = vector.shape_cast %555 : vector<16x8xbf16> to vector<1x16x8xbf16>
    %560 = vector.shape_cast %556 : vector<16x8xbf16> to vector<1x16x8xbf16>
    %561 = vector.shape_cast %557 : vector<16x8xbf16> to vector<1x16x8xbf16>
    %562 = vector.shape_cast %558 : vector<16x8xbf16> to vector<1x16x8xbf16>
    %563 = tpu.concatenate %559, %560, %561, %562 in 0 : vector<1x16x8xbf16>, vector<1x16x8xbf16>, vector<1x16x8xbf16>, vector<1x16x8xbf16> -> vector<4x16x8xbf16>
    "tpu.trace_start"() <{level = 10 : i32, message = "hqd,hkd->hqk"}> : () -> ()
    %cst_206 = arith.constant dense<0.000000e+00> : vector<4x16x16xf32>
    %564 = tpu.matmul %545, %554, %cst_206 {dimension_numbers = #tpu.dot_dimension_numbers<[2], [2], [1], [1], [0, 0, 0, 1, 1, 1], [0], [0]>} : vector<4x16x8xbf16>, vector<4x16x8xbf16>, vector<4x16x16xf32> -> vector<4x16x16xf32>
    "tpu.trace_stop"() : () -> ()
    %565 = vector.shape_cast %1 : vector<16x16xf32> to vector<1x16x16xf32>
    %566 = vector.broadcast %565 : vector<1x16x16xf32> to vector<4x16x16xf32>
    %567 = arith.addf %564, %566 : vector<4x16x16xf32>
    %cst_207 = arith.constant dense<0xFF800000> : vector<4x16xf32>
    %568 = vector.multi_reduction <maximumf>, %567, %cst_207 [2] : vector<4x16x16xf32> to vector<4x16xf32>
    %569 = vector.shape_cast %568 : vector<4x16xf32> to vector<4x16x1xf32>
    %570 = vector.broadcast %569 : vector<4x16x1xf32> to vector<4x16x16xf32>
    %571 = arith.subf %567, %570 : vector<4x16x16xf32>
    %572 = math.exp %571 : vector<4x16x16xf32>
    %cst_208 = arith.constant dense<0.000000e+00> : vector<4x16xf32>
    %573 = vector.multi_reduction <add>, %572, %cst_208 [2] : vector<4x16x16xf32> to vector<4x16xf32>
    %574 = vector.shape_cast %573 : vector<4x16xf32> to vector<4x16x1xf32>
    %575 = tpu.reciprocal %574 {approx = true} : vector<4x16x1xf32> -> vector<4x16x1xf32>
    %576 = vector.broadcast %575 : vector<4x16x1xf32> to vector<4x16x16xf32>
    %577 = arith.mulf %572, %576 : vector<4x16x16xf32>
    %578 = arith.truncf %577 : vector<4x16x16xf32> to vector<4x16x16xbf16>
    "tpu.trace_start"() <{level = 10 : i32, message = "hqk,hkd->hqd"}> : () -> ()
    %cst_209 = arith.constant dense<0.000000e+00> : vector<4x16x8xf32>
    %579 = tpu.matmul %578, %563, %cst_209 {dimension_numbers = #tpu.dot_dimension_numbers<[2], [1], [1], [2], [0, 0, 0, 1, 1, 2], [0], [0]>} : vector<4x16x16xbf16>, vector<4x16x8xbf16>, vector<4x16x8xf32> -> vector<4x16x8xf32>
    "tpu.trace_stop"() : () -> ()
    %580 = arith.truncf %579 : vector<4x16x8xf32> to vector<4x16x8xbf16>
    "tpu.trace_start"() <{level = 10 : i32, message = "hqd,hde->hqe"}> : () -> ()
    %cst_210 = arith.constant dense<0.000000e+00> : vector<4x16x32xf32>
    %581 = tpu.matmul %580, %531, %cst_210 {dimension_numbers = #tpu.dot_dimension_numbers<[2], [1], [1], [2], [0, 0, 0, 1, 1, 2], [0], [0]>} : vector<4x16x8xbf16>, vector<4x8x32xbf16>, vector<4x16x32xf32> -> vector<4x16x32xf32>
    "tpu.trace_stop"() : () -> ()
    %cst_211 = arith.constant dense<0.000000e+00> : vector<16x32xf32>
    %582 = vector.multi_reduction <add>, %581, %cst_211 [0] : vector<4x16x32xf32> to vector<16x32xf32>
    %583 = vector.broadcast %533 : vector<1x32xf32> to vector<16x32xf32>
    %584 = arith.addf %582, %583 : vector<16x32xf32>
    %585 = arith.addf %518, %584 : vector<16x32xf32>
    %c1_212 = arith.constant 1 : index
    %c0_213 = arith.constant 0 : index
    %c480_214 = arith.constant 480 : index
    %586 = vector.load %arg9[%c1_212, %c0_213, %c480_214] : memref<2x1x896xf32, #tpu.memory_space<vmem>>, vector<1x1x32xf32>
    %587 = vector.shape_cast %586 : vector<1x1x32xf32> to vector<1x32xf32>
    %c1_215 = arith.constant 1 : index
    %c0_216 = arith.constant 0 : index
    %c512_217 = arith.constant 512 : index
    %588 = vector.load %arg9[%c1_215, %c0_216, %c512_217] : memref<2x1x896xf32, #tpu.memory_space<vmem>>, vector<1x1x32xf32>
    %589 = vector.shape_cast %588 : vector<1x1x32xf32> to vector<1x32xf32>
    %cst_218 = arith.constant dense<0.000000e+00> : vector<16xf32>
    %590 = vector.multi_reduction <add>, %585, %cst_218 [1] : vector<16x32xf32> to vector<16xf32>
    %591 = vector.shape_cast %590 : vector<16xf32> to vector<16x1xf32>
    %cst_219 = arith.constant 3.200000e+01 : f32
    %592 = vector.broadcast %cst_219 : f32 to vector<16x1xf32>
    %593 = arith.divf %591, %592 : vector<16x1xf32>
    %594 = vector.broadcast %593 : vector<16x1xf32> to vector<16x32xf32>
    %595 = arith.subf %585, %594 : vector<16x32xf32>
    %596 = arith.mulf %595, %595 : vector<16x32xf32>
    %cst_220 = arith.constant dense<0.000000e+00> : vector<16xf32>
    %597 = vector.multi_reduction <add>, %596, %cst_220 [1] : vector<16x32xf32> to vector<16xf32>
    %598 = vector.shape_cast %597 : vector<16xf32> to vector<16x1xf32>
    %cst_221 = arith.constant 3.200000e+01 : f32
    %599 = vector.broadcast %cst_221 : f32 to vector<16x1xf32>
    %600 = arith.divf %598, %599 : vector<16x1xf32>
    %601 = vector.broadcast %593 : vector<16x1xf32> to vector<16x32xf32>
    %602 = arith.subf %585, %601 : vector<16x32xf32>
    %cst_222 = arith.constant 9.99999974E-6 : f32
    %603 = vector.broadcast %cst_222 : f32 to vector<16x1xf32>
    %604 = arith.addf %600, %603 : vector<16x1xf32>
    %605 = math.rsqrt %604 : vector<16x1xf32>
    %606 = vector.broadcast %605 : vector<16x1xf32> to vector<16x32xf32>
    %607 = arith.mulf %602, %606 : vector<16x32xf32>
    %608 = vector.broadcast %587 : vector<1x32xf32> to vector<16x32xf32>
    %609 = arith.mulf %607, %608 : vector<16x32xf32>
    %610 = vector.broadcast %589 : vector<1x32xf32> to vector<16x32xf32>
    %611 = arith.addf %609, %610 : vector<16x32xf32>
    %c1_223 = arith.constant 1 : index
    %c0_224 = arith.constant 0 : index
    %c256_225 = arith.constant 256 : index
    %612 = vector.load %arg5[%c1_223, %c0_224, %c256_225] : memref<2x32x416xbf16, #tpu.memory_space<vmem>>, vector<1x32x32xbf16>
    %613 = vector.shape_cast %612 : vector<1x32x32xbf16> to vector<32x32xbf16>
    %c1_226 = arith.constant 1 : index
    %c0_227 = arith.constant 0 : index
    %c544_228 = arith.constant 544 : index
    %614 = vector.load %arg9[%c1_226, %c0_227, %c544_228] : memref<2x1x896xf32, #tpu.memory_space<vmem>>, vector<1x1x32xf32>
    %615 = vector.shape_cast %614 : vector<1x1x32xf32> to vector<1x32xf32>
    %616 = arith.truncf %611 : vector<16x32xf32> to vector<16x32xbf16>
    %cst_229 = arith.constant dense<0.000000e+00> : vector<16x32xf32>
    %617 = tpu.matmul %616, %613, %cst_229 {dimension_numbers = #tpu.dot_dimension_numbers<[1], [0], [0], [1], [0, 0, 1, 1], [], []>} : vector<16x32xbf16>, vector<32x32xbf16>, vector<16x32xf32> -> vector<16x32xf32>
    %618 = vector.broadcast %615 : vector<1x32xf32> to vector<16x32xf32>
    %619 = arith.addf %617, %618 : vector<16x32xf32>
    %c1_230 = arith.constant 1 : index
    %c0_231 = arith.constant 0 : index
    %c288_232 = arith.constant 288 : index
    %620 = vector.load %arg5[%c1_230, %c0_231, %c288_232] : memref<2x32x416xbf16, #tpu.memory_space<vmem>>, vector<1x32x64xbf16>
    %621 = vector.shape_cast %620 : vector<1x32x64xbf16> to vector<32x64xbf16>
    %c1_233 = arith.constant 1 : index
    %c0_234 = arith.constant 0 : index
    %c576_235 = arith.constant 576 : index
    %622 = vector.load %arg9[%c1_233, %c0_234, %c576_235] : memref<2x1x896xf32, #tpu.memory_space<vmem>>, vector<1x1x64xf32>
    %623 = vector.shape_cast %622 : vector<1x1x64xf32> to vector<1x64xf32>
    %624 = arith.truncf %279 : vector<16x32xf32> to vector<16x32xbf16>
    %cst_236 = arith.constant dense<0.000000e+00> : vector<16x64xf32>
    %625 = tpu.matmul %624, %621, %cst_236 {dimension_numbers = #tpu.dot_dimension_numbers<[1], [0], [0], [1], [0, 0, 1, 1], [], []>} : vector<16x32xbf16>, vector<32x64xbf16>, vector<16x64xf32> -> vector<16x64xf32>
    %626 = vector.broadcast %623 : vector<1x64xf32> to vector<16x64xf32>
    %627 = arith.addf %625, %626 : vector<16x64xf32>
    %628 = vector.extract_strided_slice %627 {offsets = [0, 0], sizes = [16, 32], strides = [1, 1]} : vector<16x64xf32> to vector<16x32xf32>
    %629 = vector.extract_strided_slice %627 {offsets = [0, 32], sizes = [16, 32], strides = [1, 1]} : vector<16x64xf32> to vector<16x32xf32>
    %c5 = arith.constant 5 : index
    %c0_237 = arith.constant 0 : index
    %c0_238 = arith.constant 0 : index
    %c0_239 = arith.constant 0 : index
    %630 = vector.load %arg7[%c5, %c0_237, %c0_238, %c0_239] : memref<6x4x8x32xbf16, #tpu.memory_space<vmem>>, vector<1x4x8x32xbf16>
    %631 = vector.shape_cast %630 : vector<1x4x8x32xbf16> to vector<4x8x32xbf16>
    %c1_240 = arith.constant 1 : index
    %c0_241 = arith.constant 0 : index
    %c640_242 = arith.constant 640 : index
    %632 = vector.load %arg9[%c1_240, %c0_241, %c640_242] : memref<2x1x896xf32, #tpu.memory_space<vmem>>, vector<1x1x32xf32>
    %633 = vector.shape_cast %632 : vector<1x1x32xf32> to vector<1x32xf32>
    %634 = arith.truncf %619 : vector<16x32xf32> to vector<16x32xbf16>
    %635 = arith.truncf %628 : vector<16x32xf32> to vector<16x32xbf16>
    %636 = arith.truncf %629 : vector<16x32xf32> to vector<16x32xbf16>
    %637 = vector.extract_strided_slice %634 {offsets = [0, 0], sizes = [16, 8], strides = [1, 1]} : vector<16x32xbf16> to vector<16x8xbf16>
    %638 = vector.extract_strided_slice %634 {offsets = [0, 8], sizes = [16, 8], strides = [1, 1]} : vector<16x32xbf16> to vector<16x8xbf16>
    %639 = vector.extract_strided_slice %634 {offsets = [0, 16], sizes = [16, 8], strides = [1, 1]} : vector<16x32xbf16> to vector<16x8xbf16>
    %640 = vector.extract_strided_slice %634 {offsets = [0, 24], sizes = [16, 8], strides = [1, 1]} : vector<16x32xbf16> to vector<16x8xbf16>
    %641 = vector.shape_cast %637 : vector<16x8xbf16> to vector<1x16x8xbf16>
    %642 = vector.shape_cast %638 : vector<16x8xbf16> to vector<1x16x8xbf16>
    %643 = vector.shape_cast %639 : vector<16x8xbf16> to vector<1x16x8xbf16>
    %644 = vector.shape_cast %640 : vector<16x8xbf16> to vector<1x16x8xbf16>
    %645 = tpu.concatenate %641, %642, %643, %644 in 0 : vector<1x16x8xbf16>, vector<1x16x8xbf16>, vector<1x16x8xbf16>, vector<1x16x8xbf16> -> vector<4x16x8xbf16>
    %646 = vector.extract_strided_slice %635 {offsets = [0, 0], sizes = [16, 8], strides = [1, 1]} : vector<16x32xbf16> to vector<16x8xbf16>
    %647 = vector.extract_strided_slice %635 {offsets = [0, 8], sizes = [16, 8], strides = [1, 1]} : vector<16x32xbf16> to vector<16x8xbf16>
    %648 = vector.extract_strided_slice %635 {offsets = [0, 16], sizes = [16, 8], strides = [1, 1]} : vector<16x32xbf16> to vector<16x8xbf16>
    %649 = vector.extract_strided_slice %635 {offsets = [0, 24], sizes = [16, 8], strides = [1, 1]} : vector<16x32xbf16> to vector<16x8xbf16>
    %650 = vector.shape_cast %646 : vector<16x8xbf16> to vector<1x16x8xbf16>
    %651 = vector.shape_cast %647 : vector<16x8xbf16> to vector<1x16x8xbf16>
    %652 = vector.shape_cast %648 : vector<16x8xbf16> to vector<1x16x8xbf16>
    %653 = vector.shape_cast %649 : vector<16x8xbf16> to vector<1x16x8xbf16>
    %654 = tpu.concatenate %650, %651, %652, %653 in 0 : vector<1x16x8xbf16>, vector<1x16x8xbf16>, vector<1x16x8xbf16>, vector<1x16x8xbf16> -> vector<4x16x8xbf16>
    %655 = vector.extract_strided_slice %636 {offsets = [0, 0], sizes = [16, 8], strides = [1, 1]} : vector<16x32xbf16> to vector<16x8xbf16>
    %656 = vector.extract_strided_slice %636 {offsets = [0, 8], sizes = [16, 8], strides = [1, 1]} : vector<16x32xbf16> to vector<16x8xbf16>
    %657 = vector.extract_strided_slice %636 {offsets = [0, 16], sizes = [16, 8], strides = [1, 1]} : vector<16x32xbf16> to vector<16x8xbf16>
    %658 = vector.extract_strided_slice %636 {offsets = [0, 24], sizes = [16, 8], strides = [1, 1]} : vector<16x32xbf16> to vector<16x8xbf16>
    %659 = vector.shape_cast %655 : vector<16x8xbf16> to vector<1x16x8xbf16>
    %660 = vector.shape_cast %656 : vector<16x8xbf16> to vector<1x16x8xbf16>
    %661 = vector.shape_cast %657 : vector<16x8xbf16> to vector<1x16x8xbf16>
    %662 = vector.shape_cast %658 : vector<16x8xbf16> to vector<1x16x8xbf16>
    %663 = tpu.concatenate %659, %660, %661, %662 in 0 : vector<1x16x8xbf16>, vector<1x16x8xbf16>, vector<1x16x8xbf16>, vector<1x16x8xbf16> -> vector<4x16x8xbf16>
    "tpu.trace_start"() <{level = 10 : i32, message = "hqd,hkd->hqk"}> : () -> ()
    %cst_243 = arith.constant dense<0.000000e+00> : vector<4x16x16xf32>
    %664 = tpu.matmul %645, %654, %cst_243 {dimension_numbers = #tpu.dot_dimension_numbers<[2], [2], [1], [1], [0, 0, 0, 1, 1, 1], [0], [0]>} : vector<4x16x8xbf16>, vector<4x16x8xbf16>, vector<4x16x16xf32> -> vector<4x16x16xf32>
    "tpu.trace_stop"() : () -> ()
    %665 = vector.shape_cast %2 : vector<16x16xf32> to vector<1x16x16xf32>
    %666 = vector.broadcast %665 : vector<1x16x16xf32> to vector<4x16x16xf32>
    %667 = arith.addf %664, %666 : vector<4x16x16xf32>
    %cst_244 = arith.constant dense<0xFF800000> : vector<4x16xf32>
    %668 = vector.multi_reduction <maximumf>, %667, %cst_244 [2] : vector<4x16x16xf32> to vector<4x16xf32>
    %669 = vector.shape_cast %668 : vector<4x16xf32> to vector<4x16x1xf32>
    %670 = vector.broadcast %669 : vector<4x16x1xf32> to vector<4x16x16xf32>
    %671 = arith.subf %667, %670 : vector<4x16x16xf32>
    %672 = math.exp %671 : vector<4x16x16xf32>
    %cst_245 = arith.constant dense<0.000000e+00> : vector<4x16xf32>
    %673 = vector.multi_reduction <add>, %672, %cst_245 [2] : vector<4x16x16xf32> to vector<4x16xf32>
    %674 = vector.shape_cast %673 : vector<4x16xf32> to vector<4x16x1xf32>
    %675 = tpu.reciprocal %674 {approx = true} : vector<4x16x1xf32> -> vector<4x16x1xf32>
    %676 = vector.broadcast %675 : vector<4x16x1xf32> to vector<4x16x16xf32>
    %677 = arith.mulf %672, %676 : vector<4x16x16xf32>
    %678 = arith.truncf %677 : vector<4x16x16xf32> to vector<4x16x16xbf16>
    "tpu.trace_start"() <{level = 10 : i32, message = "hqk,hkd->hqd"}> : () -> ()
    %cst_246 = arith.constant dense<0.000000e+00> : vector<4x16x8xf32>
    %679 = tpu.matmul %678, %663, %cst_246 {dimension_numbers = #tpu.dot_dimension_numbers<[2], [1], [1], [2], [0, 0, 0, 1, 1, 2], [0], [0]>} : vector<4x16x16xbf16>, vector<4x16x8xbf16>, vector<4x16x8xf32> -> vector<4x16x8xf32>
    "tpu.trace_stop"() : () -> ()
    %680 = arith.truncf %679 : vector<4x16x8xf32> to vector<4x16x8xbf16>
    "tpu.trace_start"() <{level = 10 : i32, message = "hqd,hde->hqe"}> : () -> ()
    %cst_247 = arith.constant dense<0.000000e+00> : vector<4x16x32xf32>
    %681 = tpu.matmul %680, %631, %cst_247 {dimension_numbers = #tpu.dot_dimension_numbers<[2], [1], [1], [2], [0, 0, 0, 1, 1, 2], [0], [0]>} : vector<4x16x8xbf16>, vector<4x8x32xbf16>, vector<4x16x32xf32> -> vector<4x16x32xf32>
    "tpu.trace_stop"() : () -> ()
    %cst_248 = arith.constant dense<0.000000e+00> : vector<16x32xf32>
    %682 = vector.multi_reduction <add>, %681, %cst_248 [0] : vector<4x16x32xf32> to vector<16x32xf32>
    %683 = vector.broadcast %633 : vector<1x32xf32> to vector<16x32xf32>
    %684 = arith.addf %682, %683 : vector<16x32xf32>
    %685 = arith.addf %611, %684 : vector<16x32xf32>
    %c1_249 = arith.constant 1 : index
    %c0_250 = arith.constant 0 : index
    %c672_251 = arith.constant 672 : index
    %686 = vector.load %arg9[%c1_249, %c0_250, %c672_251] : memref<2x1x896xf32, #tpu.memory_space<vmem>>, vector<1x1x32xf32>
    %687 = vector.shape_cast %686 : vector<1x1x32xf32> to vector<1x32xf32>
    %c1_252 = arith.constant 1 : index
    %c0_253 = arith.constant 0 : index
    %c704_254 = arith.constant 704 : index
    %688 = vector.load %arg9[%c1_252, %c0_253, %c704_254] : memref<2x1x896xf32, #tpu.memory_space<vmem>>, vector<1x1x32xf32>
    %689 = vector.shape_cast %688 : vector<1x1x32xf32> to vector<1x32xf32>
    %cst_255 = arith.constant dense<0.000000e+00> : vector<16xf32>
    %690 = vector.multi_reduction <add>, %685, %cst_255 [1] : vector<16x32xf32> to vector<16xf32>
    %691 = vector.shape_cast %690 : vector<16xf32> to vector<16x1xf32>
    %cst_256 = arith.constant 3.200000e+01 : f32
    %692 = vector.broadcast %cst_256 : f32 to vector<16x1xf32>
    %693 = arith.divf %691, %692 : vector<16x1xf32>
    %694 = vector.broadcast %693 : vector<16x1xf32> to vector<16x32xf32>
    %695 = arith.subf %685, %694 : vector<16x32xf32>
    %696 = arith.mulf %695, %695 : vector<16x32xf32>
    %cst_257 = arith.constant dense<0.000000e+00> : vector<16xf32>
    %697 = vector.multi_reduction <add>, %696, %cst_257 [1] : vector<16x32xf32> to vector<16xf32>
    %698 = vector.shape_cast %697 : vector<16xf32> to vector<16x1xf32>
    %cst_258 = arith.constant 3.200000e+01 : f32
    %699 = vector.broadcast %cst_258 : f32 to vector<16x1xf32>
    %700 = arith.divf %698, %699 : vector<16x1xf32>
    %701 = vector.broadcast %693 : vector<16x1xf32> to vector<16x32xf32>
    %702 = arith.subf %685, %701 : vector<16x32xf32>
    %cst_259 = arith.constant 9.99999974E-6 : f32
    %703 = vector.broadcast %cst_259 : f32 to vector<16x1xf32>
    %704 = arith.addf %700, %703 : vector<16x1xf32>
    %705 = math.rsqrt %704 : vector<16x1xf32>
    %706 = vector.broadcast %705 : vector<16x1xf32> to vector<16x32xf32>
    %707 = arith.mulf %702, %706 : vector<16x32xf32>
    %708 = vector.broadcast %687 : vector<1x32xf32> to vector<16x32xf32>
    %709 = arith.mulf %707, %708 : vector<16x32xf32>
    %710 = vector.broadcast %689 : vector<1x32xf32> to vector<16x32xf32>
    %711 = arith.addf %709, %710 : vector<16x32xf32>
    %c1_260 = arith.constant 1 : index
    %c0_261 = arith.constant 0 : index
    %c352_262 = arith.constant 352 : index
    %712 = vector.load %arg5[%c1_260, %c0_261, %c352_262] : memref<2x32x416xbf16, #tpu.memory_space<vmem>>, vector<1x32x64xbf16>
    %713 = vector.shape_cast %712 : vector<1x32x64xbf16> to vector<32x64xbf16>
    %c1_263 = arith.constant 1 : index
    %c0_264 = arith.constant 0 : index
    %c736_265 = arith.constant 736 : index
    %714 = vector.load %arg9[%c1_263, %c0_264, %c736_265] : memref<2x1x896xf32, #tpu.memory_space<vmem>>, vector<1x1x64xf32>
    %715 = vector.shape_cast %714 : vector<1x1x64xf32> to vector<1x64xf32>
    %716 = arith.truncf %711 : vector<16x32xf32> to vector<16x32xbf16>
    %cst_266 = arith.constant dense<0.000000e+00> : vector<16x64xf32>
    %717 = tpu.matmul %716, %713, %cst_266 {dimension_numbers = #tpu.dot_dimension_numbers<[1], [0], [0], [1], [0, 0, 1, 1], [], []>} : vector<16x32xbf16>, vector<32x64xbf16>, vector<16x64xf32> -> vector<16x64xf32>
    %718 = vector.broadcast %715 : vector<1x64xf32> to vector<16x64xf32>
    %719 = arith.addf %717, %718 : vector<16x64xf32>
    %cst_267 = arith.constant 0.000000e+00 : f32
    %720 = vector.broadcast %cst_267 : f32 to vector<16x64xf32>
    %721 = arith.maximumf %719, %720 : vector<16x64xf32>
    %c1_268 = arith.constant 1 : index
    %c0_269 = arith.constant 0 : index
    %c32_270 = arith.constant 32 : index
    %722 = vector.load %arg6[%c1_268, %c0_269, %c32_270] : memref<2x64x64xbf16, #tpu.memory_space<vmem>>, vector<1x64x32xbf16>
    %723 = vector.shape_cast %722 : vector<1x64x32xbf16> to vector<64x32xbf16>
    %c1_271 = arith.constant 1 : index
    %c0_272 = arith.constant 0 : index
    %c800_273 = arith.constant 800 : index
    %724 = vector.load %arg9[%c1_271, %c0_272, %c800_273] : memref<2x1x896xf32, #tpu.memory_space<vmem>>, vector<1x1x32xf32>
    %725 = vector.shape_cast %724 : vector<1x1x32xf32> to vector<1x32xf32>
    %726 = arith.truncf %721 : vector<16x64xf32> to vector<16x64xbf16>
    %cst_274 = arith.constant dense<0.000000e+00> : vector<16x32xf32>
    %727 = tpu.matmul %726, %723, %cst_274 {dimension_numbers = #tpu.dot_dimension_numbers<[1], [0], [0], [1], [0, 0, 1, 1], [], []>} : vector<16x64xbf16>, vector<64x32xbf16>, vector<16x32xf32> -> vector<16x32xf32>
    %728 = vector.broadcast %725 : vector<1x32xf32> to vector<16x32xf32>
    %729 = arith.addf %727, %728 : vector<16x32xf32>
    %730 = arith.addf %711, %729 : vector<16x32xf32>
    %c1_275 = arith.constant 1 : index
    %c0_276 = arith.constant 0 : index
    %c832_277 = arith.constant 832 : index
    %731 = vector.load %arg9[%c1_275, %c0_276, %c832_277] : memref<2x1x896xf32, #tpu.memory_space<vmem>>, vector<1x1x32xf32>
    %732 = vector.shape_cast %731 : vector<1x1x32xf32> to vector<1x32xf32>
    %c1_278 = arith.constant 1 : index
    %c0_279 = arith.constant 0 : index
    %c864_280 = arith.constant 864 : index
    %733 = vector.load %arg9[%c1_278, %c0_279, %c864_280] : memref<2x1x896xf32, #tpu.memory_space<vmem>>, vector<1x1x32xf32>
    %734 = vector.shape_cast %733 : vector<1x1x32xf32> to vector<1x32xf32>
    %cst_281 = arith.constant dense<0.000000e+00> : vector<16xf32>
    %735 = vector.multi_reduction <add>, %730, %cst_281 [1] : vector<16x32xf32> to vector<16xf32>
    %736 = vector.shape_cast %735 : vector<16xf32> to vector<16x1xf32>
    %cst_282 = arith.constant 3.200000e+01 : f32
    %737 = vector.broadcast %cst_282 : f32 to vector<16x1xf32>
    %738 = arith.divf %736, %737 : vector<16x1xf32>
    %739 = vector.broadcast %738 : vector<16x1xf32> to vector<16x32xf32>
    %740 = arith.subf %730, %739 : vector<16x32xf32>
    %741 = arith.mulf %740, %740 : vector<16x32xf32>
    %cst_283 = arith.constant dense<0.000000e+00> : vector<16xf32>
    %742 = vector.multi_reduction <add>, %741, %cst_283 [1] : vector<16x32xf32> to vector<16xf32>
    %743 = vector.shape_cast %742 : vector<16xf32> to vector<16x1xf32>
    %cst_284 = arith.constant 3.200000e+01 : f32
    %744 = vector.broadcast %cst_284 : f32 to vector<16x1xf32>
    %745 = arith.divf %743, %744 : vector<16x1xf32>
    %746 = vector.broadcast %738 : vector<16x1xf32> to vector<16x32xf32>
    %747 = arith.subf %730, %746 : vector<16x32xf32>
    %cst_285 = arith.constant 9.99999974E-6 : f32
    %748 = vector.broadcast %cst_285 : f32 to vector<16x1xf32>
    %749 = arith.addf %745, %748 : vector<16x1xf32>
    %750 = math.rsqrt %749 : vector<16x1xf32>
    %751 = vector.broadcast %750 : vector<16x1xf32> to vector<16x32xf32>
    %752 = arith.mulf %747, %751 : vector<16x32xf32>
    %753 = vector.broadcast %732 : vector<1x32xf32> to vector<16x32xf32>
    %754 = arith.mulf %752, %753 : vector<16x32xf32>
    %755 = vector.broadcast %734 : vector<1x32xf32> to vector<16x32xf32>
    %756 = arith.addf %754, %755 : vector<16x32xf32>
    %c0_286 = arith.constant 0 : index
    %c0_287 = arith.constant 0 : index
    %757 = vector.load %arg8[%c0_286, %c0_287] : memref<32x128xbf16, #tpu.memory_space<vmem>>, vector<32x128xbf16>
    %c0_288 = arith.constant 0 : index
    %c0_289 = arith.constant 0 : index
    %758 = vector.load %arg10[%c0_288, %c0_289] : memref<1x128xf32, #tpu.memory_space<vmem>>, vector<1x128xf32>
    %759 = arith.truncf %756 : vector<16x32xf32> to vector<16x32xbf16>
    %cst_290 = arith.constant dense<0.000000e+00> : vector<16x128xf32>
    %760 = tpu.matmul %759, %757, %cst_290 {dimension_numbers = #tpu.dot_dimension_numbers<[1], [0], [0], [1], [0, 0, 1, 1], [], []>} : vector<16x32xbf16>, vector<32x128xbf16>, vector<16x128xf32> -> vector<16x128xf32>
    %761 = vector.broadcast %758 : vector<1x128xf32> to vector<16x128xf32>
    %762 = arith.addf %760, %761 : vector<16x128xf32>
    %c0_291 = arith.constant 0 : index
    %c0_292 = arith.constant 0 : index
    %763 = vector.load %arg11[%c0_291, %c0_292] : memref<16x128xf32, #tpu.memory_space<vmem>>, vector<16x128xf32>
    tpu.vector_store %arg11[%c0_291, %c0_292], %762 {strides = array<i32>} : memref<16x128xf32, #tpu.memory_space<vmem>>, vector<16x128xf32>,
    return
  }
}

</mosaic_0001>

<llo_original>
// kernel: transformer_forward.1
$region0: #{transformer_forward.1}
  #allocation0 [shape = 'u32[]', space=smem, size = 0x4, offset = 0x4, fixed_abs, tag = 'smem constant byte address 0x4 - core index']
  #allocation1 [shape = 'u32[144,128]{1,0:T(1,128)}', space=vmem, size = 0x12000, scoped, tag = 'internal scratch']
  %s0 = inlined_call_operand.vmem [shape: f32[16,32], index: 0, kind: input, shape index: {}]
  %s1 = inlined_call_operand.vmem [shape: f32[16,32], index: 1, kind: input, shape index: {}]
  %s2 = inlined_call_operand.vmem [shape: f32[16,16], index: 2, kind: input, shape index: {}]
  %s3 = inlined_call_operand.vmem [shape: f32[16,16], index: 3, kind: input, shape index: {}]
  %s4 = inlined_call_operand.vmem [shape: f32[16,16], index: 4, kind: input, shape index: {}]
  %s5 = inlined_call_operand.vmem [shape: bf16[2,32,416], index: 5, kind: input, shape index: {}]
  %s6 = inlined_call_operand.vmem [shape: bf16[2,64,64], index: 6, kind: input, shape index: {}]
  %s7 = inlined_call_operand.vmem [shape: bf16[6,4,8,32], index: 7, kind: input, shape index: {}]
  %s8 = inlined_call_operand.vmem [shape: bf16[32,128], index: 8, kind: input, shape index: {}]
  %s9 = inlined_call_operand.vmem [shape: f32[2,1,896], index: 9, kind: input, shape index: {}]
  %s10 = inlined_call_operand.vmem [shape: f32[1,128], index: 10, kind: input, shape index: {}]
  %s11 = inlined_call_operand.hbm [shape: f32[16,128], index: 11, kind: output, shape index: {}]
  %s12 = sld [smem:[#allocation0]]
  $region54: #{transformer_forward.1} parent=0
    _
  %s14 = ssub.s32 1, %s12
  %s15 = scalar_select 0, %s14, %s12
  $region1: #{transformer_forward.1} parent=0
    #allocation2 [shape = 'u8[8192]{0}', space=vmem, size = 0x2000, scoped, tag = 'output window, operand 0, single buffered']
    #allocation3 [shape = 's32[1]{0}', space=sflag, size = 0x4, scoped, tag = 'scoped memory for transformer_forward.1']
    %16 = vsyncpa [#allocation3], 0
    // Predicated region
    $region2: #{transformer_forward.1} parent=1 // pred_check
      _
    $region3: #{transformer_forward.1} parent=1 // pred_check_branch
      %18 = sbr.rel (0) target = $region5
    $region4: #{transformer_forward.1} parent=1 // pred_region
      _
    $region5: #{transformer_forward.1} parent=1 // pred_fallthru
      _
    // Predicated region
    $region6: #{transformer_forward.1} parent=1 // pred_check
      _
    $region7: #{transformer_forward.1} parent=1 // pred_check_branch
      %20 = sbr.rel (0) target = $region9
    $region8: #{transformer_forward.1} parent=1 // pred_region
      _
    $region9: #{transformer_forward.1} parent=1 // pred_fallthru
      _
    // Predicated region
    $region10: #{transformer_forward.1} parent=1 // pred_check
      _
    $region11: #{transformer_forward.1} parent=1 // pred_check_branch
      %22 = sbr.rel (0) target = $region13
    $region12: #{transformer_forward.1} parent=1 // pred_region
      _
    $region13: #{transformer_forward.1} parent=1 // pred_fallthru
      _
    // Predicated region
    $region14: #{transformer_forward.1} parent=1 // pred_check
      _
    $region15: #{transformer_forward.1} parent=1 // pred_check_branch
      %24 = sbr.rel (0) target = $region17
    $region16: #{transformer_forward.1} parent=1 // pred_region
      _
    $region17: #{transformer_forward.1} parent=1 // pred_fallthru
      _
    // Predicated region
    $region18: #{transformer_forward.1} parent=1 // pred_check
      _
    $region19: #{transformer_forward.1} parent=1 // pred_check_branch
      %26 = sbr.rel (0) target = $region21
    $region20: #{transformer_forward.1} parent=1 // pred_region
      _
    $region21: #{transformer_forward.1} parent=1 // pred_fallthru
      _
    // Predicated region
    $region22: #{transformer_forward.1} parent=1 // pred_check
      _
    $region23: #{transformer_forward.1} parent=1 // pred_check_branch
      %28 = sbr.rel (0) target = $region25
    $region24: #{transformer_forward.1} parent=1 // pred_region
      _
    $region25: #{transformer_forward.1} parent=1 // pred_fallthru
      _
    // Predicated region
    $region26: #{transformer_forward.1} parent=1 // pred_check
      _
    $region27: #{transformer_forward.1} parent=1 // pred_check_branch
      %30 = sbr.rel (0) target = $region29
    $region28: #{transformer_forward.1} parent=1 // pred_region
      _
    $region29: #{transformer_forward.1} parent=1 // pred_fallthru
      _
    // Predicated region
    $region30: #{transformer_forward.1} parent=1 // pred_check
      _
    $region31: #{transformer_forward.1} parent=1 // pred_check_branch
      %32 = sbr.rel (0) target = $region33
    $region32: #{transformer_forward.1} parent=1 // pred_region
      _
    $region33: #{transformer_forward.1} parent=1 // pred_fallthru
      _
    // Predicated region
    $region34: #{transformer_forward.1} parent=1 // pred_check
      _
    $region35: #{transformer_forward.1} parent=1 // pred_check_branch
      %34 = sbr.rel (0) target = $region37
    $region36: #{transformer_forward.1} parent=1 // pred_region
      _
    $region37: #{transformer_forward.1} parent=1 // pred_fallthru
      _
    // Predicated region
    $region38: #{transformer_forward.1} parent=1 // pred_check
      _
    $region39: #{transformer_forward.1} parent=1 // pred_check_branch
      %36 = sbr.rel (0) target = $region41
    $region40: #{transformer_forward.1} parent=1 // pred_region
      _
    $region41: #{transformer_forward.1} parent=1 // pred_fallthru
      _
    // Predicated region
    $region42: #{transformer_forward.1} parent=1 // pred_check
      _
    $region43: #{transformer_forward.1} parent=1 // pred_check_branch
      %38 = sbr.rel (0) target = $region45
    $region44: #{transformer_forward.1} parent=1 // pred_region
      _
    $region45: #{transformer_forward.1} parent=1 // pred_fallthru
      _
    %v40 = vld [vmem:[%s2] sm:$0xff]
    %v41 = vld [vmem:[%s2 + $0x8] sm:$0xff]
    %v42 = vld [vmem:[%s3] sm:$0xff]
    %v43 = vld [vmem:[%s3 + $0x8] sm:$0xff]
    %v44 = vld [vmem:[%s4] sm:$0xff]
    %v45 = vld [vmem:[%s4 + $0x8] sm:$0xff]
    %v46 = vld [vmem:[%s0] sm:$0xff]
    %v47 = vld [vmem:[%s0 + $0x8] sm:$0xff]
    %v48 = vld [vmem:[%s5] sm:$0xf]
    %v49 = vld [vmem:[%s5 + $0x10] sm:$0xf]
    %v50 = vld [vmem:[%s5 + $0x20] sm:$0xf]
    %v51 = vld [vmem:[%s5 + $0x30] sm:$0xf]
    %v52 = vld [vmem:[%s9] sm:$0x1]
    %v53 = vpack.c.bf16 %v47, %v46
    %v55 = vlaneseq
    %v56 = vshrl.u32 %v55, 7
    %v57 = vsub.s32 0, %v56
    %v58 = vrot.slane %v52, %v57
    %v64 = vunpack.c.l.b16 %v48
    %v65 = vunpack.c.l.b16 %v49
    %v66 = vunpack.c.l.b16 %v50
    %v67 = vunpack.c.l.b16 %v51
    %v68 = vpack.c.b16 %v65, %v64
    %v69 = vpack.c.b16 %v67, %v66
    %vm72 = vcmask 261120
    %v74 = vsel %vm72, %v53, 0
    %76 = vmatprep.subr.bf16.mxu0 0
    %77 = vmatpush1.bf16.msra.mxu0 0
    %78 = vmatprep.subr.bf16.mxu0 0
    %79 = vmatpush1.bf16.msra.mxu0 0
    %80 = vmatprep.subr.bf16.mxu0 0
    %81 = vmatpush1.bf16.msra.mxu0 0
    %82 = vmatprep.subr.bf16.mxu0 0
    %83 = vmatpush1.bf16.msra.mxu0 0
    %84 = vmatprep.subr.bf16.mxu0 0
    %85 = vmatpush1.bf16.msra.mxu0 0
    %86 = vmatprep.subr.bf16.mxu0 0
    %87 = vmatpush1.bf16.msra.mxu0 0
    %88 = vmatprep.subr.bf16.mxu0 0
    %89 = vmatpush1.bf16.msra.mxu0 %v69
    %90 = vmatprep.subr.bf16.mxu0 0
    %91 = vmatpush1.bf16.msra.mxu0 %v68
    %92 = vmatprep.subr.bf16.mxu0 0
    %93 = vmatpush2.bf16.msra.mxu0 0
    %94 = vmatprep.subr.bf16.mxu0 0
    %95 = vmatpush2.bf16.msra.mxu0 0
    %96 = vmatprep.subr.bf16.mxu0 0
    %97 = vmatpush2.bf16.msra.mxu0 0
    %98 = vmatprep.subr.bf16.mxu0 0
    %99 = vmatpush2.bf16.msra.mxu0 0
    %100 = vmatprep.subr.bf16.mxu0 0
    %101 = vmatpush2.bf16.msra.mxu0 0
    %102 = vmatprep.subr.bf16.mxu0 0
    %103 = vmatpush2.bf16.msra.mxu0 0
    %104 = vmatprep.subr.bf16.mxu0 0
    %105 = vmatpush2.bf16.msra.mxu0 0
    %106 = vmatprep.subr.bf16.mxu0 0
    %107 = vmatpush2.bf16.msra.mxu0 0
    %108 = vmatprep.mubr.bf16.mxu0 0
    %109 = vmatmul.mubr.bf16.gmra.mxu0 %v74
    %v110 = vpop.f32.mrf.mxu0
    %v111 = vadd.f32 %v58, %v110
    %v112 = vpop.f32.mrf.mxu0
    %v113 = vpop.f32.mrf.mxu0
    %v114 = vadd.f32 %v58, %v113
    %v115 = vpop.f32.mrf.mxu0
    %116 = vdwg.mxu0
    %v117 = vld [vmem:[%s7] sm:$0xf]
    %v118 = vld [vmem:[%s7 + $0x4] sm:$0xf]
    %v119 = vld [vmem:[%s7 + $0x8] sm:$0xf]
    %v120 = vld [vmem:[%s7 + $0xc] sm:$0xf]
    %v121 = vpack.c.bf16 %v114, %v111
    %123 = vrot.lane.b32.xlu0 %v121, 120
    %v124 = vpop.permute.xlu0 %123
    %125 = vrot.lane.b32.xlu0 %v121, 112
    %v126 = vpop.permute.xlu0 %125
    %127 = vrot.lane.b32.xlu0 %v121, 104
    %v128 = vpop.permute.xlu0 %127
    %129 = vrot.lane.b32.xlu0 %v121, 96
    %v130 = vpop.permute.xlu0 %129
    %vm131 = vcmask 64512
    %v133 = vsel %vm131, %v121, 0
    %v136 = vsel %vm131, %v130, 0
    %138 = vmatprep.subr.bf16.mxu0 0
    %139 = vmatpush1.bf16.xpose.msra.mxu0 0
    %140 = vmatprep.subr.bf16.mxu0 0
    %141 = vmatpush1.bf16.xpose.msra.mxu0 0
    %142 = vmatprep.subr.bf16.mxu0 0
    %143 = vmatpush1.bf16.xpose.msra.mxu0 0
    %144 = vmatprep.subr.bf16.mxu0 0
    %145 = vmatpush1.bf16.xpose.msra.mxu0 0
    %146 = vmatprep.subr.bf16.mxu0 0
    %147 = vmatpush1.bf16.xpose.msra.mxu0 0
    %148 = vmatprep.subr.bf16.mxu0 0
    %149 = vmatpush1.bf16.xpose.msra.mxu0 0
    %150 = vmatprep.subr.bf16.mxu0 0
    %151 = vmatpush1.bf16.xpose.msra.mxu0 0
    %152 = vmatprep.subr.bf16.mxu0 0
    %153 = vmatpush1.bf16.xpose.msra.mxu0 %v136
    %154 = vmatprep.subr.bf16.mxu0 0
    %155 = vmatpush2.bf16.xpose.msra.mxu0 0
    %156 = vmatprep.subr.bf16.mxu0 0
    %157 = vmatpush2.bf16.xpose.msra.mxu0 0
    %158 = vmatprep.subr.bf16.mxu0 0
    %159 = vmatpush2.bf16.xpose.msra.mxu0 0
    %160 = vmatprep.subr.bf16.mxu0 0
    %161 = vmatpush2.bf16.xpose.msra.mxu0 0
    %162 = vmatprep.subr.bf16.mxu0 0
    %163 = vmatpush2.bf16.xpose.msra.mxu0 0
    %164 = vmatprep.subr.bf16.mxu0 0
    %165 = vmatpush2.bf16.xpose.msra.mxu0 0
    %166 = vmatprep.subr.bf16.mxu0 0
    %167 = vmatpush2.bf16.xpose.msra.mxu0 0
    %168 = vmatprep.subr.bf16.mxu0 0
    %169 = vmatpush2.bf16.xpose.msra.mxu0 0
    %170 = vmatprep.mubr.bf16.mxu0 0
    %171 = vmatmul.mubr.bf16.gmra.mxu0 %v133
    %v172 = vpop.f32.mrf.mxu0
    %v173 = vadd.f32 %v40, %v172
    %v174 = vpop.f32.mrf.mxu0
    %v175 = vpop.f32.mrf.mxu0
    %v176 = vadd.f32 %v41, %v175
    %v177 = vpop.f32.mrf.mxu0
    %178 = vdwg.mxu0
    %179 = vrot.lane.b32.xlu0 %v124, 96
    %v180 = vpop.permute.xlu0 %179
    %v182 = vsel %vm131, %v124, 0
    %v185 = vsel %vm131, %v180, 0
    %187 = vmatprep.subr.bf16.mxu0 0
    %188 = vmatpush1.bf16.xpose.msra.mxu0 0
    %189 = vmatprep.subr.bf16.mxu0 0
    %190 = vmatpush1.bf16.xpose.msra.mxu0 0
    %191 = vmatprep.subr.bf16.mxu0 0
    %192 = vmatpush1.bf16.xpose.msra.mxu0 0
    %193 = vmatprep.subr.bf16.mxu0 0
    %194 = vmatpush1.bf16.xpose.msra.mxu0 0
    %195 = vmatprep.subr.bf16.mxu0 0
    %196 = vmatpush1.bf16.xpose.msra.mxu0 0
    %197 = vmatprep.subr.bf16.mxu0 0
    %198 = vmatpush1.bf16.xpose.msra.mxu0 0
    %199 = vmatprep.subr.bf16.mxu0 0
    %200 = vmatpush1.bf16.xpose.msra.mxu0 0
    %201 = vmatprep.subr.bf16.mxu0 0
    %202 = vmatpush1.bf16.xpose.msra.mxu0 %v185
    %203 = vmatprep.subr.bf16.mxu0 0
    %204 = vmatpush2.bf16.xpose.msra.mxu0 0
    %205 = vmatprep.subr.bf16.mxu0 0
    %206 = vmatpush2.bf16.xpose.msra.mxu0 0
    %207 = vmatprep.subr.bf16.mxu0 0
    %208 = vmatpush2.bf16.xpose.msra.mxu0 0
    %209 = vmatprep.subr.bf16.mxu0 0
    %210 = vmatpush2.bf16.xpose.msra.mxu0 0
    %211 = vmatprep.subr.bf16.mxu0 0
    %212 = vmatpush2.bf16.xpose.msra.mxu0 0
    %213 = vmatprep.subr.bf16.mxu0 0
    %214 = vmatpush2.bf16.xpose.msra.mxu0 0
    %215 = vmatprep.subr.bf16.mxu0 0
    %216 = vmatpush2.bf16.xpose.msra.mxu0 0
    %217 = vmatprep.subr.bf16.mxu0 0
    %218 = vmatpush2.bf16.xpose.msra.mxu0 0
    %219 = vmatprep.mubr.bf16.mxu0 0
    %220 = vmatmul.mubr.bf16.gmra.mxu0 %v182
    %v221 = vpop.f32.mrf.mxu0
    %v222 = vadd.f32 %v40, %v221
    %v223 = vpop.f32.mrf.mxu0
    %v224 = vpop.f32.mrf.mxu0
    %v225 = vadd.f32 %v41, %v224
    %v226 = vpop.f32.mrf.mxu0
    %227 = vdwg.mxu0
    %228 = vrot.lane.b32.xlu0 %v126, 96
    %v229 = vpop.permute.xlu0 %228
    %v231 = vsel %vm131, %v126, 0
    %v234 = vsel %vm131, %v229, 0
    %236 = vmatprep.subr.bf16.mxu0 0
    %237 = vmatpush1.bf16.xpose.msra.mxu0 0
    %238 = vmatprep.subr.bf16.mxu0 0
    %239 = vmatpush1.bf16.xpose.msra.mxu0 0
    %240 = vmatprep.subr.bf16.mxu0 0
    %241 = vmatpush1.bf16.xpose.msra.mxu0 0
    %242 = vmatprep.subr.bf16.mxu0 0
    %243 = vmatpush1.bf16.xpose.msra.mxu0 0
    %244 = vmatprep.subr.bf16.mxu0 0
    %245 = vmatpush1.bf16.xpose.msra.mxu0 0
    %246 = vmatprep.subr.bf16.mxu0 0
    %247 = vmatpush1.bf16.xpose.msra.mxu0 0
    %248 = vmatprep.subr.bf16.mxu0 0
    %249 = vmatpush1.bf16.xpose.msra.mxu0 0
    %250 = vmatprep.subr.bf16.mxu0 0
    %251 = vmatpush1.bf16.xpose.msra.mxu0 %v234
    %252 = vmatprep.subr.bf16.mxu0 0
    %253 = vmatpush2.bf16.xpose.msra.mxu0 0
    %254 = vmatprep.subr.bf16.mxu0 0
    %255 = vmatpush2.bf16.xpose.msra.mxu0 0
    %256 = vmatprep.subr.bf16.mxu0 0
    %257 = vmatpush2.bf16.xpose.msra.mxu0 0
    %258 = vmatprep.subr.bf16.mxu0 0
    %259 = vmatpush2.bf16.xpose.msra.mxu0 0
    %260 = vmatprep.subr.bf16.mxu0 0
    %261 = vmatpush2.bf16.xpose.msra.mxu0 0
    %262 = vmatprep.subr.bf16.mxu0 0
    %263 = vmatpush2.bf16.xpose.msra.mxu0 0
    %264 = vmatprep.subr.bf16.mxu0 0
    %265 = vmatpush2.bf16.xpose.msra.mxu0 0
    %266 = vmatprep.subr.bf16.mxu0 0
    %267 = vmatpush2.bf16.xpose.msra.mxu0 0
    %268 = vmatprep.mubr.bf16.mxu0 0
    %269 = vmatmul.mubr.bf16.gmra.mxu0 %v231
    %v270 = vpop.f32.mrf.mxu0
    %v271 = vadd.f32 %v40, %v270
    %v272 = vpop.f32.mrf.mxu0
    %v273 = vpop.f32.mrf.mxu0
    %v274 = vadd.f32 %v41, %v273
    %v275 = vpop.f32.mrf.mxu0
    %276 = vdwg.mxu0
    %277 = vrot.lane.b32.xlu0 %v128, 96
    %v278 = vpop.permute.xlu0 %277
    %v280 = vsel %vm131, %v128, 0
    %v283 = vsel %vm131, %v278, 0
    %285 = vmatprep.subr.bf16.mxu0 0
    %286 = vmatpush1.bf16.xpose.msra.mxu0 0
    %287 = vmatprep.subr.bf16.mxu0 0
    %288 = vmatpush1.bf16.xpose.msra.mxu0 0
    %289 = vmatprep.subr.bf16.mxu0 0
    %290 = vmatpush1.bf16.xpose.msra.mxu0 0
    %291 = vmatprep.subr.bf16.mxu0 0
    %292 = vmatpush1.bf16.xpose.msra.mxu0 0
    %293 = vmatprep.subr.bf16.mxu0 0
    %294 = vmatpush1.bf16.xpose.msra.mxu0 0
    %295 = vmatprep.subr.bf16.mxu0 0
    %296 = vmatpush1.bf16.xpose.msra.mxu0 0
    %297 = vmatprep.subr.bf16.mxu0 0
    %298 = vmatpush1.bf16.xpose.msra.mxu0 0
    %299 = vmatprep.subr.bf16.mxu0 0
    %300 = vmatpush1.bf16.xpose.msra.mxu0 %v283
    %301 = vmatprep.subr.bf16.mxu0 0
    %302 = vmatpush2.bf16.xpose.msra.mxu0 0
    %303 = vmatprep.subr.bf16.mxu0 0
    %304 = vmatpush2.bf16.xpose.msra.mxu0 0
    %305 = vmatprep.subr.bf16.mxu0 0
    %306 = vmatpush2.bf16.xpose.msra.mxu0 0
    %307 = vmatprep.subr.bf16.mxu0 0
    %308 = vmatpush2.bf16.xpose.msra.mxu0 0
    %309 = vmatprep.subr.bf16.mxu0 0
    %310 = vmatpush2.bf16.xpose.msra.mxu0 0
    %311 = vmatprep.subr.bf16.mxu0 0
    %312 = vmatpush2.bf16.xpose.msra.mxu0 0
    %313 = vmatprep.subr.bf16.mxu0 0
    %314 = vmatpush2.bf16.xpose.msra.mxu0 0
    %315 = vmatprep.subr.bf16.mxu0 0
    %316 = vmatpush2.bf16.xpose.msra.mxu0 0
    %317 = vmatprep.mubr.bf16.mxu0 0
    %318 = vmatmul.mubr.bf16.gmra.mxu0 %v280
    %v319 = vpop.f32.mrf.mxu0
    %v320 = vadd.f32 %v40, %v319
    %v321 = vpop.f32.mrf.mxu0
    %v322 = vpop.f32.mrf.mxu0
    %v323 = vadd.f32 %v41, %v322
    %v324 = vpop.f32.mrf.mxu0
    %325 = vdwg.mxu0
    %vm326 = vcmask 130048
    %v327 = vsel %vm326, %v173, -inf
    %328 = vmax.xlane.f32.xlu0 %v327
    %v329 = vpop.xlane.xlu0 %328
    %v330 = vsel %vm326, %v176, -inf
    %331 = vmax.xlane.f32.xlu0 %v330
    %v332 = vpop.xlane.xlu0 %331
    %v333 = vsel %vm326, %v222, -inf
    %334 = vmax.xlane.f32.xlu0 %v333
    %v335 = vpop.xlane.xlu0 %334
    %v336 = vsel %vm326, %v225, -inf
    %337 = vmax.xlane.f32.xlu0 %v336
    %v338 = vpop.xlane.xlu0 %337
    %v339 = vsel %vm326, %v271, -inf
    %340 = vmax.xlane.f32.xlu0 %v339
    %v341 = vpop.xlane.xlu0 %340
    %v342 = vsel %vm326, %v274, -inf
    %343 = vmax.xlane.f32.xlu0 %v342
    %v344 = vpop.xlane.xlu0 %343
    %v345 = vsel %vm326, %v320, -inf
    %346 = vmax.xlane.f32.xlu0 %v345
    %v347 = vpop.xlane.xlu0 %346
    %v348 = vsel %vm326, %v323, -inf
    %349 = vmax.xlane.f32.xlu0 %v348
    %v350 = vpop.xlane.xlu0 %349
    %v351 = vsub.f32 %v173, %v329
    %v352 = vsub.f32 %v176, %v332
    %v353 = vsub.f32 %v222, %v335
    %v354 = vsub.f32 %v225, %v338
    %v355 = vsub.f32 %v271, %v341
    %v356 = vsub.f32 %v274, %v344
    %v357 = vsub.f32 %v320, %v347
    %v358 = vsub.f32 %v323, %v350
    %v359 = vmul.f32 %v351, 1.442695
    %v360 = vpow.pop %v359
    %v361 = vmul.f32 %v352, 1.442695
    %v362 = vpow.pop %v361
    %v363 = vmul.f32 %v353, 1.442695
    %v364 = vpow.pop %v363
    %v365 = vmul.f32 %v354, 1.442695
    %v366 = vpow.pop %v365
    %v367 = vmul.f32 %v355, 1.442695
    %v368 = vpow.pop %v367
    %v369 = vmul.f32 %v356, 1.442695
    %v370 = vpow.pop %v369
    %v371 = vmul.f32 %v357, 1.442695
    %v372 = vpow.pop %v371
    %v373 = vmul.f32 %v358, 1.442695
    %v374 = vpow.pop %v373
    %v375 = vsel %vm326, %v360, 0.0
    %376 = vadd.xlane.f32.xlu0 %v375
    %v377 = vpop.xlane.xlu0 %376
    %v378 = vsel %vm326, %v362, 0.0
    %379 = vadd.xlane.f32.xlu0 %v378
    %v380 = vpop.xlane.xlu0 %379
    %v381 = vsel %vm326, %v364, 0.0
    %382 = vadd.xlane.f32.xlu0 %v381
    %v383 = vpop.xlane.xlu0 %382
    %v384 = vsel %vm326, %v366, 0.0
    %385 = vadd.xlane.f32.xlu0 %v384
    %v386 = vpop.xlane.xlu0 %385
    %v387 = vsel %vm326, %v368, 0.0
    %388 = vadd.xlane.f32.xlu0 %v387
    %v389 = vpop.xlane.xlu0 %388
    %v390 = vsel %vm326, %v370, 0.0
    %391 = vadd.xlane.f32.xlu0 %v390
    %v392 = vpop.xlane.xlu0 %391
    %v393 = vsel %vm326, %v372, 0.0
    %394 = vadd.xlane.f32.xlu0 %v393
    %v395 = vpop.xlane.xlu0 %394
    %v396 = vsel %vm326, %v374, 0.0
    %397 = vadd.xlane.f32.xlu0 %v396
    %v398 = vpop.xlane.xlu0 %397
    %v399 = vrcp.pop %v377
    %v400 = vrcp.pop %v380
    %v401 = vrcp.pop %v383
    %v402 = vrcp.pop %v386
    %v403 = vrcp.pop %v389
    %v404 = vrcp.pop %v392
    %v405 = vrcp.pop %v395
    %v406 = vrcp.pop %v398
    %v407 = vmul.f32 %v360, %v399
    %v408 = vmul.f32 %v362, %v400
    %v409 = vmul.f32 %v364, %v401
    %v410 = vmul.f32 %v366, %v402
    %v411 = vmul.f32 %v368, %v403
    %v412 = vmul.f32 %v370, %v404
    %v413 = vmul.f32 %v372, %v405
    %v414 = vmul.f32 %v374, %v406
    %v415 = vpack.c.bf16 %v408, %v407
    %v416 = vpack.c.bf16 %v410, %v409
    %v417 = vpack.c.bf16 %v412, %v411
    %v418 = vpack.c.bf16 %v414, %v413
    %419 = vrot.lane.b32.xlu0 %v121, 64
    %v420 = vpop.permute.xlu0 %419
    %v423 = vsel %vm326, %v415, 0
    %425 = vmatprep.subr.bf16.mxu0 0
    %426 = vmatpush1.bf16.msra.mxu0 0
    %427 = vmatprep.subr.bf16.mxu0 0
    %428 = vmatpush1.bf16.msra.mxu0 0
    %429 = vmatprep.subr.bf16.mxu0 0
    %430 = vmatpush1.bf16.msra.mxu0 0
    %431 = vmatprep.subr.bf16.mxu0 0
    %432 = vmatpush1.bf16.msra.mxu0 0
    %433 = vmatprep.subr.bf16.mxu0 0
    %434 = vmatpush1.bf16.msra.mxu0 0
    %435 = vmatprep.subr.bf16.mxu0 0
    %436 = vmatpush1.bf16.msra.mxu0 0
    %437 = vmatprep.subr.bf16.mxu0 0
    %438 = vmatpush1.bf16.msra.mxu0 0
    %439 = vmatprep.subr.bf16.mxu0 0
    %440 = vmatpush1.bf16.msra.mxu0 %v420
    %441 = vmatprep.subr.bf16.mxu0 0
    %442 = vmatpush2.bf16.msra.mxu0 0
    %443 = vmatprep.subr.bf16.mxu0 0
    %444 = vmatpush2.bf16.msra.mxu0 0
    %445 = vmatprep.subr.bf16.mxu0 0
    %446 = vmatpush2.bf16.msra.mxu0 0
    %447 = vmatprep.subr.bf16.mxu0 0
    %448 = vmatpush2.bf16.msra.mxu0 0
    %449 = vmatprep.subr.bf16.mxu0 0
    %450 = vmatpush2.bf16.msra.mxu0 0
    %451 = vmatprep.subr.bf16.mxu0 0
    %452 = vmatpush2.bf16.msra.mxu0 0
    %453 = vmatprep.subr.bf16.mxu0 0
    %454 = vmatpush2.bf16.msra.mxu0 0
    %455 = vmatprep.subr.bf16.mxu0 0
    %456 = vmatpush2.bf16.msra.mxu0 0
    %457 = vmatprep.mubr.bf16.mxu0 0
    %458 = vmatmul.mubr.bf16.gmra.mxu0 %v423
    %v459 = vpop.f32.mrf.mxu0
    %v460 = vadd.f32 0.0, %v459
    %v461 = vpop.f32.mrf.mxu0
    %v462 = vpop.f32.mrf.mxu0
    %v463 = vadd.f32 0.0, %v462
    %v464 = vpop.f32.mrf.mxu0
    %465 = vdwg.mxu0
    %466 = vrot.lane.b32.xlu0 %v124, 64
    %v467 = vpop.permute.xlu0 %466
    %v470 = vsel %vm326, %v416, 0
    %472 = vmatprep.subr.bf16.mxu0 0
    %473 = vmatpush1.bf16.msra.mxu0 0
    %474 = vmatprep.subr.bf16.mxu0 0
    %475 = vmatpush1.bf16.msra.mxu0 0
    %476 = vmatprep.subr.bf16.mxu0 0
    %477 = vmatpush1.bf16.msra.mxu0 0
    %478 = vmatprep.subr.bf16.mxu0 0
    %479 = vmatpush1.bf16.msra.mxu0 0
    %480 = vmatprep.subr.bf16.mxu0 0
    %481 = vmatpush1.bf16.msra.mxu0 0
    %482 = vmatprep.subr.bf16.mxu0 0
    %483 = vmatpush1.bf16.msra.mxu0 0
    %484 = vmatprep.subr.bf16.mxu0 0
    %485 = vmatpush1.bf16.msra.mxu0 0
    %486 = vmatprep.subr.bf16.mxu0 0
    %487 = vmatpush1.bf16.msra.mxu0 %v467
    %488 = vmatprep.subr.bf16.mxu0 0
    %489 = vmatpush2.bf16.msra.mxu0 0
    %490 = vmatprep.subr.bf16.mxu0 0
    %491 = vmatpush2.bf16.msra.mxu0 0
    %492 = vmatprep.subr.bf16.mxu0 0
    %493 = vmatpush2.bf16.msra.mxu0 0
    %494 = vmatprep.subr.bf16.mxu0 0
    %495 = vmatpush2.bf16.msra.mxu0 0
    %496 = vmatprep.subr.bf16.mxu0 0
    %497 = vmatpush2.bf16.msra.mxu0 0
    %498 = vmatprep.subr.bf16.mxu0 0
    %499 = vmatpush2.bf16.msra.mxu0 0
    %500 = vmatprep.subr.bf16.mxu0 0
    %501 = vmatpush2.bf16.msra.mxu0 0
    %502 = vmatprep.subr.bf16.mxu0 0
    %503 = vmatpush2.bf16.msra.mxu0 0
    %504 = vmatprep.mubr.bf16.mxu0 0
    %505 = vmatmul.mubr.bf16.gmra.mxu0 %v470
    %v506 = vpop.f32.mrf.mxu0
    %v507 = vadd.f32 0.0, %v506
    %v508 = vpop.f32.mrf.mxu0
    %v509 = vpop.f32.mrf.mxu0
    %v510 = vadd.f32 0.0, %v509
    %v511 = vpop.f32.mrf.mxu0
    %512 = vdwg.mxu0
    %513 = vrot.lane.b32.xlu0 %v126, 64
    %v514 = vpop.permute.xlu0 %513
    %v517 = vsel %vm326, %v417, 0
    %519 = vmatprep.subr.bf16.mxu0 0
    %520 = vmatpush1.bf16.msra.mxu0 0
    %521 = vmatprep.subr.bf16.mxu0 0
    %522 = vmatpush1.bf16.msra.mxu0 0
    %523 = vmatprep.subr.bf16.mxu0 0
    %524 = vmatpush1.bf16.msra.mxu0 0
    %525 = vmatprep.subr.bf16.mxu0 0
    %526 = vmatpush1.bf16.msra.mxu0 0
    %527 = vmatprep.subr.bf16.mxu0 0
    %528 = vmatpush1.bf16.msra.mxu0 0
    %529 = vmatprep.subr.bf16.mxu0 0
    %530 = vmatpush1.bf16.msra.mxu0 0
    %531 = vmatprep.subr.bf16.mxu0 0
    %532 = vmatpush1.bf16.msra.mxu0 0
    %533 = vmatprep.subr.bf16.mxu0 0
    %534 = vmatpush1.bf16.msra.mxu0 %v514
    %535 = vmatprep.subr.bf16.mxu0 0
    %536 = vmatpush2.bf16.msra.mxu0 0
    %537 = vmatprep.subr.bf16.mxu0 0
    %538 = vmatpush2.bf16.msra.mxu0 0
    %539 = vmatprep.subr.bf16.mxu0 0
    %540 = vmatpush2.bf16.msra.mxu0 0
    %541 = vmatprep.subr.bf16.mxu0 0
    %542 = vmatpush2.bf16.msra.mxu0 0
    %543 = vmatprep.subr.bf16.mxu0 0
    %544 = vmatpush2.bf16.msra.mxu0 0
    %545 = vmatprep.subr.bf16.mxu0 0
    %546 = vmatpush2.bf16.msra.mxu0 0
    %547 = vmatprep.subr.bf16.mxu0 0
    %548 = vmatpush2.bf16.msra.mxu0 0
    %549 = vmatprep.subr.bf16.mxu0 0
    %550 = vmatpush2.bf16.msra.mxu0 0
    %551 = vmatprep.mubr.bf16.mxu0 0
    %552 = vmatmul.mubr.bf16.gmra.mxu0 %v517
    %v553 = vpop.f32.mrf.mxu0
    %v554 = vadd.f32 0.0, %v553
    %v555 = vpop.f32.mrf.mxu0
    %v556 = vpop.f32.mrf.mxu0
    %v557 = vadd.f32 0.0, %v556
    %v558 = vpop.f32.mrf.mxu0
    %559 = vdwg.mxu0
    %560 = vrot.lane.b32.xlu0 %v128, 64
    %v561 = vpop.permute.xlu0 %560
    %v564 = vsel %vm326, %v418, 0
    %566 = vmatprep.subr.bf16.mxu0 0
    %567 = vmatpush1.bf16.msra.mxu0 0
    %568 = vmatprep.subr.bf16.mxu0 0
    %569 = vmatpush1.bf16.msra.mxu0 0
    %570 = vmatprep.subr.bf16.mxu0 0
    %571 = vmatpush1.bf16.msra.mxu0 0
    %572 = vmatprep.subr.bf16.mxu0 0
    %573 = vmatpush1.bf16.msra.mxu0 0
    %574 = vmatprep.subr.bf16.mxu0 0
    %575 = vmatpush1.bf16.msra.mxu0 0
    %576 = vmatprep.subr.bf16.mxu0 0
    %577 = vmatpush1.bf16.msra.mxu0 0
    %578 = vmatprep.subr.bf16.mxu0 0
    %579 = vmatpush1.bf16.msra.mxu0 0
    %580 = vmatprep.subr.bf16.mxu0 0
    %581 = vmatpush1.bf16.msra.mxu0 %v561
    %582 = vmatprep.subr.bf16.mxu0 0
    %583 = vmatpush2.bf16.msra.mxu0 0
    %584 = vmatprep.subr.bf16.mxu0 0
    %585 = vmatpush2.bf16.msra.mxu0 0
    %586 = vmatprep.subr.bf16.mxu0 0
    %587 = vmatpush2.bf16.msra.mxu0 0
    %588 = vmatprep.subr.bf16.mxu0 0
    %589 = vmatpush2.bf16.msra.mxu0 0
    %590 = vmatprep.subr.bf16.mxu0 0
    %591 = vmatpush2.bf16.msra.mxu0 0
    %592 = vmatprep.subr.bf16.mxu0 0
    %593 = vmatpush2.bf16.msra.mxu0 0
    %594 = vmatprep.subr.bf16.mxu0 0
    %595 = vmatpush2.bf16.msra.mxu0 0
    %596 = vmatprep.subr.bf16.mxu0 0
    %597 = vmatpush2.bf16.msra.mxu0 0
    %598 = vmatprep.mubr.bf16.mxu0 0
    %599 = vmatmul.mubr.bf16.gmra.mxu0 %v564
    %v600 = vpop.f32.mrf.mxu0
    %v601 = vadd.f32 0.0, %v600
    %v602 = vpop.f32.mrf.mxu0
    %v603 = vpop.f32.mrf.mxu0
    %v604 = vadd.f32 0.0, %v603
    %v605 = vpop.f32.mrf.mxu0
    %606 = vdwg.mxu0
    %v607 = vpack.c.bf16 %v463, %v460
    %v608 = vpack.c.bf16 %v510, %v507
    %v609 = vpack.c.bf16 %v557, %v554
    %v610 = vpack.c.bf16 %v604, %v601
    %v612 = vsel %vm131, %v607, 0
    %vm614 = vcmask 1043456
    %v616 = vsel %vm614, %v117, 0
    %618 = vmatprep.subr.bf16.mxu0 0
    %619 = vmatpush1.bf16.msra.mxu0 0
    %620 = vmatprep.subr.bf16.mxu0 0
    %621 = vmatpush1.bf16.msra.mxu0 0
    %622 = vmatprep.subr.bf16.mxu0 0
    %623 = vmatpush1.bf16.msra.mxu0 0
    %624 = vmatprep.subr.bf16.mxu0 0
    %625 = vmatpush1.bf16.msra.mxu0 0
    %626 = vmatprep.subr.bf16.mxu0 0
    %627 = vmatpush1.bf16.msra.mxu0 0
    %628 = vmatprep.subr.bf16.mxu0 0
    %629 = vmatpush1.bf16.msra.mxu0 0
    %630 = vmatprep.subr.bf16.mxu0 0
    %631 = vmatpush1.bf16.msra.mxu0 0
    %632 = vmatprep.subr.bf16.mxu0 0
    %633 = vmatpush1.bf16.msra.mxu0 %v616
    %634 = vmatprep.subr.bf16.mxu0 0
    %635 = vmatpush2.bf16.msra.mxu0 0
    %636 = vmatprep.subr.bf16.mxu0 0
    %637 = vmatpush2.bf16.msra.mxu0 0
    %638 = vmatprep.subr.bf16.mxu0 0
    %639 = vmatpush2.bf16.msra.mxu0 0
    %640 = vmatprep.subr.bf16.mxu0 0
    %641 = vmatpush2.bf16.msra.mxu0 0
    %642 = vmatprep.subr.bf16.mxu0 0
    %643 = vmatpush2.bf16.msra.mxu0 0
    %644 = vmatprep.subr.bf16.mxu0 0
    %645 = vmatpush2.bf16.msra.mxu0 0
    %646 = vmatprep.subr.bf16.mxu0 0
    %647 = vmatpush2.bf16.msra.mxu0 0
    %648 = vmatprep.subr.bf16.mxu0 0
    %649 = vmatpush2.bf16.msra.mxu0 0
    %650 = vmatprep.mubr.bf16.mxu0 0
    %651 = vmatmul.mubr.bf16.gmra.mxu0 %v612
    %v652 = vpop.f32.mrf.mxu0
    %v653 = vadd.f32 0.0, %v652
    %v654 = vpop.f32.mrf.mxu0
    %v655 = vpop.f32.mrf.mxu0
    %v656 = vadd.f32 0.0, %v655
    %v657 = vpop.f32.mrf.mxu0
    %658 = vdwg.mxu0
    %v660 = vsel %vm131, %v608, 0
    %v663 = vsel %vm614, %v118, 0
    %665 = vmatprep.subr.bf16.mxu0 0
    %666 = vmatpush1.bf16.msra.mxu0 0
    %667 = vmatprep.subr.bf16.mxu0 0
    %668 = vmatpush1.bf16.msra.mxu0 0
    %669 = vmatprep.subr.bf16.mxu0 0
    %670 = vmatpush1.bf16.msra.mxu0 0
    %671 = vmatprep.subr.bf16.mxu0 0
    %672 = vmatpush1.bf16.msra.mxu0 0
    %673 = vmatprep.subr.bf16.mxu0 0
    %674 = vmatpush1.bf16.msra.mxu0 0
    %675 = vmatprep.subr.bf16.mxu0 0
    %676 = vmatpush1.bf16.msra.mxu0 0
    %677 = vmatprep.subr.bf16.mxu0 0
    %678 = vmatpush1.bf16.msra.mxu0 0
    %679 = vmatprep.subr.bf16.mxu0 0
    %680 = vmatpush1.bf16.msra.mxu0 %v663
    %681 = vmatprep.subr.bf16.mxu0 0
    %682 = vmatpush2.bf16.msra.mxu0 0
    %683 = vmatprep.subr.bf16.mxu0 0
    %684 = vmatpush2.bf16.msra.mxu0 0
    %685 = vmatprep.subr.bf16.mxu0 0
    %686 = vmatpush2.bf16.msra.mxu0 0
    %687 = vmatprep.subr.bf16.mxu0 0
    %688 = vmatpush2.bf16.msra.mxu0 0
    %689 = vmatprep.subr.bf16.mxu0 0
    %690 = vmatpush2.bf16.msra.mxu0 0
    %691 = vmatprep.subr.bf16.mxu0 0
    %692 = vmatpush2.bf16.msra.mxu0 0
    %693 = vmatprep.subr.bf16.mxu0 0
    %694 = vmatpush2.bf16.msra.mxu0 0
    %695 = vmatprep.subr.bf16.mxu0 0
    %696 = vmatpush2.bf16.msra.mxu0 0
    %697 = vmatprep.mubr.bf16.mxu0 0
    %698 = vmatmul.mubr.bf16.gmra.mxu0 %v660
    %v699 = vpop.f32.mrf.mxu0
    %v700 = vadd.f32 0.0, %v699
    %v701 = vpop.f32.mrf.mxu0
    %v702 = vpop.f32.mrf.mxu0
    %v703 = vadd.f32 0.0, %v702
    %v704 = vpop.f32.mrf.mxu0
    %705 = vdwg.mxu0
    %v707 = vsel %vm131, %v609, 0
    %v710 = vsel %vm614, %v119, 0
    %712 = vmatprep.subr.bf16.mxu0 0
    %713 = vmatpush1.bf16.msra.mxu0 0
    %714 = vmatprep.subr.bf16.mxu0 0
    %715 = vmatpush1.bf16.msra.mxu0 0
    %716 = vmatprep.subr.bf16.mxu0 0
    %717 = vmatpush1.bf16.msra.mxu0 0
    %718 = vmatprep.subr.bf16.mxu0 0
    %719 = vmatpush1.bf16.msra.mxu0 0
    %720 = vmatprep.subr.bf16.mxu0 0
    %721 = vmatpush1.bf16.msra.mxu0 0
    %722 = vmatprep.subr.bf16.mxu0 0
    %723 = vmatpush1.bf16.msra.mxu0 0
    %724 = vmatprep.subr.bf16.mxu0 0
    %725 = vmatpush1.bf16.msra.mxu0 0
    %726 = vmatprep.subr.bf16.mxu0 0
    %727 = vmatpush1.bf16.msra.mxu0 %v710
    %728 = vmatprep.subr.bf16.mxu0 0
    %729 = vmatpush2.bf16.msra.mxu0 0
    %730 = vmatprep.subr.bf16.mxu0 0
    %731 = vmatpush2.bf16.msra.mxu0 0
    %732 = vmatprep.subr.bf16.mxu0 0
    %733 = vmatpush2.bf16.msra.mxu0 0
    %734 = vmatprep.subr.bf16.mxu0 0
    %735 = vmatpush2.bf16.msra.mxu0 0
    %736 = vmatprep.subr.bf16.mxu0 0
    %737 = vmatpush2.bf16.msra.mxu0 0
    %738 = vmatprep.subr.bf16.mxu0 0
    %739 = vmatpush2.bf16.msra.mxu0 0
    %740 = vmatprep.subr.bf16.mxu0 0
    %741 = vmatpush2.bf16.msra.mxu0 0
    %742 = vmatprep.subr.bf16.mxu0 0
    %743 = vmatpush2.bf16.msra.mxu0 0
    %744 = vmatprep.mubr.bf16.mxu0 0
    %745 = vmatmul.mubr.bf16.gmra.mxu0 %v707
    %v746 = vpop.f32.mrf.mxu0
    %v747 = vadd.f32 0.0, %v746
    %v748 = vpop.f32.mrf.mxu0
    %v749 = vpop.f32.mrf.mxu0
    %v750 = vadd.f32 0.0, %v749
    %v751 = vpop.f32.mrf.mxu0
    %752 = vdwg.mxu0
    %v754 = vsel %vm131, %v610, 0
    %v757 = vsel %vm614, %v120, 0
    %759 = vmatprep.subr.bf16.mxu0 0
    %760 = vmatpush1.bf16.msra.mxu0 0
    %761 = vmatprep.subr.bf16.mxu0 0
    %762 = vmatpush1.bf16.msra.mxu0 0
    %763 = vmatprep.subr.bf16.mxu0 0
    %764 = vmatpush1.bf16.msra.mxu0 0
    %765 = vmatprep.subr.bf16.mxu0 0
    %766 = vmatpush1.bf16.msra.mxu0 0
    %767 = vmatprep.subr.bf16.mxu0 0
    %768 = vmatpush1.bf16.msra.mxu0 0
    %769 = vmatprep.subr.bf16.mxu0 0
    %770 = vmatpush1.bf16.msra.mxu0 0
    %771 = vmatprep.subr.bf16.mxu0 0
    %772 = vmatpush1.bf16.msra.mxu0 0
    %773 = vmatprep.subr.bf16.mxu0 0
    %774 = vmatpush1.bf16.msra.mxu0 %v757
    %775 = vmatprep.subr.bf16.mxu0 0
    %776 = vmatpush2.bf16.msra.mxu0 0
    %777 = vmatprep.subr.bf16.mxu0 0
    %778 = vmatpush2.bf16.msra.mxu0 0
    %779 = vmatprep.subr.bf16.mxu0 0
    %780 = vmatpush2.bf16.msra.mxu0 0
    %781 = vmatprep.subr.bf16.mxu0 0
    %782 = vmatpush2.bf16.msra.mxu0 0
    %783 = vmatprep.subr.bf16.mxu0 0
    %784 = vmatpush2.bf16.msra.mxu0 0
    %785 = vmatprep.subr.bf16.mxu0 0
    %786 = vmatpush2.bf16.msra.mxu0 0
    %787 = vmatprep.subr.bf16.mxu0 0
    %788 = vmatpush2.bf16.msra.mxu0 0
    %789 = vmatprep.subr.bf16.mxu0 0
    %790 = vmatpush2.bf16.msra.mxu0 0
    %791 = vmatprep.mubr.bf16.mxu0 0
    %792 = vmatmul.mubr.bf16.gmra.mxu0 %v754
    %v793 = vpop.f32.mrf.mxu0
    %v794 = vadd.f32 0.0, %v793
    %v795 = vpop.f32.mrf.mxu0
    %v796 = vpop.f32.mrf.mxu0
    %v797 = vadd.f32 0.0, %v796
    %v798 = vpop.f32.mrf.mxu0
    %799 = vdwg.mxu0
    %v800 = vsel %vm72, %v653, 0.0
    %v801 = vsel %vm72, %v700, 0.0
    %v802 = vadd.f32 %v800, %v801
    %v803 = vsel %vm72, %v747, 0.0
    %v804 = vadd.f32 %v802, %v803
    %v805 = vsel %vm72, %v794, 0.0
    %v806 = vadd.f32 %v804, %v805
    %v807 = vsel %vm72, %v656, 0.0
    %v808 = vsel %vm72, %v703, 0.0
    %v809 = vadd.f32 %v807, %v808
    %v810 = vsel %vm72, %v750, 0.0
    %v811 = vadd.f32 %v809, %v810
    %v812 = vsel %vm72, %v797, 0.0
    %v813 = vadd.f32 %v811, %v812
    %814 = vrot.lane.b32.xlu0 %v58, 32
    %v815 = vpop.permute.xlu0 %814
    %v817 = vadd.f32 %v806, %v815
    %v818 = vadd.f32 %v813, %v815
    %v819 = vadd.f32 %v46, %v817
    %v820 = vadd.f32 %v47, %v818
    %v821 = vld [vmem:[%s9 + $0x1] sm:$0x1]
    %v822 = vsel %vm72, %v819, 0.0
    %823 = vadd.xlane.f32.xlu0 %v822
    %v824 = vpop.xlane.xlu0 %823
    %v825 = vsel %vm72, %v820, 0.0
    %826 = vadd.xlane.f32.xlu0 %v825
    %v827 = vpop.xlane.xlu0 %826
    %v828 = vrcp.pop 32.0
    %v829 = vmul.f32 %v824, %v828
    %v830 = vmul.f32 %v827, %v828
    %v831 = vsub.f32 %v819, %v829
    %v832 = vsub.f32 %v820, %v830
    %v833 = vmul.f32 %v831, %v831
    %v834 = vmul.f32 %v832, %v832
    %v835 = vsel %vm72, %v833, 0.0
    %836 = vadd.xlane.f32.xlu0 %v835
    %v837 = vpop.xlane.xlu0 %836
    %v838 = vsel %vm72, %v834, 0.0
    %839 = vadd.xlane.f32.xlu0 %v838
    %v840 = vpop.xlane.xlu0 %839
    %v841 = vmul.f32 %v837, %v828
    %v842 = vmul.f32 %v840, %v828
    %v843 = vadd.f32 %v841, 1e-05
    %v844 = vadd.f32 %v842, 1e-05
    %v845 = vrsqrt.pop %v843
    %v846 = vrsqrt.pop %v844
    %v847 = vmul.f32 %v831, %v845
    %v848 = vmul.f32 %v832, %v846
    %v850 = vlaneseq
    %v851 = vshrl.u32 %v850, 7
    %v852 = vsub.s32 0, %v851
    %v853 = vrot.slane %v821, %v852
    %v855 = vmul.f32 %v847, %v853
    %v856 = vmul.f32 %v848, %v853
    %857 = vrot.lane.b32.xlu0 %v853, 96
    %v858 = vpop.permute.xlu0 %857
    %v860 = vadd.f32 %v855, %v858
    %v861 = vadd.f32 %v856, %v858
    %v862 = vld [vmem:[%s5] sm:$0xff]
    %v863 = vld [vmem:[%s5 + $0x10] sm:$0xff]
    %v864 = vld [vmem:[%s5 + $0x20] sm:$0xff]
    %v865 = vld [vmem:[%s5 + $0x30] sm:$0xff]
    %v866 = vpack.c.bf16 %v861, %v860
    %v871 = vunpack.c.l.b16 %v862
    %v872 = vunpack.c.h.b16 %v862
    %v873 = vunpack.c.l.b16 %v863
    %v874 = vunpack.c.h.b16 %v863
    %v875 = vunpack.c.l.b16 %v864
    %v876 = vunpack.c.h.b16 %v864
    %v877 = vunpack.c.l.b16 %v865
    %v878 = vunpack.c.h.b16 %v865
    %v879 = vpack.c.b16 %v873, %v871
    %v880 = vpack.c.b16 %v874, %v872
    %v881 = vpack.c.b16 %v877, %v875
    %v882 = vpack.c.b16 %v878, %v876
    %883 = vrot.lane.b32.xlu0 %v879, 32
    %v884 = vpop.permute.xlu0 %883
    %885 = vrot.lane.b32.xlu0 %v880, 32
    %v886 = vpop.permute.xlu0 %885
    %887 = vrot.lane.b32.xlu0 %v881, 32
    %v888 = vpop.permute.xlu0 %887
    %889 = vrot.lane.b32.xlu0 %v882, 32
    %v890 = vpop.permute.xlu0 %889
    %vm891 = vcmask 261120
    %v892 = vsel %vm891, %v884, %v886
    %v893 = vsel %vm891, %v888, %v890
    %896 = vrot.lane.b32.xlu0 %v853, 64
    %v897 = vpop.permute.xlu0 %896
    %v900 = vsel %vm72, %v866, 0
    %902 = vmatprep.subr.bf16.mxu0 0
    %903 = vmatpush1.bf16.msra.mxu0 0
    %904 = vmatprep.subr.bf16.mxu0 0
    %905 = vmatpush1.bf16.msra.mxu0 0
    %906 = vmatprep.subr.bf16.mxu0 0
    %907 = vmatpush1.bf16.msra.mxu0 0
    %908 = vmatprep.subr.bf16.mxu0 0
    %909 = vmatpush1.bf16.msra.mxu0 0
    %910 = vmatprep.subr.bf16.mxu0 0
    %911 = vmatpush1.bf16.msra.mxu0 0
    %912 = vmatprep.subr.bf16.mxu0 0
    %913 = vmatpush1.bf16.msra.mxu0 0
    %914 = vmatprep.subr.bf16.mxu0 0
    %915 = vmatpush1.bf16.msra.mxu0 %v893
    %916 = vmatprep.subr.bf16.mxu0 0
    %917 = vmatpush1.bf16.msra.mxu0 %v892
    %918 = vmatprep.subr.bf16.mxu0 0
    %919 = vmatpush2.bf16.msra.mxu0 0
    %920 = vmatprep.subr.bf16.mxu0 0
    %921 = vmatpush2.bf16.msra.mxu0 0
    %922 = vmatprep.subr.bf16.mxu0 0
    %923 = vmatpush2.bf16.msra.mxu0 0
    %924 = vmatprep.subr.bf16.mxu0 0
    %925 = vmatpush2.bf16.msra.mxu0 0
    %926 = vmatprep.subr.bf16.mxu0 0
    %927 = vmatpush2.bf16.msra.mxu0 0
    %928 = vmatprep.subr.bf16.mxu0 0
    %929 = vmatpush2.bf16.msra.mxu0 0
    %930 = vmatprep.subr.bf16.mxu0 0
    %931 = vmatpush2.bf16.msra.mxu0 0
    %932 = vmatprep.subr.bf16.mxu0 0
    %933 = vmatpush2.bf16.msra.mxu0 0
    %934 = vmatprep.mubr.bf16.mxu0 0
    %935 = vmatmul.mubr.bf16.gmra.mxu0 %v900
    %v936 = vpop.f32.mrf.mxu0
    %v937 = vadd.f32 %v897, %v936
    %v938 = vpop.f32.mrf.mxu0
    %v939 = vpop.f32.mrf.mxu0
    %v940 = vadd.f32 %v897, %v939
    %v941 = vpop.f32.mrf.mxu0
    %942 = vdwg.mxu0
    %v943 = vmax.f32 %v937, 0.0
    %v944 = vmax.f32 %v940, 0.0
    %v945 = vld [vmem:[%s6] sm:$0xf]
    %v946 = vld [vmem:[%s6 + $0x4] sm:$0xf]
    %v947 = vld [vmem:[%s6 + $0x8] sm:$0xf]
    %v948 = vld [vmem:[%s6 + $0xc] sm:$0xf]
    %v949 = vld [vmem:[%s6 + $0x10] sm:$0xf]
    %v950 = vld [vmem:[%s6 + $0x14] sm:$0xf]
    %v951 = vld [vmem:[%s6 + $0x18] sm:$0xf]
    %v952 = vld [vmem:[%s6 + $0x1c] sm:$0xf]
    %v953 = vld [vmem:[%s9 + $0x2] sm:$0x1]
    %v954 = vpack.c.bf16 %v944, %v943
    %v956 = vlaneseq
    %v957 = vshrl.u32 %v956, 7
    %v958 = vsub.s32 0, %v957
    %v959 = vrot.slane %v953, %v958
    %v969 = vunpack.c.l.b16 %v945
    %v970 = vunpack.c.l.b16 %v946
    %v971 = vunpack.c.l.b16 %v947
    %v972 = vunpack.c.l.b16 %v948
    %v973 = vunpack.c.l.b16 %v949
    %v974 = vunpack.c.l.b16 %v950
    %v975 = vunpack.c.l.b16 %v951
    %v976 = vunpack.c.l.b16 %v952
    %v977 = vpack.c.b16 %v970, %v969
    %v978 = vpack.c.b16 %v972, %v971
    %v979 = vpack.c.b16 %v974, %v973
    %v980 = vpack.c.b16 %v976, %v975
    %vm985 = vcmask 523264
    %v987 = vsel %vm985, %v954, 0
    %989 = vmatprep.subr.bf16.mxu0 0
    %990 = vmatpush1.bf16.msra.mxu0 0
    %991 = vmatprep.subr.bf16.mxu0 0
    %992 = vmatpush1.bf16.msra.mxu0 0
    %993 = vmatprep.subr.bf16.mxu0 0
    %994 = vmatpush1.bf16.msra.mxu0 0
    %995 = vmatprep.subr.bf16.mxu0 0
    %996 = vmatpush1.bf16.msra.mxu0 0
    %997 = vmatprep.subr.bf16.mxu0 0
    %998 = vmatpush1.bf16.msra.mxu0 %v980
    %999 = vmatprep.subr.bf16.mxu0 0
    %1000 = vmatpush1.bf16.msra.mxu0 %v979
    %1001 = vmatprep.subr.bf16.mxu0 0
    %1002 = vmatpush1.bf16.msra.mxu0 %v978
    %1003 = vmatprep.subr.bf16.mxu0 0
    %1004 = vmatpush1.bf16.msra.mxu0 %v977
    %1005 = vmatprep.subr.bf16.mxu0 0
    %1006 = vmatpush2.bf16.msra.mxu0 0
    %1007 = vmatprep.subr.bf16.mxu0 0
    %1008 = vmatpush2.bf16.msra.mxu0 0
    %1009 = vmatprep.subr.bf16.mxu0 0
    %1010 = vmatpush2.bf16.msra.mxu0 0
    %1011 = vmatprep.subr.bf16.mxu0 0
    %1012 = vmatpush2.bf16.msra.mxu0 0
    %1013 = vmatprep.subr.bf16.mxu0 0
    %1014 = vmatpush2.bf16.msra.mxu0 0
    %1015 = vmatprep.subr.bf16.mxu0 0
    %1016 = vmatpush2.bf16.msra.mxu0 0
    %1017 = vmatprep.subr.bf16.mxu0 0
    %1018 = vmatpush2.bf16.msra.mxu0 0
    %1019 = vmatprep.subr.bf16.mxu0 0
    %1020 = vmatpush2.bf16.msra.mxu0 0
    %1021 = vmatprep.mubr.bf16.mxu0 0
    %1022 = vmatmul.mubr.bf16.gmra.mxu0 %v987
    %v1023 = vpop.f32.mrf.mxu0
    %v1024 = vadd.f32 %v959, %v1023
    %v1025 = vpop.f32.mrf.mxu0
    %v1026 = vpop.f32.mrf.mxu0
    %v1027 = vadd.f32 %v959, %v1026
    %v1028 = vpop.f32.mrf.mxu0
    %1029 = vdwg.mxu0
    %v1030 = vadd.f32 %v860, %v1024
    %v1031 = vadd.f32 %v861, %v1027
    %v1032 = vsel %vm72, %v1030, 0.0
    %1033 = vadd.xlane.f32.xlu0 %v1032
    %v1034 = vpop.xlane.xlu0 %1033
    %v1035 = vsel %vm72, %v1031, 0.0
    %1036 = vadd.xlane.f32.xlu0 %v1035
    %v1037 = vpop.xlane.xlu0 %1036
    %v1038 = vmul.f32 %v1034, %v828
    %v1039 = vmul.f32 %v1037, %v828
    %v1040 = vsub.f32 %v1030, %v1038
    %v1041 = vsub.f32 %v1031, %v1039
    %v1042 = vmul.f32 %v1040, %v1040
    %v1043 = vmul.f32 %v1041, %v1041
    %v1044 = vsel %vm72, %v1042, 0.0
    %1045 = vadd.xlane.f32.xlu0 %v1044
    %v1046 = vpop.xlane.xlu0 %1045
    %v1047 = vsel %vm72, %v1043, 0.0
    %1048 = vadd.xlane.f32.xlu0 %v1047
    %v1049 = vpop.xlane.xlu0 %1048
    %v1050 = vmul.f32 %v1046, %v828
    %v1051 = vmul.f32 %v1049, %v828
    %v1052 = vadd.f32 %v1050, 1e-05
    %v1053 = vadd.f32 %v1051, 1e-05
    %v1054 = vrsqrt.pop %v1052
    %v1055 = vrsqrt.pop %v1053
    %v1056 = vmul.f32 %v1040, %v1054
    %v1057 = vmul.f32 %v1041, %v1055
    %1058 = vrot.lane.b32.xlu0 %v959, 96
    %v1059 = vpop.permute.xlu0 %1058
    %v1061 = vmul.f32 %v1056, %v1059
    %v1062 = vmul.f32 %v1057, %v1059
    %1063 = vrot.lane.b32.xlu0 %v959, 64
    %v1064 = vpop.permute.xlu0 %1063
    %v1066 = vadd.f32 %v1061, %v1064
    %v1067 = vadd.f32 %v1062, %v1064
    %s1068 = scalar_lea.vmem %s5, 64
    %v1069 = vld [vmem:[%s1068] sm:$0xf]
    %v1070 = vld [vmem:[%s1068 + $0x10] sm:$0xf]
    %v1071 = vld [vmem:[%s1068 + $0x20] sm:$0xf]
    %v1072 = vld [vmem:[%s1068 + $0x30] sm:$0xf]
    %s1073 = scalar_lea.vmem %s9, 7
    %v1074 = vld [vmem:[%s1073] sm:$0x1]
    %v1075 = vpack.c.bf16 %v1067, %v1066
    %v1077 = vlaneseq
    %v1078 = vshrl.u32 %v1077, 7
    %v1079 = vsub.s32 0, %v1078
    %v1080 = vrot.slane %v1074, %v1079
    %v1086 = vunpack.c.l.b16 %v1069
    %v1087 = vunpack.c.l.b16 %v1070
    %v1088 = vunpack.c.l.b16 %v1071
    %v1089 = vunpack.c.l.b16 %v1072
    %v1090 = vpack.c.b16 %v1087, %v1086
    %v1091 = vpack.c.b16 %v1089, %v1088
    %v1095 = vsel %vm72, %v1075, 0
    %1097 = vmatprep.subr.bf16.mxu0 0
    %1098 = vmatpush1.bf16.msra.mxu0 0
    %1099 = vmatprep.subr.bf16.mxu0 0
    %1100 = vmatpush1.bf16.msra.mxu0 0
    %1101 = vmatprep.subr.bf16.mxu0 0
    %1102 = vmatpush1.bf16.msra.mxu0 0
    %1103 = vmatprep.subr.bf16.mxu0 0
    %1104 = vmatpush1.bf16.msra.mxu0 0
    %1105 = vmatprep.subr.bf16.mxu0 0
    %1106 = vmatpush1.bf16.msra.mxu0 0
    %1107 = vmatprep.subr.bf16.mxu0 0
    %1108 = vmatpush1.bf16.msra.mxu0 0
    %1109 = vmatprep.subr.bf16.mxu0 0
    %1110 = vmatpush1.bf16.msra.mxu0 %v1091
    %1111 = vmatprep.subr.bf16.mxu0 0
    %1112 = vmatpush1.bf16.msra.mxu0 %v1090
    %1113 = vmatprep.subr.bf16.mxu0 0
    %1114 = vmatpush2.bf16.msra.mxu0 0
    %1115 = vmatprep.subr.bf16.mxu0 0
    %1116 = vmatpush2.bf16.msra.mxu0 0
    %1117 = vmatprep.subr.bf16.mxu0 0
    %1118 = vmatpush2.bf16.msra.mxu0 0
    %1119 = vmatprep.subr.bf16.mxu0 0
    %1120 = vmatpush2.bf16.msra.mxu0 0
    %1121 = vmatprep.subr.bf16.mxu0 0
    %1122 = vmatpush2.bf16.msra.mxu0 0
    %1123 = vmatprep.subr.bf16.mxu0 0
    %1124 = vmatpush2.bf16.msra.mxu0 0
    %1125 = vmatprep.subr.bf16.mxu0 0
    %1126 = vmatpush2.bf16.msra.mxu0 0
    %1127 = vmatprep.subr.bf16.mxu0 0
    %1128 = vmatpush2.bf16.msra.mxu0 0
    %1129 = vmatprep.mubr.bf16.mxu0 0
    %1130 = vmatmul.mubr.bf16.gmra.mxu0 %v1095
    %v1131 = vpop.f32.mrf.mxu0
    %v1132 = vadd.f32 %v1080, %v1131
    %v1133 = vpop.f32.mrf.mxu0
    %v1134 = vpop.f32.mrf.mxu0
    %v1135 = vadd.f32 %v1080, %v1134
    %v1136 = vpop.f32.mrf.mxu0
    %1137 = vdwg.mxu0
    %s1138 = scalar_lea.vmem %s7, 48
    %v1139 = vld [vmem:[%s1138] sm:$0xf]
    %v1140 = vld [vmem:[%s1138 + $0x4] sm:$0xf]
    %v1141 = vld [vmem:[%s1138 + $0x8] sm:$0xf]
    %v1142 = vld [vmem:[%s1138 + $0xc] sm:$0xf]
    %v1143 = vpack.c.bf16 %v1135, %v1132
    %1145 = vrot.lane.b32.xlu0 %v1143, 120
    %v1146 = vpop.permute.xlu0 %1145
    %1147 = vrot.lane.b32.xlu0 %v1143, 112
    %v1148 = vpop.permute.xlu0 %1147
    %1149 = vrot.lane.b32.xlu0 %v1143, 104
    %v1150 = vpop.permute.xlu0 %1149
    %1151 = vrot.lane.b32.xlu0 %v1143, 96
    %v1152 = vpop.permute.xlu0 %1151
    %v1154 = vsel %vm131, %v1143, 0
    %v1157 = vsel %vm131, %v1152, 0
    %1159 = vmatprep.subr.bf16.mxu0 0
    %1160 = vmatpush1.bf16.xpose.msra.mxu0 0
    %1161 = vmatprep.subr.bf16.mxu0 0
    %1162 = vmatpush1.bf16.xpose.msra.mxu0 0
    %1163 = vmatprep.subr.bf16.mxu0 0
    %1164 = vmatpush1.bf16.xpose.msra.mxu0 0
    %1165 = vmatprep.subr.bf16.mxu0 0
    %1166 = vmatpush1.bf16.xpose.msra.mxu0 0
    %1167 = vmatprep.subr.bf16.mxu0 0
    %1168 = vmatpush1.bf16.xpose.msra.mxu0 0
    %1169 = vmatprep.subr.bf16.mxu0 0
    %1170 = vmatpush1.bf16.xpose.msra.mxu0 0
    %1171 = vmatprep.subr.bf16.mxu0 0
    %1172 = vmatpush1.bf16.xpose.msra.mxu0 0
    %1173 = vmatprep.subr.bf16.mxu0 0
    %1174 = vmatpush1.bf16.xpose.msra.mxu0 %v1157
    %1175 = vmatprep.subr.bf16.mxu0 0
    %1176 = vmatpush2.bf16.xpose.msra.mxu0 0
    %1177 = vmatprep.subr.bf16.mxu0 0
    %1178 = vmatpush2.bf16.xpose.msra.mxu0 0
    %1179 = vmatprep.subr.bf16.mxu0 0
    %1180 = vmatpush2.bf16.xpose.msra.mxu0 0
    %1181 = vmatprep.subr.bf16.mxu0 0
    %1182 = vmatpush2.bf16.xpose.msra.mxu0 0
    %1183 = vmatprep.subr.bf16.mxu0 0
    %1184 = vmatpush2.bf16.xpose.msra.mxu0 0
    %1185 = vmatprep.subr.bf16.mxu0 0
    %1186 = vmatpush2.bf16.xpose.msra.mxu0 0
    %1187 = vmatprep.subr.bf16.mxu0 0
    %1188 = vmatpush2.bf16.xpose.msra.mxu0 0
    %1189 = vmatprep.subr.bf16.mxu0 0
    %1190 = vmatpush2.bf16.xpose.msra.mxu0 0
    %1191 = vmatprep.mubr.bf16.mxu0 0
    %1192 = vmatmul.mubr.bf16.gmra.mxu0 %v1154
    %v1193 = vpop.f32.mrf.mxu0
    %v1194 = vadd.f32 %v40, %v1193
    %v1195 = vpop.f32.mrf.mxu0
    %v1196 = vpop.f32.mrf.mxu0
    %v1197 = vadd.f32 %v41, %v1196
    %v1198 = vpop.f32.mrf.mxu0
    %1199 = vdwg.mxu0
    %1200 = vrot.lane.b32.xlu0 %v1146, 96
    %v1201 = vpop.permute.xlu0 %1200
    %v1203 = vsel %vm131, %v1146, 0
    %v1206 = vsel %vm131, %v1201, 0
    %1208 = vmatprep.subr.bf16.mxu0 0
    %1209 = vmatpush1.bf16.xpose.msra.mxu0 0
    %1210 = vmatprep.subr.bf16.mxu0 0
    %1211 = vmatpush1.bf16.xpose.msra.mxu0 0
    %1212 = vmatprep.subr.bf16.mxu0 0
    %1213 = vmatpush1.bf16.xpose.msra.mxu0 0
    %1214 = vmatprep.subr.bf16.mxu0 0
    %1215 = vmatpush1.bf16.xpose.msra.mxu0 0
    %1216 = vmatprep.subr.bf16.mxu0 0
    %1217 = vmatpush1.bf16.xpose.msra.mxu0 0
    %1218 = vmatprep.subr.bf16.mxu0 0
    %1219 = vmatpush1.bf16.xpose.msra.mxu0 0
    %1220 = vmatprep.subr.bf16.mxu0 0
    %1221 = vmatpush1.bf16.xpose.msra.mxu0 0
    %1222 = vmatprep.subr.bf16.mxu0 0
    %1223 = vmatpush1.bf16.xpose.msra.mxu0 %v1206
    %1224 = vmatprep.subr.bf16.mxu0 0
    %1225 = vmatpush2.bf16.xpose.msra.mxu0 0
    %1226 = vmatprep.subr.bf16.mxu0 0
    %1227 = vmatpush2.bf16.xpose.msra.mxu0 0
    %1228 = vmatprep.subr.bf16.mxu0 0
    %1229 = vmatpush2.bf16.xpose.msra.mxu0 0
    %1230 = vmatprep.subr.bf16.mxu0 0
    %1231 = vmatpush2.bf16.xpose.msra.mxu0 0
    %1232 = vmatprep.subr.bf16.mxu0 0
    %1233 = vmatpush2.bf16.xpose.msra.mxu0 0
    %1234 = vmatprep.subr.bf16.mxu0 0
    %1235 = vmatpush2.bf16.xpose.msra.mxu0 0
    %1236 = vmatprep.subr.bf16.mxu0 0
    %1237 = vmatpush2.bf16.xpose.msra.mxu0 0
    %1238 = vmatprep.subr.bf16.mxu0 0
    %1239 = vmatpush2.bf16.xpose.msra.mxu0 0
    %1240 = vmatprep.mubr.bf16.mxu0 0
    %1241 = vmatmul.mubr.bf16.gmra.mxu0 %v1203
    %v1242 = vpop.f32.mrf.mxu0
    %v1243 = vadd.f32 %v40, %v1242
    %v1244 = vpop.f32.mrf.mxu0
    %v1245 = vpop.f32.mrf.mxu0
    %v1246 = vadd.f32 %v41, %v1245
    %v1247 = vpop.f32.mrf.mxu0
    %1248 = vdwg.mxu0
    %1249 = vrot.lane.b32.xlu0 %v1148, 96
    %v1250 = vpop.permute.xlu0 %1249
    %v1252 = vsel %vm131, %v1148, 0
    %v1255 = vsel %vm131, %v1250, 0
    %1257 = vmatprep.subr.bf16.mxu0 0
    %1258 = vmatpush1.bf16.xpose.msra.mxu0 0
    %1259 = vmatprep.subr.bf16.mxu0 0
    %1260 = vmatpush1.bf16.xpose.msra.mxu0 0
    %1261 = vmatprep.subr.bf16.mxu0 0
    %1262 = vmatpush1.bf16.xpose.msra.mxu0 0
    %1263 = vmatprep.subr.bf16.mxu0 0
    %1264 = vmatpush1.bf16.xpose.msra.mxu0 0
    %1265 = vmatprep.subr.bf16.mxu0 0
    %1266 = vmatpush1.bf16.xpose.msra.mxu0 0
    %1267 = vmatprep.subr.bf16.mxu0 0
    %1268 = vmatpush1.bf16.xpose.msra.mxu0 0
    %1269 = vmatprep.subr.bf16.mxu0 0
    %1270 = vmatpush1.bf16.xpose.msra.mxu0 0
    %1271 = vmatprep.subr.bf16.mxu0 0
    %1272 = vmatpush1.bf16.xpose.msra.mxu0 %v1255
    %1273 = vmatprep.subr.bf16.mxu0 0
    %1274 = vmatpush2.bf16.xpose.msra.mxu0 0
    %1275 = vmatprep.subr.bf16.mxu0 0
    %1276 = vmatpush2.bf16.xpose.msra.mxu0 0
    %1277 = vmatprep.subr.bf16.mxu0 0
    %1278 = vmatpush2.bf16.xpose.msra.mxu0 0
    %1279 = vmatprep.subr.bf16.mxu0 0
    %1280 = vmatpush2.bf16.xpose.msra.mxu0 0
    %1281 = vmatprep.subr.bf16.mxu0 0
    %1282 = vmatpush2.bf16.xpose.msra.mxu0 0
    %1283 = vmatprep.subr.bf16.mxu0 0
    %1284 = vmatpush2.bf16.xpose.msra.mxu0 0
    %1285 = vmatprep.subr.bf16.mxu0 0
    %1286 = vmatpush2.bf16.xpose.msra.mxu0 0
    %1287 = vmatprep.subr.bf16.mxu0 0
    %1288 = vmatpush2.bf16.xpose.msra.mxu0 0
    %1289 = vmatprep.mubr.bf16.mxu0 0
    %1290 = vmatmul.mubr.bf16.gmra.mxu0 %v1252
    %v1291 = vpop.f32.mrf.mxu0
    %v1292 = vadd.f32 %v40, %v1291
    %v1293 = vpop.f32.mrf.mxu0
    %v1294 = vpop.f32.mrf.mxu0
    %v1295 = vadd.f32 %v41, %v1294
    %v1296 = vpop.f32.mrf.mxu0
    %1297 = vdwg.mxu0
    %1298 = vrot.lane.b32.xlu0 %v1150, 96
    %v1299 = vpop.permute.xlu0 %1298
    %v1301 = vsel %vm131, %v1150, 0
    %v1304 = vsel %vm131, %v1299, 0
    %1306 = vmatprep.subr.bf16.mxu0 0
    %1307 = vmatpush1.bf16.xpose.msra.mxu0 0
    %1308 = vmatprep.subr.bf16.mxu0 0
    %1309 = vmatpush1.bf16.xpose.msra.mxu0 0
    %1310 = vmatprep.subr.bf16.mxu0 0
    %1311 = vmatpush1.bf16.xpose.msra.mxu0 0
    %1312 = vmatprep.subr.bf16.mxu0 0
    %1313 = vmatpush1.bf16.xpose.msra.mxu0 0
    %1314 = vmatprep.subr.bf16.mxu0 0
    %1315 = vmatpush1.bf16.xpose.msra.mxu0 0
    %1316 = vmatprep.subr.bf16.mxu0 0
    %1317 = vmatpush1.bf16.xpose.msra.mxu0 0
    %1318 = vmatprep.subr.bf16.mxu0 0
    %1319 = vmatpush1.bf16.xpose.msra.mxu0 0
    %1320 = vmatprep.subr.bf16.mxu0 0
    %1321 = vmatpush1.bf16.xpose.msra.mxu0 %v1304
    %1322 = vmatprep.subr.bf16.mxu0 0
    %1323 = vmatpush2.bf16.xpose.msra.mxu0 0
    %1324 = vmatprep.subr.bf16.mxu0 0
    %1325 = vmatpush2.bf16.xpose.msra.mxu0 0
    %1326 = vmatprep.subr.bf16.mxu0 0
    %1327 = vmatpush2.bf16.xpose.msra.mxu0 0
    %1328 = vmatprep.subr.bf16.mxu0 0
    %1329 = vmatpush2.bf16.xpose.msra.mxu0 0
    %1330 = vmatprep.subr.bf16.mxu0 0
    %1331 = vmatpush2.bf16.xpose.msra.mxu0 0
    %1332 = vmatprep.subr.bf16.mxu0 0
    %1333 = vmatpush2.bf16.xpose.msra.mxu0 0
    %1334 = vmatprep.subr.bf16.mxu0 0
    %1335 = vmatpush2.bf16.xpose.msra.mxu0 0
    %1336 = vmatprep.subr.bf16.mxu0 0
    %1337 = vmatpush2.bf16.xpose.msra.mxu0 0
    %1338 = vmatprep.mubr.bf16.mxu0 0
    %1339 = vmatmul.mubr.bf16.gmra.mxu0 %v1301
    %v1340 = vpop.f32.mrf.mxu0
    %v1341 = vadd.f32 %v40, %v1340
    %v1342 = vpop.f32.mrf.mxu0
    %v1343 = vpop.f32.mrf.mxu0
    %v1344 = vadd.f32 %v41, %v1343
    %v1345 = vpop.f32.mrf.mxu0
    %1346 = vdwg.mxu0
    %v1347 = vsel %vm326, %v1194, -inf
    %1348 = vmax.xlane.f32.xlu0 %v1347
    %v1349 = vpop.xlane.xlu0 %1348
    %v1350 = vsel %vm326, %v1197, -inf
    %1351 = vmax.xlane.f32.xlu0 %v1350
    %v1352 = vpop.xlane.xlu0 %1351
    %v1353 = vsel %vm326, %v1243, -inf
    %1354 = vmax.xlane.f32.xlu0 %v1353
    %v1355 = vpop.xlane.xlu0 %1354
    %v1356 = vsel %vm326, %v1246, -inf
    %1357 = vmax.xlane.f32.xlu0 %v1356
    %v1358 = vpop.xlane.xlu0 %1357
    %v1359 = vsel %vm326, %v1292, -inf
    %1360 = vmax.xlane.f32.xlu0 %v1359
    %v1361 = vpop.xlane.xlu0 %1360
    %v1362 = vsel %vm326, %v1295, -inf
    %1363 = vmax.xlane.f32.xlu0 %v1362
    %v1364 = vpop.xlane.xlu0 %1363
    %v1365 = vsel %vm326, %v1341, -inf
    %1366 = vmax.xlane.f32.xlu0 %v1365
    %v1367 = vpop.xlane.xlu0 %1366
    %v1368 = vsel %vm326, %v1344, -inf
    %1369 = vmax.xlane.f32.xlu0 %v1368
    %v1370 = vpop.xlane.xlu0 %1369
    %v1371 = vsub.f32 %v1194, %v1349
    %v1372 = vsub.f32 %v1197, %v1352
    %v1373 = vsub.f32 %v1243, %v1355
    %v1374 = vsub.f32 %v1246, %v1358
    %v1375 = vsub.f32 %v1292, %v1361
    %v1376 = vsub.f32 %v1295, %v1364
    %v1377 = vsub.f32 %v1341, %v1367
    %v1378 = vsub.f32 %v1344, %v1370
    %v1379 = vmul.f32 %v1371, 1.442695
    %v1380 = vpow.pop %v1379
    %v1381 = vmul.f32 %v1372, 1.442695
    %v1382 = vpow.pop %v1381
    %v1383 = vmul.f32 %v1373, 1.442695
    %v1384 = vpow.pop %v1383
    %v1385 = vmul.f32 %v1374, 1.442695
    %v1386 = vpow.pop %v1385
    %v1387 = vmul.f32 %v1375, 1.442695
    %v1388 = vpow.pop %v1387
    %v1389 = vmul.f32 %v1376, 1.442695
    %v1390 = vpow.pop %v1389
    %v1391 = vmul.f32 %v1377, 1.442695
    %v1392 = vpow.pop %v1391
    %v1393 = vmul.f32 %v1378, 1.442695
    %v1394 = vpow.pop %v1393
    %v1395 = vsel %vm326, %v1380, 0.0
    %1396 = vadd.xlane.f32.xlu0 %v1395
    %v1397 = vpop.xlane.xlu0 %1396
    %v1398 = vsel %vm326, %v1382, 0.0
    %1399 = vadd.xlane.f32.xlu0 %v1398
    %v1400 = vpop.xlane.xlu0 %1399
    %v1401 = vsel %vm326, %v1384, 0.0
    %1402 = vadd.xlane.f32.xlu0 %v1401
    %v1403 = vpop.xlane.xlu0 %1402
    %v1404 = vsel %vm326, %v1386, 0.0
    %1405 = vadd.xlane.f32.xlu0 %v1404
    %v1406 = vpop.xlane.xlu0 %1405
    %v1407 = vsel %vm326, %v1388, 0.0
    %1408 = vadd.xlane.f32.xlu0 %v1407
    %v1409 = vpop.xlane.xlu0 %1408
    %v1410 = vsel %vm326, %v1390, 0.0
    %1411 = vadd.xlane.f32.xlu0 %v1410
    %v1412 = vpop.xlane.xlu0 %1411
    %v1413 = vsel %vm326, %v1392, 0.0
    %1414 = vadd.xlane.f32.xlu0 %v1413
    %v1415 = vpop.xlane.xlu0 %1414
    %v1416 = vsel %vm326, %v1394, 0.0
    %1417 = vadd.xlane.f32.xlu0 %v1416
    %v1418 = vpop.xlane.xlu0 %1417
    %v1419 = vrcp.pop %v1397
    %v1420 = vrcp.pop %v1400
    %v1421 = vrcp.pop %v1403
    %v1422 = vrcp.pop %v1406
    %v1423 = vrcp.pop %v1409
    %v1424 = vrcp.pop %v1412
    %v1425 = vrcp.pop %v1415
    %v1426 = vrcp.pop %v1418
    %v1427 = vmul.f32 %v1380, %v1419
    %v1428 = vmul.f32 %v1382, %v1420
    %v1429 = vmul.f32 %v1384, %v1421
    %v1430 = vmul.f32 %v1386, %v1422
    %v1431 = vmul.f32 %v1388, %v1423
    %v1432 = vmul.f32 %v1390, %v1424
    %v1433 = vmul.f32 %v1392, %v1425
    %v1434 = vmul.f32 %v1394, %v1426
    %v1435 = vpack.c.bf16 %v1428, %v1427
    %v1436 = vpack.c.bf16 %v1430, %v1429
    %v1437 = vpack.c.bf16 %v1432, %v1431
    %v1438 = vpack.c.bf16 %v1434, %v1433
    %1439 = vrot.lane.b32.xlu0 %v1143, 64
    %v1440 = vpop.permute.xlu0 %1439
    %v1443 = vsel %vm326, %v1435, 0
    %1445 = vmatprep.subr.bf16.mxu0 0
    %1446 = vmatpush1.bf16.msra.mxu0 0
    %1447 = vmatprep.subr.bf16.mxu0 0
    %1448 = vmatpush1.bf16.msra.mxu0 0
    %1449 = vmatprep.subr.bf16.mxu0 0
    %1450 = vmatpush1.bf16.msra.mxu0 0
    %1451 = vmatprep.subr.bf16.mxu0 0
    %1452 = vmatpush1.bf16.msra.mxu0 0
    %1453 = vmatprep.subr.bf16.mxu0 0
    %1454 = vmatpush1.bf16.msra.mxu0 0
    %1455 = vmatprep.subr.bf16.mxu0 0
    %1456 = vmatpush1.bf16.msra.mxu0 0
    %1457 = vmatprep.subr.bf16.mxu0 0
    %1458 = vmatpush1.bf16.msra.mxu0 0
    %1459 = vmatprep.subr.bf16.mxu0 0
    %1460 = vmatpush1.bf16.msra.mxu0 %v1440
    %1461 = vmatprep.subr.bf16.mxu0 0
    %1462 = vmatpush2.bf16.msra.mxu0 0
    %1463 = vmatprep.subr.bf16.mxu0 0
    %1464 = vmatpush2.bf16.msra.mxu0 0
    %1465 = vmatprep.subr.bf16.mxu0 0
    %1466 = vmatpush2.bf16.msra.mxu0 0
    %1467 = vmatprep.subr.bf16.mxu0 0
    %1468 = vmatpush2.bf16.msra.mxu0 0
    %1469 = vmatprep.subr.bf16.mxu0 0
    %1470 = vmatpush2.bf16.msra.mxu0 0
    %1471 = vmatprep.subr.bf16.mxu0 0
    %1472 = vmatpush2.bf16.msra.mxu0 0
    %1473 = vmatprep.subr.bf16.mxu0 0
    %1474 = vmatpush2.bf16.msra.mxu0 0
    %1475 = vmatprep.subr.bf16.mxu0 0
    %1476 = vmatpush2.bf16.msra.mxu0 0
    %1477 = vmatprep.mubr.bf16.mxu0 0
    %1478 = vmatmul.mubr.bf16.gmra.mxu0 %v1443
    %v1479 = vpop.f32.mrf.mxu0
    %v1480 = vadd.f32 0.0, %v1479
    %v1481 = vpop.f32.mrf.mxu0
    %v1482 = vpop.f32.mrf.mxu0
    %v1483 = vadd.f32 0.0, %v1482
    %v1484 = vpop.f32.mrf.mxu0
    %1485 = vdwg.mxu0
    %1486 = vrot.lane.b32.xlu0 %v1146, 64
    %v1487 = vpop.permute.xlu0 %1486
    %v1490 = vsel %vm326, %v1436, 0
    %1492 = vmatprep.subr.bf16.mxu0 0
    %1493 = vmatpush1.bf16.msra.mxu0 0
    %1494 = vmatprep.subr.bf16.mxu0 0
    %1495 = vmatpush1.bf16.msra.mxu0 0
    %1496 = vmatprep.subr.bf16.mxu0 0
    %1497 = vmatpush1.bf16.msra.mxu0 0
    %1498 = vmatprep.subr.bf16.mxu0 0
    %1499 = vmatpush1.bf16.msra.mxu0 0
    %1500 = vmatprep.subr.bf16.mxu0 0
    %1501 = vmatpush1.bf16.msra.mxu0 0
    %1502 = vmatprep.subr.bf16.mxu0 0
    %1503 = vmatpush1.bf16.msra.mxu0 0
    %1504 = vmatprep.subr.bf16.mxu0 0
    %1505 = vmatpush1.bf16.msra.mxu0 0
    %1506 = vmatprep.subr.bf16.mxu0 0
    %1507 = vmatpush1.bf16.msra.mxu0 %v1487
    %1508 = vmatprep.subr.bf16.mxu0 0
    %1509 = vmatpush2.bf16.msra.mxu0 0
    %1510 = vmatprep.subr.bf16.mxu0 0
    %1511 = vmatpush2.bf16.msra.mxu0 0
    %1512 = vmatprep.subr.bf16.mxu0 0
    %1513 = vmatpush2.bf16.msra.mxu0 0
    %1514 = vmatprep.subr.bf16.mxu0 0
    %1515 = vmatpush2.bf16.msra.mxu0 0
    %1516 = vmatprep.subr.bf16.mxu0 0
    %1517 = vmatpush2.bf16.msra.mxu0 0
    %1518 = vmatprep.subr.bf16.mxu0 0
    %1519 = vmatpush2.bf16.msra.mxu0 0
    %1520 = vmatprep.subr.bf16.mxu0 0
    %1521 = vmatpush2.bf16.msra.mxu0 0
    %1522 = vmatprep.subr.bf16.mxu0 0
    %1523 = vmatpush2.bf16.msra.mxu0 0
    %1524 = vmatprep.mubr.bf16.mxu0 0
    %1525 = vmatmul.mubr.bf16.gmra.mxu0 %v1490
    %v1526 = vpop.f32.mrf.mxu0
    %v1527 = vadd.f32 0.0, %v1526
    %v1528 = vpop.f32.mrf.mxu0
    %v1529 = vpop.f32.mrf.mxu0
    %v1530 = vadd.f32 0.0, %v1529
    %v1531 = vpop.f32.mrf.mxu0
    %1532 = vdwg.mxu0
    %1533 = vrot.lane.b32.xlu0 %v1148, 64
    %v1534 = vpop.permute.xlu0 %1533
    %v1537 = vsel %vm326, %v1437, 0
    %1539 = vmatprep.subr.bf16.mxu0 0
    %1540 = vmatpush1.bf16.msra.mxu0 0
    %1541 = vmatprep.subr.bf16.mxu0 0
    %1542 = vmatpush1.bf16.msra.mxu0 0
    %1543 = vmatprep.subr.bf16.mxu0 0
    %1544 = vmatpush1.bf16.msra.mxu0 0
    %1545 = vmatprep.subr.bf16.mxu0 0
    %1546 = vmatpush1.bf16.msra.mxu0 0
    %1547 = vmatprep.subr.bf16.mxu0 0
    %1548 = vmatpush1.bf16.msra.mxu0 0
    %1549 = vmatprep.subr.bf16.mxu0 0
    %1550 = vmatpush1.bf16.msra.mxu0 0
    %1551 = vmatprep.subr.bf16.mxu0 0
    %1552 = vmatpush1.bf16.msra.mxu0 0
    %1553 = vmatprep.subr.bf16.mxu0 0
    %1554 = vmatpush1.bf16.msra.mxu0 %v1534
    %1555 = vmatprep.subr.bf16.mxu0 0
    %1556 = vmatpush2.bf16.msra.mxu0 0
    %1557 = vmatprep.subr.bf16.mxu0 0
    %1558 = vmatpush2.bf16.msra.mxu0 0
    %1559 = vmatprep.subr.bf16.mxu0 0
    %1560 = vmatpush2.bf16.msra.mxu0 0
    %1561 = vmatprep.subr.bf16.mxu0 0
    %1562 = vmatpush2.bf16.msra.mxu0 0
    %1563 = vmatprep.subr.bf16.mxu0 0
    %1564 = vmatpush2.bf16.msra.mxu0 0
    %1565 = vmatprep.subr.bf16.mxu0 0
    %1566 = vmatpush2.bf16.msra.mxu0 0
    %1567 = vmatprep.subr.bf16.mxu0 0
    %1568 = vmatpush2.bf16.msra.mxu0 0
    %1569 = vmatprep.subr.bf16.mxu0 0
    %1570 = vmatpush2.bf16.msra.mxu0 0
    %1571 = vmatprep.mubr.bf16.mxu0 0
    %1572 = vmatmul.mubr.bf16.gmra.mxu0 %v1537
    %v1573 = vpop.f32.mrf.mxu0
    %v1574 = vadd.f32 0.0, %v1573
    %v1575 = vpop.f32.mrf.mxu0
    %v1576 = vpop.f32.mrf.mxu0
    %v1577 = vadd.f32 0.0, %v1576
    %v1578 = vpop.f32.mrf.mxu0
    %1579 = vdwg.mxu0
    %1580 = vrot.lane.b32.xlu0 %v1150, 64
    %v1581 = vpop.permute.xlu0 %1580
    %v1584 = vsel %vm326, %v1438, 0
    %1586 = vmatprep.subr.bf16.mxu0 0
    %1587 = vmatpush1.bf16.msra.mxu0 0
    %1588 = vmatprep.subr.bf16.mxu0 0
    %1589 = vmatpush1.bf16.msra.mxu0 0
    %1590 = vmatprep.subr.bf16.mxu0 0
    %1591 = vmatpush1.bf16.msra.mxu0 0
    %1592 = vmatprep.subr.bf16.mxu0 0
    %1593 = vmatpush1.bf16.msra.mxu0 0
    %1594 = vmatprep.subr.bf16.mxu0 0
    %1595 = vmatpush1.bf16.msra.mxu0 0
    %1596 = vmatprep.subr.bf16.mxu0 0
    %1597 = vmatpush1.bf16.msra.mxu0 0
    %1598 = vmatprep.subr.bf16.mxu0 0
    %1599 = vmatpush1.bf16.msra.mxu0 0
    %1600 = vmatprep.subr.bf16.mxu0 0
    %1601 = vmatpush1.bf16.msra.mxu0 %v1581
    %1602 = vmatprep.subr.bf16.mxu0 0
    %1603 = vmatpush2.bf16.msra.mxu0 0
    %1604 = vmatprep.subr.bf16.mxu0 0
    %1605 = vmatpush2.bf16.msra.mxu0 0
    %1606 = vmatprep.subr.bf16.mxu0 0
    %1607 = vmatpush2.bf16.msra.mxu0 0
    %1608 = vmatprep.subr.bf16.mxu0 0
    %1609 = vmatpush2.bf16.msra.mxu0 0
    %1610 = vmatprep.subr.bf16.mxu0 0
    %1611 = vmatpush2.bf16.msra.mxu0 0
    %1612 = vmatprep.subr.bf16.mxu0 0
    %1613 = vmatpush2.bf16.msra.mxu0 0
    %1614 = vmatprep.subr.bf16.mxu0 0
    %1615 = vmatpush2.bf16.msra.mxu0 0
    %1616 = vmatprep.subr.bf16.mxu0 0
    %1617 = vmatpush2.bf16.msra.mxu0 0
    %1618 = vmatprep.mubr.bf16.mxu0 0
    %1619 = vmatmul.mubr.bf16.gmra.mxu0 %v1584
    %v1620 = vpop.f32.mrf.mxu0
    %v1621 = vadd.f32 0.0, %v1620
    %v1622 = vpop.f32.mrf.mxu0
    %v1623 = vpop.f32.mrf.mxu0
    %v1624 = vadd.f32 0.0, %v1623
    %v1625 = vpop.f32.mrf.mxu0
    %1626 = vdwg.mxu0
    %v1627 = vpack.c.bf16 %v1483, %v1480
    %v1628 = vpack.c.bf16 %v1530, %v1527
    %v1629 = vpack.c.bf16 %v1577, %v1574
    %v1630 = vpack.c.bf16 %v1624, %v1621
    %v1632 = vsel %vm131, %v1627, 0
    %v1635 = vsel %vm614, %v1139, 0
    %1637 = vmatprep.subr.bf16.mxu0 0
    %1638 = vmatpush1.bf16.msra.mxu0 0
    %1639 = vmatprep.subr.bf16.mxu0 0
    %1640 = vmatpush1.bf16.msra.mxu0 0
    %1641 = vmatprep.subr.bf16.mxu0 0
    %1642 = vmatpush1.bf16.msra.mxu0 0
    %1643 = vmatprep.subr.bf16.mxu0 0
    %1644 = vmatpush1.bf16.msra.mxu0 0
    %1645 = vmatprep.subr.bf16.mxu0 0
    %1646 = vmatpush1.bf16.msra.mxu0 0
    %1647 = vmatprep.subr.bf16.mxu0 0
    %1648 = vmatpush1.bf16.msra.mxu0 0
    %1649 = vmatprep.subr.bf16.mxu0 0
    %1650 = vmatpush1.bf16.msra.mxu0 0
    %1651 = vmatprep.subr.bf16.mxu0 0
    %1652 = vmatpush1.bf16.msra.mxu0 %v1635
    %1653 = vmatprep.subr.bf16.mxu0 0
    %1654 = vmatpush2.bf16.msra.mxu0 0
    %1655 = vmatprep.subr.bf16.mxu0 0
    %1656 = vmatpush2.bf16.msra.mxu0 0
    %1657 = vmatprep.subr.bf16.mxu0 0
    %1658 = vmatpush2.bf16.msra.mxu0 0
    %1659 = vmatprep.subr.bf16.mxu0 0
    %1660 = vmatpush2.bf16.msra.mxu0 0
    %1661 = vmatprep.subr.bf16.mxu0 0
    %1662 = vmatpush2.bf16.msra.mxu0 0
    %1663 = vmatprep.subr.bf16.mxu0 0
    %1664 = vmatpush2.bf16.msra.mxu0 0
    %1665 = vmatprep.subr.bf16.mxu0 0
    %1666 = vmatpush2.bf16.msra.mxu0 0
    %1667 = vmatprep.subr.bf16.mxu0 0
    %1668 = vmatpush2.bf16.msra.mxu0 0
    %1669 = vmatprep.mubr.bf16.mxu0 0
    %1670 = vmatmul.mubr.bf16.gmra.mxu0 %v1632
    %v1671 = vpop.f32.mrf.mxu0
    %v1672 = vadd.f32 0.0, %v1671
    %v1673 = vpop.f32.mrf.mxu0
    %v1674 = vpop.f32.mrf.mxu0
    %v1675 = vadd.f32 0.0, %v1674
    %v1676 = vpop.f32.mrf.mxu0
    %1677 = vdwg.mxu0
    %v1679 = vsel %vm131, %v1628, 0
    %v1682 = vsel %vm614, %v1140, 0
    %1684 = vmatprep.subr.bf16.mxu0 0
    %1685 = vmatpush1.bf16.msra.mxu0 0
    %1686 = vmatprep.subr.bf16.mxu0 0
    %1687 = vmatpush1.bf16.msra.mxu0 0
    %1688 = vmatprep.subr.bf16.mxu0 0
    %1689 = vmatpush1.bf16.msra.mxu0 0
    %1690 = vmatprep.subr.bf16.mxu0 0
    %1691 = vmatpush1.bf16.msra.mxu0 0
    %1692 = vmatprep.subr.bf16.mxu0 0
    %1693 = vmatpush1.bf16.msra.mxu0 0
    %1694 = vmatprep.subr.bf16.mxu0 0
    %1695 = vmatpush1.bf16.msra.mxu0 0
    %1696 = vmatprep.subr.bf16.mxu0 0
    %1697 = vmatpush1.bf16.msra.mxu0 0
    %1698 = vmatprep.subr.bf16.mxu0 0
    %1699 = vmatpush1.bf16.msra.mxu0 %v1682
    %1700 = vmatprep.subr.bf16.mxu0 0
    %1701 = vmatpush2.bf16.msra.mxu0 0
    %1702 = vmatprep.subr.bf16.mxu0 0
    %1703 = vmatpush2.bf16.msra.mxu0 0
    %1704 = vmatprep.subr.bf16.mxu0 0
    %1705 = vmatpush2.bf16.msra.mxu0 0
    %1706 = vmatprep.subr.bf16.mxu0 0
    %1707 = vmatpush2.bf16.msra.mxu0 0
    %1708 = vmatprep.subr.bf16.mxu0 0
    %1709 = vmatpush2.bf16.msra.mxu0 0
    %1710 = vmatprep.subr.bf16.mxu0 0
    %1711 = vmatpush2.bf16.msra.mxu0 0
    %1712 = vmatprep.subr.bf16.mxu0 0
    %1713 = vmatpush2.bf16.msra.mxu0 0
    %1714 = vmatprep.subr.bf16.mxu0 0
    %1715 = vmatpush2.bf16.msra.mxu0 0
    %1716 = vmatprep.mubr.bf16.mxu0 0
    %1717 = vmatmul.mubr.bf16.gmra.mxu0 %v1679
    %v1718 = vpop.f32.mrf.mxu0
    %v1719 = vadd.f32 0.0, %v1718
    %v1720 = vpop.f32.mrf.mxu0
    %v1721 = vpop.f32.mrf.mxu0
    %v1722 = vadd.f32 0.0, %v1721
    %v1723 = vpop.f32.mrf.mxu0
    %1724 = vdwg.mxu0
    %v1726 = vsel %vm131, %v1629, 0
    %v1729 = vsel %vm614, %v1141, 0
    %1731 = vmatprep.subr.bf16.mxu0 0
    %1732 = vmatpush1.bf16.msra.mxu0 0
    %1733 = vmatprep.subr.bf16.mxu0 0
    %1734 = vmatpush1.bf16.msra.mxu0 0
    %1735 = vmatprep.subr.bf16.mxu0 0
    %1736 = vmatpush1.bf16.msra.mxu0 0
    %1737 = vmatprep.subr.bf16.mxu0 0
    %1738 = vmatpush1.bf16.msra.mxu0 0
    %1739 = vmatprep.subr.bf16.mxu0 0
    %1740 = vmatpush1.bf16.msra.mxu0 0
    %1741 = vmatprep.subr.bf16.mxu0 0
    %1742 = vmatpush1.bf16.msra.mxu0 0
    %1743 = vmatprep.subr.bf16.mxu0 0
    %1744 = vmatpush1.bf16.msra.mxu0 0
    %1745 = vmatprep.subr.bf16.mxu0 0
    %1746 = vmatpush1.bf16.msra.mxu0 %v1729
    %1747 = vmatprep.subr.bf16.mxu0 0
    %1748 = vmatpush2.bf16.msra.mxu0 0
    %1749 = vmatprep.subr.bf16.mxu0 0
    %1750 = vmatpush2.bf16.msra.mxu0 0
    %1751 = vmatprep.subr.bf16.mxu0 0
    %1752 = vmatpush2.bf16.msra.mxu0 0
    %1753 = vmatprep.subr.bf16.mxu0 0
    %1754 = vmatpush2.bf16.msra.mxu0 0
    %1755 = vmatprep.subr.bf16.mxu0 0
    %1756 = vmatpush2.bf16.msra.mxu0 0
    %1757 = vmatprep.subr.bf16.mxu0 0
    %1758 = vmatpush2.bf16.msra.mxu0 0
    %1759 = vmatprep.subr.bf16.mxu0 0
    %1760 = vmatpush2.bf16.msra.mxu0 0
    %1761 = vmatprep.subr.bf16.mxu0 0
    %1762 = vmatpush2.bf16.msra.mxu0 0
    %1763 = vmatprep.mubr.bf16.mxu0 0
    %1764 = vmatmul.mubr.bf16.gmra.mxu0 %v1726
    %v1765 = vpop.f32.mrf.mxu0
    %v1766 = vadd.f32 0.0, %v1765
    %v1767 = vpop.f32.mrf.mxu0
    %v1768 = vpop.f32.mrf.mxu0
    %v1769 = vadd.f32 0.0, %v1768
    %v1770 = vpop.f32.mrf.mxu0
    %1771 = vdwg.mxu0
    %v1773 = vsel %vm131, %v1630, 0
    %v1776 = vsel %vm614, %v1142, 0
    %1778 = vmatprep.subr.bf16.mxu0 0
    %1779 = vmatpush1.bf16.msra.mxu0 0
    %1780 = vmatprep.subr.bf16.mxu0 0
    %1781 = vmatpush1.bf16.msra.mxu0 0
    %1782 = vmatprep.subr.bf16.mxu0 0
    %1783 = vmatpush1.bf16.msra.mxu0 0
    %1784 = vmatprep.subr.bf16.mxu0 0
    %1785 = vmatpush1.bf16.msra.mxu0 0
    %1786 = vmatprep.subr.bf16.mxu0 0
    %1787 = vmatpush1.bf16.msra.mxu0 0
    %1788 = vmatprep.subr.bf16.mxu0 0
    %1789 = vmatpush1.bf16.msra.mxu0 0
    %1790 = vmatprep.subr.bf16.mxu0 0
    %1791 = vmatpush1.bf16.msra.mxu0 0
    %1792 = vmatprep.subr.bf16.mxu0 0
    %1793 = vmatpush1.bf16.msra.mxu0 %v1776
    %1794 = vmatprep.subr.bf16.mxu0 0
    %1795 = vmatpush2.bf16.msra.mxu0 0
    %1796 = vmatprep.subr.bf16.mxu0 0
    %1797 = vmatpush2.bf16.msra.mxu0 0
    %1798 = vmatprep.subr.bf16.mxu0 0
    %1799 = vmatpush2.bf16.msra.mxu0 0
    %1800 = vmatprep.subr.bf16.mxu0 0
    %1801 = vmatpush2.bf16.msra.mxu0 0
    %1802 = vmatprep.subr.bf16.mxu0 0
    %1803 = vmatpush2.bf16.msra.mxu0 0
    %1804 = vmatprep.subr.bf16.mxu0 0
    %1805 = vmatpush2.bf16.msra.mxu0 0
    %1806 = vmatprep.subr.bf16.mxu0 0
    %1807 = vmatpush2.bf16.msra.mxu0 0
    %1808 = vmatprep.subr.bf16.mxu0 0
    %1809 = vmatpush2.bf16.msra.mxu0 0
    %1810 = vmatprep.mubr.bf16.mxu0 0
    %1811 = vmatmul.mubr.bf16.gmra.mxu0 %v1773
    %v1812 = vpop.f32.mrf.mxu0
    %v1813 = vadd.f32 0.0, %v1812
    %v1814 = vpop.f32.mrf.mxu0
    %v1815 = vpop.f32.mrf.mxu0
    %v1816 = vadd.f32 0.0, %v1815
    %v1817 = vpop.f32.mrf.mxu0
    %1818 = vdwg.mxu0
    %v1819 = vsel %vm72, %v1672, 0.0
    %v1820 = vsel %vm72, %v1719, 0.0
    %v1821 = vadd.f32 %v1819, %v1820
    %v1822 = vsel %vm72, %v1766, 0.0
    %v1823 = vadd.f32 %v1821, %v1822
    %v1824 = vsel %vm72, %v1813, 0.0
    %v1825 = vadd.f32 %v1823, %v1824
    %v1826 = vsel %vm72, %v1675, 0.0
    %v1827 = vsel %vm72, %v1722, 0.0
    %v1828 = vadd.f32 %v1826, %v1827
    %v1829 = vsel %vm72, %v1769, 0.0
    %v1830 = vadd.f32 %v1828, %v1829
    %v1831 = vsel %vm72, %v1816, 0.0
    %v1832 = vadd.f32 %v1830, %v1831
    %1833 = vrot.lane.b32.xlu0 %v1080, 32
    %v1834 = vpop.permute.xlu0 %1833
    %v1836 = vadd.f32 %v1825, %v1834
    %v1837 = vadd.f32 %v1832, %v1834
    %v1838 = vadd.f32 %v1066, %v1836
    %v1839 = vadd.f32 %v1067, %v1837
    %v1840 = vld [vmem:[%s1073 + $0x1] sm:$0x1]
    %v1841 = vsel %vm72, %v1838, 0.0
    %1842 = vadd.xlane.f32.xlu0 %v1841
    %v1843 = vpop.xlane.xlu0 %1842
    %v1844 = vsel %vm72, %v1839, 0.0
    %1845 = vadd.xlane.f32.xlu0 %v1844
    %v1846 = vpop.xlane.xlu0 %1845
    %v1847 = vmul.f32 %v1843, %v828
    %v1848 = vmul.f32 %v1846, %v828
    %v1849 = vsub.f32 %v1838, %v1847
    %v1850 = vsub.f32 %v1839, %v1848
    %v1851 = vmul.f32 %v1849, %v1849
    %v1852 = vmul.f32 %v1850, %v1850
    %v1853 = vsel %vm72, %v1851, 0.0
    %1854 = vadd.xlane.f32.xlu0 %v1853
    %v1855 = vpop.xlane.xlu0 %1854
    %v1856 = vsel %vm72, %v1852, 0.0
    %1857 = vadd.xlane.f32.xlu0 %v1856
    %v1858 = vpop.xlane.xlu0 %1857
    %v1859 = vmul.f32 %v1855, %v828
    %v1860 = vmul.f32 %v1858, %v828
    %v1861 = vadd.f32 %v1859, 1e-05
    %v1862 = vadd.f32 %v1860, 1e-05
    %v1863 = vrsqrt.pop %v1861
    %v1864 = vrsqrt.pop %v1862
    %v1865 = vmul.f32 %v1849, %v1863
    %v1866 = vmul.f32 %v1850, %v1864
    %v1868 = vlaneseq
    %v1869 = vshrl.u32 %v1868, 7
    %v1870 = vsub.s32 0, %v1869
    %v1871 = vrot.slane %v1840, %v1870
    %v1873 = vmul.f32 %v1865, %v1871
    %v1874 = vmul.f32 %v1866, %v1871
    %1875 = vrot.lane.b32.xlu0 %v1871, 96
    %v1876 = vpop.permute.xlu0 %1875
    %v1878 = vadd.f32 %v1873, %v1876
    %v1879 = vadd.f32 %v1874, %v1876
    %v1880 = vld [vmem:[%s1068] sm:$0xff]
    %v1881 = vld [vmem:[%s1068 + $0x10] sm:$0xff]
    %v1882 = vld [vmem:[%s1068 + $0x20] sm:$0xff]
    %v1883 = vld [vmem:[%s1068 + $0x30] sm:$0xff]
    %v1884 = vpack.c.bf16 %v1879, %v1878
    %v1889 = vunpack.c.l.b16 %v1880
    %v1890 = vunpack.c.h.b16 %v1880
    %v1891 = vunpack.c.l.b16 %v1881
    %v1892 = vunpack.c.h.b16 %v1881
    %v1893 = vunpack.c.l.b16 %v1882
    %v1894 = vunpack.c.h.b16 %v1882
    %v1895 = vunpack.c.l.b16 %v1883
    %v1896 = vunpack.c.h.b16 %v1883
    %v1897 = vpack.c.b16 %v1891, %v1889
    %v1898 = vpack.c.b16 %v1892, %v1890
    %v1899 = vpack.c.b16 %v1895, %v1893
    %v1900 = vpack.c.b16 %v1896, %v1894
    %1901 = vrot.lane.b32.xlu0 %v1897, 32
    %v1902 = vpop.permute.xlu0 %1901
    %1903 = vrot.lane.b32.xlu0 %v1898, 32
    %v1904 = vpop.permute.xlu0 %1903
    %1905 = vrot.lane.b32.xlu0 %v1899, 32
    %v1906 = vpop.permute.xlu0 %1905
    %1907 = vrot.lane.b32.xlu0 %v1900, 32
    %v1908 = vpop.permute.xlu0 %1907
    %v1909 = vsel %vm891, %v1902, %v1904
    %v1910 = vsel %vm891, %v1906, %v1908
    %1913 = vrot.lane.b32.xlu0 %v1871, 64
    %v1914 = vpop.permute.xlu0 %1913
    %v1917 = vsel %vm72, %v1884, 0
    %1919 = vmatprep.subr.bf16.mxu0 0
    %1920 = vmatpush1.bf16.msra.mxu0 0
    %1921 = vmatprep.subr.bf16.mxu0 0
    %1922 = vmatpush1.bf16.msra.mxu0 0
    %1923 = vmatprep.subr.bf16.mxu0 0
    %1924 = vmatpush1.bf16.msra.mxu0 0
    %1925 = vmatprep.subr.bf16.mxu0 0
    %1926 = vmatpush1.bf16.msra.mxu0 0
    %1927 = vmatprep.subr.bf16.mxu0 0
    %1928 = vmatpush1.bf16.msra.mxu0 0
    %1929 = vmatprep.subr.bf16.mxu0 0
    %1930 = vmatpush1.bf16.msra.mxu0 0
    %1931 = vmatprep.subr.bf16.mxu0 0
    %1932 = vmatpush1.bf16.msra.mxu0 %v1910
    %1933 = vmatprep.subr.bf16.mxu0 0
    %1934 = vmatpush1.bf16.msra.mxu0 %v1909
    %1935 = vmatprep.subr.bf16.mxu0 0
    %1936 = vmatpush2.bf16.msra.mxu0 0
    %1937 = vmatprep.subr.bf16.mxu0 0
    %1938 = vmatpush2.bf16.msra.mxu0 0
    %1939 = vmatprep.subr.bf16.mxu0 0
    %1940 = vmatpush2.bf16.msra.mxu0 0
    %1941 = vmatprep.subr.bf16.mxu0 0
    %1942 = vmatpush2.bf16.msra.mxu0 0
    %1943 = vmatprep.subr.bf16.mxu0 0
    %1944 = vmatpush2.bf16.msra.mxu0 0
    %1945 = vmatprep.subr.bf16.mxu0 0
    %1946 = vmatpush2.bf16.msra.mxu0 0
    %1947 = vmatprep.subr.bf16.mxu0 0
    %1948 = vmatpush2.bf16.msra.mxu0 0
    %1949 = vmatprep.subr.bf16.mxu0 0
    %1950 = vmatpush2.bf16.msra.mxu0 0
    %1951 = vmatprep.mubr.bf16.mxu0 0
    %1952 = vmatmul.mubr.bf16.gmra.mxu0 %v1917
    %v1953 = vpop.f32.mrf.mxu0
    %v1954 = vadd.f32 %v1914, %v1953
    %v1955 = vpop.f32.mrf.mxu0
    %v1956 = vpop.f32.mrf.mxu0
    %v1957 = vadd.f32 %v1914, %v1956
    %v1958 = vpop.f32.mrf.mxu0
    %1959 = vdwg.mxu0
    %v1960 = vmax.f32 %v1954, 0.0
    %v1961 = vmax.f32 %v1957, 0.0
    %s1962 = scalar_lea.vmem %s6, 32
    %v1963 = vld [vmem:[%s1962] sm:$0xf]
    %v1964 = vld [vmem:[%s1962 + $0x4] sm:$0xf]
    %v1965 = vld [vmem:[%s1962 + $0x8] sm:$0xf]
    %v1966 = vld [vmem:[%s1962 + $0xc] sm:$0xf]
    %v1967 = vld [vmem:[%s1962 + $0x10] sm:$0xf]
    %v1968 = vld [vmem:[%s1962 + $0x14] sm:$0xf]
    %v1969 = vld [vmem:[%s1962 + $0x18] sm:$0xf]
    %v1970 = vld [vmem:[%s1962 + $0x1c] sm:$0xf]
    %v1971 = vld [vmem:[%s1073 + $0x2] sm:$0x1]
    %v1972 = vpack.c.bf16 %v1961, %v1960
    %v1974 = vlaneseq
    %v1975 = vshrl.u32 %v1974, 7
    %v1976 = vsub.s32 0, %v1975
    %v1977 = vrot.slane %v1971, %v1976
    %v1987 = vunpack.c.l.b16 %v1963
    %v1988 = vunpack.c.l.b16 %v1964
    %v1989 = vunpack.c.l.b16 %v1965
    %v1990 = vunpack.c.l.b16 %v1966
    %v1991 = vunpack.c.l.b16 %v1967
    %v1992 = vunpack.c.l.b16 %v1968
    %v1993 = vunpack.c.l.b16 %v1969
    %v1994 = vunpack.c.l.b16 %v1970
    %v1995 = vpack.c.b16 %v1988, %v1987
    %v1996 = vpack.c.b16 %v1990, %v1989
    %v1997 = vpack.c.b16 %v1992, %v1991
    %v1998 = vpack.c.b16 %v1994, %v1993
    %v2004 = vsel %vm985, %v1972, 0
    %2006 = vmatprep.subr.bf16.mxu0 0
    %2007 = vmatpush1.bf16.msra.mxu0 0
    %2008 = vmatprep.subr.bf16.mxu0 0
    %2009 = vmatpush1.bf16.msra.mxu0 0
    %2010 = vmatprep.subr.bf16.mxu0 0
    %2011 = vmatpush1.bf16.msra.mxu0 0
    %2012 = vmatprep.subr.bf16.mxu0 0
    %2013 = vmatpush1.bf16.msra.mxu0 0
    %2014 = vmatprep.subr.bf16.mxu0 0
    %2015 = vmatpush1.bf16.msra.mxu0 %v1998
    %2016 = vmatprep.subr.bf16.mxu0 0
    %2017 = vmatpush1.bf16.msra.mxu0 %v1997
    %2018 = vmatprep.subr.bf16.mxu0 0
    %2019 = vmatpush1.bf16.msra.mxu0 %v1996
    %2020 = vmatprep.subr.bf16.mxu0 0
    %2021 = vmatpush1.bf16.msra.mxu0 %v1995
    %2022 = vmatprep.subr.bf16.mxu0 0
    %2023 = vmatpush2.bf16.msra.mxu0 0
    %2024 = vmatprep.subr.bf16.mxu0 0
    %2025 = vmatpush2.bf16.msra.mxu0 0
    %2026 = vmatprep.subr.bf16.mxu0 0
    %2027 = vmatpush2.bf16.msra.mxu0 0
    %2028 = vmatprep.subr.bf16.mxu0 0
    %2029 = vmatpush2.bf16.msra.mxu0 0
    %2030 = vmatprep.subr.bf16.mxu0 0
    %2031 = vmatpush2.bf16.msra.mxu0 0
    %2032 = vmatprep.subr.bf16.mxu0 0
    %2033 = vmatpush2.bf16.msra.mxu0 0
    %2034 = vmatprep.subr.bf16.mxu0 0
    %2035 = vmatpush2.bf16.msra.mxu0 0
    %2036 = vmatprep.subr.bf16.mxu0 0
    %2037 = vmatpush2.bf16.msra.mxu0 0
    %2038 = vmatprep.mubr.bf16.mxu0 0
    %2039 = vmatmul.mubr.bf16.gmra.mxu0 %v2004
    %v2040 = vpop.f32.mrf.mxu0
    %v2041 = vadd.f32 %v1977, %v2040
    %v2042 = vpop.f32.mrf.mxu0
    %v2043 = vpop.f32.mrf.mxu0
    %v2044 = vadd.f32 %v1977, %v2043
    %v2045 = vpop.f32.mrf.mxu0
    %2046 = vdwg.mxu0
    %v2047 = vadd.f32 %v1878, %v2041
    %v2048 = vadd.f32 %v1879, %v2044
    %v2049 = vsel %vm72, %v2047, 0.0
    %2050 = vadd.xlane.f32.xlu0 %v2049
    %v2051 = vpop.xlane.xlu0 %2050
    %v2052 = vsel %vm72, %v2048, 0.0
    %2053 = vadd.xlane.f32.xlu0 %v2052
    %v2054 = vpop.xlane.xlu0 %2053
    %v2055 = vmul.f32 %v2051, %v828
    %v2056 = vmul.f32 %v2054, %v828
    %v2057 = vsub.f32 %v2047, %v2055
    %v2058 = vsub.f32 %v2048, %v2056
    %v2059 = vmul.f32 %v2057, %v2057
    %v2060 = vmul.f32 %v2058, %v2058
    %v2061 = vsel %vm72, %v2059, 0.0
    %2062 = vadd.xlane.f32.xlu0 %v2061
    %v2063 = vpop.xlane.xlu0 %2062
    %v2064 = vsel %vm72, %v2060, 0.0
    %2065 = vadd.xlane.f32.xlu0 %v2064
    %v2066 = vpop.xlane.xlu0 %2065
    %v2067 = vmul.f32 %v2063, %v828
    %v2068 = vmul.f32 %v2066, %v828
    %v2069 = vadd.f32 %v2067, 1e-05
    %v2070 = vadd.f32 %v2068, 1e-05
    %v2071 = vrsqrt.pop %v2069
    %v2072 = vrsqrt.pop %v2070
    %v2073 = vmul.f32 %v2057, %v2071
    %v2074 = vmul.f32 %v2058, %v2072
    %2075 = vrot.lane.b32.xlu0 %v1977, 96
    %v2076 = vpop.permute.xlu0 %2075
    %v2078 = vmul.f32 %v2073, %v2076
    %v2079 = vmul.f32 %v2074, %v2076
    %2080 = vrot.lane.b32.xlu0 %v1977, 64
    %v2081 = vpop.permute.xlu0 %2080
    %v2083 = vadd.f32 %v2078, %v2081
    %v2084 = vadd.f32 %v2079, %v2081
    %v2085 = vld [vmem:[%s1] sm:$0xff]
    %v2086 = vld [vmem:[%s1 + $0x8] sm:$0xff]
    %v2087 = vld [vmem:[%s5 + $0x4] sm:$0xf]
    %v2088 = vld [vmem:[%s5 + $0x14] sm:$0xf]
    %v2089 = vld [vmem:[%s5 + $0x24] sm:$0xf]
    %v2090 = vld [vmem:[%s5 + $0x34] sm:$0xf]
    %v2091 = vld [vmem:[%s9 + $0x2] sm:$0x3]
    %v2092 = vpack.c.bf16 %v2086, %v2085
    %v2094 = vlaneseq
    %v2095 = vshrl.u32 %v2094, 7
    %v2096 = vsub.s32 0, %v2095
    %v2097 = vrot.slane %v2091, %v2096
    %v2098 = vlaneseq
    %v2099 = vshrl.u32 %v2098, 7
    %v2100 = vsub.s32 1, %v2099
    %v2101 = vrot.slane %v2091, %v2100
    %v2106 = vunpack.c.l.b16 %v2087
    %v2107 = vunpack.c.l.b16 %v2088
    %v2108 = vunpack.c.l.b16 %v2089
    %v2109 = vunpack.c.l.b16 %v2090
    %v2110 = vpack.c.b16 %v2107, %v2106
    %v2111 = vpack.c.b16 %v2109, %v2108
    %2112 = vrot.lane.b32.xlu0 %v2110, 96
    %v2113 = vpop.permute.xlu0 %2112
    %2114 = vrot.lane.b32.xlu0 %v2111, 96
    %v2115 = vpop.permute.xlu0 %2114
    %2118 = vrot.lane.b32.xlu0 %v2097, 32
    %v2119 = vpop.permute.xlu0 %2118
    %2120 = vrot.lane.b32.xlu0 %v2101, 32
    %v2121 = vpop.permute.xlu0 %2120
    %v2122 = vsel %vm72, %v2119, %v2121
    %v2125 = vsel %vm72, %v2092, 0
    %2127 = vmatprep.subr.bf16.mxu0 0
    %2128 = vmatpush1.bf16.msra.mxu0 0
    %2129 = vmatprep.subr.bf16.mxu0 0
    %2130 = vmatpush1.bf16.msra.mxu0 0
    %2131 = vmatprep.subr.bf16.mxu0 0
    %2132 = vmatpush1.bf16.msra.mxu0 0
    %2133 = vmatprep.subr.bf16.mxu0 0
    %2134 = vmatpush1.bf16.msra.mxu0 0
    %2135 = vmatprep.subr.bf16.mxu0 0
    %2136 = vmatpush1.bf16.msra.mxu0 0
    %2137 = vmatprep.subr.bf16.mxu0 0
    %2138 = vmatpush1.bf16.msra.mxu0 0
    %2139 = vmatprep.subr.bf16.mxu0 0
    %2140 = vmatpush1.bf16.msra.mxu0 %v2115
    %2141 = vmatprep.subr.bf16.mxu0 0
    %2142 = vmatpush1.bf16.msra.mxu0 %v2113
    %2143 = vmatprep.subr.bf16.mxu0 0
    %2144 = vmatpush2.bf16.msra.mxu0 0
    %2145 = vmatprep.subr.bf16.mxu0 0
    %2146 = vmatpush2.bf16.msra.mxu0 0
    %2147 = vmatprep.subr.bf16.mxu0 0
    %2148 = vmatpush2.bf16.msra.mxu0 0
    %2149 = vmatprep.subr.bf16.mxu0 0
    %2150 = vmatpush2.bf16.msra.mxu0 0
    %2151 = vmatprep.subr.bf16.mxu0 0
    %2152 = vmatpush2.bf16.msra.mxu0 0
    %2153 = vmatprep.subr.bf16.mxu0 0
    %2154 = vmatpush2.bf16.msra.mxu0 0
    %2155 = vmatprep.subr.bf16.mxu0 0
    %2156 = vmatpush2.bf16.msra.mxu0 0
    %2157 = vmatprep.subr.bf16.mxu0 0
    %2158 = vmatpush2.bf16.msra.mxu0 0
    %2159 = vmatprep.mubr.bf16.mxu0 0
    %2160 = vmatmul.mubr.bf16.gmra.mxu0 %v2125
    %v2161 = vpop.f32.mrf.mxu0
    %v2162 = vadd.f32 %v2122, %v2161
    %v2163 = vpop.f32.mrf.mxu0
    %v2164 = vpop.f32.mrf.mxu0
    %v2165 = vadd.f32 %v2122, %v2164
    %v2166 = vpop.f32.mrf.mxu0
    %2167 = vdwg.mxu0
    %s2168 = scalar_lea.vmem %s7, 16
    %v2169 = vld [vmem:[%s2168] sm:$0xf]
    %v2170 = vld [vmem:[%s2168 + $0x4] sm:$0xf]
    %v2171 = vld [vmem:[%s2168 + $0x8] sm:$0xf]
    %v2172 = vld [vmem:[%s2168 + $0xc] sm:$0xf]
    %v2173 = vld [vmem:[%s9 + $0x3] sm:$0x1]
    %v2174 = vpack.c.bf16 %v2165, %v2162
    %2176 = vrot.lane.b32.xlu0 %v2174, 120
    %v2177 = vpop.permute.xlu0 %2176
    %2178 = vrot.lane.b32.xlu0 %v2174, 112
    %v2179 = vpop.permute.xlu0 %2178
    %2180 = vrot.lane.b32.xlu0 %v2174, 104
    %v2181 = vpop.permute.xlu0 %2180
    %2182 = vrot.lane.b32.xlu0 %v2174, 96
    %v2183 = vpop.permute.xlu0 %2182
    %v2185 = vsel %vm131, %v2174, 0
    %v2188 = vsel %vm131, %v2183, 0
    %2190 = vmatprep.subr.bf16.mxu0 0
    %2191 = vmatpush1.bf16.xpose.msra.mxu0 0
    %2192 = vmatprep.subr.bf16.mxu0 0
    %2193 = vmatpush1.bf16.xpose.msra.mxu0 0
    %2194 = vmatprep.subr.bf16.mxu0 0
    %2195 = vmatpush1.bf16.xpose.msra.mxu0 0
    %2196 = vmatprep.subr.bf16.mxu0 0
    %2197 = vmatpush1.bf16.xpose.msra.mxu0 0
    %2198 = vmatprep.subr.bf16.mxu0 0
    %2199 = vmatpush1.bf16.xpose.msra.mxu0 0
    %2200 = vmatprep.subr.bf16.mxu0 0
    %2201 = vmatpush1.bf16.xpose.msra.mxu0 0
    %2202 = vmatprep.subr.bf16.mxu0 0
    %2203 = vmatpush1.bf16.xpose.msra.mxu0 0
    %2204 = vmatprep.subr.bf16.mxu0 0
    %2205 = vmatpush1.bf16.xpose.msra.mxu0 %v2188
    %2206 = vmatprep.subr.bf16.mxu0 0
    %2207 = vmatpush2.bf16.xpose.msra.mxu0 0
    %2208 = vmatprep.subr.bf16.mxu0 0
    %2209 = vmatpush2.bf16.xpose.msra.mxu0 0
    %2210 = vmatprep.subr.bf16.mxu0 0
    %2211 = vmatpush2.bf16.xpose.msra.mxu0 0
    %2212 = vmatprep.subr.bf16.mxu0 0
    %2213 = vmatpush2.bf16.xpose.msra.mxu0 0
    %2214 = vmatprep.subr.bf16.mxu0 0
    %2215 = vmatpush2.bf16.xpose.msra.mxu0 0
    %2216 = vmatprep.subr.bf16.mxu0 0
    %2217 = vmatpush2.bf16.xpose.msra.mxu0 0
    %2218 = vmatprep.subr.bf16.mxu0 0
    %2219 = vmatpush2.bf16.xpose.msra.mxu0 0
    %2220 = vmatprep.subr.bf16.mxu0 0
    %2221 = vmatpush2.bf16.xpose.msra.mxu0 0
    %2222 = vmatprep.mubr.bf16.mxu0 0
    %2223 = vmatmul.mubr.bf16.gmra.mxu0 %v2185
    %v2224 = vpop.f32.mrf.mxu0
    %v2225 = vadd.f32 %v42, %v2224
    %v2226 = vpop.f32.mrf.mxu0
    %v2227 = vpop.f32.mrf.mxu0
    %v2228 = vadd.f32 %v43, %v2227
    %v2229 = vpop.f32.mrf.mxu0
    %2230 = vdwg.mxu0
    %2231 = vrot.lane.b32.xlu0 %v2177, 96
    %v2232 = vpop.permute.xlu0 %2231
    %v2234 = vsel %vm131, %v2177, 0
    %v2237 = vsel %vm131, %v2232, 0
    %2239 = vmatprep.subr.bf16.mxu0 0
    %2240 = vmatpush1.bf16.xpose.msra.mxu0 0
    %2241 = vmatprep.subr.bf16.mxu0 0
    %2242 = vmatpush1.bf16.xpose.msra.mxu0 0
    %2243 = vmatprep.subr.bf16.mxu0 0
    %2244 = vmatpush1.bf16.xpose.msra.mxu0 0
    %2245 = vmatprep.subr.bf16.mxu0 0
    %2246 = vmatpush1.bf16.xpose.msra.mxu0 0
    %2247 = vmatprep.subr.bf16.mxu0 0
    %2248 = vmatpush1.bf16.xpose.msra.mxu0 0
    %2249 = vmatprep.subr.bf16.mxu0 0
    %2250 = vmatpush1.bf16.xpose.msra.mxu0 0
    %2251 = vmatprep.subr.bf16.mxu0 0
    %2252 = vmatpush1.bf16.xpose.msra.mxu0 0
    %2253 = vmatprep.subr.bf16.mxu0 0
    %2254 = vmatpush1.bf16.xpose.msra.mxu0 %v2237
    %2255 = vmatprep.subr.bf16.mxu0 0
    %2256 = vmatpush2.bf16.xpose.msra.mxu0 0
    %2257 = vmatprep.subr.bf16.mxu0 0
    %2258 = vmatpush2.bf16.xpose.msra.mxu0 0
    %2259 = vmatprep.subr.bf16.mxu0 0
    %2260 = vmatpush2.bf16.xpose.msra.mxu0 0
    %2261 = vmatprep.subr.bf16.mxu0 0
    %2262 = vmatpush2.bf16.xpose.msra.mxu0 0
    %2263 = vmatprep.subr.bf16.mxu0 0
    %2264 = vmatpush2.bf16.xpose.msra.mxu0 0
    %2265 = vmatprep.subr.bf16.mxu0 0
    %2266 = vmatpush2.bf16.xpose.msra.mxu0 0
    %2267 = vmatprep.subr.bf16.mxu0 0
    %2268 = vmatpush2.bf16.xpose.msra.mxu0 0
    %2269 = vmatprep.subr.bf16.mxu0 0
    %2270 = vmatpush2.bf16.xpose.msra.mxu0 0
    %2271 = vmatprep.mubr.bf16.mxu0 0
    %2272 = vmatmul.mubr.bf16.gmra.mxu0 %v2234
    %v2273 = vpop.f32.mrf.mxu0
    %v2274 = vadd.f32 %v42, %v2273
    %v2275 = vpop.f32.mrf.mxu0
    %v2276 = vpop.f32.mrf.mxu0
    %v2277 = vadd.f32 %v43, %v2276
    %v2278 = vpop.f32.mrf.mxu0
    %2279 = vdwg.mxu0
    %2280 = vrot.lane.b32.xlu0 %v2179, 96
    %v2281 = vpop.permute.xlu0 %2280
    %v2283 = vsel %vm131, %v2179, 0
    %v2286 = vsel %vm131, %v2281, 0
    %2288 = vmatprep.subr.bf16.mxu0 0
    %2289 = vmatpush1.bf16.xpose.msra.mxu0 0
    %2290 = vmatprep.subr.bf16.mxu0 0
    %2291 = vmatpush1.bf16.xpose.msra.mxu0 0
    %2292 = vmatprep.subr.bf16.mxu0 0
    %2293 = vmatpush1.bf16.xpose.msra.mxu0 0
    %2294 = vmatprep.subr.bf16.mxu0 0
    %2295 = vmatpush1.bf16.xpose.msra.mxu0 0
    %2296 = vmatprep.subr.bf16.mxu0 0
    %2297 = vmatpush1.bf16.xpose.msra.mxu0 0
    %2298 = vmatprep.subr.bf16.mxu0 0
    %2299 = vmatpush1.bf16.xpose.msra.mxu0 0
    %2300 = vmatprep.subr.bf16.mxu0 0
    %2301 = vmatpush1.bf16.xpose.msra.mxu0 0
    %2302 = vmatprep.subr.bf16.mxu0 0
    %2303 = vmatpush1.bf16.xpose.msra.mxu0 %v2286
    %2304 = vmatprep.subr.bf16.mxu0 0
    %2305 = vmatpush2.bf16.xpose.msra.mxu0 0
    %2306 = vmatprep.subr.bf16.mxu0 0
    %2307 = vmatpush2.bf16.xpose.msra.mxu0 0
    %2308 = vmatprep.subr.bf16.mxu0 0
    %2309 = vmatpush2.bf16.xpose.msra.mxu0 0
    %2310 = vmatprep.subr.bf16.mxu0 0
    %2311 = vmatpush2.bf16.xpose.msra.mxu0 0
    %2312 = vmatprep.subr.bf16.mxu0 0
    %2313 = vmatpush2.bf16.xpose.msra.mxu0 0
    %2314 = vmatprep.subr.bf16.mxu0 0
    %2315 = vmatpush2.bf16.xpose.msra.mxu0 0
    %2316 = vmatprep.subr.bf16.mxu0 0
    %2317 = vmatpush2.bf16.xpose.msra.mxu0 0
    %2318 = vmatprep.subr.bf16.mxu0 0
    %2319 = vmatpush2.bf16.xpose.msra.mxu0 0
    %2320 = vmatprep.mubr.bf16.mxu0 0
    %2321 = vmatmul.mubr.bf16.gmra.mxu0 %v2283
    %v2322 = vpop.f32.mrf.mxu0
    %v2323 = vadd.f32 %v42, %v2322
    %v2324 = vpop.f32.mrf.mxu0
    %v2325 = vpop.f32.mrf.mxu0
    %v2326 = vadd.f32 %v43, %v2325
    %v2327 = vpop.f32.mrf.mxu0
    %2328 = vdwg.mxu0
    %2329 = vrot.lane.b32.xlu0 %v2181, 96
    %v2330 = vpop.permute.xlu0 %2329
    %v2332 = vsel %vm131, %v2181, 0
    %v2335 = vsel %vm131, %v2330, 0
    %2337 = vmatprep.subr.bf16.mxu0 0
    %2338 = vmatpush1.bf16.xpose.msra.mxu0 0
    %2339 = vmatprep.subr.bf16.mxu0 0
    %2340 = vmatpush1.bf16.xpose.msra.mxu0 0
    %2341 = vmatprep.subr.bf16.mxu0 0
    %2342 = vmatpush1.bf16.xpose.msra.mxu0 0
    %2343 = vmatprep.subr.bf16.mxu0 0
    %2344 = vmatpush1.bf16.xpose.msra.mxu0 0
    %2345 = vmatprep.subr.bf16.mxu0 0
    %2346 = vmatpush1.bf16.xpose.msra.mxu0 0
    %2347 = vmatprep.subr.bf16.mxu0 0
    %2348 = vmatpush1.bf16.xpose.msra.mxu0 0
    %2349 = vmatprep.subr.bf16.mxu0 0
    %2350 = vmatpush1.bf16.xpose.msra.mxu0 0
    %2351 = vmatprep.subr.bf16.mxu0 0
    %2352 = vmatpush1.bf16.xpose.msra.mxu0 %v2335
    %2353 = vmatprep.subr.bf16.mxu0 0
    %2354 = vmatpush2.bf16.xpose.msra.mxu0 0
    %2355 = vmatprep.subr.bf16.mxu0 0
    %2356 = vmatpush2.bf16.xpose.msra.mxu0 0
    %2357 = vmatprep.subr.bf16.mxu0 0
    %2358 = vmatpush2.bf16.xpose.msra.mxu0 0
    %2359 = vmatprep.subr.bf16.mxu0 0
    %2360 = vmatpush2.bf16.xpose.msra.mxu0 0
    %2361 = vmatprep.subr.bf16.mxu0 0
    %2362 = vmatpush2.bf16.xpose.msra.mxu0 0
    %2363 = vmatprep.subr.bf16.mxu0 0
    %2364 = vmatpush2.bf16.xpose.msra.mxu0 0
    %2365 = vmatprep.subr.bf16.mxu0 0
    %2366 = vmatpush2.bf16.xpose.msra.mxu0 0
    %2367 = vmatprep.subr.bf16.mxu0 0
    %2368 = vmatpush2.bf16.xpose.msra.mxu0 0
    %2369 = vmatprep.mubr.bf16.mxu0 0
    %2370 = vmatmul.mubr.bf16.gmra.mxu0 %v2332
    %v2371 = vpop.f32.mrf.mxu0
    %v2372 = vadd.f32 %v42, %v2371
    %v2373 = vpop.f32.mrf.mxu0
    %v2374 = vpop.f32.mrf.mxu0
    %v2375 = vadd.f32 %v43, %v2374
    %v2376 = vpop.f32.mrf.mxu0
    %2377 = vdwg.mxu0
    %v2378 = vsel %vm326, %v2225, -inf
    %2379 = vmax.xlane.f32.xlu0 %v2378
    %v2380 = vpop.xlane.xlu0 %2379
    %v2381 = vsel %vm326, %v2228, -inf
    %2382 = vmax.xlane.f32.xlu0 %v2381
    %v2383 = vpop.xlane.xlu0 %2382
    %v2384 = vsel %vm326, %v2274, -inf
    %2385 = vmax.xlane.f32.xlu0 %v2384
    %v2386 = vpop.xlane.xlu0 %2385
    %v2387 = vsel %vm326, %v2277, -inf
    %2388 = vmax.xlane.f32.xlu0 %v2387
    %v2389 = vpop.xlane.xlu0 %2388
    %v2390 = vsel %vm326, %v2323, -inf
    %2391 = vmax.xlane.f32.xlu0 %v2390
    %v2392 = vpop.xlane.xlu0 %2391
    %v2393 = vsel %vm326, %v2326, -inf
    %2394 = vmax.xlane.f32.xlu0 %v2393
    %v2395 = vpop.xlane.xlu0 %2394
    %v2396 = vsel %vm326, %v2372, -inf
    %2397 = vmax.xlane.f32.xlu0 %v2396
    %v2398 = vpop.xlane.xlu0 %2397
    %v2399 = vsel %vm326, %v2375, -inf
    %2400 = vmax.xlane.f32.xlu0 %v2399
    %v2401 = vpop.xlane.xlu0 %2400
    %v2402 = vsub.f32 %v2225, %v2380
    %v2403 = vsub.f32 %v2228, %v2383
    %v2404 = vsub.f32 %v2274, %v2386
    %v2405 = vsub.f32 %v2277, %v2389
    %v2406 = vsub.f32 %v2323, %v2392
    %v2407 = vsub.f32 %v2326, %v2395
    %v2408 = vsub.f32 %v2372, %v2398
    %v2409 = vsub.f32 %v2375, %v2401
    %v2410 = vmul.f32 %v2402, 1.442695
    %v2411 = vpow.pop %v2410
    %v2412 = vmul.f32 %v2403, 1.442695
    %v2413 = vpow.pop %v2412
    %v2414 = vmul.f32 %v2404, 1.442695
    %v2415 = vpow.pop %v2414
    %v2416 = vmul.f32 %v2405, 1.442695
    %v2417 = vpow.pop %v2416
    %v2418 = vmul.f32 %v2406, 1.442695
    %v2419 = vpow.pop %v2418
    %v2420 = vmul.f32 %v2407, 1.442695
    %v2421 = vpow.pop %v2420
    %v2422 = vmul.f32 %v2408, 1.442695
    %v2423 = vpow.pop %v2422
    %v2424 = vmul.f32 %v2409, 1.442695
    %v2425 = vpow.pop %v2424
    %v2426 = vsel %vm326, %v2411, 0.0
    %2427 = vadd.xlane.f32.xlu0 %v2426
    %v2428 = vpop.xlane.xlu0 %2427
    %v2429 = vsel %vm326, %v2413, 0.0
    %2430 = vadd.xlane.f32.xlu0 %v2429
    %v2431 = vpop.xlane.xlu0 %2430
    %v2432 = vsel %vm326, %v2415, 0.0
    %2433 = vadd.xlane.f32.xlu0 %v2432
    %v2434 = vpop.xlane.xlu0 %2433
    %v2435 = vsel %vm326, %v2417, 0.0
    %2436 = vadd.xlane.f32.xlu0 %v2435
    %v2437 = vpop.xlane.xlu0 %2436
    %v2438 = vsel %vm326, %v2419, 0.0
    %2439 = vadd.xlane.f32.xlu0 %v2438
    %v2440 = vpop.xlane.xlu0 %2439
    %v2441 = vsel %vm326, %v2421, 0.0
    %2442 = vadd.xlane.f32.xlu0 %v2441
    %v2443 = vpop.xlane.xlu0 %2442
    %v2444 = vsel %vm326, %v2423, 0.0
    %2445 = vadd.xlane.f32.xlu0 %v2444
    %v2446 = vpop.xlane.xlu0 %2445
    %v2447 = vsel %vm326, %v2425, 0.0
    %2448 = vadd.xlane.f32.xlu0 %v2447
    %v2449 = vpop.xlane.xlu0 %2448
    %v2450 = vrcp.pop %v2428
    %v2451 = vrcp.pop %v2431
    %v2452 = vrcp.pop %v2434
    %v2453 = vrcp.pop %v2437
    %v2454 = vrcp.pop %v2440
    %v2455 = vrcp.pop %v2443
    %v2456 = vrcp.pop %v2446
    %v2457 = vrcp.pop %v2449
    %v2458 = vmul.f32 %v2411, %v2450
    %v2459 = vmul.f32 %v2413, %v2451
    %v2460 = vmul.f32 %v2415, %v2452
    %v2461 = vmul.f32 %v2417, %v2453
    %v2462 = vmul.f32 %v2419, %v2454
    %v2463 = vmul.f32 %v2421, %v2455
    %v2464 = vmul.f32 %v2423, %v2456
    %v2465 = vmul.f32 %v2425, %v2457
    %v2466 = vpack.c.bf16 %v2459, %v2458
    %v2467 = vpack.c.bf16 %v2461, %v2460
    %v2468 = vpack.c.bf16 %v2463, %v2462
    %v2469 = vpack.c.bf16 %v2465, %v2464
    %2470 = vrot.lane.b32.xlu0 %v2174, 64
    %v2471 = vpop.permute.xlu0 %2470
    %v2474 = vsel %vm326, %v2466, 0
    %2476 = vmatprep.subr.bf16.mxu0 0
    %2477 = vmatpush1.bf16.msra.mxu0 0
    %2478 = vmatprep.subr.bf16.mxu0 0
    %2479 = vmatpush1.bf16.msra.mxu0 0
    %2480 = vmatprep.subr.bf16.mxu0 0
    %2481 = vmatpush1.bf16.msra.mxu0 0
    %2482 = vmatprep.subr.bf16.mxu0 0
    %2483 = vmatpush1.bf16.msra.mxu0 0
    %2484 = vmatprep.subr.bf16.mxu0 0
    %2485 = vmatpush1.bf16.msra.mxu0 0
    %2486 = vmatprep.subr.bf16.mxu0 0
    %2487 = vmatpush1.bf16.msra.mxu0 0
    %2488 = vmatprep.subr.bf16.mxu0 0
    %2489 = vmatpush1.bf16.msra.mxu0 0
    %2490 = vmatprep.subr.bf16.mxu0 0
    %2491 = vmatpush1.bf16.msra.mxu0 %v2471
    %2492 = vmatprep.subr.bf16.mxu0 0
    %2493 = vmatpush2.bf16.msra.mxu0 0
    %2494 = vmatprep.subr.bf16.mxu0 0
    %2495 = vmatpush2.bf16.msra.mxu0 0
    %2496 = vmatprep.subr.bf16.mxu0 0
    %2497 = vmatpush2.bf16.msra.mxu0 0
    %2498 = vmatprep.subr.bf16.mxu0 0
    %2499 = vmatpush2.bf16.msra.mxu0 0
    %2500 = vmatprep.subr.bf16.mxu0 0
    %2501 = vmatpush2.bf16.msra.mxu0 0
    %2502 = vmatprep.subr.bf16.mxu0 0
    %2503 = vmatpush2.bf16.msra.mxu0 0
    %2504 = vmatprep.subr.bf16.mxu0 0
    %2505 = vmatpush2.bf16.msra.mxu0 0
    %2506 = vmatprep.subr.bf16.mxu0 0
    %2507 = vmatpush2.bf16.msra.mxu0 0
    %2508 = vmatprep.mubr.bf16.mxu0 0
    %2509 = vmatmul.mubr.bf16.gmra.mxu0 %v2474
    %v2510 = vpop.f32.mrf.mxu0
    %v2511 = vadd.f32 0.0, %v2510
    %v2512 = vpop.f32.mrf.mxu0
    %v2513 = vpop.f32.mrf.mxu0
    %v2514 = vadd.f32 0.0, %v2513
    %v2515 = vpop.f32.mrf.mxu0
    %2516 = vdwg.mxu0
    %2517 = vrot.lane.b32.xlu0 %v2177, 64
    %v2518 = vpop.permute.xlu0 %2517
    %v2521 = vsel %vm326, %v2467, 0
    %2523 = vmatprep.subr.bf16.mxu0 0
    %2524 = vmatpush1.bf16.msra.mxu0 0
    %2525 = vmatprep.subr.bf16.mxu0 0
    %2526 = vmatpush1.bf16.msra.mxu0 0
    %2527 = vmatprep.subr.bf16.mxu0 0
    %2528 = vmatpush1.bf16.msra.mxu0 0
    %2529 = vmatprep.subr.bf16.mxu0 0
    %2530 = vmatpush1.bf16.msra.mxu0 0
    %2531 = vmatprep.subr.bf16.mxu0 0
    %2532 = vmatpush1.bf16.msra.mxu0 0
    %2533 = vmatprep.subr.bf16.mxu0 0
    %2534 = vmatpush1.bf16.msra.mxu0 0
    %2535 = vmatprep.subr.bf16.mxu0 0
    %2536 = vmatpush1.bf16.msra.mxu0 0
    %2537 = vmatprep.subr.bf16.mxu0 0
    %2538 = vmatpush1.bf16.msra.mxu0 %v2518
    %2539 = vmatprep.subr.bf16.mxu0 0
    %2540 = vmatpush2.bf16.msra.mxu0 0
    %2541 = vmatprep.subr.bf16.mxu0 0
    %2542 = vmatpush2.bf16.msra.mxu0 0
    %2543 = vmatprep.subr.bf16.mxu0 0
    %2544 = vmatpush2.bf16.msra.mxu0 0
    %2545 = vmatprep.subr.bf16.mxu0 0
    %2546 = vmatpush2.bf16.msra.mxu0 0
    %2547 = vmatprep.subr.bf16.mxu0 0
    %2548 = vmatpush2.bf16.msra.mxu0 0
    %2549 = vmatprep.subr.bf16.mxu0 0
    %2550 = vmatpush2.bf16.msra.mxu0 0
    %2551 = vmatprep.subr.bf16.mxu0 0
    %2552 = vmatpush2.bf16.msra.mxu0 0
    %2553 = vmatprep.subr.bf16.mxu0 0
    %2554 = vmatpush2.bf16.msra.mxu0 0
    %2555 = vmatprep.mubr.bf16.mxu0 0
    %2556 = vmatmul.mubr.bf16.gmra.mxu0 %v2521
    %v2557 = vpop.f32.mrf.mxu0
    %v2558 = vadd.f32 0.0, %v2557
    %v2559 = vpop.f32.mrf.mxu0
    %v2560 = vpop.f32.mrf.mxu0
    %v2561 = vadd.f32 0.0, %v2560
    %v2562 = vpop.f32.mrf.mxu0
    %2563 = vdwg.mxu0
    %2564 = vrot.lane.b32.xlu0 %v2179, 64
    %v2565 = vpop.permute.xlu0 %2564
    %v2568 = vsel %vm326, %v2468, 0
    %2570 = vmatprep.subr.bf16.mxu0 0
    %2571 = vmatpush1.bf16.msra.mxu0 0
    %2572 = vmatprep.subr.bf16.mxu0 0
    %2573 = vmatpush1.bf16.msra.mxu0 0
    %2574 = vmatprep.subr.bf16.mxu0 0
    %2575 = vmatpush1.bf16.msra.mxu0 0
    %2576 = vmatprep.subr.bf16.mxu0 0
    %2577 = vmatpush1.bf16.msra.mxu0 0
    %2578 = vmatprep.subr.bf16.mxu0 0
    %2579 = vmatpush1.bf16.msra.mxu0 0
    %2580 = vmatprep.subr.bf16.mxu0 0
    %2581 = vmatpush1.bf16.msra.mxu0 0
    %2582 = vmatprep.subr.bf16.mxu0 0
    %2583 = vmatpush1.bf16.msra.mxu0 0
    %2584 = vmatprep.subr.bf16.mxu0 0
    %2585 = vmatpush1.bf16.msra.mxu0 %v2565
    %2586 = vmatprep.subr.bf16.mxu0 0
    %2587 = vmatpush2.bf16.msra.mxu0 0
    %2588 = vmatprep.subr.bf16.mxu0 0
    %2589 = vmatpush2.bf16.msra.mxu0 0
    %2590 = vmatprep.subr.bf16.mxu0 0
    %2591 = vmatpush2.bf16.msra.mxu0 0
    %2592 = vmatprep.subr.bf16.mxu0 0
    %2593 = vmatpush2.bf16.msra.mxu0 0
    %2594 = vmatprep.subr.bf16.mxu0 0
    %2595 = vmatpush2.bf16.msra.mxu0 0
    %2596 = vmatprep.subr.bf16.mxu0 0
    %2597 = vmatpush2.bf16.msra.mxu0 0
    %2598 = vmatprep.subr.bf16.mxu0 0
    %2599 = vmatpush2.bf16.msra.mxu0 0
    %2600 = vmatprep.subr.bf16.mxu0 0
    %2601 = vmatpush2.bf16.msra.mxu0 0
    %2602 = vmatprep.mubr.bf16.mxu0 0
    %2603 = vmatmul.mubr.bf16.gmra.mxu0 %v2568
    %v2604 = vpop.f32.mrf.mxu0
    %v2605 = vadd.f32 0.0, %v2604
    %v2606 = vpop.f32.mrf.mxu0
    %v2607 = vpop.f32.mrf.mxu0
    %v2608 = vadd.f32 0.0, %v2607
    %v2609 = vpop.f32.mrf.mxu0
    %2610 = vdwg.mxu0
    %2611 = vrot.lane.b32.xlu0 %v2181, 64
    %v2612 = vpop.permute.xlu0 %2611
    %v2615 = vsel %vm326, %v2469, 0
    %2617 = vmatprep.subr.bf16.mxu0 0
    %2618 = vmatpush1.bf16.msra.mxu0 0
    %2619 = vmatprep.subr.bf16.mxu0 0
    %2620 = vmatpush1.bf16.msra.mxu0 0
    %2621 = vmatprep.subr.bf16.mxu0 0
    %2622 = vmatpush1.bf16.msra.mxu0 0
    %2623 = vmatprep.subr.bf16.mxu0 0
    %2624 = vmatpush1.bf16.msra.mxu0 0
    %2625 = vmatprep.subr.bf16.mxu0 0
    %2626 = vmatpush1.bf16.msra.mxu0 0
    %2627 = vmatprep.subr.bf16.mxu0 0
    %2628 = vmatpush1.bf16.msra.mxu0 0
    %2629 = vmatprep.subr.bf16.mxu0 0
    %2630 = vmatpush1.bf16.msra.mxu0 0
    %2631 = vmatprep.subr.bf16.mxu0 0
    %2632 = vmatpush1.bf16.msra.mxu0 %v2612
    %2633 = vmatprep.subr.bf16.mxu0 0
    %2634 = vmatpush2.bf16.msra.mxu0 0
    %2635 = vmatprep.subr.bf16.mxu0 0
    %2636 = vmatpush2.bf16.msra.mxu0 0
    %2637 = vmatprep.subr.bf16.mxu0 0
    %2638 = vmatpush2.bf16.msra.mxu0 0
    %2639 = vmatprep.subr.bf16.mxu0 0
    %2640 = vmatpush2.bf16.msra.mxu0 0
    %2641 = vmatprep.subr.bf16.mxu0 0
    %2642 = vmatpush2.bf16.msra.mxu0 0
    %2643 = vmatprep.subr.bf16.mxu0 0
    %2644 = vmatpush2.bf16.msra.mxu0 0
    %2645 = vmatprep.subr.bf16.mxu0 0
    %2646 = vmatpush2.bf16.msra.mxu0 0
    %2647 = vmatprep.subr.bf16.mxu0 0
    %2648 = vmatpush2.bf16.msra.mxu0 0
    %2649 = vmatprep.mubr.bf16.mxu0 0
    %2650 = vmatmul.mubr.bf16.gmra.mxu0 %v2615
    %v2651 = vpop.f32.mrf.mxu0
    %v2652 = vadd.f32 0.0, %v2651
    %v2653 = vpop.f32.mrf.mxu0
    %v2654 = vpop.f32.mrf.mxu0
    %v2655 = vadd.f32 0.0, %v2654
    %v2656 = vpop.f32.mrf.mxu0
    %2657 = vdwg.mxu0
    %v2658 = vpack.c.bf16 %v2514, %v2511
    %v2659 = vpack.c.bf16 %v2561, %v2558
    %v2660 = vpack.c.bf16 %v2608, %v2605
    %v2661 = vpack.c.bf16 %v2655, %v2652
    %v2663 = vsel %vm131, %v2658, 0
    %v2666 = vsel %vm614, %v2169, 0
    %2668 = vmatprep.subr.bf16.mxu0 0
    %2669 = vmatpush1.bf16.msra.mxu0 0
    %2670 = vmatprep.subr.bf16.mxu0 0
    %2671 = vmatpush1.bf16.msra.mxu0 0
    %2672 = vmatprep.subr.bf16.mxu0 0
    %2673 = vmatpush1.bf16.msra.mxu0 0
    %2674 = vmatprep.subr.bf16.mxu0 0
    %2675 = vmatpush1.bf16.msra.mxu0 0
    %2676 = vmatprep.subr.bf16.mxu0 0
    %2677 = vmatpush1.bf16.msra.mxu0 0
    %2678 = vmatprep.subr.bf16.mxu0 0
    %2679 = vmatpush1.bf16.msra.mxu0 0
    %2680 = vmatprep.subr.bf16.mxu0 0
    %2681 = vmatpush1.bf16.msra.mxu0 0
    %2682 = vmatprep.subr.bf16.mxu0 0
    %2683 = vmatpush1.bf16.msra.mxu0 %v2666
    %2684 = vmatprep.subr.bf16.mxu0 0
    %2685 = vmatpush2.bf16.msra.mxu0 0
    %2686 = vmatprep.subr.bf16.mxu0 0
    %2687 = vmatpush2.bf16.msra.mxu0 0
    %2688 = vmatprep.subr.bf16.mxu0 0
    %2689 = vmatpush2.bf16.msra.mxu0 0
    %2690 = vmatprep.subr.bf16.mxu0 0
    %2691 = vmatpush2.bf16.msra.mxu0 0
    %2692 = vmatprep.subr.bf16.mxu0 0
    %2693 = vmatpush2.bf16.msra.mxu0 0
    %2694 = vmatprep.subr.bf16.mxu0 0
    %2695 = vmatpush2.bf16.msra.mxu0 0
    %2696 = vmatprep.subr.bf16.mxu0 0
    %2697 = vmatpush2.bf16.msra.mxu0 0
    %2698 = vmatprep.subr.bf16.mxu0 0
    %2699 = vmatpush2.bf16.msra.mxu0 0
    %2700 = vmatprep.mubr.bf16.mxu0 0
    %2701 = vmatmul.mubr.bf16.gmra.mxu0 %v2663
    %v2702 = vpop.f32.mrf.mxu0
    %v2703 = vadd.f32 0.0, %v2702
    %v2704 = vpop.f32.mrf.mxu0
    %v2705 = vpop.f32.mrf.mxu0
    %v2706 = vadd.f32 0.0, %v2705
    %v2707 = vpop.f32.mrf.mxu0
    %2708 = vdwg.mxu0
    %v2710 = vsel %vm131, %v2659, 0
    %v2713 = vsel %vm614, %v2170, 0
    %2715 = vmatprep.subr.bf16.mxu0 0
    %2716 = vmatpush1.bf16.msra.mxu0 0
    %2717 = vmatprep.subr.bf16.mxu0 0
    %2718 = vmatpush1.bf16.msra.mxu0 0
    %2719 = vmatprep.subr.bf16.mxu0 0
    %2720 = vmatpush1.bf16.msra.mxu0 0
    %2721 = vmatprep.subr.bf16.mxu0 0
    %2722 = vmatpush1.bf16.msra.mxu0 0
    %2723 = vmatprep.subr.bf16.mxu0 0
    %2724 = vmatpush1.bf16.msra.mxu0 0
    %2725 = vmatprep.subr.bf16.mxu0 0
    %2726 = vmatpush1.bf16.msra.mxu0 0
    %2727 = vmatprep.subr.bf16.mxu0 0
    %2728 = vmatpush1.bf16.msra.mxu0 0
    %2729 = vmatprep.subr.bf16.mxu0 0
    %2730 = vmatpush1.bf16.msra.mxu0 %v2713
    %2731 = vmatprep.subr.bf16.mxu0 0
    %2732 = vmatpush2.bf16.msra.mxu0 0
    %2733 = vmatprep.subr.bf16.mxu0 0
    %2734 = vmatpush2.bf16.msra.mxu0 0
    %2735 = vmatprep.subr.bf16.mxu0 0
    %2736 = vmatpush2.bf16.msra.mxu0 0
    %2737 = vmatprep.subr.bf16.mxu0 0
    %2738 = vmatpush2.bf16.msra.mxu0 0
    %2739 = vmatprep.subr.bf16.mxu0 0
    %2740 = vmatpush2.bf16.msra.mxu0 0
    %2741 = vmatprep.subr.bf16.mxu0 0
    %2742 = vmatpush2.bf16.msra.mxu0 0
    %2743 = vmatprep.subr.bf16.mxu0 0
    %2744 = vmatpush2.bf16.msra.mxu0 0
    %2745 = vmatprep.subr.bf16.mxu0 0
    %2746 = vmatpush2.bf16.msra.mxu0 0
    %2747 = vmatprep.mubr.bf16.mxu0 0
    %2748 = vmatmul.mubr.bf16.gmra.mxu0 %v2710
    %v2749 = vpop.f32.mrf.mxu0
    %v2750 = vadd.f32 0.0, %v2749
    %v2751 = vpop.f32.mrf.mxu0
    %v2752 = vpop.f32.mrf.mxu0
    %v2753 = vadd.f32 0.0, %v2752
    %v2754 = vpop.f32.mrf.mxu0
    %2755 = vdwg.mxu0
    %v2757 = vsel %vm131, %v2660, 0
    %v2760 = vsel %vm614, %v2171, 0
    %2762 = vmatprep.subr.bf16.mxu0 0
    %2763 = vmatpush1.bf16.msra.mxu0 0
    %2764 = vmatprep.subr.bf16.mxu0 0
    %2765 = vmatpush1.bf16.msra.mxu0 0
    %2766 = vmatprep.subr.bf16.mxu0 0
    %2767 = vmatpush1.bf16.msra.mxu0 0
    %2768 = vmatprep.subr.bf16.mxu0 0
    %2769 = vmatpush1.bf16.msra.mxu0 0
    %2770 = vmatprep.subr.bf16.mxu0 0
    %2771 = vmatpush1.bf16.msra.mxu0 0
    %2772 = vmatprep.subr.bf16.mxu0 0
    %2773 = vmatpush1.bf16.msra.mxu0 0
    %2774 = vmatprep.subr.bf16.mxu0 0
    %2775 = vmatpush1.bf16.msra.mxu0 0
    %2776 = vmatprep.subr.bf16.mxu0 0
    %2777 = vmatpush1.bf16.msra.mxu0 %v2760
    %2778 = vmatprep.subr.bf16.mxu0 0
    %2779 = vmatpush2.bf16.msra.mxu0 0
    %2780 = vmatprep.subr.bf16.mxu0 0
    %2781 = vmatpush2.bf16.msra.mxu0 0
    %2782 = vmatprep.subr.bf16.mxu0 0
    %2783 = vmatpush2.bf16.msra.mxu0 0
    %2784 = vmatprep.subr.bf16.mxu0 0
    %2785 = vmatpush2.bf16.msra.mxu0 0
    %2786 = vmatprep.subr.bf16.mxu0 0
    %2787 = vmatpush2.bf16.msra.mxu0 0
    %2788 = vmatprep.subr.bf16.mxu0 0
    %2789 = vmatpush2.bf16.msra.mxu0 0
    %2790 = vmatprep.subr.bf16.mxu0 0
    %2791 = vmatpush2.bf16.msra.mxu0 0
    %2792 = vmatprep.subr.bf16.mxu0 0
    %2793 = vmatpush2.bf16.msra.mxu0 0
    %2794 = vmatprep.mubr.bf16.mxu0 0
    %2795 = vmatmul.mubr.bf16.gmra.mxu0 %v2757
    %v2796 = vpop.f32.mrf.mxu0
    %v2797 = vadd.f32 0.0, %v2796
    %v2798 = vpop.f32.mrf.mxu0
    %v2799 = vpop.f32.mrf.mxu0
    %v2800 = vadd.f32 0.0, %v2799
    %v2801 = vpop.f32.mrf.mxu0
    %2802 = vdwg.mxu0
    %v2804 = vsel %vm131, %v2661, 0
    %v2807 = vsel %vm614, %v2172, 0
    %2809 = vmatprep.subr.bf16.mxu0 0
    %2810 = vmatpush1.bf16.msra.mxu0 0
    %2811 = vmatprep.subr.bf16.mxu0 0
    %2812 = vmatpush1.bf16.msra.mxu0 0
    %2813 = vmatprep.subr.bf16.mxu0 0
    %2814 = vmatpush1.bf16.msra.mxu0 0
    %2815 = vmatprep.subr.bf16.mxu0 0
    %2816 = vmatpush1.bf16.msra.mxu0 0
    %2817 = vmatprep.subr.bf16.mxu0 0
    %2818 = vmatpush1.bf16.msra.mxu0 0
    %2819 = vmatprep.subr.bf16.mxu0 0
    %2820 = vmatpush1.bf16.msra.mxu0 0
    %2821 = vmatprep.subr.bf16.mxu0 0
    %2822 = vmatpush1.bf16.msra.mxu0 0
    %2823 = vmatprep.subr.bf16.mxu0 0
    %2824 = vmatpush1.bf16.msra.mxu0 %v2807
    %2825 = vmatprep.subr.bf16.mxu0 0
    %2826 = vmatpush2.bf16.msra.mxu0 0
    %2827 = vmatprep.subr.bf16.mxu0 0
    %2828 = vmatpush2.bf16.msra.mxu0 0
    %2829 = vmatprep.subr.bf16.mxu0 0
    %2830 = vmatpush2.bf16.msra.mxu0 0
    %2831 = vmatprep.subr.bf16.mxu0 0
    %2832 = vmatpush2.bf16.msra.mxu0 0
    %2833 = vmatprep.subr.bf16.mxu0 0
    %2834 = vmatpush2.bf16.msra.mxu0 0
    %2835 = vmatprep.subr.bf16.mxu0 0
    %2836 = vmatpush2.bf16.msra.mxu0 0
    %2837 = vmatprep.subr.bf16.mxu0 0
    %2838 = vmatpush2.bf16.msra.mxu0 0
    %2839 = vmatprep.subr.bf16.mxu0 0
    %2840 = vmatpush2.bf16.msra.mxu0 0
    %2841 = vmatprep.mubr.bf16.mxu0 0
    %2842 = vmatmul.mubr.bf16.gmra.mxu0 %v2804
    %v2843 = vpop.f32.mrf.mxu0
    %v2844 = vadd.f32 0.0, %v2843
    %v2845 = vpop.f32.mrf.mxu0
    %v2846 = vpop.f32.mrf.mxu0
    %v2847 = vadd.f32 0.0, %v2846
    %v2848 = vpop.f32.mrf.mxu0
    %2849 = vdwg.mxu0
    %v2850 = vsel %vm72, %v2703, 0.0
    %v2851 = vsel %vm72, %v2750, 0.0
    %v2852 = vadd.f32 %v2850, %v2851
    %v2853 = vsel %vm72, %v2797, 0.0
    %v2854 = vadd.f32 %v2852, %v2853
    %v2855 = vsel %vm72, %v2844, 0.0
    %v2856 = vadd.f32 %v2854, %v2855
    %v2857 = vsel %vm72, %v2706, 0.0
    %v2858 = vsel %vm72, %v2753, 0.0
    %v2859 = vadd.f32 %v2857, %v2858
    %v2860 = vsel %vm72, %v2800, 0.0
    %v2861 = vadd.f32 %v2859, %v2860
    %v2862 = vsel %vm72, %v2847, 0.0
    %v2863 = vadd.f32 %v2861, %v2862
    %v2865 = vlaneseq
    %v2866 = vshrl.u32 %v2865, 7
    %v2867 = vsub.s32 0, %v2866
    %v2868 = vrot.slane %v2173, %v2867
    %2869 = vrot.lane.b32.xlu0 %v2868, 64
    %v2870 = vpop.permute.xlu0 %2869
    %v2872 = vadd.f32 %v2856, %v2870
    %v2873 = vadd.f32 %v2863, %v2870
    %v2874 = vadd.f32 %v2085, %v2872
    %v2875 = vadd.f32 %v2086, %v2873
    %v2876 = vld [vmem:[%s9 + $0x3] sm:$0x1]
    %v2877 = vld [vmem:[%s9 + $0x4] sm:$0x1]
    %v2878 = vsel %vm72, %v2874, 0.0
    %2879 = vadd.xlane.f32.xlu0 %v2878
    %v2880 = vpop.xlane.xlu0 %2879
    %v2881 = vsel %vm72, %v2875, 0.0
    %2882 = vadd.xlane.f32.xlu0 %v2881
    %v2883 = vpop.xlane.xlu0 %2882
    %v2884 = vmul.f32 %v2880, %v828
    %v2885 = vmul.f32 %v2883, %v828
    %v2886 = vsub.f32 %v2874, %v2884
    %v2887 = vsub.f32 %v2875, %v2885
    %v2888 = vmul.f32 %v2886, %v2886
    %v2889 = vmul.f32 %v2887, %v2887
    %v2890 = vsel %vm72, %v2888, 0.0
    %2891 = vadd.xlane.f32.xlu0 %v2890
    %v2892 = vpop.xlane.xlu0 %2891
    %v2893 = vsel %vm72, %v2889, 0.0
    %2894 = vadd.xlane.f32.xlu0 %v2893
    %v2895 = vpop.xlane.xlu0 %2894
    %v2896 = vmul.f32 %v2892, %v828
    %v2897 = vmul.f32 %v2895, %v828
    %v2898 = vadd.f32 %v2896, 1e-05
    %v2899 = vadd.f32 %v2897, 1e-05
    %v2900 = vrsqrt.pop %v2898
    %v2901 = vrsqrt.pop %v2899
    %v2902 = vmul.f32 %v2886, %v2900
    %v2903 = vmul.f32 %v2887, %v2901
    %v2905 = vlaneseq
    %v2906 = vshrl.u32 %v2905, 7
    %v2907 = vsub.s32 0, %v2906
    %v2908 = vrot.slane %v2876, %v2907
    %2909 = vrot.lane.b32.xlu0 %v2908, 32
    %v2910 = vpop.permute.xlu0 %2909
    %v2912 = vmul.f32 %v2902, %v2910
    %v2913 = vmul.f32 %v2903, %v2910
    %v2915 = vlaneseq
    %v2916 = vshrl.u32 %v2915, 7
    %v2917 = vsub.s32 0, %v2916
    %v2918 = vrot.slane %v2877, %v2917
    %v2920 = vadd.f32 %v2912, %v2918
    %v2921 = vadd.f32 %v2913, %v2918
    %v2922 = vld [vmem:[%s5 + $0x8] sm:$0xf]
    %v2923 = vld [vmem:[%s5 + $0x18] sm:$0xf]
    %v2924 = vld [vmem:[%s5 + $0x28] sm:$0xf]
    %v2925 = vld [vmem:[%s5 + $0x38] sm:$0xf]
    %v2926 = vpack.c.bf16 %v2921, %v2920
    %v2931 = vunpack.c.l.b16 %v2922
    %v2932 = vunpack.c.l.b16 %v2923
    %v2933 = vunpack.c.l.b16 %v2924
    %v2934 = vunpack.c.l.b16 %v2925
    %v2935 = vpack.c.b16 %v2932, %v2931
    %v2936 = vpack.c.b16 %v2934, %v2933
    %2939 = vrot.lane.b32.xlu0 %v2918, 96
    %v2940 = vpop.permute.xlu0 %2939
    %v2943 = vsel %vm72, %v2926, 0
    %2945 = vmatprep.subr.bf16.mxu0 0
    %2946 = vmatpush1.bf16.msra.mxu0 0
    %2947 = vmatprep.subr.bf16.mxu0 0
    %2948 = vmatpush1.bf16.msra.mxu0 0
    %2949 = vmatprep.subr.bf16.mxu0 0
    %2950 = vmatpush1.bf16.msra.mxu0 0
    %2951 = vmatprep.subr.bf16.mxu0 0
    %2952 = vmatpush1.bf16.msra.mxu0 0
    %2953 = vmatprep.subr.bf16.mxu0 0
    %2954 = vmatpush1.bf16.msra.mxu0 0
    %2955 = vmatprep.subr.bf16.mxu0 0
    %2956 = vmatpush1.bf16.msra.mxu0 0
    %2957 = vmatprep.subr.bf16.mxu0 0
    %2958 = vmatpush1.bf16.msra.mxu0 %v2936
    %2959 = vmatprep.subr.bf16.mxu0 0
    %2960 = vmatpush1.bf16.msra.mxu0 %v2935
    %2961 = vmatprep.subr.bf16.mxu0 0
    %2962 = vmatpush2.bf16.msra.mxu0 0
    %2963 = vmatprep.subr.bf16.mxu0 0
    %2964 = vmatpush2.bf16.msra.mxu0 0
    %2965 = vmatprep.subr.bf16.mxu0 0
    %2966 = vmatpush2.bf16.msra.mxu0 0
    %2967 = vmatprep.subr.bf16.mxu0 0
    %2968 = vmatpush2.bf16.msra.mxu0 0
    %2969 = vmatprep.subr.bf16.mxu0 0
    %2970 = vmatpush2.bf16.msra.mxu0 0
    %2971 = vmatprep.subr.bf16.mxu0 0
    %2972 = vmatpush2.bf16.msra.mxu0 0
    %2973 = vmatprep.subr.bf16.mxu0 0
    %2974 = vmatpush2.bf16.msra.mxu0 0
    %2975 = vmatprep.subr.bf16.mxu0 0
    %2976 = vmatpush2.bf16.msra.mxu0 0
    %2977 = vmatprep.mubr.bf16.mxu0 0
    %2978 = vmatmul.mubr.bf16.gmra.mxu0 %v2943
    %v2979 = vpop.f32.mrf.mxu0
    %v2980 = vadd.f32 %v2940, %v2979
    %v2981 = vpop.f32.mrf.mxu0
    %v2982 = vpop.f32.mrf.mxu0
    %v2983 = vadd.f32 %v2940, %v2982
    %v2984 = vpop.f32.mrf.mxu0
    %2985 = vdwg.mxu0
    %v2986 = vpack.c.bf16 %v2084, %v2083
    %2987 = vrot.lane.b32.xlu0 %v2935, 96
    %v2988 = vpop.permute.xlu0 %2987
    %2989 = vrot.lane.b32.xlu0 %v2936, 96
    %v2990 = vpop.permute.xlu0 %2989
    %2993 = vrot.lane.b32.xlu0 %v2918, 64
    %v2994 = vpop.permute.xlu0 %2993
    %v2997 = vsel %vm72, %v2986, 0
    %2999 = vmatprep.subr.bf16.mxu0 0
    %3000 = vmatpush1.bf16.msra.mxu0 0
    %3001 = vmatprep.subr.bf16.mxu0 0
    %3002 = vmatpush1.bf16.msra.mxu0 0
    %3003 = vmatprep.subr.bf16.mxu0 0
    %3004 = vmatpush1.bf16.msra.mxu0 0
    %3005 = vmatprep.subr.bf16.mxu0 0
    %3006 = vmatpush1.bf16.msra.mxu0 0
    %3007 = vmatprep.subr.bf16.mxu0 0
    %3008 = vmatpush1.bf16.msra.mxu0 0
    %3009 = vmatprep.subr.bf16.mxu0 0
    %3010 = vmatpush1.bf16.msra.mxu0 0
    %3011 = vmatprep.subr.bf16.mxu0 0
    %3012 = vmatpush1.bf16.msra.mxu0 %v2990
    %3013 = vmatprep.subr.bf16.mxu0 0
    %3014 = vmatpush1.bf16.msra.mxu0 %v2988
    %3015 = vmatprep.subr.bf16.mxu0 0
    %3016 = vmatpush2.bf16.msra.mxu0 0
    %3017 = vmatprep.subr.bf16.mxu0 0
    %3018 = vmatpush2.bf16.msra.mxu0 0
    %3019 = vmatprep.subr.bf16.mxu0 0
    %3020 = vmatpush2.bf16.msra.mxu0 0
    %3021 = vmatprep.subr.bf16.mxu0 0
    %3022 = vmatpush2.bf16.msra.mxu0 0
    %3023 = vmatprep.subr.bf16.mxu0 0
    %3024 = vmatpush2.bf16.msra.mxu0 0
    %3025 = vmatprep.subr.bf16.mxu0 0
    %3026 = vmatpush2.bf16.msra.mxu0 0
    %3027 = vmatprep.subr.bf16.mxu0 0
    %3028 = vmatpush2.bf16.msra.mxu0 0
    %3029 = vmatprep.subr.bf16.mxu0 0
    %3030 = vmatpush2.bf16.msra.mxu0 0
    %3031 = vmatprep.mubr.bf16.mxu0 0
    %3032 = vmatmul.mubr.bf16.gmra.mxu0 %v2997
    %v3033 = vpop.f32.mrf.mxu0
    %v3034 = vadd.f32 %v2994, %v3033
    %v3035 = vpop.f32.mrf.mxu0
    %v3036 = vpop.f32.mrf.mxu0
    %v3037 = vadd.f32 %v2994, %v3036
    %v3038 = vpop.f32.mrf.mxu0
    %3039 = vdwg.mxu0
    %s3040 = scalar_lea.vmem %s7, 32
    %v3041 = vld [vmem:[%s3040] sm:$0xf]
    %v3042 = vld [vmem:[%s3040 + $0x4] sm:$0xf]
    %v3043 = vld [vmem:[%s3040 + $0x8] sm:$0xf]
    %v3044 = vld [vmem:[%s3040 + $0xc] sm:$0xf]
    %v3045 = vld [vmem:[%s9 + $0x5] sm:$0x1]
    %v3046 = vpack.c.bf16 %v2983, %v2980
    %v3047 = vpack.c.bf16 %v3037, %v3034
    %3049 = vrot.lane.b32.xlu0 %v3046, 120
    %v3050 = vpop.permute.xlu0 %3049
    %3051 = vrot.lane.b32.xlu0 %v3046, 112
    %v3052 = vpop.permute.xlu0 %3051
    %3053 = vrot.lane.b32.xlu0 %v3046, 104
    %v3054 = vpop.permute.xlu0 %3053
    %3056 = vrot.lane.b32.xlu0 %v3047, 120
    %v3057 = vpop.permute.xlu0 %3056
    %3058 = vrot.lane.b32.xlu0 %v3047, 112
    %v3059 = vpop.permute.xlu0 %3058
    %3060 = vrot.lane.b32.xlu0 %v3047, 104
    %v3061 = vpop.permute.xlu0 %3060
    %v3063 = vsel %vm131, %v3046, 0
    %v3066 = vsel %vm131, %v3047, 0
    %3068 = vmatprep.subr.bf16.mxu0 0
    %3069 = vmatpush1.bf16.xpose.msra.mxu0 0
    %3070 = vmatprep.subr.bf16.mxu0 0
    %3071 = vmatpush1.bf16.xpose.msra.mxu0 0
    %3072 = vmatprep.subr.bf16.mxu0 0
    %3073 = vmatpush1.bf16.xpose.msra.mxu0 0
    %3074 = vmatprep.subr.bf16.mxu0 0
    %3075 = vmatpush1.bf16.xpose.msra.mxu0 0
    %3076 = vmatprep.subr.bf16.mxu0 0
    %3077 = vmatpush1.bf16.xpose.msra.mxu0 0
    %3078 = vmatprep.subr.bf16.mxu0 0
    %3079 = vmatpush1.bf16.xpose.msra.mxu0 0
    %3080 = vmatprep.subr.bf16.mxu0 0
    %3081 = vmatpush1.bf16.xpose.msra.mxu0 0
    %3082 = vmatprep.subr.bf16.mxu0 0
    %3083 = vmatpush1.bf16.xpose.msra.mxu0 %v3066
    %3084 = vmatprep.subr.bf16.mxu0 0
    %3085 = vmatpush2.bf16.xpose.msra.mxu0 0
    %3086 = vmatprep.subr.bf16.mxu0 0
    %3087 = vmatpush2.bf16.xpose.msra.mxu0 0
    %3088 = vmatprep.subr.bf16.mxu0 0
    %3089 = vmatpush2.bf16.xpose.msra.mxu0 0
    %3090 = vmatprep.subr.bf16.mxu0 0
    %3091 = vmatpush2.bf16.xpose.msra.mxu0 0
    %3092 = vmatprep.subr.bf16.mxu0 0
    %3093 = vmatpush2.bf16.xpose.msra.mxu0 0
    %3094 = vmatprep.subr.bf16.mxu0 0
    %3095 = vmatpush2.bf16.xpose.msra.mxu0 0
    %3096 = vmatprep.subr.bf16.mxu0 0
    %3097 = vmatpush2.bf16.xpose.msra.mxu0 0
    %3098 = vmatprep.subr.bf16.mxu0 0
    %3099 = vmatpush2.bf16.xpose.msra.mxu0 0
    %3100 = vmatprep.mubr.bf16.mxu0 0
    %3101 = vmatmul.mubr.bf16.gmra.mxu0 %v3063
    %v3102 = vpop.f32.mrf.mxu0
    %v3103 = vadd.f32 %v44, %v3102
    %v3104 = vpop.f32.mrf.mxu0
    %v3105 = vpop.f32.mrf.mxu0
    %v3106 = vadd.f32 %v45, %v3105
    %v3107 = vpop.f32.mrf.mxu0
    %3108 = vdwg.mxu0
    %v3110 = vsel %vm131, %v3050, 0
    %v3113 = vsel %vm131, %v3057, 0
    %3115 = vmatprep.subr.bf16.mxu0 0
    %3116 = vmatpush1.bf16.xpose.msra.mxu0 0
    %3117 = vmatprep.subr.bf16.mxu0 0
    %3118 = vmatpush1.bf16.xpose.msra.mxu0 0
    %3119 = vmatprep.subr.bf16.mxu0 0
    %3120 = vmatpush1.bf16.xpose.msra.mxu0 0
    %3121 = vmatprep.subr.bf16.mxu0 0
    %3122 = vmatpush1.bf16.xpose.msra.mxu0 0
    %3123 = vmatprep.subr.bf16.mxu0 0
    %3124 = vmatpush1.bf16.xpose.msra.mxu0 0
    %3125 = vmatprep.subr.bf16.mxu0 0
    %3126 = vmatpush1.bf16.xpose.msra.mxu0 0
    %3127 = vmatprep.subr.bf16.mxu0 0
    %3128 = vmatpush1.bf16.xpose.msra.mxu0 0
    %3129 = vmatprep.subr.bf16.mxu0 0
    %3130 = vmatpush1.bf16.xpose.msra.mxu0 %v3113
    %3131 = vmatprep.subr.bf16.mxu0 0
    %3132 = vmatpush2.bf16.xpose.msra.mxu0 0
    %3133 = vmatprep.subr.bf16.mxu0 0
    %3134 = vmatpush2.bf16.xpose.msra.mxu0 0
    %3135 = vmatprep.subr.bf16.mxu0 0
    %3136 = vmatpush2.bf16.xpose.msra.mxu0 0
    %3137 = vmatprep.subr.bf16.mxu0 0
    %3138 = vmatpush2.bf16.xpose.msra.mxu0 0
    %3139 = vmatprep.subr.bf16.mxu0 0
    %3140 = vmatpush2.bf16.xpose.msra.mxu0 0
    %3141 = vmatprep.subr.bf16.mxu0 0
    %3142 = vmatpush2.bf16.xpose.msra.mxu0 0
    %3143 = vmatprep.subr.bf16.mxu0 0
    %3144 = vmatpush2.bf16.xpose.msra.mxu0 0
    %3145 = vmatprep.subr.bf16.mxu0 0
    %3146 = vmatpush2.bf16.xpose.msra.mxu0 0
    %3147 = vmatprep.mubr.bf16.mxu0 0
    %3148 = vmatmul.mubr.bf16.gmra.mxu0 %v3110
    %v3149 = vpop.f32.mrf.mxu0
    %v3150 = vadd.f32 %v44, %v3149
    %v3151 = vpop.f32.mrf.mxu0
    %v3152 = vpop.f32.mrf.mxu0
    %v3153 = vadd.f32 %v45, %v3152
    %v3154 = vpop.f32.mrf.mxu0
    %3155 = vdwg.mxu0
    %v3157 = vsel %vm131, %v3052, 0
    %v3160 = vsel %vm131, %v3059, 0
    %3162 = vmatprep.subr.bf16.mxu0 0
    %3163 = vmatpush1.bf16.xpose.msra.mxu0 0
    %3164 = vmatprep.subr.bf16.mxu0 0
    %3165 = vmatpush1.bf16.xpose.msra.mxu0 0
    %3166 = vmatprep.subr.bf16.mxu0 0
    %3167 = vmatpush1.bf16.xpose.msra.mxu0 0
    %3168 = vmatprep.subr.bf16.mxu0 0
    %3169 = vmatpush1.bf16.xpose.msra.mxu0 0
    %3170 = vmatprep.subr.bf16.mxu0 0
    %3171 = vmatpush1.bf16.xpose.msra.mxu0 0
    %3172 = vmatprep.subr.bf16.mxu0 0
    %3173 = vmatpush1.bf16.xpose.msra.mxu0 0
    %3174 = vmatprep.subr.bf16.mxu0 0
    %3175 = vmatpush1.bf16.xpose.msra.mxu0 0
    %3176 = vmatprep.subr.bf16.mxu0 0
    %3177 = vmatpush1.bf16.xpose.msra.mxu0 %v3160
    %3178 = vmatprep.subr.bf16.mxu0 0
    %3179 = vmatpush2.bf16.xpose.msra.mxu0 0
    %3180 = vmatprep.subr.bf16.mxu0 0
    %3181 = vmatpush2.bf16.xpose.msra.mxu0 0
    %3182 = vmatprep.subr.bf16.mxu0 0
    %3183 = vmatpush2.bf16.xpose.msra.mxu0 0
    %3184 = vmatprep.subr.bf16.mxu0 0
    %3185 = vmatpush2.bf16.xpose.msra.mxu0 0
    %3186 = vmatprep.subr.bf16.mxu0 0
    %3187 = vmatpush2.bf16.xpose.msra.mxu0 0
    %3188 = vmatprep.subr.bf16.mxu0 0
    %3189 = vmatpush2.bf16.xpose.msra.mxu0 0
    %3190 = vmatprep.subr.bf16.mxu0 0
    %3191 = vmatpush2.bf16.xpose.msra.mxu0 0
    %3192 = vmatprep.subr.bf16.mxu0 0
    %3193 = vmatpush2.bf16.xpose.msra.mxu0 0
    %3194 = vmatprep.mubr.bf16.mxu0 0
    %3195 = vmatmul.mubr.bf16.gmra.mxu0 %v3157
    %v3196 = vpop.f32.mrf.mxu0
    %v3197 = vadd.f32 %v44, %v3196
    %v3198 = vpop.f32.mrf.mxu0
    %v3199 = vpop.f32.mrf.mxu0
    %v3200 = vadd.f32 %v45, %v3199
    %v3201 = vpop.f32.mrf.mxu0
    %3202 = vdwg.mxu0
    %v3204 = vsel %vm131, %v3054, 0
    %v3207 = vsel %vm131, %v3061, 0
    %3209 = vmatprep.subr.bf16.mxu0 0
    %3210 = vmatpush1.bf16.xpose.msra.mxu0 0
    %3211 = vmatprep.subr.bf16.mxu0 0
    %3212 = vmatpush1.bf16.xpose.msra.mxu0 0
    %3213 = vmatprep.subr.bf16.mxu0 0
    %3214 = vmatpush1.bf16.xpose.msra.mxu0 0
    %3215 = vmatprep.subr.bf16.mxu0 0
    %3216 = vmatpush1.bf16.xpose.msra.mxu0 0
    %3217 = vmatprep.subr.bf16.mxu0 0
    %3218 = vmatpush1.bf16.xpose.msra.mxu0 0
    %3219 = vmatprep.subr.bf16.mxu0 0
    %3220 = vmatpush1.bf16.xpose.msra.mxu0 0
    %3221 = vmatprep.subr.bf16.mxu0 0
    %3222 = vmatpush1.bf16.xpose.msra.mxu0 0
    %3223 = vmatprep.subr.bf16.mxu0 0
    %3224 = vmatpush1.bf16.xpose.msra.mxu0 %v3207
    %3225 = vmatprep.subr.bf16.mxu0 0
    %3226 = vmatpush2.bf16.xpose.msra.mxu0 0
    %3227 = vmatprep.subr.bf16.mxu0 0
    %3228 = vmatpush2.bf16.xpose.msra.mxu0 0
    %3229 = vmatprep.subr.bf16.mxu0 0
    %3230 = vmatpush2.bf16.xpose.msra.mxu0 0
    %3231 = vmatprep.subr.bf16.mxu0 0
    %3232 = vmatpush2.bf16.xpose.msra.mxu0 0
    %3233 = vmatprep.subr.bf16.mxu0 0
    %3234 = vmatpush2.bf16.xpose.msra.mxu0 0
    %3235 = vmatprep.subr.bf16.mxu0 0
    %3236 = vmatpush2.bf16.xpose.msra.mxu0 0
    %3237 = vmatprep.subr.bf16.mxu0 0
    %3238 = vmatpush2.bf16.xpose.msra.mxu0 0
    %3239 = vmatprep.subr.bf16.mxu0 0
    %3240 = vmatpush2.bf16.xpose.msra.mxu0 0
    %3241 = vmatprep.mubr.bf16.mxu0 0
    %3242 = vmatmul.mubr.bf16.gmra.mxu0 %v3204
    %v3243 = vpop.f32.mrf.mxu0
    %v3244 = vadd.f32 %v44, %v3243
    %v3245 = vpop.f32.mrf.mxu0
    %v3246 = vpop.f32.mrf.mxu0
    %v3247 = vadd.f32 %v45, %v3246
    %v3248 = vpop.f32.mrf.mxu0
    %3249 = vdwg.mxu0
    %v3250 = vsel %vm326, %v3103, -inf
    %3251 = vmax.xlane.f32.xlu0 %v3250
    %v3252 = vpop.xlane.xlu0 %3251
    %v3253 = vsel %vm326, %v3106, -inf
    %3254 = vmax.xlane.f32.xlu0 %v3253
    %v3255 = vpop.xlane.xlu0 %3254
    %v3256 = vsel %vm326, %v3150, -inf
    %3257 = vmax.xlane.f32.xlu0 %v3256
    %v3258 = vpop.xlane.xlu0 %3257
    %v3259 = vsel %vm326, %v3153, -inf
    %3260 = vmax.xlane.f32.xlu0 %v3259
    %v3261 = vpop.xlane.xlu0 %3260
    %v3262 = vsel %vm326, %v3197, -inf
    %3263 = vmax.xlane.f32.xlu0 %v3262
    %v3264 = vpop.xlane.xlu0 %3263
    %v3265 = vsel %vm326, %v3200, -inf
    %3266 = vmax.xlane.f32.xlu0 %v3265
    %v3267 = vpop.xlane.xlu0 %3266
    %v3268 = vsel %vm326, %v3244, -inf
    %3269 = vmax.xlane.f32.xlu0 %v3268
    %v3270 = vpop.xlane.xlu0 %3269
    %v3271 = vsel %vm326, %v3247, -inf
    %3272 = vmax.xlane.f32.xlu0 %v3271
    %v3273 = vpop.xlane.xlu0 %3272
    %v3274 = vsub.f32 %v3103, %v3252
    %v3275 = vsub.f32 %v3106, %v3255
    %v3276 = vsub.f32 %v3150, %v3258
    %v3277 = vsub.f32 %v3153, %v3261
    %v3278 = vsub.f32 %v3197, %v3264
    %v3279 = vsub.f32 %v3200, %v3267
    %v3280 = vsub.f32 %v3244, %v3270
    %v3281 = vsub.f32 %v3247, %v3273
    %v3282 = vmul.f32 %v3274, 1.442695
    %v3283 = vpow.pop %v3282
    %v3284 = vmul.f32 %v3275, 1.442695
    %v3285 = vpow.pop %v3284
    %v3286 = vmul.f32 %v3276, 1.442695
    %v3287 = vpow.pop %v3286
    %v3288 = vmul.f32 %v3277, 1.442695
    %v3289 = vpow.pop %v3288
    %v3290 = vmul.f32 %v3278, 1.442695
    %v3291 = vpow.pop %v3290
    %v3292 = vmul.f32 %v3279, 1.442695
    %v3293 = vpow.pop %v3292
    %v3294 = vmul.f32 %v3280, 1.442695
    %v3295 = vpow.pop %v3294
    %v3296 = vmul.f32 %v3281, 1.442695
    %v3297 = vpow.pop %v3296
    %v3298 = vsel %vm326, %v3283, 0.0
    %3299 = vadd.xlane.f32.xlu0 %v3298
    %v3300 = vpop.xlane.xlu0 %3299
    %v3301 = vsel %vm326, %v3285, 0.0
    %3302 = vadd.xlane.f32.xlu0 %v3301
    %v3303 = vpop.xlane.xlu0 %3302
    %v3304 = vsel %vm326, %v3287, 0.0
    %3305 = vadd.xlane.f32.xlu0 %v3304
    %v3306 = vpop.xlane.xlu0 %3305
    %v3307 = vsel %vm326, %v3289, 0.0
    %3308 = vadd.xlane.f32.xlu0 %v3307
    %v3309 = vpop.xlane.xlu0 %3308
    %v3310 = vsel %vm326, %v3291, 0.0
    %3311 = vadd.xlane.f32.xlu0 %v3310
    %v3312 = vpop.xlane.xlu0 %3311
    %v3313 = vsel %vm326, %v3293, 0.0
    %3314 = vadd.xlane.f32.xlu0 %v3313
    %v3315 = vpop.xlane.xlu0 %3314
    %v3316 = vsel %vm326, %v3295, 0.0
    %3317 = vadd.xlane.f32.xlu0 %v3316
    %v3318 = vpop.xlane.xlu0 %3317
    %v3319 = vsel %vm326, %v3297, 0.0
    %3320 = vadd.xlane.f32.xlu0 %v3319
    %v3321 = vpop.xlane.xlu0 %3320
    %v3322 = vrcp.pop %v3300
    %v3323 = vrcp.pop %v3303
    %v3324 = vrcp.pop %v3306
    %v3325 = vrcp.pop %v3309
    %v3326 = vrcp.pop %v3312
    %v3327 = vrcp.pop %v3315
    %v3328 = vrcp.pop %v3318
    %v3329 = vrcp.pop %v3321
    %v3330 = vmul.f32 %v3283, %v3322
    %v3331 = vmul.f32 %v3285, %v3323
    %v3332 = vmul.f32 %v3287, %v3324
    %v3333 = vmul.f32 %v3289, %v3325
    %v3334 = vmul.f32 %v3291, %v3326
    %v3335 = vmul.f32 %v3293, %v3327
    %v3336 = vmul.f32 %v3295, %v3328
    %v3337 = vmul.f32 %v3297, %v3329
    %v3338 = vpack.c.bf16 %v3331, %v3330
    %v3339 = vpack.c.bf16 %v3333, %v3332
    %v3340 = vpack.c.bf16 %v3335, %v3334
    %v3341 = vpack.c.bf16 %v3337, %v3336
    %3342 = vrot.lane.b32.xlu0 %v3047, 96
    %v3343 = vpop.permute.xlu0 %3342
    %v3346 = vsel %vm326, %v3338, 0
    %3348 = vmatprep.subr.bf16.mxu0 0
    %3349 = vmatpush1.bf16.msra.mxu0 0
    %3350 = vmatprep.subr.bf16.mxu0 0
    %3351 = vmatpush1.bf16.msra.mxu0 0
    %3352 = vmatprep.subr.bf16.mxu0 0
    %3353 = vmatpush1.bf16.msra.mxu0 0
    %3354 = vmatprep.subr.bf16.mxu0 0
    %3355 = vmatpush1.bf16.msra.mxu0 0
    %3356 = vmatprep.subr.bf16.mxu0 0
    %3357 = vmatpush1.bf16.msra.mxu0 0
    %3358 = vmatprep.subr.bf16.mxu0 0
    %3359 = vmatpush1.bf16.msra.mxu0 0
    %3360 = vmatprep.subr.bf16.mxu0 0
    %3361 = vmatpush1.bf16.msra.mxu0 0
    %3362 = vmatprep.subr.bf16.mxu0 0
    %3363 = vmatpush1.bf16.msra.mxu0 %v3343
    %3364 = vmatprep.subr.bf16.mxu0 0
    %3365 = vmatpush2.bf16.msra.mxu0 0
    %3366 = vmatprep.subr.bf16.mxu0 0
    %3367 = vmatpush2.bf16.msra.mxu0 0
    %3368 = vmatprep.subr.bf16.mxu0 0
    %3369 = vmatpush2.bf16.msra.mxu0 0
    %3370 = vmatprep.subr.bf16.mxu0 0
    %3371 = vmatpush2.bf16.msra.mxu0 0
    %3372 = vmatprep.subr.bf16.mxu0 0
    %3373 = vmatpush2.bf16.msra.mxu0 0
    %3374 = vmatprep.subr.bf16.mxu0 0
    %3375 = vmatpush2.bf16.msra.mxu0 0
    %3376 = vmatprep.subr.bf16.mxu0 0
    %3377 = vmatpush2.bf16.msra.mxu0 0
    %3378 = vmatprep.subr.bf16.mxu0 0
    %3379 = vmatpush2.bf16.msra.mxu0 0
    %3380 = vmatprep.mubr.bf16.mxu0 0
    %3381 = vmatmul.mubr.bf16.gmra.mxu0 %v3346
    %v3382 = vpop.f32.mrf.mxu0
    %v3383 = vadd.f32 0.0, %v3382
    %v3384 = vpop.f32.mrf.mxu0
    %v3385 = vpop.f32.mrf.mxu0
    %v3386 = vadd.f32 0.0, %v3385
    %v3387 = vpop.f32.mrf.mxu0
    %3388 = vdwg.mxu0
    %3389 = vrot.lane.b32.xlu0 %v3057, 96
    %v3390 = vpop.permute.xlu0 %3389
    %v3393 = vsel %vm326, %v3339, 0
    %3395 = vmatprep.subr.bf16.mxu0 0
    %3396 = vmatpush1.bf16.msra.mxu0 0
    %3397 = vmatprep.subr.bf16.mxu0 0
    %3398 = vmatpush1.bf16.msra.mxu0 0
    %3399 = vmatprep.subr.bf16.mxu0 0
    %3400 = vmatpush1.bf16.msra.mxu0 0
    %3401 = vmatprep.subr.bf16.mxu0 0
    %3402 = vmatpush1.bf16.msra.mxu0 0
    %3403 = vmatprep.subr.bf16.mxu0 0
    %3404 = vmatpush1.bf16.msra.mxu0 0
    %3405 = vmatprep.subr.bf16.mxu0 0
    %3406 = vmatpush1.bf16.msra.mxu0 0
    %3407 = vmatprep.subr.bf16.mxu0 0
    %3408 = vmatpush1.bf16.msra.mxu0 0
    %3409 = vmatprep.subr.bf16.mxu0 0
    %3410 = vmatpush1.bf16.msra.mxu0 %v3390
    %3411 = vmatprep.subr.bf16.mxu0 0
    %3412 = vmatpush2.bf16.msra.mxu0 0
    %3413 = vmatprep.subr.bf16.mxu0 0
    %3414 = vmatpush2.bf16.msra.mxu0 0
    %3415 = vmatprep.subr.bf16.mxu0 0
    %3416 = vmatpush2.bf16.msra.mxu0 0
    %3417 = vmatprep.subr.bf16.mxu0 0
    %3418 = vmatpush2.bf16.msra.mxu0 0
    %3419 = vmatprep.subr.bf16.mxu0 0
    %3420 = vmatpush2.bf16.msra.mxu0 0
    %3421 = vmatprep.subr.bf16.mxu0 0
    %3422 = vmatpush2.bf16.msra.mxu0 0
    %3423 = vmatprep.subr.bf16.mxu0 0
    %3424 = vmatpush2.bf16.msra.mxu0 0
    %3425 = vmatprep.subr.bf16.mxu0 0
    %3426 = vmatpush2.bf16.msra.mxu0 0
    %3427 = vmatprep.mubr.bf16.mxu0 0
    %3428 = vmatmul.mubr.bf16.gmra.mxu0 %v3393
    %v3429 = vpop.f32.mrf.mxu0
    %v3430 = vadd.f32 0.0, %v3429
    %v3431 = vpop.f32.mrf.mxu0
    %v3432 = vpop.f32.mrf.mxu0
    %v3433 = vadd.f32 0.0, %v3432
    %v3434 = vpop.f32.mrf.mxu0
    %3435 = vdwg.mxu0
    %3436 = vrot.lane.b32.xlu0 %v3059, 96
    %v3437 = vpop.permute.xlu0 %3436
    %v3440 = vsel %vm326, %v3340, 0
    %3442 = vmatprep.subr.bf16.mxu0 0
    %3443 = vmatpush1.bf16.msra.mxu0 0
    %3444 = vmatprep.subr.bf16.mxu0 0
    %3445 = vmatpush1.bf16.msra.mxu0 0
    %3446 = vmatprep.subr.bf16.mxu0 0
    %3447 = vmatpush1.bf16.msra.mxu0 0
    %3448 = vmatprep.subr.bf16.mxu0 0
    %3449 = vmatpush1.bf16.msra.mxu0 0
    %3450 = vmatprep.subr.bf16.mxu0 0
    %3451 = vmatpush1.bf16.msra.mxu0 0
    %3452 = vmatprep.subr.bf16.mxu0 0
    %3453 = vmatpush1.bf16.msra.mxu0 0
    %3454 = vmatprep.subr.bf16.mxu0 0
    %3455 = vmatpush1.bf16.msra.mxu0 0
    %3456 = vmatprep.subr.bf16.mxu0 0
    %3457 = vmatpush1.bf16.msra.mxu0 %v3437
    %3458 = vmatprep.subr.bf16.mxu0 0
    %3459 = vmatpush2.bf16.msra.mxu0 0
    %3460 = vmatprep.subr.bf16.mxu0 0
    %3461 = vmatpush2.bf16.msra.mxu0 0
    %3462 = vmatprep.subr.bf16.mxu0 0
    %3463 = vmatpush2.bf16.msra.mxu0 0
    %3464 = vmatprep.subr.bf16.mxu0 0
    %3465 = vmatpush2.bf16.msra.mxu0 0
    %3466 = vmatprep.subr.bf16.mxu0 0
    %3467 = vmatpush2.bf16.msra.mxu0 0
    %3468 = vmatprep.subr.bf16.mxu0 0
    %3469 = vmatpush2.bf16.msra.mxu0 0
    %3470 = vmatprep.subr.bf16.mxu0 0
    %3471 = vmatpush2.bf16.msra.mxu0 0
    %3472 = vmatprep.subr.bf16.mxu0 0
    %3473 = vmatpush2.bf16.msra.mxu0 0
    %3474 = vmatprep.mubr.bf16.mxu0 0
    %3475 = vmatmul.mubr.bf16.gmra.mxu0 %v3440
    %v3476 = vpop.f32.mrf.mxu0
    %v3477 = vadd.f32 0.0, %v3476
    %v3478 = vpop.f32.mrf.mxu0
    %v3479 = vpop.f32.mrf.mxu0
    %v3480 = vadd.f32 0.0, %v3479
    %v3481 = vpop.f32.mrf.mxu0
    %3482 = vdwg.mxu0
    %3483 = vrot.lane.b32.xlu0 %v3061, 96
    %v3484 = vpop.permute.xlu0 %3483
    %v3487 = vsel %vm326, %v3341, 0
    %3489 = vmatprep.subr.bf16.mxu0 0
    %3490 = vmatpush1.bf16.msra.mxu0 0
    %3491 = vmatprep.subr.bf16.mxu0 0
    %3492 = vmatpush1.bf16.msra.mxu0 0
    %3493 = vmatprep.subr.bf16.mxu0 0
    %3494 = vmatpush1.bf16.msra.mxu0 0
    %3495 = vmatprep.subr.bf16.mxu0 0
    %3496 = vmatpush1.bf16.msra.mxu0 0
    %3497 = vmatprep.subr.bf16.mxu0 0
    %3498 = vmatpush1.bf16.msra.mxu0 0
    %3499 = vmatprep.subr.bf16.mxu0 0
    %3500 = vmatpush1.bf16.msra.mxu0 0
    %3501 = vmatprep.subr.bf16.mxu0 0
    %3502 = vmatpush1.bf16.msra.mxu0 0
    %3503 = vmatprep.subr.bf16.mxu0 0
    %3504 = vmatpush1.bf16.msra.mxu0 %v3484
    %3505 = vmatprep.subr.bf16.mxu0 0
    %3506 = vmatpush2.bf16.msra.mxu0 0
    %3507 = vmatprep.subr.bf16.mxu0 0
    %3508 = vmatpush2.bf16.msra.mxu0 0
    %3509 = vmatprep.subr.bf16.mxu0 0
    %3510 = vmatpush2.bf16.msra.mxu0 0
    %3511 = vmatprep.subr.bf16.mxu0 0
    %3512 = vmatpush2.bf16.msra.mxu0 0
    %3513 = vmatprep.subr.bf16.mxu0 0
    %3514 = vmatpush2.bf16.msra.mxu0 0
    %3515 = vmatprep.subr.bf16.mxu0 0
    %3516 = vmatpush2.bf16.msra.mxu0 0
    %3517 = vmatprep.subr.bf16.mxu0 0
    %3518 = vmatpush2.bf16.msra.mxu0 0
    %3519 = vmatprep.subr.bf16.mxu0 0
    %3520 = vmatpush2.bf16.msra.mxu0 0
    %3521 = vmatprep.mubr.bf16.mxu0 0
    %3522 = vmatmul.mubr.bf16.gmra.mxu0 %v3487
    %v3523 = vpop.f32.mrf.mxu0
    %v3524 = vadd.f32 0.0, %v3523
    %v3525 = vpop.f32.mrf.mxu0
    %v3526 = vpop.f32.mrf.mxu0
    %v3527 = vadd.f32 0.0, %v3526
    %v3528 = vpop.f32.mrf.mxu0
    %3529 = vdwg.mxu0
    %v3530 = vpack.c.bf16 %v3386, %v3383
    %v3531 = vpack.c.bf16 %v3433, %v3430
    %v3532 = vpack.c.bf16 %v3480, %v3477
    %v3533 = vpack.c.bf16 %v3527, %v3524
    %v3535 = vsel %vm131, %v3530, 0
    %v3538 = vsel %vm614, %v3041, 0
    %3540 = vmatprep.subr.bf16.mxu0 0
    %3541 = vmatpush1.bf16.msra.mxu0 0
    %3542 = vmatprep.subr.bf16.mxu0 0
    %3543 = vmatpush1.bf16.msra.mxu0 0
    %3544 = vmatprep.subr.bf16.mxu0 0
    %3545 = vmatpush1.bf16.msra.mxu0 0
    %3546 = vmatprep.subr.bf16.mxu0 0
    %3547 = vmatpush1.bf16.msra.mxu0 0
    %3548 = vmatprep.subr.bf16.mxu0 0
    %3549 = vmatpush1.bf16.msra.mxu0 0
    %3550 = vmatprep.subr.bf16.mxu0 0
    %3551 = vmatpush1.bf16.msra.mxu0 0
    %3552 = vmatprep.subr.bf16.mxu0 0
    %3553 = vmatpush1.bf16.msra.mxu0 0
    %3554 = vmatprep.subr.bf16.mxu0 0
    %3555 = vmatpush1.bf16.msra.mxu0 %v3538
    %3556 = vmatprep.subr.bf16.mxu0 0
    %3557 = vmatpush2.bf16.msra.mxu0 0
    %3558 = vmatprep.subr.bf16.mxu0 0
    %3559 = vmatpush2.bf16.msra.mxu0 0
    %3560 = vmatprep.subr.bf16.mxu0 0
    %3561 = vmatpush2.bf16.msra.mxu0 0
    %3562 = vmatprep.subr.bf16.mxu0 0
    %3563 = vmatpush2.bf16.msra.mxu0 0
    %3564 = vmatprep.subr.bf16.mxu0 0
    %3565 = vmatpush2.bf16.msra.mxu0 0
    %3566 = vmatprep.subr.bf16.mxu0 0
    %3567 = vmatpush2.bf16.msra.mxu0 0
    %3568 = vmatprep.subr.bf16.mxu0 0
    %3569 = vmatpush2.bf16.msra.mxu0 0
    %3570 = vmatprep.subr.bf16.mxu0 0
    %3571 = vmatpush2.bf16.msra.mxu0 0
    %3572 = vmatprep.mubr.bf16.mxu0 0
    %3573 = vmatmul.mubr.bf16.gmra.mxu0 %v3535
    %v3574 = vpop.f32.mrf.mxu0
    %v3575 = vadd.f32 0.0, %v3574
    %v3576 = vpop.f32.mrf.mxu0
    %v3577 = vpop.f32.mrf.mxu0
    %v3578 = vadd.f32 0.0, %v3577
    %v3579 = vpop.f32.mrf.mxu0
    %3580 = vdwg.mxu0
    %v3582 = vsel %vm131, %v3531, 0
    %v3585 = vsel %vm614, %v3042, 0
    %3587 = vmatprep.subr.bf16.mxu0 0
    %3588 = vmatpush1.bf16.msra.mxu0 0
    %3589 = vmatprep.subr.bf16.mxu0 0
    %3590 = vmatpush1.bf16.msra.mxu0 0
    %3591 = vmatprep.subr.bf16.mxu0 0
    %3592 = vmatpush1.bf16.msra.mxu0 0
    %3593 = vmatprep.subr.bf16.mxu0 0
    %3594 = vmatpush1.bf16.msra.mxu0 0
    %3595 = vmatprep.subr.bf16.mxu0 0
    %3596 = vmatpush1.bf16.msra.mxu0 0
    %3597 = vmatprep.subr.bf16.mxu0 0
    %3598 = vmatpush1.bf16.msra.mxu0 0
    %3599 = vmatprep.subr.bf16.mxu0 0
    %3600 = vmatpush1.bf16.msra.mxu0 0
    %3601 = vmatprep.subr.bf16.mxu0 0
    %3602 = vmatpush1.bf16.msra.mxu0 %v3585
    %3603 = vmatprep.subr.bf16.mxu0 0
    %3604 = vmatpush2.bf16.msra.mxu0 0
    %3605 = vmatprep.subr.bf16.mxu0 0
    %3606 = vmatpush2.bf16.msra.mxu0 0
    %3607 = vmatprep.subr.bf16.mxu0 0
    %3608 = vmatpush2.bf16.msra.mxu0 0
    %3609 = vmatprep.subr.bf16.mxu0 0
    %3610 = vmatpush2.bf16.msra.mxu0 0
    %3611 = vmatprep.subr.bf16.mxu0 0
    %3612 = vmatpush2.bf16.msra.mxu0 0
    %3613 = vmatprep.subr.bf16.mxu0 0
    %3614 = vmatpush2.bf16.msra.mxu0 0
    %3615 = vmatprep.subr.bf16.mxu0 0
    %3616 = vmatpush2.bf16.msra.mxu0 0
    %3617 = vmatprep.subr.bf16.mxu0 0
    %3618 = vmatpush2.bf16.msra.mxu0 0
    %3619 = vmatprep.mubr.bf16.mxu0 0
    %3620 = vmatmul.mubr.bf16.gmra.mxu0 %v3582
    %v3621 = vpop.f32.mrf.mxu0
    %v3622 = vadd.f32 0.0, %v3621
    %v3623 = vpop.f32.mrf.mxu0
    %v3624 = vpop.f32.mrf.mxu0
    %v3625 = vadd.f32 0.0, %v3624
    %v3626 = vpop.f32.mrf.mxu0
    %3627 = vdwg.mxu0
    %v3629 = vsel %vm131, %v3532, 0
    %v3632 = vsel %vm614, %v3043, 0
    %3634 = vmatprep.subr.bf16.mxu0 0
    %3635 = vmatpush1.bf16.msra.mxu0 0
    %3636 = vmatprep.subr.bf16.mxu0 0
    %3637 = vmatpush1.bf16.msra.mxu0 0
    %3638 = vmatprep.subr.bf16.mxu0 0
    %3639 = vmatpush1.bf16.msra.mxu0 0
    %3640 = vmatprep.subr.bf16.mxu0 0
    %3641 = vmatpush1.bf16.msra.mxu0 0
    %3642 = vmatprep.subr.bf16.mxu0 0
    %3643 = vmatpush1.bf16.msra.mxu0 0
    %3644 = vmatprep.subr.bf16.mxu0 0
    %3645 = vmatpush1.bf16.msra.mxu0 0
    %3646 = vmatprep.subr.bf16.mxu0 0
    %3647 = vmatpush1.bf16.msra.mxu0 0
    %3648 = vmatprep.subr.bf16.mxu0 0
    %3649 = vmatpush1.bf16.msra.mxu0 %v3632
    %3650 = vmatprep.subr.bf16.mxu0 0
    %3651 = vmatpush2.bf16.msra.mxu0 0
    %3652 = vmatprep.subr.bf16.mxu0 0
    %3653 = vmatpush2.bf16.msra.mxu0 0
    %3654 = vmatprep.subr.bf16.mxu0 0
    %3655 = vmatpush2.bf16.msra.mxu0 0
    %3656 = vmatprep.subr.bf16.mxu0 0
    %3657 = vmatpush2.bf16.msra.mxu0 0
    %3658 = vmatprep.subr.bf16.mxu0 0
    %3659 = vmatpush2.bf16.msra.mxu0 0
    %3660 = vmatprep.subr.bf16.mxu0 0
    %3661 = vmatpush2.bf16.msra.mxu0 0
    %3662 = vmatprep.subr.bf16.mxu0 0
    %3663 = vmatpush2.bf16.msra.mxu0 0
    %3664 = vmatprep.subr.bf16.mxu0 0
    %3665 = vmatpush2.bf16.msra.mxu0 0
    %3666 = vmatprep.mubr.bf16.mxu0 0
    %3667 = vmatmul.mubr.bf16.gmra.mxu0 %v3629
    %v3668 = vpop.f32.mrf.mxu0
    %v3669 = vadd.f32 0.0, %v3668
    %v3670 = vpop.f32.mrf.mxu0
    %v3671 = vpop.f32.mrf.mxu0
    %v3672 = vadd.f32 0.0, %v3671
    %v3673 = vpop.f32.mrf.mxu0
    %3674 = vdwg.mxu0
    %v3676 = vsel %vm131, %v3533, 0
    %v3679 = vsel %vm614, %v3044, 0
    %3681 = vmatprep.subr.bf16.mxu0 0
    %3682 = vmatpush1.bf16.msra.mxu0 0
    %3683 = vmatprep.subr.bf16.mxu0 0
    %3684 = vmatpush1.bf16.msra.mxu0 0
    %3685 = vmatprep.subr.bf16.mxu0 0
    %3686 = vmatpush1.bf16.msra.mxu0 0
    %3687 = vmatprep.subr.bf16.mxu0 0
    %3688 = vmatpush1.bf16.msra.mxu0 0
    %3689 = vmatprep.subr.bf16.mxu0 0
    %3690 = vmatpush1.bf16.msra.mxu0 0
    %3691 = vmatprep.subr.bf16.mxu0 0
    %3692 = vmatpush1.bf16.msra.mxu0 0
    %3693 = vmatprep.subr.bf16.mxu0 0
    %3694 = vmatpush1.bf16.msra.mxu0 0
    %3695 = vmatprep.subr.bf16.mxu0 0
    %3696 = vmatpush1.bf16.msra.mxu0 %v3679
    %3697 = vmatprep.subr.bf16.mxu0 0
    %3698 = vmatpush2.bf16.msra.mxu0 0
    %3699 = vmatprep.subr.bf16.mxu0 0
    %3700 = vmatpush2.bf16.msra.mxu0 0
    %3701 = vmatprep.subr.bf16.mxu0 0
    %3702 = vmatpush2.bf16.msra.mxu0 0
    %3703 = vmatprep.subr.bf16.mxu0 0
    %3704 = vmatpush2.bf16.msra.mxu0 0
    %3705 = vmatprep.subr.bf16.mxu0 0
    %3706 = vmatpush2.bf16.msra.mxu0 0
    %3707 = vmatprep.subr.bf16.mxu0 0
    %3708 = vmatpush2.bf16.msra.mxu0 0
    %3709 = vmatprep.subr.bf16.mxu0 0
    %3710 = vmatpush2.bf16.msra.mxu0 0
    %3711 = vmatprep.subr.bf16.mxu0 0
    %3712 = vmatpush2.bf16.msra.mxu0 0
    %3713 = vmatprep.mubr.bf16.mxu0 0
    %3714 = vmatmul.mubr.bf16.gmra.mxu0 %v3676
    %v3715 = vpop.f32.mrf.mxu0
    %v3716 = vadd.f32 0.0, %v3715
    %v3717 = vpop.f32.mrf.mxu0
    %v3718 = vpop.f32.mrf.mxu0
    %v3719 = vadd.f32 0.0, %v3718
    %v3720 = vpop.f32.mrf.mxu0
    %3721 = vdwg.mxu0
    %v3722 = vsel %vm72, %v3575, 0.0
    %v3723 = vsel %vm72, %v3622, 0.0
    %v3724 = vadd.f32 %v3722, %v3723
    %v3725 = vsel %vm72, %v3669, 0.0
    %v3726 = vadd.f32 %v3724, %v3725
    %v3727 = vsel %vm72, %v3716, 0.0
    %v3728 = vadd.f32 %v3726, %v3727
    %v3729 = vsel %vm72, %v3578, 0.0
    %v3730 = vsel %vm72, %v3625, 0.0
    %v3731 = vadd.f32 %v3729, %v3730
    %v3732 = vsel %vm72, %v3672, 0.0
    %v3733 = vadd.f32 %v3731, %v3732
    %v3734 = vsel %vm72, %v3719, 0.0
    %v3735 = vadd.f32 %v3733, %v3734
    %v3737 = vlaneseq
    %v3738 = vshrl.u32 %v3737, 7
    %v3739 = vsub.s32 0, %v3738
    %v3740 = vrot.slane %v3045, %v3739
    %v3742 = vadd.f32 %v3728, %v3740
    %v3743 = vadd.f32 %v3735, %v3740
    %v3744 = vadd.f32 %v2920, %v3742
    %v3745 = vadd.f32 %v2921, %v3743
    %v3746 = vld [vmem:[%s9 + $0x5] sm:$0x1]
    %v3747 = vsel %vm72, %v3744, 0.0
    %3748 = vadd.xlane.f32.xlu0 %v3747
    %v3749 = vpop.xlane.xlu0 %3748
    %v3750 = vsel %vm72, %v3745, 0.0
    %3751 = vadd.xlane.f32.xlu0 %v3750
    %v3752 = vpop.xlane.xlu0 %3751
    %v3753 = vmul.f32 %v3749, %v828
    %v3754 = vmul.f32 %v3752, %v828
    %v3755 = vsub.f32 %v3744, %v3753
    %v3756 = vsub.f32 %v3745, %v3754
    %v3757 = vmul.f32 %v3755, %v3755
    %v3758 = vmul.f32 %v3756, %v3756
    %v3759 = vsel %vm72, %v3757, 0.0
    %3760 = vadd.xlane.f32.xlu0 %v3759
    %v3761 = vpop.xlane.xlu0 %3760
    %v3762 = vsel %vm72, %v3758, 0.0
    %3763 = vadd.xlane.f32.xlu0 %v3762
    %v3764 = vpop.xlane.xlu0 %3763
    %v3765 = vmul.f32 %v3761, %v828
    %v3766 = vmul.f32 %v3764, %v828
    %v3767 = vadd.f32 %v3765, 1e-05
    %v3768 = vadd.f32 %v3766, 1e-05
    %v3769 = vrsqrt.pop %v3767
    %v3770 = vrsqrt.pop %v3768
    %v3771 = vmul.f32 %v3755, %v3769
    %v3772 = vmul.f32 %v3756, %v3770
    %v3774 = vlaneseq
    %v3775 = vshrl.u32 %v3774, 7
    %v3776 = vsub.s32 0, %v3775
    %v3777 = vrot.slane %v3746, %v3776
    %3778 = vrot.lane.b32.xlu0 %v3777, 96
    %v3779 = vpop.permute.xlu0 %3778
    %v3781 = vmul.f32 %v3771, %v3779
    %v3782 = vmul.f32 %v3772, %v3779
    %3783 = vrot.lane.b32.xlu0 %v3777, 64
    %v3784 = vpop.permute.xlu0 %3783
    %v3786 = vadd.f32 %v3781, %v3784
    %v3787 = vadd.f32 %v3782, %v3784
    %v3788 = vld [vmem:[%s5 + $0x8] sm:$0xff]
    %v3789 = vld [vmem:[%s5 + $0x18] sm:$0xff]
    %v3790 = vld [vmem:[%s5 + $0x28] sm:$0xff]
    %v3791 = vld [vmem:[%s5 + $0x38] sm:$0xff]
    %v3792 = vld [vmem:[%s9 + $0x5] sm:$0x3]
    %v3793 = vpack.c.bf16 %v3787, %v3786
    %v3795 = vlaneseq
    %v3796 = vshrl.u32 %v3795, 7
    %v3797 = vsub.s32 0, %v3796
    %v3798 = vrot.slane %v3792, %v3797
    %v3799 = vlaneseq
    %v3800 = vshrl.u32 %v3799, 7
    %v3801 = vsub.s32 1, %v3800
    %v3802 = vrot.slane %v3792, %v3801
    %v3807 = vunpack.c.l.b16 %v3788
    %v3808 = vunpack.c.h.b16 %v3788
    %v3809 = vunpack.c.l.b16 %v3789
    %v3810 = vunpack.c.h.b16 %v3789
    %v3811 = vunpack.c.l.b16 %v3790
    %v3812 = vunpack.c.h.b16 %v3790
    %v3813 = vunpack.c.l.b16 %v3791
    %v3814 = vunpack.c.h.b16 %v3791
    %v3815 = vpack.c.b16 %v3809, %v3807
    %v3816 = vpack.c.b16 %v3810, %v3808
    %v3817 = vpack.c.b16 %v3813, %v3811
    %v3818 = vpack.c.b16 %v3814, %v3812
    %3819 = vrot.lane.b32.xlu0 %v3815, 32
    %v3820 = vpop.permute.xlu0 %3819
    %3821 = vrot.lane.b32.xlu0 %v3816, 32
    %v3822 = vpop.permute.xlu0 %3821
    %3823 = vrot.lane.b32.xlu0 %v3817, 32
    %v3824 = vpop.permute.xlu0 %3823
    %3825 = vrot.lane.b32.xlu0 %v3818, 32
    %v3826 = vpop.permute.xlu0 %3825
    %v3827 = vsel %vm891, %v3820, %v3822
    %v3828 = vsel %vm891, %v3824, %v3826
    %3831 = vrot.lane.b32.xlu0 %v3798, 32
    %v3832 = vpop.permute.xlu0 %3831
    %3833 = vrot.lane.b32.xlu0 %v3802, 32
    %v3834 = vpop.permute.xlu0 %3833
    %v3835 = vsel %vm72, %v3832, %v3834
    %v3838 = vsel %vm72, %v3793, 0
    %3840 = vmatprep.subr.bf16.mxu0 0
    %3841 = vmatpush1.bf16.msra.mxu0 0
    %3842 = vmatprep.subr.bf16.mxu0 0
    %3843 = vmatpush1.bf16.msra.mxu0 0
    %3844 = vmatprep.subr.bf16.mxu0 0
    %3845 = vmatpush1.bf16.msra.mxu0 0
    %3846 = vmatprep.subr.bf16.mxu0 0
    %3847 = vmatpush1.bf16.msra.mxu0 0
    %3848 = vmatprep.subr.bf16.mxu0 0
    %3849 = vmatpush1.bf16.msra.mxu0 0
    %3850 = vmatprep.subr.bf16.mxu0 0
    %3851 = vmatpush1.bf16.msra.mxu0 0
    %3852 = vmatprep.subr.bf16.mxu0 0
    %3853 = vmatpush1.bf16.msra.mxu0 %v3828
    %3854 = vmatprep.subr.bf16.mxu0 0
    %3855 = vmatpush1.bf16.msra.mxu0 %v3827
    %3856 = vmatprep.subr.bf16.mxu0 0
    %3857 = vmatpush2.bf16.msra.mxu0 0
    %3858 = vmatprep.subr.bf16.mxu0 0
    %3859 = vmatpush2.bf16.msra.mxu0 0
    %3860 = vmatprep.subr.bf16.mxu0 0
    %3861 = vmatpush2.bf16.msra.mxu0 0
    %3862 = vmatprep.subr.bf16.mxu0 0
    %3863 = vmatpush2.bf16.msra.mxu0 0
    %3864 = vmatprep.subr.bf16.mxu0 0
    %3865 = vmatpush2.bf16.msra.mxu0 0
    %3866 = vmatprep.subr.bf16.mxu0 0
    %3867 = vmatpush2.bf16.msra.mxu0 0
    %3868 = vmatprep.subr.bf16.mxu0 0
    %3869 = vmatpush2.bf16.msra.mxu0 0
    %3870 = vmatprep.subr.bf16.mxu0 0
    %3871 = vmatpush2.bf16.msra.mxu0 0
    %3872 = vmatprep.mubr.bf16.mxu0 0
    %3873 = vmatmul.mubr.bf16.gmra.mxu0 %v3838
    %v3874 = vpop.f32.mrf.mxu0
    %v3875 = vadd.f32 %v3835, %v3874
    %v3876 = vpop.f32.mrf.mxu0
    %v3877 = vpop.f32.mrf.mxu0
    %v3878 = vadd.f32 %v3835, %v3877
    %v3879 = vpop.f32.mrf.mxu0
    %3880 = vdwg.mxu0
    %v3881 = vmax.f32 %v3875, 0.0
    %v3882 = vmax.f32 %v3878, 0.0
    %v3883 = vld [vmem:[%s6] sm:$0xf]
    %v3884 = vld [vmem:[%s6 + $0x4] sm:$0xf]
    %v3885 = vld [vmem:[%s6 + $0x8] sm:$0xf]
    %v3886 = vld [vmem:[%s6 + $0xc] sm:$0xf]
    %v3887 = vld [vmem:[%s6 + $0x10] sm:$0xf]
    %v3888 = vld [vmem:[%s6 + $0x14] sm:$0xf]
    %v3889 = vld [vmem:[%s6 + $0x18] sm:$0xf]
    %v3890 = vld [vmem:[%s6 + $0x1c] sm:$0xf]
    %v3891 = vld [vmem:[%s9 + $0x6] sm:$0x1]
    %v3892 = vpack.c.bf16 %v3882, %v3881
    %v3894 = vlaneseq
    %v3895 = vshrl.u32 %v3894, 7
    %v3896 = vsub.s32 0, %v3895
    %v3897 = vrot.slane %v3891, %v3896
    %v3906 = vunpack.c.l.b16 %v3883
    %v3907 = vunpack.c.l.b16 %v3884
    %v3908 = vunpack.c.l.b16 %v3885
    %v3909 = vunpack.c.l.b16 %v3886
    %v3910 = vunpack.c.l.b16 %v3887
    %v3911 = vunpack.c.l.b16 %v3888
    %v3912 = vunpack.c.l.b16 %v3889
    %v3913 = vunpack.c.l.b16 %v3890
    %v3914 = vpack.c.b16 %v3907, %v3906
    %v3915 = vpack.c.b16 %v3909, %v3908
    %v3916 = vpack.c.b16 %v3911, %v3910
    %v3917 = vpack.c.b16 %v3913, %v3912
    %3918 = vrot.lane.b32.xlu0 %v3914, 96
    %v3919 = vpop.permute.xlu0 %3918
    %3920 = vrot.lane.b32.xlu0 %v3915, 96
    %v3921 = vpop.permute.xlu0 %3920
    %3922 = vrot.lane.b32.xlu0 %v3916, 96
    %v3923 = vpop.permute.xlu0 %3922
    %3924 = vrot.lane.b32.xlu0 %v3917, 96
    %v3925 = vpop.permute.xlu0 %3924
    %3930 = vrot.lane.b32.xlu0 %v3897, 96
    %v3931 = vpop.permute.xlu0 %3930
    %v3934 = vsel %vm985, %v3892, 0
    %3936 = vmatprep.subr.bf16.mxu0 0
    %3937 = vmatpush1.bf16.msra.mxu0 0
    %3938 = vmatprep.subr.bf16.mxu0 0
    %3939 = vmatpush1.bf16.msra.mxu0 0
    %3940 = vmatprep.subr.bf16.mxu0 0
    %3941 = vmatpush1.bf16.msra.mxu0 0
    %3942 = vmatprep.subr.bf16.mxu0 0
    %3943 = vmatpush1.bf16.msra.mxu0 0
    %3944 = vmatprep.subr.bf16.mxu0 0
    %3945 = vmatpush1.bf16.msra.mxu0 %v3925
    %3946 = vmatprep.subr.bf16.mxu0 0
    %3947 = vmatpush1.bf16.msra.mxu0 %v3923
    %3948 = vmatprep.subr.bf16.mxu0 0
    %3949 = vmatpush1.bf16.msra.mxu0 %v3921
    %3950 = vmatprep.subr.bf16.mxu0 0
    %3951 = vmatpush1.bf16.msra.mxu0 %v3919
    %3952 = vmatprep.subr.bf16.mxu0 0
    %3953 = vmatpush2.bf16.msra.mxu0 0
    %3954 = vmatprep.subr.bf16.mxu0 0
    %3955 = vmatpush2.bf16.msra.mxu0 0
    %3956 = vmatprep.subr.bf16.mxu0 0
    %3957 = vmatpush2.bf16.msra.mxu0 0
    %3958 = vmatprep.subr.bf16.mxu0 0
    %3959 = vmatpush2.bf16.msra.mxu0 0
    %3960 = vmatprep.subr.bf16.mxu0 0
    %3961 = vmatpush2.bf16.msra.mxu0 0
    %3962 = vmatprep.subr.bf16.mxu0 0
    %3963 = vmatpush2.bf16.msra.mxu0 0
    %3964 = vmatprep.subr.bf16.mxu0 0
    %3965 = vmatpush2.bf16.msra.mxu0 0
    %3966 = vmatprep.subr.bf16.mxu0 0
    %3967 = vmatpush2.bf16.msra.mxu0 0
    %3968 = vmatprep.mubr.bf16.mxu0 0
    %3969 = vmatmul.mubr.bf16.gmra.mxu0 %v3934
    %v3970 = vpop.f32.mrf.mxu0
    %v3971 = vadd.f32 %v3931, %v3970
    %v3972 = vpop.f32.mrf.mxu0
    %v3973 = vpop.f32.mrf.mxu0
    %v3974 = vadd.f32 %v3931, %v3973
    %v3975 = vpop.f32.mrf.mxu0
    %3976 = vdwg.mxu0
    %v3977 = vadd.f32 %v3786, %v3971
    %v3978 = vadd.f32 %v3787, %v3974
    %v3979 = vsel %vm72, %v3977, 0.0
    %3980 = vadd.xlane.f32.xlu0 %v3979
    %v3981 = vpop.xlane.xlu0 %3980
    %v3982 = vsel %vm72, %v3978, 0.0
    %3983 = vadd.xlane.f32.xlu0 %v3982
    %v3984 = vpop.xlane.xlu0 %3983
    %v3985 = vmul.f32 %v3981, %v828
    %v3986 = vmul.f32 %v3984, %v828
    %v3987 = vsub.f32 %v3977, %v3985
    %v3988 = vsub.f32 %v3978, %v3986
    %v3989 = vmul.f32 %v3987, %v3987
    %v3990 = vmul.f32 %v3988, %v3988
    %v3991 = vsel %vm72, %v3989, 0.0
    %3992 = vadd.xlane.f32.xlu0 %v3991
    %v3993 = vpop.xlane.xlu0 %3992
    %v3994 = vsel %vm72, %v3990, 0.0
    %3995 = vadd.xlane.f32.xlu0 %v3994
    %v3996 = vpop.xlane.xlu0 %3995
    %v3997 = vmul.f32 %v3993, %v828
    %v3998 = vmul.f32 %v3996, %v828
    %v3999 = vadd.f32 %v3997, 1e-05
    %v4000 = vadd.f32 %v3998, 1e-05
    %v4001 = vrsqrt.pop %v3999
    %v4002 = vrsqrt.pop %v4000
    %v4003 = vmul.f32 %v3987, %v4001
    %v4004 = vmul.f32 %v3988, %v4002
    %4005 = vrot.lane.b32.xlu0 %v3897, 64
    %v4006 = vpop.permute.xlu0 %4005
    %v4008 = vmul.f32 %v4003, %v4006
    %v4009 = vmul.f32 %v4004, %v4006
    %4010 = vrot.lane.b32.xlu0 %v3897, 32
    %v4011 = vpop.permute.xlu0 %4010
    %v4013 = vadd.f32 %v4008, %v4011
    %v4014 = vadd.f32 %v4009, %v4011
    %v4015 = vld [vmem:[%s1068 + $0x4] sm:$0xf]
    %v4016 = vld [vmem:[%s1068 + $0x14] sm:$0xf]
    %v4017 = vld [vmem:[%s1068 + $0x24] sm:$0xf]
    %v4018 = vld [vmem:[%s1068 + $0x34] sm:$0xf]
    %v4019 = vld [vmem:[%s1073 + $0x2] sm:$0x3]
    %v4020 = vpack.c.bf16 %v4014, %v4013
    %v4022 = vlaneseq
    %v4023 = vshrl.u32 %v4022, 7
    %v4024 = vsub.s32 0, %v4023
    %v4025 = vrot.slane %v4019, %v4024
    %v4026 = vlaneseq
    %v4027 = vshrl.u32 %v4026, 7
    %v4028 = vsub.s32 1, %v4027
    %v4029 = vrot.slane %v4019, %v4028
    %v4034 = vunpack.c.l.b16 %v4015
    %v4035 = vunpack.c.l.b16 %v4016
    %v4036 = vunpack.c.l.b16 %v4017
    %v4037 = vunpack.c.l.b16 %v4018
    %v4038 = vpack.c.b16 %v4035, %v4034
    %v4039 = vpack.c.b16 %v4037, %v4036
    %4040 = vrot.lane.b32.xlu0 %v4038, 96
    %v4041 = vpop.permute.xlu0 %4040
    %4042 = vrot.lane.b32.xlu0 %v4039, 96
    %v4043 = vpop.permute.xlu0 %4042
    %4046 = vrot.lane.b32.xlu0 %v4025, 32
    %v4047 = vpop.permute.xlu0 %4046
    %4048 = vrot.lane.b32.xlu0 %v4029, 32
    %v4049 = vpop.permute.xlu0 %4048
    %v4050 = vsel %vm72, %v4047, %v4049
    %v4053 = vsel %vm72, %v4020, 0
    %4055 = vmatprep.subr.bf16.mxu0 0
    %4056 = vmatpush1.bf16.msra.mxu0 0
    %4057 = vmatprep.subr.bf16.mxu0 0
    %4058 = vmatpush1.bf16.msra.mxu0 0
    %4059 = vmatprep.subr.bf16.mxu0 0
    %4060 = vmatpush1.bf16.msra.mxu0 0
    %4061 = vmatprep.subr.bf16.mxu0 0
    %4062 = vmatpush1.bf16.msra.mxu0 0
    %4063 = vmatprep.subr.bf16.mxu0 0
    %4064 = vmatpush1.bf16.msra.mxu0 0
    %4065 = vmatprep.subr.bf16.mxu0 0
    %4066 = vmatpush1.bf16.msra.mxu0 0
    %4067 = vmatprep.subr.bf16.mxu0 0
    %4068 = vmatpush1.bf16.msra.mxu0 %v4043
    %4069 = vmatprep.subr.bf16.mxu0 0
    %4070 = vmatpush1.bf16.msra.mxu0 %v4041
    %4071 = vmatprep.subr.bf16.mxu0 0
    %4072 = vmatpush2.bf16.msra.mxu0 0
    %4073 = vmatprep.subr.bf16.mxu0 0
    %4074 = vmatpush2.bf16.msra.mxu0 0
    %4075 = vmatprep.subr.bf16.mxu0 0
    %4076 = vmatpush2.bf16.msra.mxu0 0
    %4077 = vmatprep.subr.bf16.mxu0 0
    %4078 = vmatpush2.bf16.msra.mxu0 0
    %4079 = vmatprep.subr.bf16.mxu0 0
    %4080 = vmatpush2.bf16.msra.mxu0 0
    %4081 = vmatprep.subr.bf16.mxu0 0
    %4082 = vmatpush2.bf16.msra.mxu0 0
    %4083 = vmatprep.subr.bf16.mxu0 0
    %4084 = vmatpush2.bf16.msra.mxu0 0
    %4085 = vmatprep.subr.bf16.mxu0 0
    %4086 = vmatpush2.bf16.msra.mxu0 0
    %4087 = vmatprep.mubr.bf16.mxu0 0
    %4088 = vmatmul.mubr.bf16.gmra.mxu0 %v4053
    %v4089 = vpop.f32.mrf.mxu0
    %v4090 = vadd.f32 %v4050, %v4089
    %v4091 = vpop.f32.mrf.mxu0
    %v4092 = vpop.f32.mrf.mxu0
    %v4093 = vadd.f32 %v4050, %v4092
    %v4094 = vpop.f32.mrf.mxu0
    %4095 = vdwg.mxu0
    %s4096 = scalar_lea.vmem %s7, 64
    %v4097 = vld [vmem:[%s4096] sm:$0xf]
    %v4098 = vld [vmem:[%s4096 + $0x4] sm:$0xf]
    %v4099 = vld [vmem:[%s4096 + $0x8] sm:$0xf]
    %v4100 = vld [vmem:[%s4096 + $0xc] sm:$0xf]
    %v4101 = vld [vmem:[%s1073 + $0x3] sm:$0x1]
    %v4102 = vpack.c.bf16 %v4093, %v4090
    %4104 = vrot.lane.b32.xlu0 %v4102, 120
    %v4105 = vpop.permute.xlu0 %4104
    %4106 = vrot.lane.b32.xlu0 %v4102, 112
    %v4107 = vpop.permute.xlu0 %4106
    %4108 = vrot.lane.b32.xlu0 %v4102, 104
    %v4109 = vpop.permute.xlu0 %4108
    %4110 = vrot.lane.b32.xlu0 %v4102, 96
    %v4111 = vpop.permute.xlu0 %4110
    %v4113 = vsel %vm131, %v4102, 0
    %v4116 = vsel %vm131, %v4111, 0
    %4118 = vmatprep.subr.bf16.mxu0 0
    %4119 = vmatpush1.bf16.xpose.msra.mxu0 0
    %4120 = vmatprep.subr.bf16.mxu0 0
    %4121 = vmatpush1.bf16.xpose.msra.mxu0 0
    %4122 = vmatprep.subr.bf16.mxu0 0
    %4123 = vmatpush1.bf16.xpose.msra.mxu0 0
    %4124 = vmatprep.subr.bf16.mxu0 0
    %4125 = vmatpush1.bf16.xpose.msra.mxu0 0
    %4126 = vmatprep.subr.bf16.mxu0 0
    %4127 = vmatpush1.bf16.xpose.msra.mxu0 0
    %4128 = vmatprep.subr.bf16.mxu0 0
    %4129 = vmatpush1.bf16.xpose.msra.mxu0 0
    %4130 = vmatprep.subr.bf16.mxu0 0
    %4131 = vmatpush1.bf16.xpose.msra.mxu0 0
    %4132 = vmatprep.subr.bf16.mxu0 0
    %4133 = vmatpush1.bf16.xpose.msra.mxu0 %v4116
    %4134 = vmatprep.subr.bf16.mxu0 0
    %4135 = vmatpush2.bf16.xpose.msra.mxu0 0
    %4136 = vmatprep.subr.bf16.mxu0 0
    %4137 = vmatpush2.bf16.xpose.msra.mxu0 0
    %4138 = vmatprep.subr.bf16.mxu0 0
    %4139 = vmatpush2.bf16.xpose.msra.mxu0 0
    %4140 = vmatprep.subr.bf16.mxu0 0
    %4141 = vmatpush2.bf16.xpose.msra.mxu0 0
    %4142 = vmatprep.subr.bf16.mxu0 0
    %4143 = vmatpush2.bf16.xpose.msra.mxu0 0
    %4144 = vmatprep.subr.bf16.mxu0 0
    %4145 = vmatpush2.bf16.xpose.msra.mxu0 0
    %4146 = vmatprep.subr.bf16.mxu0 0
    %4147 = vmatpush2.bf16.xpose.msra.mxu0 0
    %4148 = vmatprep.subr.bf16.mxu0 0
    %4149 = vmatpush2.bf16.xpose.msra.mxu0 0
    %4150 = vmatprep.mubr.bf16.mxu0 0
    %4151 = vmatmul.mubr.bf16.gmra.mxu0 %v4113
    %v4152 = vpop.f32.mrf.mxu0
    %v4153 = vadd.f32 %v42, %v4152
    %v4154 = vpop.f32.mrf.mxu0
    %v4155 = vpop.f32.mrf.mxu0
    %v4156 = vadd.f32 %v43, %v4155
    %v4157 = vpop.f32.mrf.mxu0
    %4158 = vdwg.mxu0
    %4159 = vrot.lane.b32.xlu0 %v4105, 96
    %v4160 = vpop.permute.xlu0 %4159
    %v4162 = vsel %vm131, %v4105, 0
    %v4165 = vsel %vm131, %v4160, 0
    %4167 = vmatprep.subr.bf16.mxu0 0
    %4168 = vmatpush1.bf16.xpose.msra.mxu0 0
    %4169 = vmatprep.subr.bf16.mxu0 0
    %4170 = vmatpush1.bf16.xpose.msra.mxu0 0
    %4171 = vmatprep.subr.bf16.mxu0 0
    %4172 = vmatpush1.bf16.xpose.msra.mxu0 0
    %4173 = vmatprep.subr.bf16.mxu0 0
    %4174 = vmatpush1.bf16.xpose.msra.mxu0 0
    %4175 = vmatprep.subr.bf16.mxu0 0
    %4176 = vmatpush1.bf16.xpose.msra.mxu0 0
    %4177 = vmatprep.subr.bf16.mxu0 0
    %4178 = vmatpush1.bf16.xpose.msra.mxu0 0
    %4179 = vmatprep.subr.bf16.mxu0 0
    %4180 = vmatpush1.bf16.xpose.msra.mxu0 0
    %4181 = vmatprep.subr.bf16.mxu0 0
    %4182 = vmatpush1.bf16.xpose.msra.mxu0 %v4165
    %4183 = vmatprep.subr.bf16.mxu0 0
    %4184 = vmatpush2.bf16.xpose.msra.mxu0 0
    %4185 = vmatprep.subr.bf16.mxu0 0
    %4186 = vmatpush2.bf16.xpose.msra.mxu0 0
    %4187 = vmatprep.subr.bf16.mxu0 0
    %4188 = vmatpush2.bf16.xpose.msra.mxu0 0
    %4189 = vmatprep.subr.bf16.mxu0 0
    %4190 = vmatpush2.bf16.xpose.msra.mxu0 0
    %4191 = vmatprep.subr.bf16.mxu0 0
    %4192 = vmatpush2.bf16.xpose.msra.mxu0 0
    %4193 = vmatprep.subr.bf16.mxu0 0
    %4194 = vmatpush2.bf16.xpose.msra.mxu0 0
    %4195 = vmatprep.subr.bf16.mxu0 0
    %4196 = vmatpush2.bf16.xpose.msra.mxu0 0
    %4197 = vmatprep.subr.bf16.mxu0 0
    %4198 = vmatpush2.bf16.xpose.msra.mxu0 0
    %4199 = vmatprep.mubr.bf16.mxu0 0
    %4200 = vmatmul.mubr.bf16.gmra.mxu0 %v4162
    %v4201 = vpop.f32.mrf.mxu0
    %v4202 = vadd.f32 %v42, %v4201
    %v4203 = vpop.f32.mrf.mxu0
    %v4204 = vpop.f32.mrf.mxu0
    %v4205 = vadd.f32 %v43, %v4204
    %v4206 = vpop.f32.mrf.mxu0
    %4207 = vdwg.mxu0
    %4208 = vrot.lane.b32.xlu0 %v4107, 96
    %v4209 = vpop.permute.xlu0 %4208
    %v4211 = vsel %vm131, %v4107, 0
    %v4214 = vsel %vm131, %v4209, 0
    %4216 = vmatprep.subr.bf16.mxu0 0
    %4217 = vmatpush1.bf16.xpose.msra.mxu0 0
    %4218 = vmatprep.subr.bf16.mxu0 0
    %4219 = vmatpush1.bf16.xpose.msra.mxu0 0
    %4220 = vmatprep.subr.bf16.mxu0 0
    %4221 = vmatpush1.bf16.xpose.msra.mxu0 0
    %4222 = vmatprep.subr.bf16.mxu0 0
    %4223 = vmatpush1.bf16.xpose.msra.mxu0 0
    %4224 = vmatprep.subr.bf16.mxu0 0
    %4225 = vmatpush1.bf16.xpose.msra.mxu0 0
    %4226 = vmatprep.subr.bf16.mxu0 0
    %4227 = vmatpush1.bf16.xpose.msra.mxu0 0
    %4228 = vmatprep.subr.bf16.mxu0 0
    %4229 = vmatpush1.bf16.xpose.msra.mxu0 0
    %4230 = vmatprep.subr.bf16.mxu0 0
    %4231 = vmatpush1.bf16.xpose.msra.mxu0 %v4214
    %4232 = vmatprep.subr.bf16.mxu0 0
    %4233 = vmatpush2.bf16.xpose.msra.mxu0 0
    %4234 = vmatprep.subr.bf16.mxu0 0
    %4235 = vmatpush2.bf16.xpose.msra.mxu0 0
    %4236 = vmatprep.subr.bf16.mxu0 0
    %4237 = vmatpush2.bf16.xpose.msra.mxu0 0
    %4238 = vmatprep.subr.bf16.mxu0 0
    %4239 = vmatpush2.bf16.xpose.msra.mxu0 0
    %4240 = vmatprep.subr.bf16.mxu0 0
    %4241 = vmatpush2.bf16.xpose.msra.mxu0 0
    %4242 = vmatprep.subr.bf16.mxu0 0
    %4243 = vmatpush2.bf16.xpose.msra.mxu0 0
    %4244 = vmatprep.subr.bf16.mxu0 0
    %4245 = vmatpush2.bf16.xpose.msra.mxu0 0
    %4246 = vmatprep.subr.bf16.mxu0 0
    %4247 = vmatpush2.bf16.xpose.msra.mxu0 0
    %4248 = vmatprep.mubr.bf16.mxu0 0
    %4249 = vmatmul.mubr.bf16.gmra.mxu0 %v4211
    %v4250 = vpop.f32.mrf.mxu0
    %v4251 = vadd.f32 %v42, %v4250
    %v4252 = vpop.f32.mrf.mxu0
    %v4253 = vpop.f32.mrf.mxu0
    %v4254 = vadd.f32 %v43, %v4253
    %v4255 = vpop.f32.mrf.mxu0
    %4256 = vdwg.mxu0
    %4257 = vrot.lane.b32.xlu0 %v4109, 96
    %v4258 = vpop.permute.xlu0 %4257
    %v4260 = vsel %vm131, %v4109, 0
    %v4263 = vsel %vm131, %v4258, 0
    %4265 = vmatprep.subr.bf16.mxu0 0
    %4266 = vmatpush1.bf16.xpose.msra.mxu0 0
    %4267 = vmatprep.subr.bf16.mxu0 0
    %4268 = vmatpush1.bf16.xpose.msra.mxu0 0
    %4269 = vmatprep.subr.bf16.mxu0 0
    %4270 = vmatpush1.bf16.xpose.msra.mxu0 0
    %4271 = vmatprep.subr.bf16.mxu0 0
    %4272 = vmatpush1.bf16.xpose.msra.mxu0 0
    %4273 = vmatprep.subr.bf16.mxu0 0
    %4274 = vmatpush1.bf16.xpose.msra.mxu0 0
    %4275 = vmatprep.subr.bf16.mxu0 0
    %4276 = vmatpush1.bf16.xpose.msra.mxu0 0
    %4277 = vmatprep.subr.bf16.mxu0 0
    %4278 = vmatpush1.bf16.xpose.msra.mxu0 0
    %4279 = vmatprep.subr.bf16.mxu0 0
    %4280 = vmatpush1.bf16.xpose.msra.mxu0 %v4263
    %4281 = vmatprep.subr.bf16.mxu0 0
    %4282 = vmatpush2.bf16.xpose.msra.mxu0 0
    %4283 = vmatprep.subr.bf16.mxu0 0
    %4284 = vmatpush2.bf16.xpose.msra.mxu0 0
    %4285 = vmatprep.subr.bf16.mxu0 0
    %4286 = vmatpush2.bf16.xpose.msra.mxu0 0
    %4287 = vmatprep.subr.bf16.mxu0 0
    %4288 = vmatpush2.bf16.xpose.msra.mxu0 0
    %4289 = vmatprep.subr.bf16.mxu0 0
    %4290 = vmatpush2.bf16.xpose.msra.mxu0 0
    %4291 = vmatprep.subr.bf16.mxu0 0
    %4292 = vmatpush2.bf16.xpose.msra.mxu0 0
    %4293 = vmatprep.subr.bf16.mxu0 0
    %4294 = vmatpush2.bf16.xpose.msra.mxu0 0
    %4295 = vmatprep.subr.bf16.mxu0 0
    %4296 = vmatpush2.bf16.xpose.msra.mxu0 0
    %4297 = vmatprep.mubr.bf16.mxu0 0
    %4298 = vmatmul.mubr.bf16.gmra.mxu0 %v4260
    %v4299 = vpop.f32.mrf.mxu0
    %v4300 = vadd.f32 %v42, %v4299
    %v4301 = vpop.f32.mrf.mxu0
    %v4302 = vpop.f32.mrf.mxu0
    %v4303 = vadd.f32 %v43, %v4302
    %v4304 = vpop.f32.mrf.mxu0
    %4305 = vdwg.mxu0
    %v4306 = vsel %vm326, %v4153, -inf
    %4307 = vmax.xlane.f32.xlu0 %v4306
    %v4308 = vpop.xlane.xlu0 %4307
    %v4309 = vsel %vm326, %v4156, -inf
    %4310 = vmax.xlane.f32.xlu0 %v4309
    %v4311 = vpop.xlane.xlu0 %4310
    %v4312 = vsel %vm326, %v4202, -inf
    %4313 = vmax.xlane.f32.xlu0 %v4312
    %v4314 = vpop.xlane.xlu0 %4313
    %v4315 = vsel %vm326, %v4205, -inf
    %4316 = vmax.xlane.f32.xlu0 %v4315
    %v4317 = vpop.xlane.xlu0 %4316
    %v4318 = vsel %vm326, %v4251, -inf
    %4319 = vmax.xlane.f32.xlu0 %v4318
    %v4320 = vpop.xlane.xlu0 %4319
    %v4321 = vsel %vm326, %v4254, -inf
    %4322 = vmax.xlane.f32.xlu0 %v4321
    %v4323 = vpop.xlane.xlu0 %4322
    %v4324 = vsel %vm326, %v4300, -inf
    %4325 = vmax.xlane.f32.xlu0 %v4324
    %v4326 = vpop.xlane.xlu0 %4325
    %v4327 = vsel %vm326, %v4303, -inf
    %4328 = vmax.xlane.f32.xlu0 %v4327
    %v4329 = vpop.xlane.xlu0 %4328
    %v4330 = vsub.f32 %v4153, %v4308
    %v4331 = vsub.f32 %v4156, %v4311
    %v4332 = vsub.f32 %v4202, %v4314
    %v4333 = vsub.f32 %v4205, %v4317
    %v4334 = vsub.f32 %v4251, %v4320
    %v4335 = vsub.f32 %v4254, %v4323
    %v4336 = vsub.f32 %v4300, %v4326
    %v4337 = vsub.f32 %v4303, %v4329
    %v4338 = vmul.f32 %v4330, 1.442695
    %v4339 = vpow.pop %v4338
    %v4340 = vmul.f32 %v4331, 1.442695
    %v4341 = vpow.pop %v4340
    %v4342 = vmul.f32 %v4332, 1.442695
    %v4343 = vpow.pop %v4342
    %v4344 = vmul.f32 %v4333, 1.442695
    %v4345 = vpow.pop %v4344
    %v4346 = vmul.f32 %v4334, 1.442695
    %v4347 = vpow.pop %v4346
    %v4348 = vmul.f32 %v4335, 1.442695
    %v4349 = vpow.pop %v4348
    %v4350 = vmul.f32 %v4336, 1.442695
    %v4351 = vpow.pop %v4350
    %v4352 = vmul.f32 %v4337, 1.442695
    %v4353 = vpow.pop %v4352
    %v4354 = vsel %vm326, %v4339, 0.0
    %4355 = vadd.xlane.f32.xlu0 %v4354
    %v4356 = vpop.xlane.xlu0 %4355
    %v4357 = vsel %vm326, %v4341, 0.0
    %4358 = vadd.xlane.f32.xlu0 %v4357
    %v4359 = vpop.xlane.xlu0 %4358
    %v4360 = vsel %vm326, %v4343, 0.0
    %4361 = vadd.xlane.f32.xlu0 %v4360
    %v4362 = vpop.xlane.xlu0 %4361
    %v4363 = vsel %vm326, %v4345, 0.0
    %4364 = vadd.xlane.f32.xlu0 %v4363
    %v4365 = vpop.xlane.xlu0 %4364
    %v4366 = vsel %vm326, %v4347, 0.0
    %4367 = vadd.xlane.f32.xlu0 %v4366
    %v4368 = vpop.xlane.xlu0 %4367
    %v4369 = vsel %vm326, %v4349, 0.0
    %4370 = vadd.xlane.f32.xlu0 %v4369
    %v4371 = vpop.xlane.xlu0 %4370
    %v4372 = vsel %vm326, %v4351, 0.0
    %4373 = vadd.xlane.f32.xlu0 %v4372
    %v4374 = vpop.xlane.xlu0 %4373
    %v4375 = vsel %vm326, %v4353, 0.0
    %4376 = vadd.xlane.f32.xlu0 %v4375
    %v4377 = vpop.xlane.xlu0 %4376
    %v4378 = vrcp.pop %v4356
    %v4379 = vrcp.pop %v4359
    %v4380 = vrcp.pop %v4362
    %v4381 = vrcp.pop %v4365
    %v4382 = vrcp.pop %v4368
    %v4383 = vrcp.pop %v4371
    %v4384 = vrcp.pop %v4374
    %v4385 = vrcp.pop %v4377
    %v4386 = vmul.f32 %v4339, %v4378
    %v4387 = vmul.f32 %v4341, %v4379
    %v4388 = vmul.f32 %v4343, %v4380
    %v4389 = vmul.f32 %v4345, %v4381
    %v4390 = vmul.f32 %v4347, %v4382
    %v4391 = vmul.f32 %v4349, %v4383
    %v4392 = vmul.f32 %v4351, %v4384
    %v4393 = vmul.f32 %v4353, %v4385
    %v4394 = vpack.c.bf16 %v4387, %v4386
    %v4395 = vpack.c.bf16 %v4389, %v4388
    %v4396 = vpack.c.bf16 %v4391, %v4390
    %v4397 = vpack.c.bf16 %v4393, %v4392
    %4398 = vrot.lane.b32.xlu0 %v4102, 64
    %v4399 = vpop.permute.xlu0 %4398
    %v4402 = vsel %vm326, %v4394, 0
    %4404 = vmatprep.subr.bf16.mxu0 0
    %4405 = vmatpush1.bf16.msra.mxu0 0
    %4406 = vmatprep.subr.bf16.mxu0 0
    %4407 = vmatpush1.bf16.msra.mxu0 0
    %4408 = vmatprep.subr.bf16.mxu0 0
    %4409 = vmatpush1.bf16.msra.mxu0 0
    %4410 = vmatprep.subr.bf16.mxu0 0
    %4411 = vmatpush1.bf16.msra.mxu0 0
    %4412 = vmatprep.subr.bf16.mxu0 0
    %4413 = vmatpush1.bf16.msra.mxu0 0
    %4414 = vmatprep.subr.bf16.mxu0 0
    %4415 = vmatpush1.bf16.msra.mxu0 0
    %4416 = vmatprep.subr.bf16.mxu0 0
    %4417 = vmatpush1.bf16.msra.mxu0 0
    %4418 = vmatprep.subr.bf16.mxu0 0
    %4419 = vmatpush1.bf16.msra.mxu0 %v4399
    %4420 = vmatprep.subr.bf16.mxu0 0
    %4421 = vmatpush2.bf16.msra.mxu0 0
    %4422 = vmatprep.subr.bf16.mxu0 0
    %4423 = vmatpush2.bf16.msra.mxu0 0
    %4424 = vmatprep.subr.bf16.mxu0 0
    %4425 = vmatpush2.bf16.msra.mxu0 0
    %4426 = vmatprep.subr.bf16.mxu0 0
    %4427 = vmatpush2.bf16.msra.mxu0 0
    %4428 = vmatprep.subr.bf16.mxu0 0
    %4429 = vmatpush2.bf16.msra.mxu0 0
    %4430 = vmatprep.subr.bf16.mxu0 0
    %4431 = vmatpush2.bf16.msra.mxu0 0
    %4432 = vmatprep.subr.bf16.mxu0 0
    %4433 = vmatpush2.bf16.msra.mxu0 0
    %4434 = vmatprep.subr.bf16.mxu0 0
    %4435 = vmatpush2.bf16.msra.mxu0 0
    %4436 = vmatprep.mubr.bf16.mxu0 0
    %4437 = vmatmul.mubr.bf16.gmra.mxu0 %v4402
    %v4438 = vpop.f32.mrf.mxu0
    %v4439 = vadd.f32 0.0, %v4438
    %v4440 = vpop.f32.mrf.mxu0
    %v4441 = vpop.f32.mrf.mxu0
    %v4442 = vadd.f32 0.0, %v4441
    %v4443 = vpop.f32.mrf.mxu0
    %4444 = vdwg.mxu0
    %4445 = vrot.lane.b32.xlu0 %v4105, 64
    %v4446 = vpop.permute.xlu0 %4445
    %v4449 = vsel %vm326, %v4395, 0
    %4451 = vmatprep.subr.bf16.mxu0 0
    %4452 = vmatpush1.bf16.msra.mxu0 0
    %4453 = vmatprep.subr.bf16.mxu0 0
    %4454 = vmatpush1.bf16.msra.mxu0 0
    %4455 = vmatprep.subr.bf16.mxu0 0
    %4456 = vmatpush1.bf16.msra.mxu0 0
    %4457 = vmatprep.subr.bf16.mxu0 0
    %4458 = vmatpush1.bf16.msra.mxu0 0
    %4459 = vmatprep.subr.bf16.mxu0 0
    %4460 = vmatpush1.bf16.msra.mxu0 0
    %4461 = vmatprep.subr.bf16.mxu0 0
    %4462 = vmatpush1.bf16.msra.mxu0 0
    %4463 = vmatprep.subr.bf16.mxu0 0
    %4464 = vmatpush1.bf16.msra.mxu0 0
    %4465 = vmatprep.subr.bf16.mxu0 0
    %4466 = vmatpush1.bf16.msra.mxu0 %v4446
    %4467 = vmatprep.subr.bf16.mxu0 0
    %4468 = vmatpush2.bf16.msra.mxu0 0
    %4469 = vmatprep.subr.bf16.mxu0 0
    %4470 = vmatpush2.bf16.msra.mxu0 0
    %4471 = vmatprep.subr.bf16.mxu0 0
    %4472 = vmatpush2.bf16.msra.mxu0 0
    %4473 = vmatprep.subr.bf16.mxu0 0
    %4474 = vmatpush2.bf16.msra.mxu0 0
    %4475 = vmatprep.subr.bf16.mxu0 0
    %4476 = vmatpush2.bf16.msra.mxu0 0
    %4477 = vmatprep.subr.bf16.mxu0 0
    %4478 = vmatpush2.bf16.msra.mxu0 0
    %4479 = vmatprep.subr.bf16.mxu0 0
    %4480 = vmatpush2.bf16.msra.mxu0 0
    %4481 = vmatprep.subr.bf16.mxu0 0
    %4482 = vmatpush2.bf16.msra.mxu0 0
    %4483 = vmatprep.mubr.bf16.mxu0 0
    %4484 = vmatmul.mubr.bf16.gmra.mxu0 %v4449
    %v4485 = vpop.f32.mrf.mxu0
    %v4486 = vadd.f32 0.0, %v4485
    %v4487 = vpop.f32.mrf.mxu0
    %v4488 = vpop.f32.mrf.mxu0
    %v4489 = vadd.f32 0.0, %v4488
    %v4490 = vpop.f32.mrf.mxu0
    %4491 = vdwg.mxu0
    %4492 = vrot.lane.b32.xlu0 %v4107, 64
    %v4493 = vpop.permute.xlu0 %4492
    %v4496 = vsel %vm326, %v4396, 0
    %4498 = vmatprep.subr.bf16.mxu0 0
    %4499 = vmatpush1.bf16.msra.mxu0 0
    %4500 = vmatprep.subr.bf16.mxu0 0
    %4501 = vmatpush1.bf16.msra.mxu0 0
    %4502 = vmatprep.subr.bf16.mxu0 0
    %4503 = vmatpush1.bf16.msra.mxu0 0
    %4504 = vmatprep.subr.bf16.mxu0 0
    %4505 = vmatpush1.bf16.msra.mxu0 0
    %4506 = vmatprep.subr.bf16.mxu0 0
    %4507 = vmatpush1.bf16.msra.mxu0 0
    %4508 = vmatprep.subr.bf16.mxu0 0
    %4509 = vmatpush1.bf16.msra.mxu0 0
    %4510 = vmatprep.subr.bf16.mxu0 0
    %4511 = vmatpush1.bf16.msra.mxu0 0
    %4512 = vmatprep.subr.bf16.mxu0 0
    %4513 = vmatpush1.bf16.msra.mxu0 %v4493
    %4514 = vmatprep.subr.bf16.mxu0 0
    %4515 = vmatpush2.bf16.msra.mxu0 0
    %4516 = vmatprep.subr.bf16.mxu0 0
    %4517 = vmatpush2.bf16.msra.mxu0 0
    %4518 = vmatprep.subr.bf16.mxu0 0
    %4519 = vmatpush2.bf16.msra.mxu0 0
    %4520 = vmatprep.subr.bf16.mxu0 0
    %4521 = vmatpush2.bf16.msra.mxu0 0
    %4522 = vmatprep.subr.bf16.mxu0 0
    %4523 = vmatpush2.bf16.msra.mxu0 0
    %4524 = vmatprep.subr.bf16.mxu0 0
    %4525 = vmatpush2.bf16.msra.mxu0 0
    %4526 = vmatprep.subr.bf16.mxu0 0
    %4527 = vmatpush2.bf16.msra.mxu0 0
    %4528 = vmatprep.subr.bf16.mxu0 0
    %4529 = vmatpush2.bf16.msra.mxu0 0
    %4530 = vmatprep.mubr.bf16.mxu0 0
    %4531 = vmatmul.mubr.bf16.gmra.mxu0 %v4496
    %v4532 = vpop.f32.mrf.mxu0
    %v4533 = vadd.f32 0.0, %v4532
    %v4534 = vpop.f32.mrf.mxu0
    %v4535 = vpop.f32.mrf.mxu0
    %v4536 = vadd.f32 0.0, %v4535
    %v4537 = vpop.f32.mrf.mxu0
    %4538 = vdwg.mxu0
    %4539 = vrot.lane.b32.xlu0 %v4109, 64
    %v4540 = vpop.permute.xlu0 %4539
    %v4543 = vsel %vm326, %v4397, 0
    %4545 = vmatprep.subr.bf16.mxu0 0
    %4546 = vmatpush1.bf16.msra.mxu0 0
    %4547 = vmatprep.subr.bf16.mxu0 0
    %4548 = vmatpush1.bf16.msra.mxu0 0
    %4549 = vmatprep.subr.bf16.mxu0 0
    %4550 = vmatpush1.bf16.msra.mxu0 0
    %4551 = vmatprep.subr.bf16.mxu0 0
    %4552 = vmatpush1.bf16.msra.mxu0 0
    %4553 = vmatprep.subr.bf16.mxu0 0
    %4554 = vmatpush1.bf16.msra.mxu0 0
    %4555 = vmatprep.subr.bf16.mxu0 0
    %4556 = vmatpush1.bf16.msra.mxu0 0
    %4557 = vmatprep.subr.bf16.mxu0 0
    %4558 = vmatpush1.bf16.msra.mxu0 0
    %4559 = vmatprep.subr.bf16.mxu0 0
    %4560 = vmatpush1.bf16.msra.mxu0 %v4540
    %4561 = vmatprep.subr.bf16.mxu0 0
    %4562 = vmatpush2.bf16.msra.mxu0 0
    %4563 = vmatprep.subr.bf16.mxu0 0
    %4564 = vmatpush2.bf16.msra.mxu0 0
    %4565 = vmatprep.subr.bf16.mxu0 0
    %4566 = vmatpush2.bf16.msra.mxu0 0
    %4567 = vmatprep.subr.bf16.mxu0 0
    %4568 = vmatpush2.bf16.msra.mxu0 0
    %4569 = vmatprep.subr.bf16.mxu0 0
    %4570 = vmatpush2.bf16.msra.mxu0 0
    %4571 = vmatprep.subr.bf16.mxu0 0
    %4572 = vmatpush2.bf16.msra.mxu0 0
    %4573 = vmatprep.subr.bf16.mxu0 0
    %4574 = vmatpush2.bf16.msra.mxu0 0
    %4575 = vmatprep.subr.bf16.mxu0 0
    %4576 = vmatpush2.bf16.msra.mxu0 0
    %4577 = vmatprep.mubr.bf16.mxu0 0
    %4578 = vmatmul.mubr.bf16.gmra.mxu0 %v4543
    %v4579 = vpop.f32.mrf.mxu0
    %v4580 = vadd.f32 0.0, %v4579
    %v4581 = vpop.f32.mrf.mxu0
    %v4582 = vpop.f32.mrf.mxu0
    %v4583 = vadd.f32 0.0, %v4582
    %v4584 = vpop.f32.mrf.mxu0
    %4585 = vdwg.mxu0
    %v4586 = vpack.c.bf16 %v4442, %v4439
    %v4587 = vpack.c.bf16 %v4489, %v4486
    %v4588 = vpack.c.bf16 %v4536, %v4533
    %v4589 = vpack.c.bf16 %v4583, %v4580
    %v4591 = vsel %vm131, %v4586, 0
    %v4594 = vsel %vm614, %v4097, 0
    %4596 = vmatprep.subr.bf16.mxu0 0
    %4597 = vmatpush1.bf16.msra.mxu0 0
    %4598 = vmatprep.subr.bf16.mxu0 0
    %4599 = vmatpush1.bf16.msra.mxu0 0
    %4600 = vmatprep.subr.bf16.mxu0 0
    %4601 = vmatpush1.bf16.msra.mxu0 0
    %4602 = vmatprep.subr.bf16.mxu0 0
    %4603 = vmatpush1.bf16.msra.mxu0 0
    %4604 = vmatprep.subr.bf16.mxu0 0
    %4605 = vmatpush1.bf16.msra.mxu0 0
    %4606 = vmatprep.subr.bf16.mxu0 0
    %4607 = vmatpush1.bf16.msra.mxu0 0
    %4608 = vmatprep.subr.bf16.mxu0 0
    %4609 = vmatpush1.bf16.msra.mxu0 0
    %4610 = vmatprep.subr.bf16.mxu0 0
    %4611 = vmatpush1.bf16.msra.mxu0 %v4594
    %4612 = vmatprep.subr.bf16.mxu0 0
    %4613 = vmatpush2.bf16.msra.mxu0 0
    %4614 = vmatprep.subr.bf16.mxu0 0
    %4615 = vmatpush2.bf16.msra.mxu0 0
    %4616 = vmatprep.subr.bf16.mxu0 0
    %4617 = vmatpush2.bf16.msra.mxu0 0
    %4618 = vmatprep.subr.bf16.mxu0 0
    %4619 = vmatpush2.bf16.msra.mxu0 0
    %4620 = vmatprep.subr.bf16.mxu0 0
    %4621 = vmatpush2.bf16.msra.mxu0 0
    %4622 = vmatprep.subr.bf16.mxu0 0
    %4623 = vmatpush2.bf16.msra.mxu0 0
    %4624 = vmatprep.subr.bf16.mxu0 0
    %4625 = vmatpush2.bf16.msra.mxu0 0
    %4626 = vmatprep.subr.bf16.mxu0 0
    %4627 = vmatpush2.bf16.msra.mxu0 0
    %4628 = vmatprep.mubr.bf16.mxu0 0
    %4629 = vmatmul.mubr.bf16.gmra.mxu0 %v4591
    %v4630 = vpop.f32.mrf.mxu0
    %v4631 = vadd.f32 0.0, %v4630
    %v4632 = vpop.f32.mrf.mxu0
    %v4633 = vpop.f32.mrf.mxu0
    %v4634 = vadd.f32 0.0, %v4633
    %v4635 = vpop.f32.mrf.mxu0
    %4636 = vdwg.mxu0
    %v4638 = vsel %vm131, %v4587, 0
    %v4641 = vsel %vm614, %v4098, 0
    %4643 = vmatprep.subr.bf16.mxu0 0
    %4644 = vmatpush1.bf16.msra.mxu0 0
    %4645 = vmatprep.subr.bf16.mxu0 0
    %4646 = vmatpush1.bf16.msra.mxu0 0
    %4647 = vmatprep.subr.bf16.mxu0 0
    %4648 = vmatpush1.bf16.msra.mxu0 0
    %4649 = vmatprep.subr.bf16.mxu0 0
    %4650 = vmatpush1.bf16.msra.mxu0 0
    %4651 = vmatprep.subr.bf16.mxu0 0
    %4652 = vmatpush1.bf16.msra.mxu0 0
    %4653 = vmatprep.subr.bf16.mxu0 0
    %4654 = vmatpush1.bf16.msra.mxu0 0
    %4655 = vmatprep.subr.bf16.mxu0 0
    %4656 = vmatpush1.bf16.msra.mxu0 0
    %4657 = vmatprep.subr.bf16.mxu0 0
    %4658 = vmatpush1.bf16.msra.mxu0 %v4641
    %4659 = vmatprep.subr.bf16.mxu0 0
    %4660 = vmatpush2.bf16.msra.mxu0 0
    %4661 = vmatprep.subr.bf16.mxu0 0
    %4662 = vmatpush2.bf16.msra.mxu0 0
    %4663 = vmatprep.subr.bf16.mxu0 0
    %4664 = vmatpush2.bf16.msra.mxu0 0
    %4665 = vmatprep.subr.bf16.mxu0 0
    %4666 = vmatpush2.bf16.msra.mxu0 0
    %4667 = vmatprep.subr.bf16.mxu0 0
    %4668 = vmatpush2.bf16.msra.mxu0 0
    %4669 = vmatprep.subr.bf16.mxu0 0
    %4670 = vmatpush2.bf16.msra.mxu0 0
    %4671 = vmatprep.subr.bf16.mxu0 0
    %4672 = vmatpush2.bf16.msra.mxu0 0
    %4673 = vmatprep.subr.bf16.mxu0 0
    %4674 = vmatpush2.bf16.msra.mxu0 0
    %4675 = vmatprep.mubr.bf16.mxu0 0
    %4676 = vmatmul.mubr.bf16.gmra.mxu0 %v4638
    %v4677 = vpop.f32.mrf.mxu0
    %v4678 = vadd.f32 0.0, %v4677
    %v4679 = vpop.f32.mrf.mxu0
    %v4680 = vpop.f32.mrf.mxu0
    %v4681 = vadd.f32 0.0, %v4680
    %v4682 = vpop.f32.mrf.mxu0
    %4683 = vdwg.mxu0
    %v4685 = vsel %vm131, %v4588, 0
    %v4688 = vsel %vm614, %v4099, 0
    %4690 = vmatprep.subr.bf16.mxu0 0
    %4691 = vmatpush1.bf16.msra.mxu0 0
    %4692 = vmatprep.subr.bf16.mxu0 0
    %4693 = vmatpush1.bf16.msra.mxu0 0
    %4694 = vmatprep.subr.bf16.mxu0 0
    %4695 = vmatpush1.bf16.msra.mxu0 0
    %4696 = vmatprep.subr.bf16.mxu0 0
    %4697 = vmatpush1.bf16.msra.mxu0 0
    %4698 = vmatprep.subr.bf16.mxu0 0
    %4699 = vmatpush1.bf16.msra.mxu0 0
    %4700 = vmatprep.subr.bf16.mxu0 0
    %4701 = vmatpush1.bf16.msra.mxu0 0
    %4702 = vmatprep.subr.bf16.mxu0 0
    %4703 = vmatpush1.bf16.msra.mxu0 0
    %4704 = vmatprep.subr.bf16.mxu0 0
    %4705 = vmatpush1.bf16.msra.mxu0 %v4688
    %4706 = vmatprep.subr.bf16.mxu0 0
    %4707 = vmatpush2.bf16.msra.mxu0 0
    %4708 = vmatprep.subr.bf16.mxu0 0
    %4709 = vmatpush2.bf16.msra.mxu0 0
    %4710 = vmatprep.subr.bf16.mxu0 0
    %4711 = vmatpush2.bf16.msra.mxu0 0
    %4712 = vmatprep.subr.bf16.mxu0 0
    %4713 = vmatpush2.bf16.msra.mxu0 0
    %4714 = vmatprep.subr.bf16.mxu0 0
    %4715 = vmatpush2.bf16.msra.mxu0 0
    %4716 = vmatprep.subr.bf16.mxu0 0
    %4717 = vmatpush2.bf16.msra.mxu0 0
    %4718 = vmatprep.subr.bf16.mxu0 0
    %4719 = vmatpush2.bf16.msra.mxu0 0
    %4720 = vmatprep.subr.bf16.mxu0 0
    %4721 = vmatpush2.bf16.msra.mxu0 0
    %4722 = vmatprep.mubr.bf16.mxu0 0
    %4723 = vmatmul.mubr.bf16.gmra.mxu0 %v4685
    %v4724 = vpop.f32.mrf.mxu0
    %v4725 = vadd.f32 0.0, %v4724
    %v4726 = vpop.f32.mrf.mxu0
    %v4727 = vpop.f32.mrf.mxu0
    %v4728 = vadd.f32 0.0, %v4727
    %v4729 = vpop.f32.mrf.mxu0
    %4730 = vdwg.mxu0
    %v4732 = vsel %vm131, %v4589, 0
    %v4735 = vsel %vm614, %v4100, 0
    %4737 = vmatprep.subr.bf16.mxu0 0
    %4738 = vmatpush1.bf16.msra.mxu0 0
    %4739 = vmatprep.subr.bf16.mxu0 0
    %4740 = vmatpush1.bf16.msra.mxu0 0
    %4741 = vmatprep.subr.bf16.mxu0 0
    %4742 = vmatpush1.bf16.msra.mxu0 0
    %4743 = vmatprep.subr.bf16.mxu0 0
    %4744 = vmatpush1.bf16.msra.mxu0 0
    %4745 = vmatprep.subr.bf16.mxu0 0
    %4746 = vmatpush1.bf16.msra.mxu0 0
    %4747 = vmatprep.subr.bf16.mxu0 0
    %4748 = vmatpush1.bf16.msra.mxu0 0
    %4749 = vmatprep.subr.bf16.mxu0 0
    %4750 = vmatpush1.bf16.msra.mxu0 0
    %4751 = vmatprep.subr.bf16.mxu0 0
    %4752 = vmatpush1.bf16.msra.mxu0 %v4735
    %4753 = vmatprep.subr.bf16.mxu0 0
    %4754 = vmatpush2.bf16.msra.mxu0 0
    %4755 = vmatprep.subr.bf16.mxu0 0
    %4756 = vmatpush2.bf16.msra.mxu0 0
    %4757 = vmatprep.subr.bf16.mxu0 0
    %4758 = vmatpush2.bf16.msra.mxu0 0
    %4759 = vmatprep.subr.bf16.mxu0 0
    %4760 = vmatpush2.bf16.msra.mxu0 0
    %4761 = vmatprep.subr.bf16.mxu0 0
    %4762 = vmatpush2.bf16.msra.mxu0 0
    %4763 = vmatprep.subr.bf16.mxu0 0
    %4764 = vmatpush2.bf16.msra.mxu0 0
    %4765 = vmatprep.subr.bf16.mxu0 0
    %4766 = vmatpush2.bf16.msra.mxu0 0
    %4767 = vmatprep.subr.bf16.mxu0 0
    %4768 = vmatpush2.bf16.msra.mxu0 0
    %4769 = vmatprep.mubr.bf16.mxu0 0
    %4770 = vmatmul.mubr.bf16.gmra.mxu0 %v4732
    %v4771 = vpop.f32.mrf.mxu0
    %v4772 = vadd.f32 0.0, %v4771
    %v4773 = vpop.f32.mrf.mxu0
    %v4774 = vpop.f32.mrf.mxu0
    %v4775 = vadd.f32 0.0, %v4774
    %v4776 = vpop.f32.mrf.mxu0
    %4777 = vdwg.mxu0
    %v4778 = vsel %vm72, %v4631, 0.0
    %v4779 = vsel %vm72, %v4678, 0.0
    %v4780 = vadd.f32 %v4778, %v4779
    %v4781 = vsel %vm72, %v4725, 0.0
    %v4782 = vadd.f32 %v4780, %v4781
    %v4783 = vsel %vm72, %v4772, 0.0
    %v4784 = vadd.f32 %v4782, %v4783
    %v4785 = vsel %vm72, %v4634, 0.0
    %v4786 = vsel %vm72, %v4681, 0.0
    %v4787 = vadd.f32 %v4785, %v4786
    %v4788 = vsel %vm72, %v4728, 0.0
    %v4789 = vadd.f32 %v4787, %v4788
    %v4790 = vsel %vm72, %v4775, 0.0
    %v4791 = vadd.f32 %v4789, %v4790
    %v4793 = vlaneseq
    %v4794 = vshrl.u32 %v4793, 7
    %v4795 = vsub.s32 0, %v4794
    %v4796 = vrot.slane %v4101, %v4795
    %4797 = vrot.lane.b32.xlu0 %v4796, 64
    %v4798 = vpop.permute.xlu0 %4797
    %v4800 = vadd.f32 %v4784, %v4798
    %v4801 = vadd.f32 %v4791, %v4798
    %v4802 = vadd.f32 %v4013, %v4800
    %v4803 = vadd.f32 %v4014, %v4801
    %v4804 = vld [vmem:[%s1073 + $0x3] sm:$0x1]
    %v4805 = vld [vmem:[%s1073 + $0x4] sm:$0x1]
    %v4806 = vsel %vm72, %v4802, 0.0
    %4807 = vadd.xlane.f32.xlu0 %v4806
    %v4808 = vpop.xlane.xlu0 %4807
    %v4809 = vsel %vm72, %v4803, 0.0
    %4810 = vadd.xlane.f32.xlu0 %v4809
    %v4811 = vpop.xlane.xlu0 %4810
    %v4812 = vmul.f32 %v4808, %v828
    %v4813 = vmul.f32 %v4811, %v828
    %v4814 = vsub.f32 %v4802, %v4812
    %v4815 = vsub.f32 %v4803, %v4813
    %v4816 = vmul.f32 %v4814, %v4814
    %v4817 = vmul.f32 %v4815, %v4815
    %v4818 = vsel %vm72, %v4816, 0.0
    %4819 = vadd.xlane.f32.xlu0 %v4818
    %v4820 = vpop.xlane.xlu0 %4819
    %v4821 = vsel %vm72, %v4817, 0.0
    %4822 = vadd.xlane.f32.xlu0 %v4821
    %v4823 = vpop.xlane.xlu0 %4822
    %v4824 = vmul.f32 %v4820, %v828
    %v4825 = vmul.f32 %v4823, %v828
    %v4826 = vadd.f32 %v4824, 1e-05
    %v4827 = vadd.f32 %v4825, 1e-05
    %v4828 = vrsqrt.pop %v4826
    %v4829 = vrsqrt.pop %v4827
    %v4830 = vmul.f32 %v4814, %v4828
    %v4831 = vmul.f32 %v4815, %v4829
    %v4833 = vlaneseq
    %v4834 = vshrl.u32 %v4833, 7
    %v4835 = vsub.s32 0, %v4834
    %v4836 = vrot.slane %v4804, %v4835
    %4837 = vrot.lane.b32.xlu0 %v4836, 32
    %v4838 = vpop.permute.xlu0 %4837
    %v4840 = vmul.f32 %v4830, %v4838
    %v4841 = vmul.f32 %v4831, %v4838
    %v4843 = vlaneseq
    %v4844 = vshrl.u32 %v4843, 7
    %v4845 = vsub.s32 0, %v4844
    %v4846 = vrot.slane %v4805, %v4845
    %v4848 = vadd.f32 %v4840, %v4846
    %v4849 = vadd.f32 %v4841, %v4846
    %v4850 = vld [vmem:[%s1068 + $0x8] sm:$0xf]
    %v4851 = vld [vmem:[%s1068 + $0x18] sm:$0xf]
    %v4852 = vld [vmem:[%s1068 + $0x28] sm:$0xf]
    %v4853 = vld [vmem:[%s1068 + $0x38] sm:$0xf]
    %v4854 = vpack.c.bf16 %v4849, %v4848
    %v4859 = vunpack.c.l.b16 %v4850
    %v4860 = vunpack.c.l.b16 %v4851
    %v4861 = vunpack.c.l.b16 %v4852
    %v4862 = vunpack.c.l.b16 %v4853
    %v4863 = vpack.c.b16 %v4860, %v4859
    %v4864 = vpack.c.b16 %v4862, %v4861
    %4867 = vrot.lane.b32.xlu0 %v4846, 96
    %v4868 = vpop.permute.xlu0 %4867
    %v4871 = vsel %vm72, %v4854, 0
    %4873 = vmatprep.subr.bf16.mxu0 0
    %4874 = vmatpush1.bf16.msra.mxu0 0
    %4875 = vmatprep.subr.bf16.mxu0 0
    %4876 = vmatpush1.bf16.msra.mxu0 0
    %4877 = vmatprep.subr.bf16.mxu0 0
    %4878 = vmatpush1.bf16.msra.mxu0 0
    %4879 = vmatprep.subr.bf16.mxu0 0
    %4880 = vmatpush1.bf16.msra.mxu0 0
    %4881 = vmatprep.subr.bf16.mxu0 0
    %4882 = vmatpush1.bf16.msra.mxu0 0
    %4883 = vmatprep.subr.bf16.mxu0 0
    %4884 = vmatpush1.bf16.msra.mxu0 0
    %4885 = vmatprep.subr.bf16.mxu0 0
    %4886 = vmatpush1.bf16.msra.mxu0 %v4864
    %4887 = vmatprep.subr.bf16.mxu0 0
    %4888 = vmatpush1.bf16.msra.mxu0 %v4863
    %4889 = vmatprep.subr.bf16.mxu0 0
    %4890 = vmatpush2.bf16.msra.mxu0 0
    %4891 = vmatprep.subr.bf16.mxu0 0
    %4892 = vmatpush2.bf16.msra.mxu0 0
    %4893 = vmatprep.subr.bf16.mxu0 0
    %4894 = vmatpush2.bf16.msra.mxu0 0
    %4895 = vmatprep.subr.bf16.mxu0 0
    %4896 = vmatpush2.bf16.msra.mxu0 0
    %4897 = vmatprep.subr.bf16.mxu0 0
    %4898 = vmatpush2.bf16.msra.mxu0 0
    %4899 = vmatprep.subr.bf16.mxu0 0
    %4900 = vmatpush2.bf16.msra.mxu0 0
    %4901 = vmatprep.subr.bf16.mxu0 0
    %4902 = vmatpush2.bf16.msra.mxu0 0
    %4903 = vmatprep.subr.bf16.mxu0 0
    %4904 = vmatpush2.bf16.msra.mxu0 0
    %4905 = vmatprep.mubr.bf16.mxu0 0
    %4906 = vmatmul.mubr.bf16.gmra.mxu0 %v4871
    %v4907 = vpop.f32.mrf.mxu0
    %v4908 = vadd.f32 %v4868, %v4907
    %v4909 = vpop.f32.mrf.mxu0
    %v4910 = vpop.f32.mrf.mxu0
    %v4911 = vadd.f32 %v4868, %v4910
    %v4912 = vpop.f32.mrf.mxu0
    %4913 = vdwg.mxu0
    %4914 = vrot.lane.b32.xlu0 %v4863, 96
    %v4915 = vpop.permute.xlu0 %4914
    %4916 = vrot.lane.b32.xlu0 %v4864, 96
    %v4917 = vpop.permute.xlu0 %4916
    %4920 = vrot.lane.b32.xlu0 %v4846, 64
    %v4921 = vpop.permute.xlu0 %4920
    %4923 = vmatprep.subr.bf16.mxu0 0
    %4924 = vmatpush1.bf16.msra.mxu0 0
    %4925 = vmatprep.subr.bf16.mxu0 0
    %4926 = vmatpush1.bf16.msra.mxu0 0
    %4927 = vmatprep.subr.bf16.mxu0 0
    %4928 = vmatpush1.bf16.msra.mxu0 0
    %4929 = vmatprep.subr.bf16.mxu0 0
    %4930 = vmatpush1.bf16.msra.mxu0 0
    %4931 = vmatprep.subr.bf16.mxu0 0
    %4932 = vmatpush1.bf16.msra.mxu0 0
    %4933 = vmatprep.subr.bf16.mxu0 0
    %4934 = vmatpush1.bf16.msra.mxu0 0
    %4935 = vmatprep.subr.bf16.mxu0 0
    %4936 = vmatpush1.bf16.msra.mxu0 %v4917
    %4937 = vmatprep.subr.bf16.mxu0 0
    %4938 = vmatpush1.bf16.msra.mxu0 %v4915
    %4939 = vmatprep.subr.bf16.mxu0 0
    %4940 = vmatpush2.bf16.msra.mxu0 0
    %4941 = vmatprep.subr.bf16.mxu0 0
    %4942 = vmatpush2.bf16.msra.mxu0 0
    %4943 = vmatprep.subr.bf16.mxu0 0
    %4944 = vmatpush2.bf16.msra.mxu0 0
    %4945 = vmatprep.subr.bf16.mxu0 0
    %4946 = vmatpush2.bf16.msra.mxu0 0
    %4947 = vmatprep.subr.bf16.mxu0 0
    %4948 = vmatpush2.bf16.msra.mxu0 0
    %4949 = vmatprep.subr.bf16.mxu0 0
    %4950 = vmatpush2.bf16.msra.mxu0 0
    %4951 = vmatprep.subr.bf16.mxu0 0
    %4952 = vmatpush2.bf16.msra.mxu0 0
    %4953 = vmatprep.subr.bf16.mxu0 0
    %4954 = vmatpush2.bf16.msra.mxu0 0
    %4955 = vmatprep.mubr.bf16.mxu0 0
    %4956 = vmatmul.mubr.bf16.gmra.mxu0 %v2997
    %v4957 = vpop.f32.mrf.mxu0
    %v4958 = vadd.f32 %v4921, %v4957
    %v4959 = vpop.f32.mrf.mxu0
    %v4960 = vpop.f32.mrf.mxu0
    %v4961 = vadd.f32 %v4921, %v4960
    %v4962 = vpop.f32.mrf.mxu0
    %4963 = vdwg.mxu0
    %s4964 = scalar_lea.vmem %s7, 80
    %v4965 = vld [vmem:[%s4964] sm:$0xf]
    %v4966 = vld [vmem:[%s4964 + $0x4] sm:$0xf]
    %v4967 = vld [vmem:[%s4964 + $0x8] sm:$0xf]
    %v4968 = vld [vmem:[%s4964 + $0xc] sm:$0xf]
    %v4969 = vld [vmem:[%s1073 + $0x5] sm:$0x1]
    %v4970 = vpack.c.bf16 %v4911, %v4908
    %v4971 = vpack.c.bf16 %v4961, %v4958
    %4973 = vrot.lane.b32.xlu0 %v4970, 120
    %v4974 = vpop.permute.xlu0 %4973
    %4975 = vrot.lane.b32.xlu0 %v4970, 112
    %v4976 = vpop.permute.xlu0 %4975
    %4977 = vrot.lane.b32.xlu0 %v4970, 104
    %v4978 = vpop.permute.xlu0 %4977
    %4980 = vrot.lane.b32.xlu0 %v4971, 120
    %v4981 = vpop.permute.xlu0 %4980
    %4982 = vrot.lane.b32.xlu0 %v4971, 112
    %v4983 = vpop.permute.xlu0 %4982
    %4984 = vrot.lane.b32.xlu0 %v4971, 104
    %v4985 = vpop.permute.xlu0 %4984
    %v4987 = vsel %vm131, %v4970, 0
    %v4990 = vsel %vm131, %v4971, 0
    %4992 = vmatprep.subr.bf16.mxu0 0
    %4993 = vmatpush1.bf16.xpose.msra.mxu0 0
    %4994 = vmatprep.subr.bf16.mxu0 0
    %4995 = vmatpush1.bf16.xpose.msra.mxu0 0
    %4996 = vmatprep.subr.bf16.mxu0 0
    %4997 = vmatpush1.bf16.xpose.msra.mxu0 0
    %4998 = vmatprep.subr.bf16.mxu0 0
    %4999 = vmatpush1.bf16.xpose.msra.mxu0 0
    %5000 = vmatprep.subr.bf16.mxu0 0
    %5001 = vmatpush1.bf16.xpose.msra.mxu0 0
    %5002 = vmatprep.subr.bf16.mxu0 0
    %5003 = vmatpush1.bf16.xpose.msra.mxu0 0
    %5004 = vmatprep.subr.bf16.mxu0 0
    %5005 = vmatpush1.bf16.xpose.msra.mxu0 0
    %5006 = vmatprep.subr.bf16.mxu0 0
    %5007 = vmatpush1.bf16.xpose.msra.mxu0 %v4990
    %5008 = vmatprep.subr.bf16.mxu0 0
    %5009 = vmatpush2.bf16.xpose.msra.mxu0 0
    %5010 = vmatprep.subr.bf16.mxu0 0
    %5011 = vmatpush2.bf16.xpose.msra.mxu0 0
    %5012 = vmatprep.subr.bf16.mxu0 0
    %5013 = vmatpush2.bf16.xpose.msra.mxu0 0
    %5014 = vmatprep.subr.bf16.mxu0 0
    %5015 = vmatpush2.bf16.xpose.msra.mxu0 0
    %5016 = vmatprep.subr.bf16.mxu0 0
    %5017 = vmatpush2.bf16.xpose.msra.mxu0 0
    %5018 = vmatprep.subr.bf16.mxu0 0
    %5019 = vmatpush2.bf16.xpose.msra.mxu0 0
    %5020 = vmatprep.subr.bf16.mxu0 0
    %5021 = vmatpush2.bf16.xpose.msra.mxu0 0
    %5022 = vmatprep.subr.bf16.mxu0 0
    %5023 = vmatpush2.bf16.xpose.msra.mxu0 0
    %5024 = vmatprep.mubr.bf16.mxu0 0
    %5025 = vmatmul.mubr.bf16.gmra.mxu0 %v4987
    %v5026 = vpop.f32.mrf.mxu0
    %v5027 = vadd.f32 %v44, %v5026
    %v5028 = vpop.f32.mrf.mxu0
    %v5029 = vpop.f32.mrf.mxu0
    %v5030 = vadd.f32 %v45, %v5029
    %v5031 = vpop.f32.mrf.mxu0
    %5032 = vdwg.mxu0
    %v5034 = vsel %vm131, %v4974, 0
    %v5037 = vsel %vm131, %v4981, 0
    %5039 = vmatprep.subr.bf16.mxu0 0
    %5040 = vmatpush1.bf16.xpose.msra.mxu0 0
    %5041 = vmatprep.subr.bf16.mxu0 0
    %5042 = vmatpush1.bf16.xpose.msra.mxu0 0
    %5043 = vmatprep.subr.bf16.mxu0 0
    %5044 = vmatpush1.bf16.xpose.msra.mxu0 0
    %5045 = vmatprep.subr.bf16.mxu0 0
    %5046 = vmatpush1.bf16.xpose.msra.mxu0 0
    %5047 = vmatprep.subr.bf16.mxu0 0
    %5048 = vmatpush1.bf16.xpose.msra.mxu0 0
    %5049 = vmatprep.subr.bf16.mxu0 0
    %5050 = vmatpush1.bf16.xpose.msra.mxu0 0
    %5051 = vmatprep.subr.bf16.mxu0 0
    %5052 = vmatpush1.bf16.xpose.msra.mxu0 0
    %5053 = vmatprep.subr.bf16.mxu0 0
    %5054 = vmatpush1.bf16.xpose.msra.mxu0 %v5037
    %5055 = vmatprep.subr.bf16.mxu0 0
    %5056 = vmatpush2.bf16.xpose.msra.mxu0 0
    %5057 = vmatprep.subr.bf16.mxu0 0
    %5058 = vmatpush2.bf16.xpose.msra.mxu0 0
    %5059 = vmatprep.subr.bf16.mxu0 0
    %5060 = vmatpush2.bf16.xpose.msra.mxu0 0
    %5061 = vmatprep.subr.bf16.mxu0 0
    %5062 = vmatpush2.bf16.xpose.msra.mxu0 0
    %5063 = vmatprep.subr.bf16.mxu0 0
    %5064 = vmatpush2.bf16.xpose.msra.mxu0 0
    %5065 = vmatprep.subr.bf16.mxu0 0
    %5066 = vmatpush2.bf16.xpose.msra.mxu0 0
    %5067 = vmatprep.subr.bf16.mxu0 0
    %5068 = vmatpush2.bf16.xpose.msra.mxu0 0
    %5069 = vmatprep.subr.bf16.mxu0 0
    %5070 = vmatpush2.bf16.xpose.msra.mxu0 0
    %5071 = vmatprep.mubr.bf16.mxu0 0
    %5072 = vmatmul.mubr.bf16.gmra.mxu0 %v5034
    %v5073 = vpop.f32.mrf.mxu0
    %v5074 = vadd.f32 %v44, %v5073
    %v5075 = vpop.f32.mrf.mxu0
    %v5076 = vpop.f32.mrf.mxu0
    %v5077 = vadd.f32 %v45, %v5076
    %v5078 = vpop.f32.mrf.mxu0
    %5079 = vdwg.mxu0
    %v5081 = vsel %vm131, %v4976, 0
    %v5084 = vsel %vm131, %v4983, 0
    %5086 = vmatprep.subr.bf16.mxu0 0
    %5087 = vmatpush1.bf16.xpose.msra.mxu0 0
    %5088 = vmatprep.subr.bf16.mxu0 0
    %5089 = vmatpush1.bf16.xpose.msra.mxu0 0
    %5090 = vmatprep.subr.bf16.mxu0 0
    %5091 = vmatpush1.bf16.xpose.msra.mxu0 0
    %5092 = vmatprep.subr.bf16.mxu0 0
    %5093 = vmatpush1.bf16.xpose.msra.mxu0 0
    %5094 = vmatprep.subr.bf16.mxu0 0
    %5095 = vmatpush1.bf16.xpose.msra.mxu0 0
    %5096 = vmatprep.subr.bf16.mxu0 0
    %5097 = vmatpush1.bf16.xpose.msra.mxu0 0
    %5098 = vmatprep.subr.bf16.mxu0 0
    %5099 = vmatpush1.bf16.xpose.msra.mxu0 0
    %5100 = vmatprep.subr.bf16.mxu0 0
    %5101 = vmatpush1.bf16.xpose.msra.mxu0 %v5084
    %5102 = vmatprep.subr.bf16.mxu0 0
    %5103 = vmatpush2.bf16.xpose.msra.mxu0 0
    %5104 = vmatprep.subr.bf16.mxu0 0
    %5105 = vmatpush2.bf16.xpose.msra.mxu0 0
    %5106 = vmatprep.subr.bf16.mxu0 0
    %5107 = vmatpush2.bf16.xpose.msra.mxu0 0
    %5108 = vmatprep.subr.bf16.mxu0 0
    %5109 = vmatpush2.bf16.xpose.msra.mxu0 0
    %5110 = vmatprep.subr.bf16.mxu0 0
    %5111 = vmatpush2.bf16.xpose.msra.mxu0 0
    %5112 = vmatprep.subr.bf16.mxu0 0
    %5113 = vmatpush2.bf16.xpose.msra.mxu0 0
    %5114 = vmatprep.subr.bf16.mxu0 0
    %5115 = vmatpush2.bf16.xpose.msra.mxu0 0
    %5116 = vmatprep.subr.bf16.mxu0 0
    %5117 = vmatpush2.bf16.xpose.msra.mxu0 0
    %5118 = vmatprep.mubr.bf16.mxu0 0
    %5119 = vmatmul.mubr.bf16.gmra.mxu0 %v5081
    %v5120 = vpop.f32.mrf.mxu0
    %v5121 = vadd.f32 %v44, %v5120
    %v5122 = vpop.f32.mrf.mxu0
    %v5123 = vpop.f32.mrf.mxu0
    %v5124 = vadd.f32 %v45, %v5123
    %v5125 = vpop.f32.mrf.mxu0
    %5126 = vdwg.mxu0
    %v5128 = vsel %vm131, %v4978, 0
    %v5131 = vsel %vm131, %v4985, 0
    %5133 = vmatprep.subr.bf16.mxu0 0
    %5134 = vmatpush1.bf16.xpose.msra.mxu0 0
    %5135 = vmatprep.subr.bf16.mxu0 0
    %5136 = vmatpush1.bf16.xpose.msra.mxu0 0
    %5137 = vmatprep.subr.bf16.mxu0 0
    %5138 = vmatpush1.bf16.xpose.msra.mxu0 0
    %5139 = vmatprep.subr.bf16.mxu0 0
    %5140 = vmatpush1.bf16.xpose.msra.mxu0 0
    %5141 = vmatprep.subr.bf16.mxu0 0
    %5142 = vmatpush1.bf16.xpose.msra.mxu0 0
    %5143 = vmatprep.subr.bf16.mxu0 0
    %5144 = vmatpush1.bf16.xpose.msra.mxu0 0
    %5145 = vmatprep.subr.bf16.mxu0 0
    %5146 = vmatpush1.bf16.xpose.msra.mxu0 0
    %5147 = vmatprep.subr.bf16.mxu0 0
    %5148 = vmatpush1.bf16.xpose.msra.mxu0 %v5131
    %5149 = vmatprep.subr.bf16.mxu0 0
    %5150 = vmatpush2.bf16.xpose.msra.mxu0 0
    %5151 = vmatprep.subr.bf16.mxu0 0
    %5152 = vmatpush2.bf16.xpose.msra.mxu0 0
    %5153 = vmatprep.subr.bf16.mxu0 0
    %5154 = vmatpush2.bf16.xpose.msra.mxu0 0
    %5155 = vmatprep.subr.bf16.mxu0 0
    %5156 = vmatpush2.bf16.xpose.msra.mxu0 0
    %5157 = vmatprep.subr.bf16.mxu0 0
    %5158 = vmatpush2.bf16.xpose.msra.mxu0 0
    %5159 = vmatprep.subr.bf16.mxu0 0
    %5160 = vmatpush2.bf16.xpose.msra.mxu0 0
    %5161 = vmatprep.subr.bf16.mxu0 0
    %5162 = vmatpush2.bf16.xpose.msra.mxu0 0
    %5163 = vmatprep.subr.bf16.mxu0 0
    %5164 = vmatpush2.bf16.xpose.msra.mxu0 0
    %5165 = vmatprep.mubr.bf16.mxu0 0
    %5166 = vmatmul.mubr.bf16.gmra.mxu0 %v5128
    %v5167 = vpop.f32.mrf.mxu0
    %v5168 = vadd.f32 %v44, %v5167
    %v5169 = vpop.f32.mrf.mxu0
    %v5170 = vpop.f32.mrf.mxu0
    %v5171 = vadd.f32 %v45, %v5170
    %v5172 = vpop.f32.mrf.mxu0
    %5173 = vdwg.mxu0
    %v5174 = vsel %vm326, %v5027, -inf
    %5175 = vmax.xlane.f32.xlu0 %v5174
    %v5176 = vpop.xlane.xlu0 %5175
    %v5177 = vsel %vm326, %v5030, -inf
    %5178 = vmax.xlane.f32.xlu0 %v5177
    %v5179 = vpop.xlane.xlu0 %5178
    %v5180 = vsel %vm326, %v5074, -inf
    %5181 = vmax.xlane.f32.xlu0 %v5180
    %v5182 = vpop.xlane.xlu0 %5181
    %v5183 = vsel %vm326, %v5077, -inf
    %5184 = vmax.xlane.f32.xlu0 %v5183
    %v5185 = vpop.xlane.xlu0 %5184
    %v5186 = vsel %vm326, %v5121, -inf
    %5187 = vmax.xlane.f32.xlu0 %v5186
    %v5188 = vpop.xlane.xlu0 %5187
    %v5189 = vsel %vm326, %v5124, -inf
    %5190 = vmax.xlane.f32.xlu0 %v5189
    %v5191 = vpop.xlane.xlu0 %5190
    %v5192 = vsel %vm326, %v5168, -inf
    %5193 = vmax.xlane.f32.xlu0 %v5192
    %v5194 = vpop.xlane.xlu0 %5193
    %v5195 = vsel %vm326, %v5171, -inf
    %5196 = vmax.xlane.f32.xlu0 %v5195
    %v5197 = vpop.xlane.xlu0 %5196
    %v5198 = vsub.f32 %v5027, %v5176
    %v5199 = vsub.f32 %v5030, %v5179
    %v5200 = vsub.f32 %v5074, %v5182
    %v5201 = vsub.f32 %v5077, %v5185
    %v5202 = vsub.f32 %v5121, %v5188
    %v5203 = vsub.f32 %v5124, %v5191
    %v5204 = vsub.f32 %v5168, %v5194
    %v5205 = vsub.f32 %v5171, %v5197
    %v5206 = vmul.f32 %v5198, 1.442695
    %v5207 = vpow.pop %v5206
    %v5208 = vmul.f32 %v5199, 1.442695
    %v5209 = vpow.pop %v5208
    %v5210 = vmul.f32 %v5200, 1.442695
    %v5211 = vpow.pop %v5210
    %v5212 = vmul.f32 %v5201, 1.442695
    %v5213 = vpow.pop %v5212
    %v5214 = vmul.f32 %v5202, 1.442695
    %v5215 = vpow.pop %v5214
    %v5216 = vmul.f32 %v5203, 1.442695
    %v5217 = vpow.pop %v5216
    %v5218 = vmul.f32 %v5204, 1.442695
    %v5219 = vpow.pop %v5218
    %v5220 = vmul.f32 %v5205, 1.442695
    %v5221 = vpow.pop %v5220
    %v5222 = vsel %vm326, %v5207, 0.0
    %5223 = vadd.xlane.f32.xlu0 %v5222
    %v5224 = vpop.xlane.xlu0 %5223
    %v5225 = vsel %vm326, %v5209, 0.0
    %5226 = vadd.xlane.f32.xlu0 %v5225
    %v5227 = vpop.xlane.xlu0 %5226
    %v5228 = vsel %vm326, %v5211, 0.0
    %5229 = vadd.xlane.f32.xlu0 %v5228
    %v5230 = vpop.xlane.xlu0 %5229
    %v5231 = vsel %vm326, %v5213, 0.0
    %5232 = vadd.xlane.f32.xlu0 %v5231
    %v5233 = vpop.xlane.xlu0 %5232
    %v5234 = vsel %vm326, %v5215, 0.0
    %5235 = vadd.xlane.f32.xlu0 %v5234
    %v5236 = vpop.xlane.xlu0 %5235
    %v5237 = vsel %vm326, %v5217, 0.0
    %5238 = vadd.xlane.f32.xlu0 %v5237
    %v5239 = vpop.xlane.xlu0 %5238
    %v5240 = vsel %vm326, %v5219, 0.0
    %5241 = vadd.xlane.f32.xlu0 %v5240
    %v5242 = vpop.xlane.xlu0 %5241
    %v5243 = vsel %vm326, %v5221, 0.0
    %5244 = vadd.xlane.f32.xlu0 %v5243
    %v5245 = vpop.xlane.xlu0 %5244
    %v5246 = vrcp.pop %v5224
    %v5247 = vrcp.pop %v5227
    %v5248 = vrcp.pop %v5230
    %v5249 = vrcp.pop %v5233
    %v5250 = vrcp.pop %v5236
    %v5251 = vrcp.pop %v5239
    %v5252 = vrcp.pop %v5242
    %v5253 = vrcp.pop %v5245
    %v5254 = vmul.f32 %v5207, %v5246
    %v5255 = vmul.f32 %v5209, %v5247
    %v5256 = vmul.f32 %v5211, %v5248
    %v5257 = vmul.f32 %v5213, %v5249
    %v5258 = vmul.f32 %v5215, %v5250
    %v5259 = vmul.f32 %v5217, %v5251
    %v5260 = vmul.f32 %v5219, %v5252
    %v5261 = vmul.f32 %v5221, %v5253
    %v5262 = vpack.c.bf16 %v5255, %v5254
    %v5263 = vpack.c.bf16 %v5257, %v5256
    %v5264 = vpack.c.bf16 %v5259, %v5258
    %v5265 = vpack.c.bf16 %v5261, %v5260
    %5266 = vrot.lane.b32.xlu0 %v4971, 96
    %v5267 = vpop.permute.xlu0 %5266
    %v5270 = vsel %vm326, %v5262, 0
    %5272 = vmatprep.subr.bf16.mxu0 0
    %5273 = vmatpush1.bf16.msra.mxu0 0
    %5274 = vmatprep.subr.bf16.mxu0 0
    %5275 = vmatpush1.bf16.msra.mxu0 0
    %5276 = vmatprep.subr.bf16.mxu0 0
    %5277 = vmatpush1.bf16.msra.mxu0 0
    %5278 = vmatprep.subr.bf16.mxu0 0
    %5279 = vmatpush1.bf16.msra.mxu0 0
    %5280 = vmatprep.subr.bf16.mxu0 0
    %5281 = vmatpush1.bf16.msra.mxu0 0
    %5282 = vmatprep.subr.bf16.mxu0 0
    %5283 = vmatpush1.bf16.msra.mxu0 0
    %5284 = vmatprep.subr.bf16.mxu0 0
    %5285 = vmatpush1.bf16.msra.mxu0 0
    %5286 = vmatprep.subr.bf16.mxu0 0
    %5287 = vmatpush1.bf16.msra.mxu0 %v5267
    %5288 = vmatprep.subr.bf16.mxu0 0
    %5289 = vmatpush2.bf16.msra.mxu0 0
    %5290 = vmatprep.subr.bf16.mxu0 0
    %5291 = vmatpush2.bf16.msra.mxu0 0
    %5292 = vmatprep.subr.bf16.mxu0 0
    %5293 = vmatpush2.bf16.msra.mxu0 0
    %5294 = vmatprep.subr.bf16.mxu0 0
    %5295 = vmatpush2.bf16.msra.mxu0 0
    %5296 = vmatprep.subr.bf16.mxu0 0
    %5297 = vmatpush2.bf16.msra.mxu0 0
    %5298 = vmatprep.subr.bf16.mxu0 0
    %5299 = vmatpush2.bf16.msra.mxu0 0
    %5300 = vmatprep.subr.bf16.mxu0 0
    %5301 = vmatpush2.bf16.msra.mxu0 0
    %5302 = vmatprep.subr.bf16.mxu0 0
    %5303 = vmatpush2.bf16.msra.mxu0 0
    %5304 = vmatprep.mubr.bf16.mxu0 0
    %5305 = vmatmul.mubr.bf16.gmra.mxu0 %v5270
    %v5306 = vpop.f32.mrf.mxu0
    %v5307 = vadd.f32 0.0, %v5306
    %v5308 = vpop.f32.mrf.mxu0
    %v5309 = vpop.f32.mrf.mxu0
    %v5310 = vadd.f32 0.0, %v5309
    %v5311 = vpop.f32.mrf.mxu0
    %5312 = vdwg.mxu0
    %5313 = vrot.lane.b32.xlu0 %v4981, 96
    %v5314 = vpop.permute.xlu0 %5313
    %v5317 = vsel %vm326, %v5263, 0
    %5319 = vmatprep.subr.bf16.mxu0 0
    %5320 = vmatpush1.bf16.msra.mxu0 0
    %5321 = vmatprep.subr.bf16.mxu0 0
    %5322 = vmatpush1.bf16.msra.mxu0 0
    %5323 = vmatprep.subr.bf16.mxu0 0
    %5324 = vmatpush1.bf16.msra.mxu0 0
    %5325 = vmatprep.subr.bf16.mxu0 0
    %5326 = vmatpush1.bf16.msra.mxu0 0
    %5327 = vmatprep.subr.bf16.mxu0 0
    %5328 = vmatpush1.bf16.msra.mxu0 0
    %5329 = vmatprep.subr.bf16.mxu0 0
    %5330 = vmatpush1.bf16.msra.mxu0 0
    %5331 = vmatprep.subr.bf16.mxu0 0
    %5332 = vmatpush1.bf16.msra.mxu0 0
    %5333 = vmatprep.subr.bf16.mxu0 0
    %5334 = vmatpush1.bf16.msra.mxu0 %v5314
    %5335 = vmatprep.subr.bf16.mxu0 0
    %5336 = vmatpush2.bf16.msra.mxu0 0
    %5337 = vmatprep.subr.bf16.mxu0 0
    %5338 = vmatpush2.bf16.msra.mxu0 0
    %5339 = vmatprep.subr.bf16.mxu0 0
    %5340 = vmatpush2.bf16.msra.mxu0 0
    %5341 = vmatprep.subr.bf16.mxu0 0
    %5342 = vmatpush2.bf16.msra.mxu0 0
    %5343 = vmatprep.subr.bf16.mxu0 0
    %5344 = vmatpush2.bf16.msra.mxu0 0
    %5345 = vmatprep.subr.bf16.mxu0 0
    %5346 = vmatpush2.bf16.msra.mxu0 0
    %5347 = vmatprep.subr.bf16.mxu0 0
    %5348 = vmatpush2.bf16.msra.mxu0 0
    %5349 = vmatprep.subr.bf16.mxu0 0
    %5350 = vmatpush2.bf16.msra.mxu0 0
    %5351 = vmatprep.mubr.bf16.mxu0 0
    %5352 = vmatmul.mubr.bf16.gmra.mxu0 %v5317
    %v5353 = vpop.f32.mrf.mxu0
    %v5354 = vadd.f32 0.0, %v5353
    %v5355 = vpop.f32.mrf.mxu0
    %v5356 = vpop.f32.mrf.mxu0
    %v5357 = vadd.f32 0.0, %v5356
    %v5358 = vpop.f32.mrf.mxu0
    %5359 = vdwg.mxu0
    %5360 = vrot.lane.b32.xlu0 %v4983, 96
    %v5361 = vpop.permute.xlu0 %5360
    %v5364 = vsel %vm326, %v5264, 0
    %5366 = vmatprep.subr.bf16.mxu0 0
    %5367 = vmatpush1.bf16.msra.mxu0 0
    %5368 = vmatprep.subr.bf16.mxu0 0
    %5369 = vmatpush1.bf16.msra.mxu0 0
    %5370 = vmatprep.subr.bf16.mxu0 0
    %5371 = vmatpush1.bf16.msra.mxu0 0
    %5372 = vmatprep.subr.bf16.mxu0 0
    %5373 = vmatpush1.bf16.msra.mxu0 0
    %5374 = vmatprep.subr.bf16.mxu0 0
    %5375 = vmatpush1.bf16.msra.mxu0 0
    %5376 = vmatprep.subr.bf16.mxu0 0
    %5377 = vmatpush1.bf16.msra.mxu0 0
    %5378 = vmatprep.subr.bf16.mxu0 0
    %5379 = vmatpush1.bf16.msra.mxu0 0
    %5380 = vmatprep.subr.bf16.mxu0 0
    %5381 = vmatpush1.bf16.msra.mxu0 %v5361
    %5382 = vmatprep.subr.bf16.mxu0 0
    %5383 = vmatpush2.bf16.msra.mxu0 0
    %5384 = vmatprep.subr.bf16.mxu0 0
    %5385 = vmatpush2.bf16.msra.mxu0 0
    %5386 = vmatprep.subr.bf16.mxu0 0
    %5387 = vmatpush2.bf16.msra.mxu0 0
    %5388 = vmatprep.subr.bf16.mxu0 0
    %5389 = vmatpush2.bf16.msra.mxu0 0
    %5390 = vmatprep.subr.bf16.mxu0 0
    %5391 = vmatpush2.bf16.msra.mxu0 0
    %5392 = vmatprep.subr.bf16.mxu0 0
    %5393 = vmatpush2.bf16.msra.mxu0 0
    %5394 = vmatprep.subr.bf16.mxu0 0
    %5395 = vmatpush2.bf16.msra.mxu0 0
    %5396 = vmatprep.subr.bf16.mxu0 0
    %5397 = vmatpush2.bf16.msra.mxu0 0
    %5398 = vmatprep.mubr.bf16.mxu0 0
    %5399 = vmatmul.mubr.bf16.gmra.mxu0 %v5364
    %v5400 = vpop.f32.mrf.mxu0
    %v5401 = vadd.f32 0.0, %v5400
    %v5402 = vpop.f32.mrf.mxu0
    %v5403 = vpop.f32.mrf.mxu0
    %v5404 = vadd.f32 0.0, %v5403
    %v5405 = vpop.f32.mrf.mxu0
    %5406 = vdwg.mxu0
    %5407 = vrot.lane.b32.xlu0 %v4985, 96
    %v5408 = vpop.permute.xlu0 %5407
    %v5411 = vsel %vm326, %v5265, 0
    %5413 = vmatprep.subr.bf16.mxu0 0
    %5414 = vmatpush1.bf16.msra.mxu0 0
    %5415 = vmatprep.subr.bf16.mxu0 0
    %5416 = vmatpush1.bf16.msra.mxu0 0
    %5417 = vmatprep.subr.bf16.mxu0 0
    %5418 = vmatpush1.bf16.msra.mxu0 0
    %5419 = vmatprep.subr.bf16.mxu0 0
    %5420 = vmatpush1.bf16.msra.mxu0 0
    %5421 = vmatprep.subr.bf16.mxu0 0
    %5422 = vmatpush1.bf16.msra.mxu0 0
    %5423 = vmatprep.subr.bf16.mxu0 0
    %5424 = vmatpush1.bf16.msra.mxu0 0
    %5425 = vmatprep.subr.bf16.mxu0 0
    %5426 = vmatpush1.bf16.msra.mxu0 0
    %5427 = vmatprep.subr.bf16.mxu0 0
    %5428 = vmatpush1.bf16.msra.mxu0 %v5408
    %5429 = vmatprep.subr.bf16.mxu0 0
    %5430 = vmatpush2.bf16.msra.mxu0 0
    %5431 = vmatprep.subr.bf16.mxu0 0
    %5432 = vmatpush2.bf16.msra.mxu0 0
    %5433 = vmatprep.subr.bf16.mxu0 0
    %5434 = vmatpush2.bf16.msra.mxu0 0
    %5435 = vmatprep.subr.bf16.mxu0 0
    %5436 = vmatpush2.bf16.msra.mxu0 0
    %5437 = vmatprep.subr.bf16.mxu0 0
    %5438 = vmatpush2.bf16.msra.mxu0 0
    %5439 = vmatprep.subr.bf16.mxu0 0
    %5440 = vmatpush2.bf16.msra.mxu0 0
    %5441 = vmatprep.subr.bf16.mxu0 0
    %5442 = vmatpush2.bf16.msra.mxu0 0
    %5443 = vmatprep.subr.bf16.mxu0 0
    %5444 = vmatpush2.bf16.msra.mxu0 0
    %5445 = vmatprep.mubr.bf16.mxu0 0
    %5446 = vmatmul.mubr.bf16.gmra.mxu0 %v5411
    %v5447 = vpop.f32.mrf.mxu0
    %v5448 = vadd.f32 0.0, %v5447
    %v5449 = vpop.f32.mrf.mxu0
    %v5450 = vpop.f32.mrf.mxu0
    %v5451 = vadd.f32 0.0, %v5450
    %v5452 = vpop.f32.mrf.mxu0
    %5453 = vdwg.mxu0
    %v5454 = vpack.c.bf16 %v5310, %v5307
    %v5455 = vpack.c.bf16 %v5357, %v5354
    %v5456 = vpack.c.bf16 %v5404, %v5401
    %v5457 = vpack.c.bf16 %v5451, %v5448
    %v5459 = vsel %vm131, %v5454, 0
    %v5462 = vsel %vm614, %v4965, 0
    %5464 = vmatprep.subr.bf16.mxu0 0
    %5465 = vmatpush1.bf16.msra.mxu0 0
    %5466 = vmatprep.subr.bf16.mxu0 0
    %5467 = vmatpush1.bf16.msra.mxu0 0
    %5468 = vmatprep.subr.bf16.mxu0 0
    %5469 = vmatpush1.bf16.msra.mxu0 0
    %5470 = vmatprep.subr.bf16.mxu0 0
    %5471 = vmatpush1.bf16.msra.mxu0 0
    %5472 = vmatprep.subr.bf16.mxu0 0
    %5473 = vmatpush1.bf16.msra.mxu0 0
    %5474 = vmatprep.subr.bf16.mxu0 0
    %5475 = vmatpush1.bf16.msra.mxu0 0
    %5476 = vmatprep.subr.bf16.mxu0 0
    %5477 = vmatpush1.bf16.msra.mxu0 0
    %5478 = vmatprep.subr.bf16.mxu0 0
    %5479 = vmatpush1.bf16.msra.mxu0 %v5462
    %5480 = vmatprep.subr.bf16.mxu0 0
    %5481 = vmatpush2.bf16.msra.mxu0 0
    %5482 = vmatprep.subr.bf16.mxu0 0
    %5483 = vmatpush2.bf16.msra.mxu0 0
    %5484 = vmatprep.subr.bf16.mxu0 0
    %5485 = vmatpush2.bf16.msra.mxu0 0
    %5486 = vmatprep.subr.bf16.mxu0 0
    %5487 = vmatpush2.bf16.msra.mxu0 0
    %5488 = vmatprep.subr.bf16.mxu0 0
    %5489 = vmatpush2.bf16.msra.mxu0 0
    %5490 = vmatprep.subr.bf16.mxu0 0
    %5491 = vmatpush2.bf16.msra.mxu0 0
    %5492 = vmatprep.subr.bf16.mxu0 0
    %5493 = vmatpush2.bf16.msra.mxu0 0
    %5494 = vmatprep.subr.bf16.mxu0 0
    %5495 = vmatpush2.bf16.msra.mxu0 0
    %5496 = vmatprep.mubr.bf16.mxu0 0
    %5497 = vmatmul.mubr.bf16.gmra.mxu0 %v5459
    %v5498 = vpop.f32.mrf.mxu0
    %v5499 = vadd.f32 0.0, %v5498
    %v5500 = vpop.f32.mrf.mxu0
    %v5501 = vpop.f32.mrf.mxu0
    %v5502 = vadd.f32 0.0, %v5501
    %v5503 = vpop.f32.mrf.mxu0
    %5504 = vdwg.mxu0
    %v5506 = vsel %vm131, %v5455, 0
    %v5509 = vsel %vm614, %v4966, 0
    %5511 = vmatprep.subr.bf16.mxu0 0
    %5512 = vmatpush1.bf16.msra.mxu0 0
    %5513 = vmatprep.subr.bf16.mxu0 0
    %5514 = vmatpush1.bf16.msra.mxu0 0
    %5515 = vmatprep.subr.bf16.mxu0 0
    %5516 = vmatpush1.bf16.msra.mxu0 0
    %5517 = vmatprep.subr.bf16.mxu0 0
    %5518 = vmatpush1.bf16.msra.mxu0 0
    %5519 = vmatprep.subr.bf16.mxu0 0
    %5520 = vmatpush1.bf16.msra.mxu0 0
    %5521 = vmatprep.subr.bf16.mxu0 0
    %5522 = vmatpush1.bf16.msra.mxu0 0
    %5523 = vmatprep.subr.bf16.mxu0 0
    %5524 = vmatpush1.bf16.msra.mxu0 0
    %5525 = vmatprep.subr.bf16.mxu0 0
    %5526 = vmatpush1.bf16.msra.mxu0 %v5509
    %5527 = vmatprep.subr.bf16.mxu0 0
    %5528 = vmatpush2.bf16.msra.mxu0 0
    %5529 = vmatprep.subr.bf16.mxu0 0
    %5530 = vmatpush2.bf16.msra.mxu0 0
    %5531 = vmatprep.subr.bf16.mxu0 0
    %5532 = vmatpush2.bf16.msra.mxu0 0
    %5533 = vmatprep.subr.bf16.mxu0 0
    %5534 = vmatpush2.bf16.msra.mxu0 0
    %5535 = vmatprep.subr.bf16.mxu0 0
    %5536 = vmatpush2.bf16.msra.mxu0 0
    %5537 = vmatprep.subr.bf16.mxu0 0
    %5538 = vmatpush2.bf16.msra.mxu0 0
    %5539 = vmatprep.subr.bf16.mxu0 0
    %5540 = vmatpush2.bf16.msra.mxu0 0
    %5541 = vmatprep.subr.bf16.mxu0 0
    %5542 = vmatpush2.bf16.msra.mxu0 0
    %5543 = vmatprep.mubr.bf16.mxu0 0
    %5544 = vmatmul.mubr.bf16.gmra.mxu0 %v5506
    %v5545 = vpop.f32.mrf.mxu0
    %v5546 = vadd.f32 0.0, %v5545
    %v5547 = vpop.f32.mrf.mxu0
    %v5548 = vpop.f32.mrf.mxu0
    %v5549 = vadd.f32 0.0, %v5548
    %v5550 = vpop.f32.mrf.mxu0
    %5551 = vdwg.mxu0
    %v5553 = vsel %vm131, %v5456, 0
    %v5556 = vsel %vm614, %v4967, 0
    %5558 = vmatprep.subr.bf16.mxu0 0
    %5559 = vmatpush1.bf16.msra.mxu0 0
    %5560 = vmatprep.subr.bf16.mxu0 0
    %5561 = vmatpush1.bf16.msra.mxu0 0
    %5562 = vmatprep.subr.bf16.mxu0 0
    %5563 = vmatpush1.bf16.msra.mxu0 0
    %5564 = vmatprep.subr.bf16.mxu0 0
    %5565 = vmatpush1.bf16.msra.mxu0 0
    %5566 = vmatprep.subr.bf16.mxu0 0
    %5567 = vmatpush1.bf16.msra.mxu0 0
    %5568 = vmatprep.subr.bf16.mxu0 0
    %5569 = vmatpush1.bf16.msra.mxu0 0
    %5570 = vmatprep.subr.bf16.mxu0 0
    %5571 = vmatpush1.bf16.msra.mxu0 0
    %5572 = vmatprep.subr.bf16.mxu0 0
    %5573 = vmatpush1.bf16.msra.mxu0 %v5556
    %5574 = vmatprep.subr.bf16.mxu0 0
    %5575 = vmatpush2.bf16.msra.mxu0 0
    %5576 = vmatprep.subr.bf16.mxu0 0
    %5577 = vmatpush2.bf16.msra.mxu0 0
    %5578 = vmatprep.subr.bf16.mxu0 0
    %5579 = vmatpush2.bf16.msra.mxu0 0
    %5580 = vmatprep.subr.bf16.mxu0 0
    %5581 = vmatpush2.bf16.msra.mxu0 0
    %5582 = vmatprep.subr.bf16.mxu0 0
    %5583 = vmatpush2.bf16.msra.mxu0 0
    %5584 = vmatprep.subr.bf16.mxu0 0
    %5585 = vmatpush2.bf16.msra.mxu0 0
    %5586 = vmatprep.subr.bf16.mxu0 0
    %5587 = vmatpush2.bf16.msra.mxu0 0
    %5588 = vmatprep.subr.bf16.mxu0 0
    %5589 = vmatpush2.bf16.msra.mxu0 0
    %5590 = vmatprep.mubr.bf16.mxu0 0
    %5591 = vmatmul.mubr.bf16.gmra.mxu0 %v5553
    %v5592 = vpop.f32.mrf.mxu0
    %v5593 = vadd.f32 0.0, %v5592
    %v5594 = vpop.f32.mrf.mxu0
    %v5595 = vpop.f32.mrf.mxu0
    %v5596 = vadd.f32 0.0, %v5595
    %v5597 = vpop.f32.mrf.mxu0
    %5598 = vdwg.mxu0
    %v5600 = vsel %vm131, %v5457, 0
    %v5603 = vsel %vm614, %v4968, 0
    %5605 = vmatprep.subr.bf16.mxu0 0
    %5606 = vmatpush1.bf16.msra.mxu0 0
    %5607 = vmatprep.subr.bf16.mxu0 0
    %5608 = vmatpush1.bf16.msra.mxu0 0
    %5609 = vmatprep.subr.bf16.mxu0 0
    %5610 = vmatpush1.bf16.msra.mxu0 0
    %5611 = vmatprep.subr.bf16.mxu0 0
    %5612 = vmatpush1.bf16.msra.mxu0 0
    %5613 = vmatprep.subr.bf16.mxu0 0
    %5614 = vmatpush1.bf16.msra.mxu0 0
    %5615 = vmatprep.subr.bf16.mxu0 0
    %5616 = vmatpush1.bf16.msra.mxu0 0
    %5617 = vmatprep.subr.bf16.mxu0 0
    %5618 = vmatpush1.bf16.msra.mxu0 0
    %5619 = vmatprep.subr.bf16.mxu0 0
    %5620 = vmatpush1.bf16.msra.mxu0 %v5603
    %5621 = vmatprep.subr.bf16.mxu0 0
    %5622 = vmatpush2.bf16.msra.mxu0 0
    %5623 = vmatprep.subr.bf16.mxu0 0
    %5624 = vmatpush2.bf16.msra.mxu0 0
    %5625 = vmatprep.subr.bf16.mxu0 0
    %5626 = vmatpush2.bf16.msra.mxu0 0
    %5627 = vmatprep.subr.bf16.mxu0 0
    %5628 = vmatpush2.bf16.msra.mxu0 0
    %5629 = vmatprep.subr.bf16.mxu0 0
    %5630 = vmatpush2.bf16.msra.mxu0 0
    %5631 = vmatprep.subr.bf16.mxu0 0
    %5632 = vmatpush2.bf16.msra.mxu0 0
    %5633 = vmatprep.subr.bf16.mxu0 0
    %5634 = vmatpush2.bf16.msra.mxu0 0
    %5635 = vmatprep.subr.bf16.mxu0 0
    %5636 = vmatpush2.bf16.msra.mxu0 0
    %5637 = vmatprep.mubr.bf16.mxu0 0
    %5638 = vmatmul.mubr.bf16.gmra.mxu0 %v5600
    %v5639 = vpop.f32.mrf.mxu0
    %v5640 = vadd.f32 0.0, %v5639
    %v5641 = vpop.f32.mrf.mxu0
    %v5642 = vpop.f32.mrf.mxu0
    %v5643 = vadd.f32 0.0, %v5642
    %v5644 = vpop.f32.mrf.mxu0
    %5645 = vdwg.mxu0
    %v5646 = vsel %vm72, %v5499, 0.0
    %v5647 = vsel %vm72, %v5546, 0.0
    %v5648 = vadd.f32 %v5646, %v5647
    %v5649 = vsel %vm72, %v5593, 0.0
    %v5650 = vadd.f32 %v5648, %v5649
    %v5651 = vsel %vm72, %v5640, 0.0
    %v5652 = vadd.f32 %v5650, %v5651
    %v5653 = vsel %vm72, %v5502, 0.0
    %v5654 = vsel %vm72, %v5549, 0.0
    %v5655 = vadd.f32 %v5653, %v5654
    %v5656 = vsel %vm72, %v5596, 0.0
    %v5657 = vadd.f32 %v5655, %v5656
    %v5658 = vsel %vm72, %v5643, 0.0
    %v5659 = vadd.f32 %v5657, %v5658
    %v5661 = vlaneseq
    %v5662 = vshrl.u32 %v5661, 7
    %v5663 = vsub.s32 0, %v5662
    %v5664 = vrot.slane %v4969, %v5663
    %v5666 = vadd.f32 %v5652, %v5664
    %v5667 = vadd.f32 %v5659, %v5664
    %v5668 = vadd.f32 %v4848, %v5666
    %v5669 = vadd.f32 %v4849, %v5667
    %v5670 = vld [vmem:[%s1073 + $0x5] sm:$0x1]
    %v5671 = vsel %vm72, %v5668, 0.0
    %5672 = vadd.xlane.f32.xlu0 %v5671
    %v5673 = vpop.xlane.xlu0 %5672
    %v5674 = vsel %vm72, %v5669, 0.0
    %5675 = vadd.xlane.f32.xlu0 %v5674
    %v5676 = vpop.xlane.xlu0 %5675
    %v5677 = vmul.f32 %v5673, %v828
    %v5678 = vmul.f32 %v5676, %v828
    %v5679 = vsub.f32 %v5668, %v5677
    %v5680 = vsub.f32 %v5669, %v5678
    %v5681 = vmul.f32 %v5679, %v5679
    %v5682 = vmul.f32 %v5680, %v5680
    %v5683 = vsel %vm72, %v5681, 0.0
    %5684 = vadd.xlane.f32.xlu0 %v5683
    %v5685 = vpop.xlane.xlu0 %5684
    %v5686 = vsel %vm72, %v5682, 0.0
    %5687 = vadd.xlane.f32.xlu0 %v5686
    %v5688 = vpop.xlane.xlu0 %5687
    %v5689 = vmul.f32 %v5685, %v828
    %v5690 = vmul.f32 %v5688, %v828
    %v5691 = vadd.f32 %v5689, 1e-05
    %v5692 = vadd.f32 %v5690, 1e-05
    %v5693 = vrsqrt.pop %v5691
    %v5694 = vrsqrt.pop %v5692
    %v5695 = vmul.f32 %v5679, %v5693
    %v5696 = vmul.f32 %v5680, %v5694
    %v5698 = vlaneseq
    %v5699 = vshrl.u32 %v5698, 7
    %v5700 = vsub.s32 0, %v5699
    %v5701 = vrot.slane %v5670, %v5700
    %5702 = vrot.lane.b32.xlu0 %v5701, 96
    %v5703 = vpop.permute.xlu0 %5702
    %v5705 = vmul.f32 %v5695, %v5703
    %v5706 = vmul.f32 %v5696, %v5703
    %5707 = vrot.lane.b32.xlu0 %v5701, 64
    %v5708 = vpop.permute.xlu0 %5707
    %v5710 = vadd.f32 %v5705, %v5708
    %v5711 = vadd.f32 %v5706, %v5708
    %v5712 = vld [vmem:[%s1068 + $0x8] sm:$0xff]
    %v5713 = vld [vmem:[%s1068 + $0x18] sm:$0xff]
    %v5714 = vld [vmem:[%s1068 + $0x28] sm:$0xff]
    %v5715 = vld [vmem:[%s1068 + $0x38] sm:$0xff]
    %v5716 = vld [vmem:[%s1073 + $0x5] sm:$0x3]
    %v5717 = vpack.c.bf16 %v5711, %v5710
    %v5719 = vlaneseq
    %v5720 = vshrl.u32 %v5719, 7
    %v5721 = vsub.s32 0, %v5720
    %v5722 = vrot.slane %v5716, %v5721
    %v5723 = vlaneseq
    %v5724 = vshrl.u32 %v5723, 7
    %v5725 = vsub.s32 1, %v5724
    %v5726 = vrot.slane %v5716, %v5725
    %v5731 = vunpack.c.l.b16 %v5712
    %v5732 = vunpack.c.h.b16 %v5712
    %v5733 = vunpack.c.l.b16 %v5713
    %v5734 = vunpack.c.h.b16 %v5713
    %v5735 = vunpack.c.l.b16 %v5714
    %v5736 = vunpack.c.h.b16 %v5714
    %v5737 = vunpack.c.l.b16 %v5715
    %v5738 = vunpack.c.h.b16 %v5715
    %v5739 = vpack.c.b16 %v5733, %v5731
    %v5740 = vpack.c.b16 %v5734, %v5732
    %v5741 = vpack.c.b16 %v5737, %v5735
    %v5742 = vpack.c.b16 %v5738, %v5736
    %5743 = vrot.lane.b32.xlu0 %v5739, 32
    %v5744 = vpop.permute.xlu0 %5743
    %5745 = vrot.lane.b32.xlu0 %v5740, 32
    %v5746 = vpop.permute.xlu0 %5745
    %5747 = vrot.lane.b32.xlu0 %v5741, 32
    %v5748 = vpop.permute.xlu0 %5747
    %5749 = vrot.lane.b32.xlu0 %v5742, 32
    %v5750 = vpop.permute.xlu0 %5749
    %v5751 = vsel %vm891, %v5744, %v5746
    %v5752 = vsel %vm891, %v5748, %v5750
    %5755 = vrot.lane.b32.xlu0 %v5722, 32
    %v5756 = vpop.permute.xlu0 %5755
    %5757 = vrot.lane.b32.xlu0 %v5726, 32
    %v5758 = vpop.permute.xlu0 %5757
    %v5759 = vsel %vm72, %v5756, %v5758
    %v5762 = vsel %vm72, %v5717, 0
    %5764 = vmatprep.subr.bf16.mxu0 0
    %5765 = vmatpush1.bf16.msra.mxu0 0
    %5766 = vmatprep.subr.bf16.mxu0 0
    %5767 = vmatpush1.bf16.msra.mxu0 0
    %5768 = vmatprep.subr.bf16.mxu0 0
    %5769 = vmatpush1.bf16.msra.mxu0 0
    %5770 = vmatprep.subr.bf16.mxu0 0
    %5771 = vmatpush1.bf16.msra.mxu0 0
    %5772 = vmatprep.subr.bf16.mxu0 0
    %5773 = vmatpush1.bf16.msra.mxu0 0
    %5774 = vmatprep.subr.bf16.mxu0 0
    %5775 = vmatpush1.bf16.msra.mxu0 0
    %5776 = vmatprep.subr.bf16.mxu0 0
    %5777 = vmatpush1.bf16.msra.mxu0 %v5752
    %5778 = vmatprep.subr.bf16.mxu0 0
    %5779 = vmatpush1.bf16.msra.mxu0 %v5751
    %5780 = vmatprep.subr.bf16.mxu0 0
    %5781 = vmatpush2.bf16.msra.mxu0 0
    %5782 = vmatprep.subr.bf16.mxu0 0
    %5783 = vmatpush2.bf16.msra.mxu0 0
    %5784 = vmatprep.subr.bf16.mxu0 0
    %5785 = vmatpush2.bf16.msra.mxu0 0
    %5786 = vmatprep.subr.bf16.mxu0 0
    %5787 = vmatpush2.bf16.msra.mxu0 0
    %5788 = vmatprep.subr.bf16.mxu0 0
    %5789 = vmatpush2.bf16.msra.mxu0 0
    %5790 = vmatprep.subr.bf16.mxu0 0
    %5791 = vmatpush2.bf16.msra.mxu0 0
    %5792 = vmatprep.subr.bf16.mxu0 0
    %5793 = vmatpush2.bf16.msra.mxu0 0
    %5794 = vmatprep.subr.bf16.mxu0 0
    %5795 = vmatpush2.bf16.msra.mxu0 0
    %5796 = vmatprep.mubr.bf16.mxu0 0
    %5797 = vmatmul.mubr.bf16.gmra.mxu0 %v5762
    %v5798 = vpop.f32.mrf.mxu0
    %v5799 = vadd.f32 %v5759, %v5798
    %v5800 = vpop.f32.mrf.mxu0
    %v5801 = vpop.f32.mrf.mxu0
    %v5802 = vadd.f32 %v5759, %v5801
    %v5803 = vpop.f32.mrf.mxu0
    %5804 = vdwg.mxu0
    %v5805 = vmax.f32 %v5799, 0.0
    %v5806 = vmax.f32 %v5802, 0.0
    %v5807 = vld [vmem:[%s1962] sm:$0xf]
    %v5808 = vld [vmem:[%s1962 + $0x4] sm:$0xf]
    %v5809 = vld [vmem:[%s1962 + $0x8] sm:$0xf]
    %v5810 = vld [vmem:[%s1962 + $0xc] sm:$0xf]
    %v5811 = vld [vmem:[%s1962 + $0x10] sm:$0xf]
    %v5812 = vld [vmem:[%s1962 + $0x14] sm:$0xf]
    %v5813 = vld [vmem:[%s1962 + $0x18] sm:$0xf]
    %v5814 = vld [vmem:[%s1962 + $0x1c] sm:$0xf]
    %v5815 = vld [vmem:[%s1073 + $0x6] sm:$0x1]
    %v5816 = vpack.c.bf16 %v5806, %v5805
    %v5818 = vlaneseq
    %v5819 = vshrl.u32 %v5818, 7
    %v5820 = vsub.s32 0, %v5819
    %v5821 = vrot.slane %v5815, %v5820
    %v5830 = vunpack.c.l.b16 %v5807
    %v5831 = vunpack.c.l.b16 %v5808
    %v5832 = vunpack.c.l.b16 %v5809
    %v5833 = vunpack.c.l.b16 %v5810
    %v5834 = vunpack.c.l.b16 %v5811
    %v5835 = vunpack.c.l.b16 %v5812
    %v5836 = vunpack.c.l.b16 %v5813
    %v5837 = vunpack.c.l.b16 %v5814
    %v5838 = vpack.c.b16 %v5831, %v5830
    %v5839 = vpack.c.b16 %v5833, %v5832
    %v5840 = vpack.c.b16 %v5835, %v5834
    %v5841 = vpack.c.b16 %v5837, %v5836
    %5842 = vrot.lane.b32.xlu0 %v5838, 96
    %v5843 = vpop.permute.xlu0 %5842
    %5844 = vrot.lane.b32.xlu0 %v5839, 96
    %v5845 = vpop.permute.xlu0 %5844
    %5846 = vrot.lane.b32.xlu0 %v5840, 96
    %v5847 = vpop.permute.xlu0 %5846
    %5848 = vrot.lane.b32.xlu0 %v5841, 96
    %v5849 = vpop.permute.xlu0 %5848
    %5854 = vrot.lane.b32.xlu0 %v5821, 96
    %v5855 = vpop.permute.xlu0 %5854
    %v5858 = vsel %vm985, %v5816, 0
    %5860 = vmatprep.subr.bf16.mxu0 0
    %5861 = vmatpush1.bf16.msra.mxu0 0
    %5862 = vmatprep.subr.bf16.mxu0 0
    %5863 = vmatpush1.bf16.msra.mxu0 0
    %5864 = vmatprep.subr.bf16.mxu0 0
    %5865 = vmatpush1.bf16.msra.mxu0 0
    %5866 = vmatprep.subr.bf16.mxu0 0
    %5867 = vmatpush1.bf16.msra.mxu0 0
    %5868 = vmatprep.subr.bf16.mxu0 0
    %5869 = vmatpush1.bf16.msra.mxu0 %v5849
    %5870 = vmatprep.subr.bf16.mxu0 0
    %5871 = vmatpush1.bf16.msra.mxu0 %v5847
    %5872 = vmatprep.subr.bf16.mxu0 0
    %5873 = vmatpush1.bf16.msra.mxu0 %v5845
    %5874 = vmatprep.subr.bf16.mxu0 0
    %5875 = vmatpush1.bf16.msra.mxu0 %v5843
    %5876 = vmatprep.subr.bf16.mxu0 0
    %5877 = vmatpush2.bf16.msra.mxu0 0
    %5878 = vmatprep.subr.bf16.mxu0 0
    %5879 = vmatpush2.bf16.msra.mxu0 0
    %5880 = vmatprep.subr.bf16.mxu0 0
    %5881 = vmatpush2.bf16.msra.mxu0 0
    %5882 = vmatprep.subr.bf16.mxu0 0
    %5883 = vmatpush2.bf16.msra.mxu0 0
    %5884 = vmatprep.subr.bf16.mxu0 0
    %5885 = vmatpush2.bf16.msra.mxu0 0
    %5886 = vmatprep.subr.bf16.mxu0 0
    %5887 = vmatpush2.bf16.msra.mxu0 0
    %5888 = vmatprep.subr.bf16.mxu0 0
    %5889 = vmatpush2.bf16.msra.mxu0 0
    %5890 = vmatprep.subr.bf16.mxu0 0
    %5891 = vmatpush2.bf16.msra.mxu0 0
    %5892 = vmatprep.mubr.bf16.mxu0 0
    %5893 = vmatmul.mubr.bf16.gmra.mxu0 %v5858
    %v5894 = vpop.f32.mrf.mxu0
    %v5895 = vadd.f32 %v5855, %v5894
    %v5896 = vpop.f32.mrf.mxu0
    %v5897 = vpop.f32.mrf.mxu0
    %v5898 = vadd.f32 %v5855, %v5897
    %v5899 = vpop.f32.mrf.mxu0
    %5900 = vdwg.mxu0
    %v5901 = vadd.f32 %v5710, %v5895
    %v5902 = vadd.f32 %v5711, %v5898
    %v5903 = vsel %vm72, %v5901, 0.0
    %5904 = vadd.xlane.f32.xlu0 %v5903
    %v5905 = vpop.xlane.xlu0 %5904
    %v5906 = vsel %vm72, %v5902, 0.0
    %5907 = vadd.xlane.f32.xlu0 %v5906
    %v5908 = vpop.xlane.xlu0 %5907
    %v5909 = vmul.f32 %v5905, %v828
    %v5910 = vmul.f32 %v5908, %v828
    %v5911 = vsub.f32 %v5901, %v5909
    %v5912 = vsub.f32 %v5902, %v5910
    %v5913 = vmul.f32 %v5911, %v5911
    %v5914 = vmul.f32 %v5912, %v5912
    %v5915 = vsel %vm72, %v5913, 0.0
    %5916 = vadd.xlane.f32.xlu0 %v5915
    %v5917 = vpop.xlane.xlu0 %5916
    %v5918 = vsel %vm72, %v5914, 0.0
    %5919 = vadd.xlane.f32.xlu0 %v5918
    %v5920 = vpop.xlane.xlu0 %5919
    %v5921 = vmul.f32 %v5917, %v828
    %v5922 = vmul.f32 %v5920, %v828
    %v5923 = vadd.f32 %v5921, 1e-05
    %v5924 = vadd.f32 %v5922, 1e-05
    %v5925 = vrsqrt.pop %v5923
    %v5926 = vrsqrt.pop %v5924
    %v5927 = vmul.f32 %v5911, %v5925
    %v5928 = vmul.f32 %v5912, %v5926
    %5929 = vrot.lane.b32.xlu0 %v5821, 64
    %v5930 = vpop.permute.xlu0 %5929
    %v5932 = vmul.f32 %v5927, %v5930
    %v5933 = vmul.f32 %v5928, %v5930
    %5934 = vrot.lane.b32.xlu0 %v5821, 32
    %v5935 = vpop.permute.xlu0 %5934
    %v5937 = vadd.f32 %v5932, %v5935
    %v5938 = vadd.f32 %v5933, %v5935
    %v5939 = vld [vmem:[%s8] sm:$0xf]
    %v5940 = vld [vmem:[%s8 + $0x4] sm:$0xf]
    %v5941 = vld [vmem:[%s8 + $0x8] sm:$0xf]
    %v5942 = vld [vmem:[%s8 + $0xc] sm:$0xf]
    %v5943 = vld [vmem:[%s10] sm:$0x1]
    %v5944 = vpack.c.bf16 %v5938, %v5937
    %v5946 = vlaneseq
    %v5947 = vshrl.u32 %v5946, 7
    %v5948 = vsub.s32 0, %v5947
    %v5949 = vrot.slane %v5943, %v5948
    %v5955 = vunpack.c.l.b16 %v5939
    %v5956 = vunpack.c.l.b16 %v5940
    %v5957 = vunpack.c.l.b16 %v5941
    %v5958 = vunpack.c.l.b16 %v5942
    %v5959 = vpack.c.b16 %v5956, %v5955
    %v5960 = vpack.c.b16 %v5958, %v5957
    %v5964 = vsel %vm72, %v5944, 0
    %5966 = vmatprep.subr.bf16.mxu0 0
    %5967 = vmatpush1.bf16.msra.mxu0 0
    %5968 = vmatprep.subr.bf16.mxu0 0
    %5969 = vmatpush1.bf16.msra.mxu0 0
    %5970 = vmatprep.subr.bf16.mxu0 0
    %5971 = vmatpush1.bf16.msra.mxu0 0
    %5972 = vmatprep.subr.bf16.mxu0 0
    %5973 = vmatpush1.bf16.msra.mxu0 0
    %5974 = vmatprep.subr.bf16.mxu0 0
    %5975 = vmatpush1.bf16.msra.mxu0 0
    %5976 = vmatprep.subr.bf16.mxu0 0
    %5977 = vmatpush1.bf16.msra.mxu0 0
    %5978 = vmatprep.subr.bf16.mxu0 0
    %5979 = vmatpush1.bf16.msra.mxu0 %v5960
    %5980 = vmatprep.subr.bf16.mxu0 0
    %5981 = vmatpush1.bf16.msra.mxu0 %v5959
    %5982 = vmatprep.subr.bf16.mxu0 0
    %5983 = vmatpush2.bf16.msra.mxu0 0
    %5984 = vmatprep.subr.bf16.mxu0 0
    %5985 = vmatpush2.bf16.msra.mxu0 0
    %5986 = vmatprep.subr.bf16.mxu0 0
    %5987 = vmatpush2.bf16.msra.mxu0 0
    %5988 = vmatprep.subr.bf16.mxu0 0
    %5989 = vmatpush2.bf16.msra.mxu0 0
    %5990 = vmatprep.subr.bf16.mxu0 0
    %5991 = vmatpush2.bf16.msra.mxu0 0
    %5992 = vmatprep.subr.bf16.mxu0 0
    %5993 = vmatpush2.bf16.msra.mxu0 0
    %5994 = vmatprep.subr.bf16.mxu0 0
    %5995 = vmatpush2.bf16.msra.mxu0 0
    %5996 = vmatprep.subr.bf16.mxu0 0
    %5997 = vmatpush2.bf16.msra.mxu0 0
    %5998 = vmatprep.mubr.bf16.mxu0 0
    %5999 = vmatmul.mubr.bf16.gmra.mxu0 %v5964
    %v6000 = vpop.f32.mrf.mxu0
    %v6001 = vadd.f32 %v5949, %v6000
    %v6002 = vpop.f32.mrf.mxu0
    %v6003 = vpop.f32.mrf.mxu0
    %v6004 = vadd.f32 %v5949, %v6003
    %v6005 = vpop.f32.mrf.mxu0
    %6006 = vdwg.mxu0
    %6007 = vst [vmem:[#allocation2] sm:$0xff] %v6001
    %6008 = vst [vmem:[#allocation2 + $0x8] sm:$0xff] %v6004
    // Predicated region
    $region46: #{transformer_forward.1} parent=1 // pred_check
      _
    $region47: #{transformer_forward.1} parent=1 // pred_check_branch
      %6010 = sbr.rel (0) target = $region49
    $region48: #{transformer_forward.1} parent=1 // pred_region
      %s6012 = ssub.s32 256, 256
      %6013 = vsyncadd [#allocation3], %s6012
      %s6014 = sshll.u32 [#allocation2], 4
      %s6015 = int_to_ptr.vmem [resolvable:$true] %s6014
      %6020 = dma.vmem_to_hbm [thread:$0]  %s6015, 256, %s11, [#allocation3], 128, 128, 8
    $region49: #{transformer_forward.1} parent=1 // pred_fallthru
      _
    // Predicated region
    $region50: #{transformer_forward.1} parent=1 // pred_check
      _
    $region51: #{transformer_forward.1} parent=1 // pred_check_branch
      %6022 = sbr.rel (0) target = $region53
    $region52: #{transformer_forward.1} parent=1 // pred_region
      %6023 = dma.done [#allocation3], 256
    $region53: #{transformer_forward.1} parent=1 // pred_fallthru
      _
    %6024 = vsyncpa [#allocation3], 1

</llo_original>
